<compile_context>
chip_gen: v7x
topology: tpu7x:2x2x1
jax: 0.10.0
libtpu: 0.0.40
codegen_flags: <defaults>
</compile_context>

<pallas_src>
import functools

import jax
import jax.numpy as jnp
from jax.experimental import pallas as pl
from jax.experimental.pallas import tpu as pltpu


# ----------------------------------------------------------------------------
# In-kernel building blocks
# ----------------------------------------------------------------------------


def _layernorm(z, gamma, beta, eps):
    # torch.nn.LayerNorm semantics: biased variance, eps inside the sqrt.
    mean = jnp.mean(z, axis=-1, keepdims=True)
    var = jnp.mean((z - mean) ** 2, axis=-1, keepdims=True)
    return (z - mean) * jax.lax.rsqrt(var + eps) * gamma + beta


def _encoder_layer(x, wqkv, bqkv, wo, bo, g1, be1, w1, b1, w2, b2, g2, be2,
                   sel, sel_t, *, S, D, H, eps):
    """One Encoder block on a single batch element's (S, D) activation slab."""
    dh = D // H
    rpb = S // H          # rows of the (S, D) slab per torch "pseudo-batch"
    npb = H               # pseudo-batches per batch element
    scale = float(dh) ** -0.5

    # ---- fused QKV projection: one MXU pass with N = 3*D ----
    qkv = jnp.dot(x, wqkv, preferred_element_type=jnp.float32) + bqkv   # (S, 3D)

    # ---- torch `Q.view(B*H, -1, dh)` quirk ----
    # pseudo-batch p, pseudo-row i, feature d live at slab row r = p*rpb + i//H
    # and column (i % H)*dh + d.  Gather "sub-row a of every pseudo-batch" via
    # tiny 0/1 selection matmuls (sel[a] is (npb, S)).
    gk = [jnp.dot(sel[a], qkv, preferred_element_type=jnp.float32)
          for a in range(rpb)]                                          # (npb, 3D)

    # static lane slices: slab (a, c) of Q/K/V = columns [c*dh, (c+1)*dh)
    q_slab = [[gk[a][:, c * dh:(c + 1) * dh] for c in range(H)]
              for a in range(rpb)]
    k_slab = [[gk[a][:, D + c * dh:D + (c + 1) * dh] for c in range(H)]
              for a in range(rpb)]
    v_slab = [[gk[a][:, 2 * D + c * dh:2 * D + (c + 1) * dh] for c in range(H)]
              for a in range(rpb)]
    wo_rows = [wo[c * dh:(c + 1) * dh, :] for c in range(H)]            # (dh, D)

    # ---- scaled-dot-product attention per pseudo-row, Wo folded in ----
    partials = [jnp.zeros((npb, D), jnp.float32) for _ in range(rpb)]
    for a in range(rpb):
        for ci in range(H):
            q = q_slab[a][ci] * scale                                   # (npb, dh)
            # scores against the S pseudo-rows j = ap*H + cj
            cols = [jnp.sum(q * k_slab[ap][cj], axis=1, keepdims=True)
                    for ap in range(rpb) for cj in range(H)]            # S x (npb,1)
            m = cols[0]
            for cval in cols[1:]:
                m = jnp.maximum(m, cval)
            es = [jnp.exp(cval - m) for cval in cols]
            denom = es[0]
            for e in es[1:]:
                denom = denom + e
            inv = pl.reciprocal(denom, approx=True)                     # (npb, 1)
            ctx = jnp.zeros((npb, dh), jnp.float32)
            j = 0
            for ap in range(rpb):
                for cj in range(H):
                    ctx = ctx + (es[j] * inv) * v_slab[ap][cj]
                    j += 1
            # context.view(B, -1, D) puts this slab's dh features at columns
            # [ci*dh, (ci+1)*dh): fold that placement into the Wo matmul.
            partials[a] = partials[a] + jnp.dot(
                ctx, wo_rows[ci], preferred_element_type=jnp.float32)

    # undo the quirky row interleaving: slab row r <- (p = r//rpb, a = r%rpb)
    attn = jnp.zeros((S, D), jnp.float32)
    for a in range(rpb):
        attn = attn + jnp.dot(sel_t[a], partials[a],
                              preferred_element_type=jnp.float32)
    attn = attn + bo

    # ---- dropout(identity) + residual + LayerNorm (fused epilogue) ----
    x = _layernorm(attn + x, g1, be1, eps)

    # ---- position-wise FFN + residual + LayerNorm ----
    h = jnp.maximum(jnp.dot(x, w1, preferred_element_type=jnp.float32) + b1, 0.0)
    f = jnp.dot(h, w2, preferred_element_type=jnp.float32) + b2
    x = _layernorm(f + x, g2, be2, eps)
    return x


def _fused_forward_kernel(x_ref, wqkv_ref, bqkv_ref, wo_ref, bo_ref,
                          g1_ref, be1_ref, w1_ref, b1_ref, w2_ref, b2_ref,
                          g2_ref, be2_ref, fcw_ref, fcb_ref, out_ref,
                          *, S, D, H, num_encoder, eps):
    """Whole forward (minus the embedding gather) for one batch element:
    encoder stack + flatten + classifier, with all weights VMEM-resident."""
    rpb = S // H
    npb = H

    # 0/1 selection matrices realising the torch .view row interleave:
    #   sel[a]   : (npb, S)  sel[a][p, r]   = (r == p*rpb + a)
    #   sel_t[a] : (S, npb)  sel_t[a][r, p] = (r == p*rpb + a)
    pp = jax.lax.broadcasted_iota(jnp.int32, (npb, S), 0)
    rr = jax.lax.broadcasted_iota(jnp.int32, (npb, S), 1)
    sel = [(rr == pp * rpb + a).astype(jnp.float32) for a in range(rpb)]
    r2 = jax.lax.broadcasted_iota(jnp.int32, (S, npb), 0)
    p2 = jax.lax.broadcasted_iota(jnp.int32, (S, npb), 1)
    sel_t = [(r2 == p2 * rpb + a).astype(jnp.float32) for a in range(rpb)]

    # weights: loaded once, resident for the whole forward
    wqkv, bqkv = wqkv_ref[...], bqkv_ref[...]
    wo, bo = wo_ref[...], bo_ref[...]
    g1, be1 = g1_ref[...], be1_ref[...]
    w1, b1 = w1_ref[...], b1_ref[...]
    w2, b2 = w2_ref[...], b2_ref[...]
    g2, be2 = g2_ref[...], be2_ref[...]
    fcw, fcb = fcw_ref[...], fcb_ref[...]

    x = x_ref[...]                          # (S, D) for this batch element
    for _ in range(num_encoder):            # encoders share deepcopied init weights
        x = _encoder_layer(x, wqkv, bqkv, wo, bo, g1, be1, w1, b1, w2, b2,
                           g2, be2, sel, sel_t, S=S, D=D, H=H, eps=eps)

    # classifier head on the flattened (S*D,) activation:
    #   out = x.view(1, S*D) @ fc_w + fc_b  ==  sum_s x[s] @ fc_w[s*D:(s+1)*D]
    logits = fcb                            # (1, C)
    for s in range(S):
        logits = logits + jnp.dot(x[s:s + 1, :], fcw[s * D:(s + 1) * D, :],
                                  preferred_element_type=jnp.float32)
    out_ref[0] = logits


# ----------------------------------------------------------------------------
# Parameters, wrapper, pure-JAX reference
# ----------------------------------------------------------------------------


def make_positional_encoding(pad_size, embed):
    # Faithful reproduction of the (quirky) torch code:
    #   pe[:, 0::2] = sin(pe[:, 0::2]);  pe[:, 0::1] = cos(pe[:, 0::1])
    # i.e. even columns become cos(sin(.)), all columns then get cos applied.
    i = jnp.arange(embed, dtype=jnp.float32)
    pos = jnp.arange(pad_size, dtype=jnp.float32)
    denom = 10000.0 ** ((jnp.floor(i / 2.0) * 2.0) / embed)
    pe = pos[:, None] / denom[None, :]
    pe = pe.at[:, 0::2].set(jnp.sin(pe[:, 0::2]))
    return jnp.cos(pe)                     # (pad_size, embed)


def init_params(key, num_embeddings, embed_dim, num_head, hidden, pad_size,
                num_classes):
    ks = jax.random.split(key, 8)
    s = 0.02
    nrm = lambda k, shape: jax.random.normal(k, shape, jnp.float32) * s

    D = embed_dim
    # torch nn.Embedding(..., padding_idx=False): weight[False] is an empty
    # slice, so no row is zeroed and forward() is a plain gather.
    emb = nrm(ks[0], (num_embeddings, D))
    wq, wk, wv = nrm(ks[1], (D, D)), nrm(ks[2], (D, D)), nrm(ks[3], (D, D))
    return dict(
        emb=emb,
        pe=make_positional_encoding(pad_size, D),              # built once
        wqkv=jnp.concatenate([wq, wk, wv], axis=1),            # fused fc_Q|fc_K|fc_V
        bqkv=jnp.zeros((1, 3 * D), jnp.float32),
        wo=nrm(ks[4], (D, D)), bo=jnp.zeros((1, D), jnp.float32),
        ln1_g=jnp.ones((1, D), jnp.float32), ln1_b=jnp.zeros((1, D), jnp.float32),
        w1=nrm(ks[5], (D, hidden)), b1=jnp.zeros((1, hidden), jnp.float32),
        w2=nrm(ks[6], (hidden, D)), b2=jnp.zeros((1, D), jnp.float32),
        ln2_g=jnp.ones((1, D), jnp.float32), ln2_b=jnp.zeros((1, D), jnp.float32),
        fc_w=nrm(ks[7], (pad_size * D, num_classes)),
        fc_b=jnp.zeros((1, num_classes), jnp.float32),
    )


def transformer_forward(params, tokens, *, num_head, num_encoder):
    B, S = tokens.shape
    D = params["emb"].shape[1]
    hidden = params["w1"].shape[1]
    C = params["fc_b"].shape[1]
    # The slab decomposition of the torch .view quirk needs S % num_head == 0
    # (true for pad_size=8, num_head=4).
    assert D % num_head == 0 and S % num_head == 0

    # Embedding lookup + positional encoding (+ identity dropout): XLA glue.
    x = params["emb"][tokens] + params["pe"][None, :, :]       # (B, S, D)
    x2 = x.reshape(B * S, D)

    def full(shape):
        return pl.BlockSpec(shape, lambda b: (0,) * len(shape))

    kernel = functools.partial(_fused_forward_kernel, S=S, D=D, H=num_head,
                               num_encoder=num_encoder, eps=1e-5)
    out3 = pl.pallas_call(
        kernel,
        grid=(B,),
        in_specs=[
            pl.BlockSpec((S, D), lambda b: (b, 0)),   # activations, one batch / program
            full((D, 3 * D)), full((1, 3 * D)),       # fused Wq|Wk|Wv + bias
            full((D, D)), full((1, D)),               # Wo + bias
            full((1, D)), full((1, D)),               # LN1 gamma / beta
            full((D, hidden)), full((1, hidden)),     # W1 + bias
            full((hidden, D)), full((1, D)),          # W2 + bias
            full((1, D)), full((1, D)),               # LN2 gamma / beta
            full((S * D, C)), full((1, C)),           # classifier fc1
        ],
        out_specs=pl.BlockSpec((1, 1, C), lambda b: (b, 0, 0)),
        out_shape=jax.ShapeDtypeStruct((B, 1, C), jnp.float32),
        compiler_params=pltpu.CompilerParams(
            dimension_semantics=("parallel",)),       # v7x: one batch per TensorCore
    )(x2, params["wqkv"], params["bqkv"], params["wo"], params["bo"],
      params["ln1_g"], params["ln1_b"], params["w1"], params["b1"],
      params["w2"], params["b2"], params["ln2_g"], params["ln2_b"],
      params["fc_w"], params["fc_b"])
    return out3[:, 0, :]


def _ref_layernorm(z, g, b, eps=1e-5):
    mu = z.mean(-1, keepdims=True)
    var = ((z - mu) ** 2).mean(-1, keepdims=True)
    return (z - mu) / jnp.sqrt(var + eps) * g + b


def reference_forward(params, tokens, *, num_head, num_encoder):
    """Plain-JAX mirror of the torch module (reshape-based attention)."""
    B, S = tokens.shape
    D = params["emb"].shape[1]
    H = num_head
    dh = D // H
    x2 = (params["emb"][tokens] + params["pe"][None, :, :]).reshape(B * S, D)
    for _ in range(num_encoder):
        qkv = x2 @ params["wqkv"] + params["bqkv"]
        q, k, v = qkv[:, :D], qkv[:, D:2 * D], qkv[:, 2 * D:]
        q3 = q.reshape(B * H, -1, dh)
        k3 = k.reshape(B * H, -1, dh)
        v3 = v.reshape(B * H, -1, dh)
        s = jnp.einsum("bqd,bkd->bqk", q3, k3) * (dh ** -0.5)
        p = jax.nn.softmax(s, axis=-1)
        ctx = jnp.einsum("bqk,bkd->bqd", p, v3).reshape(B * S, D)
        attn = ctx @ params["wo"] + params["bo"]
        x2 = _ref_layernorm(attn + x2, params["ln1_g"], params["ln1_b"])
        h = jax.nn.relu(x2 @ params["w1"] + params["b1"])
        f = h @ params["w2"] + params["b2"]
        x2 = _ref_layernorm(f + x2, params["ln2_g"], params["ln2_b"])
    flat = x2.reshape(B, S * D)
    return flat @ params["fc_w"] + params["fc_b"]


# ----------------------------------------------------------------------------


if __name__ == "__main__":
    batch = 2
    pad_size = 8           # sequence length
    embed_dim = 32
    num_head = 4
    hidden = 64
    num_encoder = 2
    num_classes = 4
    num_embeddings = 50

    key = jax.random.PRNGKey(0)
    k_tok, k_par = jax.random.split(key)

    params = init_params(k_par, num_embeddings, embed_dim, num_head, hidden,
                         pad_size, num_classes)
    tokens = jax.random.randint(k_tok, (batch, pad_size), 0, num_embeddings,
                                dtype=jnp.int32)
    seq_len = jnp.full((batch,), pad_size, jnp.int32)   # 2nd tuple elem (unused)

    x_in = (tokens, seq_len)
    toks, _ = x_in          # mirrors `x, _ = x` in the torch forward

    fwd = jax.jit(functools.partial(transformer_forward,
                                    num_head=num_head,
                                    num_encoder=num_encoder))
    out = fwd(params, toks)
    jax.block_until_ready(out)
    assert out.shape == (batch, num_classes)

    ref = reference_forward(params, toks, num_head=num_head,
                            num_encoder=num_encoder)
    assert jnp.allclose(out, ref, rtol=2e-2, atol=2e-2), (
        f"max |diff| = {float(jnp.max(jnp.abs(out - ref)))}")
    print("KERNEL_OK")
</pallas_src>

<mosaic_0001>
module attributes {stable_mosaic.version = 11 : i64} {
  func.func @_fused_forward_kernel(%arg0: i32, %arg1: memref<8x32xf32, #tpu.memory_space<vmem>>, %arg2: memref<32x96xf32, #tpu.memory_space<vmem>>, %arg3: memref<1x96xf32, #tpu.memory_space<vmem>>, %arg4: memref<32x32xf32, #tpu.memory_space<vmem>>, %arg5: memref<1x32xf32, #tpu.memory_space<vmem>>, %arg6: memref<1x32xf32, #tpu.memory_space<vmem>>, %arg7: memref<1x32xf32, #tpu.memory_space<vmem>>, %arg8: memref<32x64xf32, #tpu.memory_space<vmem>>, %arg9: memref<1x64xf32, #tpu.memory_space<vmem>>, %arg10: memref<64x32xf32, #tpu.memory_space<vmem>>, %arg11: memref<1x32xf32, #tpu.memory_space<vmem>>, %arg12: memref<1x32xf32, #tpu.memory_space<vmem>>, %arg13: memref<1x32xf32, #tpu.memory_space<vmem>>, %arg14: memref<256x4xf32, #tpu.memory_space<vmem>>, %arg15: memref<1x4xf32, #tpu.memory_space<vmem>>, %arg16: memref<1x1x4xf32, #tpu.memory_space<vmem>>) attributes {dimension_semantics = [#tpu.dimension_semantics<parallel>], iteration_bounds = array<i64: 2>, scalar_prefetch = 0 : i64, scratch_operands = 0 : i64, tpu.core_type = #tpu.core_type<tc>, window_params = [{transform_indices = @transform_0, window_bounds = array<i64: 8, 32>}, {pipeline_mode = #tpu.pipeline_mode<synchronous>, transform_indices = @transform_1, window_bounds = array<i64: 32, 96>}, {pipeline_mode = #tpu.pipeline_mode<synchronous>, transform_indices = @transform_2, window_bounds = array<i64: 1, 96>}, {pipeline_mode = #tpu.pipeline_mode<synchronous>, transform_indices = @transform_3, window_bounds = array<i64: 32, 32>}, {pipeline_mode = #tpu.pipeline_mode<synchronous>, transform_indices = @transform_4, window_bounds = array<i64: 1, 32>}, {pipeline_mode = #tpu.pipeline_mode<synchronous>, transform_indices = @transform_5, window_bounds = array<i64: 1, 32>}, {pipeline_mode = #tpu.pipeline_mode<synchronous>, transform_indices = @transform_6, window_bounds = array<i64: 1, 32>}, {pipeline_mode = #tpu.pipeline_mode<synchronous>, transform_indices = @transform_7, window_bounds = array<i64: 32, 64>}, {pipeline_mode = #tpu.pipeline_mode<synchronous>, transform_indices = @transform_8, window_bounds = array<i64: 1, 64>}, {pipeline_mode = #tpu.pipeline_mode<synchronous>, transform_indices = @transform_9, window_bounds = array<i64: 64, 32>}, {pipeline_mode = #tpu.pipeline_mode<synchronous>, transform_indices = @transform_10, window_bounds = array<i64: 1, 32>}, {pipeline_mode = #tpu.pipeline_mode<synchronous>, transform_indices = @transform_11, window_bounds = array<i64: 1, 32>}, {pipeline_mode = #tpu.pipeline_mode<synchronous>, transform_indices = @transform_12, window_bounds = array<i64: 1, 32>}, {pipeline_mode = #tpu.pipeline_mode<synchronous>, transform_indices = @transform_13, window_bounds = array<i64: 256, 4>}, {pipeline_mode = #tpu.pipeline_mode<synchronous>, transform_indices = @transform_14, window_bounds = array<i64: 1, 4>}, {transform_indices = @transform_15, window_bounds = array<i64: 1, 1, 4>}]} {
    %0 = tpu.iota {dimensions = array<i32: 0>} : vector<4x8xi32>
    %1 = tpu.iota {dimensions = array<i32: 1>} : vector<4x8xi32>
    %c2_i32 = arith.constant 2 : i32
    %2 = vector.broadcast %c2_i32 : i32 to vector<4x8xi32>
    %3 = arith.muli %0, %2 : vector<4x8xi32>
    %c0_i32 = arith.constant 0 : i32
    %4 = vector.broadcast %c0_i32 : i32 to vector<4x8xi32>
    %5 = arith.addi %3, %4 : vector<4x8xi32>
    %6 = arith.cmpi eq, %1, %5 : vector<4x8xi32>
    %7 = arith.extui %6 : vector<4x8xi1> to vector<4x8xi32>
    %8 = arith.sitofp %7 : vector<4x8xi32> to vector<4x8xf32>
    %c2_i32_0 = arith.constant 2 : i32
    %9 = vector.broadcast %c2_i32_0 : i32 to vector<4x8xi32>
    %10 = arith.muli %0, %9 : vector<4x8xi32>
    %c1_i32 = arith.constant 1 : i32
    %11 = vector.broadcast %c1_i32 : i32 to vector<4x8xi32>
    %12 = arith.addi %10, %11 : vector<4x8xi32>
    %13 = arith.cmpi eq, %1, %12 : vector<4x8xi32>
    %14 = arith.extui %13 : vector<4x8xi1> to vector<4x8xi32>
    %15 = arith.sitofp %14 : vector<4x8xi32> to vector<4x8xf32>
    %16 = tpu.iota {dimensions = array<i32: 0>} : vector<8x4xi32>
    %17 = tpu.iota {dimensions = array<i32: 1>} : vector<8x4xi32>
    %c2_i32_1 = arith.constant 2 : i32
    %18 = vector.broadcast %c2_i32_1 : i32 to vector<8x4xi32>
    %19 = arith.muli %17, %18 : vector<8x4xi32>
    %c0_i32_2 = arith.constant 0 : i32
    %20 = vector.broadcast %c0_i32_2 : i32 to vector<8x4xi32>
    %21 = arith.addi %19, %20 : vector<8x4xi32>
    %22 = arith.cmpi eq, %16, %21 : vector<8x4xi32>
    %23 = arith.extui %22 : vector<8x4xi1> to vector<8x4xi32>
    %24 = arith.sitofp %23 : vector<8x4xi32> to vector<8x4xf32>
    %c2_i32_3 = arith.constant 2 : i32
    %25 = vector.broadcast %c2_i32_3 : i32 to vector<8x4xi32>
    %26 = arith.muli %17, %25 : vector<8x4xi32>
    %c1_i32_4 = arith.constant 1 : i32
    %27 = vector.broadcast %c1_i32_4 : i32 to vector<8x4xi32>
    %28 = arith.addi %26, %27 : vector<8x4xi32>
    %29 = arith.cmpi eq, %16, %28 : vector<8x4xi32>
    %30 = arith.extui %29 : vector<8x4xi1> to vector<8x4xi32>
    %31 = arith.sitofp %30 : vector<8x4xi32> to vector<8x4xf32>
    %c0 = arith.constant 0 : index
    %c0_5 = arith.constant 0 : index
    %32 = vector.load %arg2[%c0, %c0_5] : memref<32x96xf32, #tpu.memory_space<vmem>>, vector<32x96xf32>
    %c0_6 = arith.constant 0 : index
    %c0_7 = arith.constant 0 : index
    %33 = vector.load %arg3[%c0_6, %c0_7] : memref<1x96xf32, #tpu.memory_space<vmem>>, vector<1x96xf32>
    %c0_8 = arith.constant 0 : index
    %c0_9 = arith.constant 0 : index
    %34 = vector.load %arg4[%c0_8, %c0_9] : memref<32x32xf32, #tpu.memory_space<vmem>>, vector<32x32xf32>
    %c0_10 = arith.constant 0 : index
    %c0_11 = arith.constant 0 : index
    %35 = vector.load %arg5[%c0_10, %c0_11] : memref<1x32xf32, #tpu.memory_space<vmem>>, vector<1x32xf32>
    %c0_12 = arith.constant 0 : index
    %c0_13 = arith.constant 0 : index
    %36 = vector.load %arg6[%c0_12, %c0_13] : memref<1x32xf32, #tpu.memory_space<vmem>>, vector<1x32xf32>
    %c0_14 = arith.constant 0 : index
    %c0_15 = arith.constant 0 : index
    %37 = vector.load %arg7[%c0_14, %c0_15] : memref<1x32xf32, #tpu.memory_space<vmem>>, vector<1x32xf32>
    %c0_16 = arith.constant 0 : index
    %c0_17 = arith.constant 0 : index
    %38 = vector.load %arg8[%c0_16, %c0_17] : memref<32x64xf32, #tpu.memory_space<vmem>>, vector<32x64xf32>
    %c0_18 = arith.constant 0 : index
    %c0_19 = arith.constant 0 : index
    %39 = vector.load %arg9[%c0_18, %c0_19] : memref<1x64xf32, #tpu.memory_space<vmem>>, vector<1x64xf32>
    %c0_20 = arith.constant 0 : index
    %c0_21 = arith.constant 0 : index
    %40 = vector.load %arg10[%c0_20, %c0_21] : memref<64x32xf32, #tpu.memory_space<vmem>>, vector<64x32xf32>
    %c0_22 = arith.constant 0 : index
    %c0_23 = arith.constant 0 : index
    %41 = vector.load %arg11[%c0_22, %c0_23] : memref<1x32xf32, #tpu.memory_space<vmem>>, vector<1x32xf32>
    %c0_24 = arith.constant 0 : index
    %c0_25 = arith.constant 0 : index
    %42 = vector.load %arg12[%c0_24, %c0_25] : memref<1x32xf32, #tpu.memory_space<vmem>>, vector<1x32xf32>
    %c0_26 = arith.constant 0 : index
    %c0_27 = arith.constant 0 : index
    %43 = vector.load %arg13[%c0_26, %c0_27] : memref<1x32xf32, #tpu.memory_space<vmem>>, vector<1x32xf32>
    %c0_28 = arith.constant 0 : index
    %c0_29 = arith.constant 0 : index
    %44 = vector.load %arg14[%c0_28, %c0_29] : memref<256x4xf32, #tpu.memory_space<vmem>>, vector<256x4xf32>
    %c0_30 = arith.constant 0 : index
    %c0_31 = arith.constant 0 : index
    %45 = vector.load %arg15[%c0_30, %c0_31] : memref<1x4xf32, #tpu.memory_space<vmem>>, vector<1x4xf32>
    %c0_32 = arith.constant 0 : index
    %c0_33 = arith.constant 0 : index
    %46 = vector.load %arg1[%c0_32, %c0_33] : memref<8x32xf32, #tpu.memory_space<vmem>>, vector<8x32xf32>
    %cst = arith.constant dense<0.000000e+00> : vector<8x96xf32>
    %47 = tpu.matmul %46, %32, %cst {dimension_numbers = #tpu.dot_dimension_numbers<[1], [0], [0], [1], [0, 0, 1, 1], [], []>} : vector<8x32xf32>, vector<32x96xf32>, vector<8x96xf32> -> vector<8x96xf32>
    %48 = vector.broadcast %33 : vector<1x96xf32> to vector<8x96xf32>
    %49 = arith.addf %47, %48 : vector<8x96xf32>
    %cst_34 = arith.constant dense<0.000000e+00> : vector<4x96xf32>
    %50 = tpu.matmul %8, %49, %cst_34 {dimension_numbers = #tpu.dot_dimension_numbers<[1], [0], [0], [1], [0, 0, 1, 1], [], []>} : vector<4x8xf32>, vector<8x96xf32>, vector<4x96xf32> -> vector<4x96xf32>
    %cst_35 = arith.constant dense<0.000000e+00> : vector<4x96xf32>
    %51 = tpu.matmul %15, %49, %cst_35 {dimension_numbers = #tpu.dot_dimension_numbers<[1], [0], [0], [1], [0, 0, 1, 1], [], []>} : vector<4x8xf32>, vector<8x96xf32>, vector<4x96xf32> -> vector<4x96xf32>
    %52 = vector.extract_strided_slice %50 {offsets = [0, 0], sizes = [4, 8], strides = [1, 1]} : vector<4x96xf32> to vector<4x8xf32>
    %53 = vector.extract_strided_slice %50 {offsets = [0, 8], sizes = [4, 8], strides = [1, 1]} : vector<4x96xf32> to vector<4x8xf32>
    %54 = vector.extract_strided_slice %50 {offsets = [0, 16], sizes = [4, 8], strides = [1, 1]} : vector<4x96xf32> to vector<4x8xf32>
    %55 = vector.extract_strided_slice %50 {offsets = [0, 24], sizes = [4, 8], strides = [1, 1]} : vector<4x96xf32> to vector<4x8xf32>
    %56 = vector.extract_strided_slice %51 {offsets = [0, 0], sizes = [4, 8], strides = [1, 1]} : vector<4x96xf32> to vector<4x8xf32>
    %57 = vector.extract_strided_slice %51 {offsets = [0, 8], sizes = [4, 8], strides = [1, 1]} : vector<4x96xf32> to vector<4x8xf32>
    %58 = vector.extract_strided_slice %51 {offsets = [0, 16], sizes = [4, 8], strides = [1, 1]} : vector<4x96xf32> to vector<4x8xf32>
    %59 = vector.extract_strided_slice %51 {offsets = [0, 24], sizes = [4, 8], strides = [1, 1]} : vector<4x96xf32> to vector<4x8xf32>
    %60 = vector.extract_strided_slice %50 {offsets = [0, 32], sizes = [4, 8], strides = [1, 1]} : vector<4x96xf32> to vector<4x8xf32>
    %61 = vector.extract_strided_slice %50 {offsets = [0, 40], sizes = [4, 8], strides = [1, 1]} : vector<4x96xf32> to vector<4x8xf32>
    %62 = vector.extract_strided_slice %50 {offsets = [0, 48], sizes = [4, 8], strides = [1, 1]} : vector<4x96xf32> to vector<4x8xf32>
    %63 = vector.extract_strided_slice %50 {offsets = [0, 56], sizes = [4, 8], strides = [1, 1]} : vector<4x96xf32> to vector<4x8xf32>
    %64 = vector.extract_strided_slice %51 {offsets = [0, 32], sizes = [4, 8], strides = [1, 1]} : vector<4x96xf32> to vector<4x8xf32>
    %65 = vector.extract_strided_slice %51 {offsets = [0, 40], sizes = [4, 8], strides = [1, 1]} : vector<4x96xf32> to vector<4x8xf32>
    %66 = vector.extract_strided_slice %51 {offsets = [0, 48], sizes = [4, 8], strides = [1, 1]} : vector<4x96xf32> to vector<4x8xf32>
    %67 = vector.extract_strided_slice %51 {offsets = [0, 56], sizes = [4, 8], strides = [1, 1]} : vector<4x96xf32> to vector<4x8xf32>
    %68 = vector.extract_strided_slice %50 {offsets = [0, 64], sizes = [4, 8], strides = [1, 1]} : vector<4x96xf32> to vector<4x8xf32>
    %69 = vector.extract_strided_slice %50 {offsets = [0, 72], sizes = [4, 8], strides = [1, 1]} : vector<4x96xf32> to vector<4x8xf32>
    %70 = vector.extract_strided_slice %50 {offsets = [0, 80], sizes = [4, 8], strides = [1, 1]} : vector<4x96xf32> to vector<4x8xf32>
    %71 = vector.extract_strided_slice %50 {offsets = [0, 88], sizes = [4, 8], strides = [1, 1]} : vector<4x96xf32> to vector<4x8xf32>
    %72 = vector.extract_strided_slice %51 {offsets = [0, 64], sizes = [4, 8], strides = [1, 1]} : vector<4x96xf32> to vector<4x8xf32>
    %73 = vector.extract_strided_slice %51 {offsets = [0, 72], sizes = [4, 8], strides = [1, 1]} : vector<4x96xf32> to vector<4x8xf32>
    %74 = vector.extract_strided_slice %51 {offsets = [0, 80], sizes = [4, 8], strides = [1, 1]} : vector<4x96xf32> to vector<4x8xf32>
    %75 = vector.extract_strided_slice %51 {offsets = [0, 88], sizes = [4, 8], strides = [1, 1]} : vector<4x96xf32> to vector<4x8xf32>
    %76 = vector.extract_strided_slice %34 {offsets = [0, 0], sizes = [8, 32], strides = [1, 1]} : vector<32x32xf32> to vector<8x32xf32>
    %77 = vector.extract_strided_slice %34 {offsets = [8, 0], sizes = [8, 32], strides = [1, 1]} : vector<32x32xf32> to vector<8x32xf32>
    %78 = vector.extract_strided_slice %34 {offsets = [16, 0], sizes = [8, 32], strides = [1, 1]} : vector<32x32xf32> to vector<8x32xf32>
    %79 = vector.extract_strided_slice %34 {offsets = [24, 0], sizes = [8, 32], strides = [1, 1]} : vector<32x32xf32> to vector<8x32xf32>
    %cst_36 = arith.constant 0.000000e+00 : f32
    %80 = vector.broadcast %cst_36 : f32 to vector<4x32xf32>
    %cst_37 = arith.constant 0.000000e+00 : f32
    %81 = vector.broadcast %cst_37 : f32 to vector<4x32xf32>
    %cst_38 = arith.constant 0.353553385 : f32
    %82 = vector.broadcast %cst_38 : f32 to vector<4x8xf32>
    %83 = arith.mulf %52, %82 : vector<4x8xf32>
    %84 = arith.mulf %83, %60 : vector<4x8xf32>
    %cst_39 = arith.constant dense<0.000000e+00> : vector<4xf32>
    %85 = vector.multi_reduction <add>, %84, %cst_39 [1] : vector<4x8xf32> to vector<4xf32>
    %86 = vector.shape_cast %85 : vector<4xf32> to vector<4x1xf32>
    %87 = arith.mulf %83, %61 : vector<4x8xf32>
    %cst_40 = arith.constant dense<0.000000e+00> : vector<4xf32>
    %88 = vector.multi_reduction <add>, %87, %cst_40 [1] : vector<4x8xf32> to vector<4xf32>
    %89 = vector.shape_cast %88 : vector<4xf32> to vector<4x1xf32>
    %90 = arith.mulf %83, %62 : vector<4x8xf32>
    %cst_41 = arith.constant dense<0.000000e+00> : vector<4xf32>
    %91 = vector.multi_reduction <add>, %90, %cst_41 [1] : vector<4x8xf32> to vector<4xf32>
    %92 = vector.shape_cast %91 : vector<4xf32> to vector<4x1xf32>
    %93 = arith.mulf %83, %63 : vector<4x8xf32>
    %cst_42 = arith.constant dense<0.000000e+00> : vector<4xf32>
    %94 = vector.multi_reduction <add>, %93, %cst_42 [1] : vector<4x8xf32> to vector<4xf32>
    %95 = vector.shape_cast %94 : vector<4xf32> to vector<4x1xf32>
    %96 = arith.mulf %83, %64 : vector<4x8xf32>
    %cst_43 = arith.constant dense<0.000000e+00> : vector<4xf32>
    %97 = vector.multi_reduction <add>, %96, %cst_43 [1] : vector<4x8xf32> to vector<4xf32>
    %98 = vector.shape_cast %97 : vector<4xf32> to vector<4x1xf32>
    %99 = arith.mulf %83, %65 : vector<4x8xf32>
    %cst_44 = arith.constant dense<0.000000e+00> : vector<4xf32>
    %100 = vector.multi_reduction <add>, %99, %cst_44 [1] : vector<4x8xf32> to vector<4xf32>
    %101 = vector.shape_cast %100 : vector<4xf32> to vector<4x1xf32>
    %102 = arith.mulf %83, %66 : vector<4x8xf32>
    %cst_45 = arith.constant dense<0.000000e+00> : vector<4xf32>
    %103 = vector.multi_reduction <add>, %102, %cst_45 [1] : vector<4x8xf32> to vector<4xf32>
    %104 = vector.shape_cast %103 : vector<4xf32> to vector<4x1xf32>
    %105 = arith.mulf %83, %67 : vector<4x8xf32>
    %cst_46 = arith.constant dense<0.000000e+00> : vector<4xf32>
    %106 = vector.multi_reduction <add>, %105, %cst_46 [1] : vector<4x8xf32> to vector<4xf32>
    %107 = vector.shape_cast %106 : vector<4xf32> to vector<4x1xf32>
    %108 = arith.maximumf %86, %89 : vector<4x1xf32>
    %109 = arith.maximumf %108, %92 : vector<4x1xf32>
    %110 = arith.maximumf %109, %95 : vector<4x1xf32>
    %111 = arith.maximumf %110, %98 : vector<4x1xf32>
    %112 = arith.maximumf %111, %101 : vector<4x1xf32>
    %113 = arith.maximumf %112, %104 : vector<4x1xf32>
    %114 = arith.maximumf %113, %107 : vector<4x1xf32>
    %115 = arith.subf %86, %114 : vector<4x1xf32>
    %116 = math.exp %115 : vector<4x1xf32>
    %117 = arith.subf %89, %114 : vector<4x1xf32>
    %118 = math.exp %117 : vector<4x1xf32>
    %119 = arith.subf %92, %114 : vector<4x1xf32>
    %120 = math.exp %119 : vector<4x1xf32>
    %121 = arith.subf %95, %114 : vector<4x1xf32>
    %122 = math.exp %121 : vector<4x1xf32>
    %123 = arith.subf %98, %114 : vector<4x1xf32>
    %124 = math.exp %123 : vector<4x1xf32>
    %125 = arith.subf %101, %114 : vector<4x1xf32>
    %126 = math.exp %125 : vector<4x1xf32>
    %127 = arith.subf %104, %114 : vector<4x1xf32>
    %128 = math.exp %127 : vector<4x1xf32>
    %129 = arith.subf %107, %114 : vector<4x1xf32>
    %130 = math.exp %129 : vector<4x1xf32>
    %131 = arith.addf %116, %118 : vector<4x1xf32>
    %132 = arith.addf %131, %120 : vector<4x1xf32>
    %133 = arith.addf %132, %122 : vector<4x1xf32>
    %134 = arith.addf %133, %124 : vector<4x1xf32>
    %135 = arith.addf %134, %126 : vector<4x1xf32>
    %136 = arith.addf %135, %128 : vector<4x1xf32>
    %137 = arith.addf %136, %130 : vector<4x1xf32>
    %138 = tpu.reciprocal %137 {approx = true} : vector<4x1xf32> -> vector<4x1xf32>
    %cst_47 = arith.constant 0.000000e+00 : f32
    %139 = vector.broadcast %cst_47 : f32 to vector<4x8xf32>
    %140 = arith.mulf %116, %138 : vector<4x1xf32>
    %141 = vector.broadcast %140 : vector<4x1xf32> to vector<4x8xf32>
    %142 = arith.mulf %141, %68 : vector<4x8xf32>
    %143 = arith.addf %139, %142 : vector<4x8xf32>
    %144 = arith.mulf %118, %138 : vector<4x1xf32>
    %145 = vector.broadcast %144 : vector<4x1xf32> to vector<4x8xf32>
    %146 = arith.mulf %145, %69 : vector<4x8xf32>
    %147 = arith.addf %143, %146 : vector<4x8xf32>
    %148 = arith.mulf %120, %138 : vector<4x1xf32>
    %149 = vector.broadcast %148 : vector<4x1xf32> to vector<4x8xf32>
    %150 = arith.mulf %149, %70 : vector<4x8xf32>
    %151 = arith.addf %147, %150 : vector<4x8xf32>
    %152 = arith.mulf %122, %138 : vector<4x1xf32>
    %153 = vector.broadcast %152 : vector<4x1xf32> to vector<4x8xf32>
    %154 = arith.mulf %153, %71 : vector<4x8xf32>
    %155 = arith.addf %151, %154 : vector<4x8xf32>
    %156 = arith.mulf %124, %138 : vector<4x1xf32>
    %157 = vector.broadcast %156 : vector<4x1xf32> to vector<4x8xf32>
    %158 = arith.mulf %157, %72 : vector<4x8xf32>
    %159 = arith.addf %155, %158 : vector<4x8xf32>
    %160 = arith.mulf %126, %138 : vector<4x1xf32>
    %161 = vector.broadcast %160 : vector<4x1xf32> to vector<4x8xf32>
    %162 = arith.mulf %161, %73 : vector<4x8xf32>
    %163 = arith.addf %159, %162 : vector<4x8xf32>
    %164 = arith.mulf %128, %138 : vector<4x1xf32>
    %165 = vector.broadcast %164 : vector<4x1xf32> to vector<4x8xf32>
    %166 = arith.mulf %165, %74 : vector<4x8xf32>
    %167 = arith.addf %163, %166 : vector<4x8xf32>
    %168 = arith.mulf %130, %138 : vector<4x1xf32>
    %169 = vector.broadcast %168 : vector<4x1xf32> to vector<4x8xf32>
    %170 = arith.mulf %169, %75 : vector<4x8xf32>
    %171 = arith.addf %167, %170 : vector<4x8xf32>
    %cst_48 = arith.constant dense<0.000000e+00> : vector<4x32xf32>
    %172 = tpu.matmul %171, %76, %cst_48 {dimension_numbers = #tpu.dot_dimension_numbers<[1], [0], [0], [1], [0, 0, 1, 1], [], []>} : vector<4x8xf32>, vector<8x32xf32>, vector<4x32xf32> -> vector<4x32xf32>
    %173 = arith.addf %80, %172 : vector<4x32xf32>
    %cst_49 = arith.constant 0.353553385 : f32
    %174 = vector.broadcast %cst_49 : f32 to vector<4x8xf32>
    %175 = arith.mulf %53, %174 : vector<4x8xf32>
    %176 = arith.mulf %175, %60 : vector<4x8xf32>
    %cst_50 = arith.constant dense<0.000000e+00> : vector<4xf32>
    %177 = vector.multi_reduction <add>, %176, %cst_50 [1] : vector<4x8xf32> to vector<4xf32>
    %178 = vector.shape_cast %177 : vector<4xf32> to vector<4x1xf32>
    %179 = arith.mulf %175, %61 : vector<4x8xf32>
    %cst_51 = arith.constant dense<0.000000e+00> : vector<4xf32>
    %180 = vector.multi_reduction <add>, %179, %cst_51 [1] : vector<4x8xf32> to vector<4xf32>
    %181 = vector.shape_cast %180 : vector<4xf32> to vector<4x1xf32>
    %182 = arith.mulf %175, %62 : vector<4x8xf32>
    %cst_52 = arith.constant dense<0.000000e+00> : vector<4xf32>
    %183 = vector.multi_reduction <add>, %182, %cst_52 [1] : vector<4x8xf32> to vector<4xf32>
    %184 = vector.shape_cast %183 : vector<4xf32> to vector<4x1xf32>
    %185 = arith.mulf %175, %63 : vector<4x8xf32>
    %cst_53 = arith.constant dense<0.000000e+00> : vector<4xf32>
    %186 = vector.multi_reduction <add>, %185, %cst_53 [1] : vector<4x8xf32> to vector<4xf32>
    %187 = vector.shape_cast %186 : vector<4xf32> to vector<4x1xf32>
    %188 = arith.mulf %175, %64 : vector<4x8xf32>
    %cst_54 = arith.constant dense<0.000000e+00> : vector<4xf32>
    %189 = vector.multi_reduction <add>, %188, %cst_54 [1] : vector<4x8xf32> to vector<4xf32>
    %190 = vector.shape_cast %189 : vector<4xf32> to vector<4x1xf32>
    %191 = arith.mulf %175, %65 : vector<4x8xf32>
    %cst_55 = arith.constant dense<0.000000e+00> : vector<4xf32>
    %192 = vector.multi_reduction <add>, %191, %cst_55 [1] : vector<4x8xf32> to vector<4xf32>
    %193 = vector.shape_cast %192 : vector<4xf32> to vector<4x1xf32>
    %194 = arith.mulf %175, %66 : vector<4x8xf32>
    %cst_56 = arith.constant dense<0.000000e+00> : vector<4xf32>
    %195 = vector.multi_reduction <add>, %194, %cst_56 [1] : vector<4x8xf32> to vector<4xf32>
    %196 = vector.shape_cast %195 : vector<4xf32> to vector<4x1xf32>
    %197 = arith.mulf %175, %67 : vector<4x8xf32>
    %cst_57 = arith.constant dense<0.000000e+00> : vector<4xf32>
    %198 = vector.multi_reduction <add>, %197, %cst_57 [1] : vector<4x8xf32> to vector<4xf32>
    %199 = vector.shape_cast %198 : vector<4xf32> to vector<4x1xf32>
    %200 = arith.maximumf %178, %181 : vector<4x1xf32>
    %201 = arith.maximumf %200, %184 : vector<4x1xf32>
    %202 = arith.maximumf %201, %187 : vector<4x1xf32>
    %203 = arith.maximumf %202, %190 : vector<4x1xf32>
    %204 = arith.maximumf %203, %193 : vector<4x1xf32>
    %205 = arith.maximumf %204, %196 : vector<4x1xf32>
    %206 = arith.maximumf %205, %199 : vector<4x1xf32>
    %207 = arith.subf %178, %206 : vector<4x1xf32>
    %208 = math.exp %207 : vector<4x1xf32>
    %209 = arith.subf %181, %206 : vector<4x1xf32>
    %210 = math.exp %209 : vector<4x1xf32>
    %211 = arith.subf %184, %206 : vector<4x1xf32>
    %212 = math.exp %211 : vector<4x1xf32>
    %213 = arith.subf %187, %206 : vector<4x1xf32>
    %214 = math.exp %213 : vector<4x1xf32>
    %215 = arith.subf %190, %206 : vector<4x1xf32>
    %216 = math.exp %215 : vector<4x1xf32>
    %217 = arith.subf %193, %206 : vector<4x1xf32>
    %218 = math.exp %217 : vector<4x1xf32>
    %219 = arith.subf %196, %206 : vector<4x1xf32>
    %220 = math.exp %219 : vector<4x1xf32>
    %221 = arith.subf %199, %206 : vector<4x1xf32>
    %222 = math.exp %221 : vector<4x1xf32>
    %223 = arith.addf %208, %210 : vector<4x1xf32>
    %224 = arith.addf %223, %212 : vector<4x1xf32>
    %225 = arith.addf %224, %214 : vector<4x1xf32>
    %226 = arith.addf %225, %216 : vector<4x1xf32>
    %227 = arith.addf %226, %218 : vector<4x1xf32>
    %228 = arith.addf %227, %220 : vector<4x1xf32>
    %229 = arith.addf %228, %222 : vector<4x1xf32>
    %230 = tpu.reciprocal %229 {approx = true} : vector<4x1xf32> -> vector<4x1xf32>
    %cst_58 = arith.constant 0.000000e+00 : f32
    %231 = vector.broadcast %cst_58 : f32 to vector<4x8xf32>
    %232 = arith.mulf %208, %230 : vector<4x1xf32>
    %233 = vector.broadcast %232 : vector<4x1xf32> to vector<4x8xf32>
    %234 = arith.mulf %233, %68 : vector<4x8xf32>
    %235 = arith.addf %231, %234 : vector<4x8xf32>
    %236 = arith.mulf %210, %230 : vector<4x1xf32>
    %237 = vector.broadcast %236 : vector<4x1xf32> to vector<4x8xf32>
    %238 = arith.mulf %237, %69 : vector<4x8xf32>
    %239 = arith.addf %235, %238 : vector<4x8xf32>
    %240 = arith.mulf %212, %230 : vector<4x1xf32>
    %241 = vector.broadcast %240 : vector<4x1xf32> to vector<4x8xf32>
    %242 = arith.mulf %241, %70 : vector<4x8xf32>
    %243 = arith.addf %239, %242 : vector<4x8xf32>
    %244 = arith.mulf %214, %230 : vector<4x1xf32>
    %245 = vector.broadcast %244 : vector<4x1xf32> to vector<4x8xf32>
    %246 = arith.mulf %245, %71 : vector<4x8xf32>
    %247 = arith.addf %243, %246 : vector<4x8xf32>
    %248 = arith.mulf %216, %230 : vector<4x1xf32>
    %249 = vector.broadcast %248 : vector<4x1xf32> to vector<4x8xf32>
    %250 = arith.mulf %249, %72 : vector<4x8xf32>
    %251 = arith.addf %247, %250 : vector<4x8xf32>
    %252 = arith.mulf %218, %230 : vector<4x1xf32>
    %253 = vector.broadcast %252 : vector<4x1xf32> to vector<4x8xf32>
    %254 = arith.mulf %253, %73 : vector<4x8xf32>
    %255 = arith.addf %251, %254 : vector<4x8xf32>
    %256 = arith.mulf %220, %230 : vector<4x1xf32>
    %257 = vector.broadcast %256 : vector<4x1xf32> to vector<4x8xf32>
    %258 = arith.mulf %257, %74 : vector<4x8xf32>
    %259 = arith.addf %255, %258 : vector<4x8xf32>
    %260 = arith.mulf %222, %230 : vector<4x1xf32>
    %261 = vector.broadcast %260 : vector<4x1xf32> to vector<4x8xf32>
    %262 = arith.mulf %261, %75 : vector<4x8xf32>
    %263 = arith.addf %259, %262 : vector<4x8xf32>
    %cst_59 = arith.constant dense<0.000000e+00> : vector<4x32xf32>
    %264 = tpu.matmul %263, %77, %cst_59 {dimension_numbers = #tpu.dot_dimension_numbers<[1], [0], [0], [1], [0, 0, 1, 1], [], []>} : vector<4x8xf32>, vector<8x32xf32>, vector<4x32xf32> -> vector<4x32xf32>
    %265 = arith.addf %173, %264 : vector<4x32xf32>
    %cst_60 = arith.constant 0.353553385 : f32
    %266 = vector.broadcast %cst_60 : f32 to vector<4x8xf32>
    %267 = arith.mulf %54, %266 : vector<4x8xf32>
    %268 = arith.mulf %267, %60 : vector<4x8xf32>
    %cst_61 = arith.constant dense<0.000000e+00> : vector<4xf32>
    %269 = vector.multi_reduction <add>, %268, %cst_61 [1] : vector<4x8xf32> to vector<4xf32>
    %270 = vector.shape_cast %269 : vector<4xf32> to vector<4x1xf32>
    %271 = arith.mulf %267, %61 : vector<4x8xf32>
    %cst_62 = arith.constant dense<0.000000e+00> : vector<4xf32>
    %272 = vector.multi_reduction <add>, %271, %cst_62 [1] : vector<4x8xf32> to vector<4xf32>
    %273 = vector.shape_cast %272 : vector<4xf32> to vector<4x1xf32>
    %274 = arith.mulf %267, %62 : vector<4x8xf32>
    %cst_63 = arith.constant dense<0.000000e+00> : vector<4xf32>
    %275 = vector.multi_reduction <add>, %274, %cst_63 [1] : vector<4x8xf32> to vector<4xf32>
    %276 = vector.shape_cast %275 : vector<4xf32> to vector<4x1xf32>
    %277 = arith.mulf %267, %63 : vector<4x8xf32>
    %cst_64 = arith.constant dense<0.000000e+00> : vector<4xf32>
    %278 = vector.multi_reduction <add>, %277, %cst_64 [1] : vector<4x8xf32> to vector<4xf32>
    %279 = vector.shape_cast %278 : vector<4xf32> to vector<4x1xf32>
    %280 = arith.mulf %267, %64 : vector<4x8xf32>
    %cst_65 = arith.constant dense<0.000000e+00> : vector<4xf32>
    %281 = vector.multi_reduction <add>, %280, %cst_65 [1] : vector<4x8xf32> to vector<4xf32>
    %282 = vector.shape_cast %281 : vector<4xf32> to vector<4x1xf32>
    %283 = arith.mulf %267, %65 : vector<4x8xf32>
    %cst_66 = arith.constant dense<0.000000e+00> : vector<4xf32>
    %284 = vector.multi_reduction <add>, %283, %cst_66 [1] : vector<4x8xf32> to vector<4xf32>
    %285 = vector.shape_cast %284 : vector<4xf32> to vector<4x1xf32>
    %286 = arith.mulf %267, %66 : vector<4x8xf32>
    %cst_67 = arith.constant dense<0.000000e+00> : vector<4xf32>
    %287 = vector.multi_reduction <add>, %286, %cst_67 [1] : vector<4x8xf32> to vector<4xf32>
    %288 = vector.shape_cast %287 : vector<4xf32> to vector<4x1xf32>
    %289 = arith.mulf %267, %67 : vector<4x8xf32>
    %cst_68 = arith.constant dense<0.000000e+00> : vector<4xf32>
    %290 = vector.multi_reduction <add>, %289, %cst_68 [1] : vector<4x8xf32> to vector<4xf32>
    %291 = vector.shape_cast %290 : vector<4xf32> to vector<4x1xf32>
    %292 = arith.maximumf %270, %273 : vector<4x1xf32>
    %293 = arith.maximumf %292, %276 : vector<4x1xf32>
    %294 = arith.maximumf %293, %279 : vector<4x1xf32>
    %295 = arith.maximumf %294, %282 : vector<4x1xf32>
    %296 = arith.maximumf %295, %285 : vector<4x1xf32>
    %297 = arith.maximumf %296, %288 : vector<4x1xf32>
    %298 = arith.maximumf %297, %291 : vector<4x1xf32>
    %299 = arith.subf %270, %298 : vector<4x1xf32>
    %300 = math.exp %299 : vector<4x1xf32>
    %301 = arith.subf %273, %298 : vector<4x1xf32>
    %302 = math.exp %301 : vector<4x1xf32>
    %303 = arith.subf %276, %298 : vector<4x1xf32>
    %304 = math.exp %303 : vector<4x1xf32>
    %305 = arith.subf %279, %298 : vector<4x1xf32>
    %306 = math.exp %305 : vector<4x1xf32>
    %307 = arith.subf %282, %298 : vector<4x1xf32>
    %308 = math.exp %307 : vector<4x1xf32>
    %309 = arith.subf %285, %298 : vector<4x1xf32>
    %310 = math.exp %309 : vector<4x1xf32>
    %311 = arith.subf %288, %298 : vector<4x1xf32>
    %312 = math.exp %311 : vector<4x1xf32>
    %313 = arith.subf %291, %298 : vector<4x1xf32>
    %314 = math.exp %313 : vector<4x1xf32>
    %315 = arith.addf %300, %302 : vector<4x1xf32>
    %316 = arith.addf %315, %304 : vector<4x1xf32>
    %317 = arith.addf %316, %306 : vector<4x1xf32>
    %318 = arith.addf %317, %308 : vector<4x1xf32>
    %319 = arith.addf %318, %310 : vector<4x1xf32>
    %320 = arith.addf %319, %312 : vector<4x1xf32>
    %321 = arith.addf %320, %314 : vector<4x1xf32>
    %322 = tpu.reciprocal %321 {approx = true} : vector<4x1xf32> -> vector<4x1xf32>
    %cst_69 = arith.constant 0.000000e+00 : f32
    %323 = vector.broadcast %cst_69 : f32 to vector<4x8xf32>
    %324 = arith.mulf %300, %322 : vector<4x1xf32>
    %325 = vector.broadcast %324 : vector<4x1xf32> to vector<4x8xf32>
    %326 = arith.mulf %325, %68 : vector<4x8xf32>
    %327 = arith.addf %323, %326 : vector<4x8xf32>
    %328 = arith.mulf %302, %322 : vector<4x1xf32>
    %329 = vector.broadcast %328 : vector<4x1xf32> to vector<4x8xf32>
    %330 = arith.mulf %329, %69 : vector<4x8xf32>
    %331 = arith.addf %327, %330 : vector<4x8xf32>
    %332 = arith.mulf %304, %322 : vector<4x1xf32>
    %333 = vector.broadcast %332 : vector<4x1xf32> to vector<4x8xf32>
    %334 = arith.mulf %333, %70 : vector<4x8xf32>
    %335 = arith.addf %331, %334 : vector<4x8xf32>
    %336 = arith.mulf %306, %322 : vector<4x1xf32>
    %337 = vector.broadcast %336 : vector<4x1xf32> to vector<4x8xf32>
    %338 = arith.mulf %337, %71 : vector<4x8xf32>
    %339 = arith.addf %335, %338 : vector<4x8xf32>
    %340 = arith.mulf %308, %322 : vector<4x1xf32>
    %341 = vector.broadcast %340 : vector<4x1xf32> to vector<4x8xf32>
    %342 = arith.mulf %341, %72 : vector<4x8xf32>
    %343 = arith.addf %339, %342 : vector<4x8xf32>
    %344 = arith.mulf %310, %322 : vector<4x1xf32>
    %345 = vector.broadcast %344 : vector<4x1xf32> to vector<4x8xf32>
    %346 = arith.mulf %345, %73 : vector<4x8xf32>
    %347 = arith.addf %343, %346 : vector<4x8xf32>
    %348 = arith.mulf %312, %322 : vector<4x1xf32>
    %349 = vector.broadcast %348 : vector<4x1xf32> to vector<4x8xf32>
    %350 = arith.mulf %349, %74 : vector<4x8xf32>
    %351 = arith.addf %347, %350 : vector<4x8xf32>
    %352 = arith.mulf %314, %322 : vector<4x1xf32>
    %353 = vector.broadcast %352 : vector<4x1xf32> to vector<4x8xf32>
    %354 = arith.mulf %353, %75 : vector<4x8xf32>
    %355 = arith.addf %351, %354 : vector<4x8xf32>
    %cst_70 = arith.constant dense<0.000000e+00> : vector<4x32xf32>
    %356 = tpu.matmul %355, %78, %cst_70 {dimension_numbers = #tpu.dot_dimension_numbers<[1], [0], [0], [1], [0, 0, 1, 1], [], []>} : vector<4x8xf32>, vector<8x32xf32>, vector<4x32xf32> -> vector<4x32xf32>
    %357 = arith.addf %265, %356 : vector<4x32xf32>
    %cst_71 = arith.constant 0.353553385 : f32
    %358 = vector.broadcast %cst_71 : f32 to vector<4x8xf32>
    %359 = arith.mulf %55, %358 : vector<4x8xf32>
    %360 = arith.mulf %359, %60 : vector<4x8xf32>
    %cst_72 = arith.constant dense<0.000000e+00> : vector<4xf32>
    %361 = vector.multi_reduction <add>, %360, %cst_72 [1] : vector<4x8xf32> to vector<4xf32>
    %362 = vector.shape_cast %361 : vector<4xf32> to vector<4x1xf32>
    %363 = arith.mulf %359, %61 : vector<4x8xf32>
    %cst_73 = arith.constant dense<0.000000e+00> : vector<4xf32>
    %364 = vector.multi_reduction <add>, %363, %cst_73 [1] : vector<4x8xf32> to vector<4xf32>
    %365 = vector.shape_cast %364 : vector<4xf32> to vector<4x1xf32>
    %366 = arith.mulf %359, %62 : vector<4x8xf32>
    %cst_74 = arith.constant dense<0.000000e+00> : vector<4xf32>
    %367 = vector.multi_reduction <add>, %366, %cst_74 [1] : vector<4x8xf32> to vector<4xf32>
    %368 = vector.shape_cast %367 : vector<4xf32> to vector<4x1xf32>
    %369 = arith.mulf %359, %63 : vector<4x8xf32>
    %cst_75 = arith.constant dense<0.000000e+00> : vector<4xf32>
    %370 = vector.multi_reduction <add>, %369, %cst_75 [1] : vector<4x8xf32> to vector<4xf32>
    %371 = vector.shape_cast %370 : vector<4xf32> to vector<4x1xf32>
    %372 = arith.mulf %359, %64 : vector<4x8xf32>
    %cst_76 = arith.constant dense<0.000000e+00> : vector<4xf32>
    %373 = vector.multi_reduction <add>, %372, %cst_76 [1] : vector<4x8xf32> to vector<4xf32>
    %374 = vector.shape_cast %373 : vector<4xf32> to vector<4x1xf32>
    %375 = arith.mulf %359, %65 : vector<4x8xf32>
    %cst_77 = arith.constant dense<0.000000e+00> : vector<4xf32>
    %376 = vector.multi_reduction <add>, %375, %cst_77 [1] : vector<4x8xf32> to vector<4xf32>
    %377 = vector.shape_cast %376 : vector<4xf32> to vector<4x1xf32>
    %378 = arith.mulf %359, %66 : vector<4x8xf32>
    %cst_78 = arith.constant dense<0.000000e+00> : vector<4xf32>
    %379 = vector.multi_reduction <add>, %378, %cst_78 [1] : vector<4x8xf32> to vector<4xf32>
    %380 = vector.shape_cast %379 : vector<4xf32> to vector<4x1xf32>
    %381 = arith.mulf %359, %67 : vector<4x8xf32>
    %cst_79 = arith.constant dense<0.000000e+00> : vector<4xf32>
    %382 = vector.multi_reduction <add>, %381, %cst_79 [1] : vector<4x8xf32> to vector<4xf32>
    %383 = vector.shape_cast %382 : vector<4xf32> to vector<4x1xf32>
    %384 = arith.maximumf %362, %365 : vector<4x1xf32>
    %385 = arith.maximumf %384, %368 : vector<4x1xf32>
    %386 = arith.maximumf %385, %371 : vector<4x1xf32>
    %387 = arith.maximumf %386, %374 : vector<4x1xf32>
    %388 = arith.maximumf %387, %377 : vector<4x1xf32>
    %389 = arith.maximumf %388, %380 : vector<4x1xf32>
    %390 = arith.maximumf %389, %383 : vector<4x1xf32>
    %391 = arith.subf %362, %390 : vector<4x1xf32>
    %392 = math.exp %391 : vector<4x1xf32>
    %393 = arith.subf %365, %390 : vector<4x1xf32>
    %394 = math.exp %393 : vector<4x1xf32>
    %395 = arith.subf %368, %390 : vector<4x1xf32>
    %396 = math.exp %395 : vector<4x1xf32>
    %397 = arith.subf %371, %390 : vector<4x1xf32>
    %398 = math.exp %397 : vector<4x1xf32>
    %399 = arith.subf %374, %390 : vector<4x1xf32>
    %400 = math.exp %399 : vector<4x1xf32>
    %401 = arith.subf %377, %390 : vector<4x1xf32>
    %402 = math.exp %401 : vector<4x1xf32>
    %403 = arith.subf %380, %390 : vector<4x1xf32>
    %404 = math.exp %403 : vector<4x1xf32>
    %405 = arith.subf %383, %390 : vector<4x1xf32>
    %406 = math.exp %405 : vector<4x1xf32>
    %407 = arith.addf %392, %394 : vector<4x1xf32>
    %408 = arith.addf %407, %396 : vector<4x1xf32>
    %409 = arith.addf %408, %398 : vector<4x1xf32>
    %410 = arith.addf %409, %400 : vector<4x1xf32>
    %411 = arith.addf %410, %402 : vector<4x1xf32>
    %412 = arith.addf %411, %404 : vector<4x1xf32>
    %413 = arith.addf %412, %406 : vector<4x1xf32>
    %414 = tpu.reciprocal %413 {approx = true} : vector<4x1xf32> -> vector<4x1xf32>
    %cst_80 = arith.constant 0.000000e+00 : f32
    %415 = vector.broadcast %cst_80 : f32 to vector<4x8xf32>
    %416 = arith.mulf %392, %414 : vector<4x1xf32>
    %417 = vector.broadcast %416 : vector<4x1xf32> to vector<4x8xf32>
    %418 = arith.mulf %417, %68 : vector<4x8xf32>
    %419 = arith.addf %415, %418 : vector<4x8xf32>
    %420 = arith.mulf %394, %414 : vector<4x1xf32>
    %421 = vector.broadcast %420 : vector<4x1xf32> to vector<4x8xf32>
    %422 = arith.mulf %421, %69 : vector<4x8xf32>
    %423 = arith.addf %419, %422 : vector<4x8xf32>
    %424 = arith.mulf %396, %414 : vector<4x1xf32>
    %425 = vector.broadcast %424 : vector<4x1xf32> to vector<4x8xf32>
    %426 = arith.mulf %425, %70 : vector<4x8xf32>
    %427 = arith.addf %423, %426 : vector<4x8xf32>
    %428 = arith.mulf %398, %414 : vector<4x1xf32>
    %429 = vector.broadcast %428 : vector<4x1xf32> to vector<4x8xf32>
    %430 = arith.mulf %429, %71 : vector<4x8xf32>
    %431 = arith.addf %427, %430 : vector<4x8xf32>
    %432 = arith.mulf %400, %414 : vector<4x1xf32>
    %433 = vector.broadcast %432 : vector<4x1xf32> to vector<4x8xf32>
    %434 = arith.mulf %433, %72 : vector<4x8xf32>
    %435 = arith.addf %431, %434 : vector<4x8xf32>
    %436 = arith.mulf %402, %414 : vector<4x1xf32>
    %437 = vector.broadcast %436 : vector<4x1xf32> to vector<4x8xf32>
    %438 = arith.mulf %437, %73 : vector<4x8xf32>
    %439 = arith.addf %435, %438 : vector<4x8xf32>
    %440 = arith.mulf %404, %414 : vector<4x1xf32>
    %441 = vector.broadcast %440 : vector<4x1xf32> to vector<4x8xf32>
    %442 = arith.mulf %441, %74 : vector<4x8xf32>
    %443 = arith.addf %439, %442 : vector<4x8xf32>
    %444 = arith.mulf %406, %414 : vector<4x1xf32>
    %445 = vector.broadcast %444 : vector<4x1xf32> to vector<4x8xf32>
    %446 = arith.mulf %445, %75 : vector<4x8xf32>
    %447 = arith.addf %443, %446 : vector<4x8xf32>
    %cst_81 = arith.constant dense<0.000000e+00> : vector<4x32xf32>
    %448 = tpu.matmul %447, %79, %cst_81 {dimension_numbers = #tpu.dot_dimension_numbers<[1], [0], [0], [1], [0, 0, 1, 1], [], []>} : vector<4x8xf32>, vector<8x32xf32>, vector<4x32xf32> -> vector<4x32xf32>
    %449 = arith.addf %357, %448 : vector<4x32xf32>
    %cst_82 = arith.constant 0.353553385 : f32
    %450 = vector.broadcast %cst_82 : f32 to vector<4x8xf32>
    %451 = arith.mulf %56, %450 : vector<4x8xf32>
    %452 = arith.mulf %451, %60 : vector<4x8xf32>
    %cst_83 = arith.constant dense<0.000000e+00> : vector<4xf32>
    %453 = vector.multi_reduction <add>, %452, %cst_83 [1] : vector<4x8xf32> to vector<4xf32>
    %454 = vector.shape_cast %453 : vector<4xf32> to vector<4x1xf32>
    %455 = arith.mulf %451, %61 : vector<4x8xf32>
    %cst_84 = arith.constant dense<0.000000e+00> : vector<4xf32>
    %456 = vector.multi_reduction <add>, %455, %cst_84 [1] : vector<4x8xf32> to vector<4xf32>
    %457 = vector.shape_cast %456 : vector<4xf32> to vector<4x1xf32>
    %458 = arith.mulf %451, %62 : vector<4x8xf32>
    %cst_85 = arith.constant dense<0.000000e+00> : vector<4xf32>
    %459 = vector.multi_reduction <add>, %458, %cst_85 [1] : vector<4x8xf32> to vector<4xf32>
    %460 = vector.shape_cast %459 : vector<4xf32> to vector<4x1xf32>
    %461 = arith.mulf %451, %63 : vector<4x8xf32>
    %cst_86 = arith.constant dense<0.000000e+00> : vector<4xf32>
    %462 = vector.multi_reduction <add>, %461, %cst_86 [1] : vector<4x8xf32> to vector<4xf32>
    %463 = vector.shape_cast %462 : vector<4xf32> to vector<4x1xf32>
    %464 = arith.mulf %451, %64 : vector<4x8xf32>
    %cst_87 = arith.constant dense<0.000000e+00> : vector<4xf32>
    %465 = vector.multi_reduction <add>, %464, %cst_87 [1] : vector<4x8xf32> to vector<4xf32>
    %466 = vector.shape_cast %465 : vector<4xf32> to vector<4x1xf32>
    %467 = arith.mulf %451, %65 : vector<4x8xf32>
    %cst_88 = arith.constant dense<0.000000e+00> : vector<4xf32>
    %468 = vector.multi_reduction <add>, %467, %cst_88 [1] : vector<4x8xf32> to vector<4xf32>
    %469 = vector.shape_cast %468 : vector<4xf32> to vector<4x1xf32>
    %470 = arith.mulf %451, %66 : vector<4x8xf32>
    %cst_89 = arith.constant dense<0.000000e+00> : vector<4xf32>
    %471 = vector.multi_reduction <add>, %470, %cst_89 [1] : vector<4x8xf32> to vector<4xf32>
    %472 = vector.shape_cast %471 : vector<4xf32> to vector<4x1xf32>
    %473 = arith.mulf %451, %67 : vector<4x8xf32>
    %cst_90 = arith.constant dense<0.000000e+00> : vector<4xf32>
    %474 = vector.multi_reduction <add>, %473, %cst_90 [1] : vector<4x8xf32> to vector<4xf32>
    %475 = vector.shape_cast %474 : vector<4xf32> to vector<4x1xf32>
    %476 = arith.maximumf %454, %457 : vector<4x1xf32>
    %477 = arith.maximumf %476, %460 : vector<4x1xf32>
    %478 = arith.maximumf %477, %463 : vector<4x1xf32>
    %479 = arith.maximumf %478, %466 : vector<4x1xf32>
    %480 = arith.maximumf %479, %469 : vector<4x1xf32>
    %481 = arith.maximumf %480, %472 : vector<4x1xf32>
    %482 = arith.maximumf %481, %475 : vector<4x1xf32>
    %483 = arith.subf %454, %482 : vector<4x1xf32>
    %484 = math.exp %483 : vector<4x1xf32>
    %485 = arith.subf %457, %482 : vector<4x1xf32>
    %486 = math.exp %485 : vector<4x1xf32>
    %487 = arith.subf %460, %482 : vector<4x1xf32>
    %488 = math.exp %487 : vector<4x1xf32>
    %489 = arith.subf %463, %482 : vector<4x1xf32>
    %490 = math.exp %489 : vector<4x1xf32>
    %491 = arith.subf %466, %482 : vector<4x1xf32>
    %492 = math.exp %491 : vector<4x1xf32>
    %493 = arith.subf %469, %482 : vector<4x1xf32>
    %494 = math.exp %493 : vector<4x1xf32>
    %495 = arith.subf %472, %482 : vector<4x1xf32>
    %496 = math.exp %495 : vector<4x1xf32>
    %497 = arith.subf %475, %482 : vector<4x1xf32>
    %498 = math.exp %497 : vector<4x1xf32>
    %499 = arith.addf %484, %486 : vector<4x1xf32>
    %500 = arith.addf %499, %488 : vector<4x1xf32>
    %501 = arith.addf %500, %490 : vector<4x1xf32>
    %502 = arith.addf %501, %492 : vector<4x1xf32>
    %503 = arith.addf %502, %494 : vector<4x1xf32>
    %504 = arith.addf %503, %496 : vector<4x1xf32>
    %505 = arith.addf %504, %498 : vector<4x1xf32>
    %506 = tpu.reciprocal %505 {approx = true} : vector<4x1xf32> -> vector<4x1xf32>
    %cst_91 = arith.constant 0.000000e+00 : f32
    %507 = vector.broadcast %cst_91 : f32 to vector<4x8xf32>
    %508 = arith.mulf %484, %506 : vector<4x1xf32>
    %509 = vector.broadcast %508 : vector<4x1xf32> to vector<4x8xf32>
    %510 = arith.mulf %509, %68 : vector<4x8xf32>
    %511 = arith.addf %507, %510 : vector<4x8xf32>
    %512 = arith.mulf %486, %506 : vector<4x1xf32>
    %513 = vector.broadcast %512 : vector<4x1xf32> to vector<4x8xf32>
    %514 = arith.mulf %513, %69 : vector<4x8xf32>
    %515 = arith.addf %511, %514 : vector<4x8xf32>
    %516 = arith.mulf %488, %506 : vector<4x1xf32>
    %517 = vector.broadcast %516 : vector<4x1xf32> to vector<4x8xf32>
    %518 = arith.mulf %517, %70 : vector<4x8xf32>
    %519 = arith.addf %515, %518 : vector<4x8xf32>
    %520 = arith.mulf %490, %506 : vector<4x1xf32>
    %521 = vector.broadcast %520 : vector<4x1xf32> to vector<4x8xf32>
    %522 = arith.mulf %521, %71 : vector<4x8xf32>
    %523 = arith.addf %519, %522 : vector<4x8xf32>
    %524 = arith.mulf %492, %506 : vector<4x1xf32>
    %525 = vector.broadcast %524 : vector<4x1xf32> to vector<4x8xf32>
    %526 = arith.mulf %525, %72 : vector<4x8xf32>
    %527 = arith.addf %523, %526 : vector<4x8xf32>
    %528 = arith.mulf %494, %506 : vector<4x1xf32>
    %529 = vector.broadcast %528 : vector<4x1xf32> to vector<4x8xf32>
    %530 = arith.mulf %529, %73 : vector<4x8xf32>
    %531 = arith.addf %527, %530 : vector<4x8xf32>
    %532 = arith.mulf %496, %506 : vector<4x1xf32>
    %533 = vector.broadcast %532 : vector<4x1xf32> to vector<4x8xf32>
    %534 = arith.mulf %533, %74 : vector<4x8xf32>
    %535 = arith.addf %531, %534 : vector<4x8xf32>
    %536 = arith.mulf %498, %506 : vector<4x1xf32>
    %537 = vector.broadcast %536 : vector<4x1xf32> to vector<4x8xf32>
    %538 = arith.mulf %537, %75 : vector<4x8xf32>
    %539 = arith.addf %535, %538 : vector<4x8xf32>
    %cst_92 = arith.constant dense<0.000000e+00> : vector<4x32xf32>
    %540 = tpu.matmul %539, %76, %cst_92 {dimension_numbers = #tpu.dot_dimension_numbers<[1], [0], [0], [1], [0, 0, 1, 1], [], []>} : vector<4x8xf32>, vector<8x32xf32>, vector<4x32xf32> -> vector<4x32xf32>
    %541 = arith.addf %81, %540 : vector<4x32xf32>
    %cst_93 = arith.constant 0.353553385 : f32
    %542 = vector.broadcast %cst_93 : f32 to vector<4x8xf32>
    %543 = arith.mulf %57, %542 : vector<4x8xf32>
    %544 = arith.mulf %543, %60 : vector<4x8xf32>
    %cst_94 = arith.constant dense<0.000000e+00> : vector<4xf32>
    %545 = vector.multi_reduction <add>, %544, %cst_94 [1] : vector<4x8xf32> to vector<4xf32>
    %546 = vector.shape_cast %545 : vector<4xf32> to vector<4x1xf32>
    %547 = arith.mulf %543, %61 : vector<4x8xf32>
    %cst_95 = arith.constant dense<0.000000e+00> : vector<4xf32>
    %548 = vector.multi_reduction <add>, %547, %cst_95 [1] : vector<4x8xf32> to vector<4xf32>
    %549 = vector.shape_cast %548 : vector<4xf32> to vector<4x1xf32>
    %550 = arith.mulf %543, %62 : vector<4x8xf32>
    %cst_96 = arith.constant dense<0.000000e+00> : vector<4xf32>
    %551 = vector.multi_reduction <add>, %550, %cst_96 [1] : vector<4x8xf32> to vector<4xf32>
    %552 = vector.shape_cast %551 : vector<4xf32> to vector<4x1xf32>
    %553 = arith.mulf %543, %63 : vector<4x8xf32>
    %cst_97 = arith.constant dense<0.000000e+00> : vector<4xf32>
    %554 = vector.multi_reduction <add>, %553, %cst_97 [1] : vector<4x8xf32> to vector<4xf32>
    %555 = vector.shape_cast %554 : vector<4xf32> to vector<4x1xf32>
    %556 = arith.mulf %543, %64 : vector<4x8xf32>
    %cst_98 = arith.constant dense<0.000000e+00> : vector<4xf32>
    %557 = vector.multi_reduction <add>, %556, %cst_98 [1] : vector<4x8xf32> to vector<4xf32>
    %558 = vector.shape_cast %557 : vector<4xf32> to vector<4x1xf32>
    %559 = arith.mulf %543, %65 : vector<4x8xf32>
    %cst_99 = arith.constant dense<0.000000e+00> : vector<4xf32>
    %560 = vector.multi_reduction <add>, %559, %cst_99 [1] : vector<4x8xf32> to vector<4xf32>
    %561 = vector.shape_cast %560 : vector<4xf32> to vector<4x1xf32>
    %562 = arith.mulf %543, %66 : vector<4x8xf32>
    %cst_100 = arith.constant dense<0.000000e+00> : vector<4xf32>
    %563 = vector.multi_reduction <add>, %562, %cst_100 [1] : vector<4x8xf32> to vector<4xf32>
    %564 = vector.shape_cast %563 : vector<4xf32> to vector<4x1xf32>
    %565 = arith.mulf %543, %67 : vector<4x8xf32>
    %cst_101 = arith.constant dense<0.000000e+00> : vector<4xf32>
    %566 = vector.multi_reduction <add>, %565, %cst_101 [1] : vector<4x8xf32> to vector<4xf32>
    %567 = vector.shape_cast %566 : vector<4xf32> to vector<4x1xf32>
    %568 = arith.maximumf %546, %549 : vector<4x1xf32>
    %569 = arith.maximumf %568, %552 : vector<4x1xf32>
    %570 = arith.maximumf %569, %555 : vector<4x1xf32>
    %571 = arith.maximumf %570, %558 : vector<4x1xf32>
    %572 = arith.maximumf %571, %561 : vector<4x1xf32>
    %573 = arith.maximumf %572, %564 : vector<4x1xf32>
    %574 = arith.maximumf %573, %567 : vector<4x1xf32>
    %575 = arith.subf %546, %574 : vector<4x1xf32>
    %576 = math.exp %575 : vector<4x1xf32>
    %577 = arith.subf %549, %574 : vector<4x1xf32>
    %578 = math.exp %577 : vector<4x1xf32>
    %579 = arith.subf %552, %574 : vector<4x1xf32>
    %580 = math.exp %579 : vector<4x1xf32>
    %581 = arith.subf %555, %574 : vector<4x1xf32>
    %582 = math.exp %581 : vector<4x1xf32>
    %583 = arith.subf %558, %574 : vector<4x1xf32>
    %584 = math.exp %583 : vector<4x1xf32>
    %585 = arith.subf %561, %574 : vector<4x1xf32>
    %586 = math.exp %585 : vector<4x1xf32>
    %587 = arith.subf %564, %574 : vector<4x1xf32>
    %588 = math.exp %587 : vector<4x1xf32>
    %589 = arith.subf %567, %574 : vector<4x1xf32>
    %590 = math.exp %589 : vector<4x1xf32>
    %591 = arith.addf %576, %578 : vector<4x1xf32>
    %592 = arith.addf %591, %580 : vector<4x1xf32>
    %593 = arith.addf %592, %582 : vector<4x1xf32>
    %594 = arith.addf %593, %584 : vector<4x1xf32>
    %595 = arith.addf %594, %586 : vector<4x1xf32>
    %596 = arith.addf %595, %588 : vector<4x1xf32>
    %597 = arith.addf %596, %590 : vector<4x1xf32>
    %598 = tpu.reciprocal %597 {approx = true} : vector<4x1xf32> -> vector<4x1xf32>
    %cst_102 = arith.constant 0.000000e+00 : f32
    %599 = vector.broadcast %cst_102 : f32 to vector<4x8xf32>
    %600 = arith.mulf %576, %598 : vector<4x1xf32>
    %601 = vector.broadcast %600 : vector<4x1xf32> to vector<4x8xf32>
    %602 = arith.mulf %601, %68 : vector<4x8xf32>
    %603 = arith.addf %599, %602 : vector<4x8xf32>
    %604 = arith.mulf %578, %598 : vector<4x1xf32>
    %605 = vector.broadcast %604 : vector<4x1xf32> to vector<4x8xf32>
    %606 = arith.mulf %605, %69 : vector<4x8xf32>
    %607 = arith.addf %603, %606 : vector<4x8xf32>
    %608 = arith.mulf %580, %598 : vector<4x1xf32>
    %609 = vector.broadcast %608 : vector<4x1xf32> to vector<4x8xf32>
    %610 = arith.mulf %609, %70 : vector<4x8xf32>
    %611 = arith.addf %607, %610 : vector<4x8xf32>
    %612 = arith.mulf %582, %598 : vector<4x1xf32>
    %613 = vector.broadcast %612 : vector<4x1xf32> to vector<4x8xf32>
    %614 = arith.mulf %613, %71 : vector<4x8xf32>
    %615 = arith.addf %611, %614 : vector<4x8xf32>
    %616 = arith.mulf %584, %598 : vector<4x1xf32>
    %617 = vector.broadcast %616 : vector<4x1xf32> to vector<4x8xf32>
    %618 = arith.mulf %617, %72 : vector<4x8xf32>
    %619 = arith.addf %615, %618 : vector<4x8xf32>
    %620 = arith.mulf %586, %598 : vector<4x1xf32>
    %621 = vector.broadcast %620 : vector<4x1xf32> to vector<4x8xf32>
    %622 = arith.mulf %621, %73 : vector<4x8xf32>
    %623 = arith.addf %619, %622 : vector<4x8xf32>
    %624 = arith.mulf %588, %598 : vector<4x1xf32>
    %625 = vector.broadcast %624 : vector<4x1xf32> to vector<4x8xf32>
    %626 = arith.mulf %625, %74 : vector<4x8xf32>
    %627 = arith.addf %623, %626 : vector<4x8xf32>
    %628 = arith.mulf %590, %598 : vector<4x1xf32>
    %629 = vector.broadcast %628 : vector<4x1xf32> to vector<4x8xf32>
    %630 = arith.mulf %629, %75 : vector<4x8xf32>
    %631 = arith.addf %627, %630 : vector<4x8xf32>
    %cst_103 = arith.constant dense<0.000000e+00> : vector<4x32xf32>
    %632 = tpu.matmul %631, %77, %cst_103 {dimension_numbers = #tpu.dot_dimension_numbers<[1], [0], [0], [1], [0, 0, 1, 1], [], []>} : vector<4x8xf32>, vector<8x32xf32>, vector<4x32xf32> -> vector<4x32xf32>
    %633 = arith.addf %541, %632 : vector<4x32xf32>
    %cst_104 = arith.constant 0.353553385 : f32
    %634 = vector.broadcast %cst_104 : f32 to vector<4x8xf32>
    %635 = arith.mulf %58, %634 : vector<4x8xf32>
    %636 = arith.mulf %635, %60 : vector<4x8xf32>
    %cst_105 = arith.constant dense<0.000000e+00> : vector<4xf32>
    %637 = vector.multi_reduction <add>, %636, %cst_105 [1] : vector<4x8xf32> to vector<4xf32>
    %638 = vector.shape_cast %637 : vector<4xf32> to vector<4x1xf32>
    %639 = arith.mulf %635, %61 : vector<4x8xf32>
    %cst_106 = arith.constant dense<0.000000e+00> : vector<4xf32>
    %640 = vector.multi_reduction <add>, %639, %cst_106 [1] : vector<4x8xf32> to vector<4xf32>
    %641 = vector.shape_cast %640 : vector<4xf32> to vector<4x1xf32>
    %642 = arith.mulf %635, %62 : vector<4x8xf32>
    %cst_107 = arith.constant dense<0.000000e+00> : vector<4xf32>
    %643 = vector.multi_reduction <add>, %642, %cst_107 [1] : vector<4x8xf32> to vector<4xf32>
    %644 = vector.shape_cast %643 : vector<4xf32> to vector<4x1xf32>
    %645 = arith.mulf %635, %63 : vector<4x8xf32>
    %cst_108 = arith.constant dense<0.000000e+00> : vector<4xf32>
    %646 = vector.multi_reduction <add>, %645, %cst_108 [1] : vector<4x8xf32> to vector<4xf32>
    %647 = vector.shape_cast %646 : vector<4xf32> to vector<4x1xf32>
    %648 = arith.mulf %635, %64 : vector<4x8xf32>
    %cst_109 = arith.constant dense<0.000000e+00> : vector<4xf32>
    %649 = vector.multi_reduction <add>, %648, %cst_109 [1] : vector<4x8xf32> to vector<4xf32>
    %650 = vector.shape_cast %649 : vector<4xf32> to vector<4x1xf32>
    %651 = arith.mulf %635, %65 : vector<4x8xf32>
    %cst_110 = arith.constant dense<0.000000e+00> : vector<4xf32>
    %652 = vector.multi_reduction <add>, %651, %cst_110 [1] : vector<4x8xf32> to vector<4xf32>
    %653 = vector.shape_cast %652 : vector<4xf32> to vector<4x1xf32>
    %654 = arith.mulf %635, %66 : vector<4x8xf32>
    %cst_111 = arith.constant dense<0.000000e+00> : vector<4xf32>
    %655 = vector.multi_reduction <add>, %654, %cst_111 [1] : vector<4x8xf32> to vector<4xf32>
    %656 = vector.shape_cast %655 : vector<4xf32> to vector<4x1xf32>
    %657 = arith.mulf %635, %67 : vector<4x8xf32>
    %cst_112 = arith.constant dense<0.000000e+00> : vector<4xf32>
    %658 = vector.multi_reduction <add>, %657, %cst_112 [1] : vector<4x8xf32> to vector<4xf32>
    %659 = vector.shape_cast %658 : vector<4xf32> to vector<4x1xf32>
    %660 = arith.maximumf %638, %641 : vector<4x1xf32>
    %661 = arith.maximumf %660, %644 : vector<4x1xf32>
    %662 = arith.maximumf %661, %647 : vector<4x1xf32>
    %663 = arith.maximumf %662, %650 : vector<4x1xf32>
    %664 = arith.maximumf %663, %653 : vector<4x1xf32>
    %665 = arith.maximumf %664, %656 : vector<4x1xf32>
    %666 = arith.maximumf %665, %659 : vector<4x1xf32>
    %667 = arith.subf %638, %666 : vector<4x1xf32>
    %668 = math.exp %667 : vector<4x1xf32>
    %669 = arith.subf %641, %666 : vector<4x1xf32>
    %670 = math.exp %669 : vector<4x1xf32>
    %671 = arith.subf %644, %666 : vector<4x1xf32>
    %672 = math.exp %671 : vector<4x1xf32>
    %673 = arith.subf %647, %666 : vector<4x1xf32>
    %674 = math.exp %673 : vector<4x1xf32>
    %675 = arith.subf %650, %666 : vector<4x1xf32>
    %676 = math.exp %675 : vector<4x1xf32>
    %677 = arith.subf %653, %666 : vector<4x1xf32>
    %678 = math.exp %677 : vector<4x1xf32>
    %679 = arith.subf %656, %666 : vector<4x1xf32>
    %680 = math.exp %679 : vector<4x1xf32>
    %681 = arith.subf %659, %666 : vector<4x1xf32>
    %682 = math.exp %681 : vector<4x1xf32>
    %683 = arith.addf %668, %670 : vector<4x1xf32>
    %684 = arith.addf %683, %672 : vector<4x1xf32>
    %685 = arith.addf %684, %674 : vector<4x1xf32>
    %686 = arith.addf %685, %676 : vector<4x1xf32>
    %687 = arith.addf %686, %678 : vector<4x1xf32>
    %688 = arith.addf %687, %680 : vector<4x1xf32>
    %689 = arith.addf %688, %682 : vector<4x1xf32>
    %690 = tpu.reciprocal %689 {approx = true} : vector<4x1xf32> -> vector<4x1xf32>
    %cst_113 = arith.constant 0.000000e+00 : f32
    %691 = vector.broadcast %cst_113 : f32 to vector<4x8xf32>
    %692 = arith.mulf %668, %690 : vector<4x1xf32>
    %693 = vector.broadcast %692 : vector<4x1xf32> to vector<4x8xf32>
    %694 = arith.mulf %693, %68 : vector<4x8xf32>
    %695 = arith.addf %691, %694 : vector<4x8xf32>
    %696 = arith.mulf %670, %690 : vector<4x1xf32>
    %697 = vector.broadcast %696 : vector<4x1xf32> to vector<4x8xf32>
    %698 = arith.mulf %697, %69 : vector<4x8xf32>
    %699 = arith.addf %695, %698 : vector<4x8xf32>
    %700 = arith.mulf %672, %690 : vector<4x1xf32>
    %701 = vector.broadcast %700 : vector<4x1xf32> to vector<4x8xf32>
    %702 = arith.mulf %701, %70 : vector<4x8xf32>
    %703 = arith.addf %699, %702 : vector<4x8xf32>
    %704 = arith.mulf %674, %690 : vector<4x1xf32>
    %705 = vector.broadcast %704 : vector<4x1xf32> to vector<4x8xf32>
    %706 = arith.mulf %705, %71 : vector<4x8xf32>
    %707 = arith.addf %703, %706 : vector<4x8xf32>
    %708 = arith.mulf %676, %690 : vector<4x1xf32>
    %709 = vector.broadcast %708 : vector<4x1xf32> to vector<4x8xf32>
    %710 = arith.mulf %709, %72 : vector<4x8xf32>
    %711 = arith.addf %707, %710 : vector<4x8xf32>
    %712 = arith.mulf %678, %690 : vector<4x1xf32>
    %713 = vector.broadcast %712 : vector<4x1xf32> to vector<4x8xf32>
    %714 = arith.mulf %713, %73 : vector<4x8xf32>
    %715 = arith.addf %711, %714 : vector<4x8xf32>
    %716 = arith.mulf %680, %690 : vector<4x1xf32>
    %717 = vector.broadcast %716 : vector<4x1xf32> to vector<4x8xf32>
    %718 = arith.mulf %717, %74 : vector<4x8xf32>
    %719 = arith.addf %715, %718 : vector<4x8xf32>
    %720 = arith.mulf %682, %690 : vector<4x1xf32>
    %721 = vector.broadcast %720 : vector<4x1xf32> to vector<4x8xf32>
    %722 = arith.mulf %721, %75 : vector<4x8xf32>
    %723 = arith.addf %719, %722 : vector<4x8xf32>
    %cst_114 = arith.constant dense<0.000000e+00> : vector<4x32xf32>
    %724 = tpu.matmul %723, %78, %cst_114 {dimension_numbers = #tpu.dot_dimension_numbers<[1], [0], [0], [1], [0, 0, 1, 1], [], []>} : vector<4x8xf32>, vector<8x32xf32>, vector<4x32xf32> -> vector<4x32xf32>
    %725 = arith.addf %633, %724 : vector<4x32xf32>
    %cst_115 = arith.constant 0.353553385 : f32
    %726 = vector.broadcast %cst_115 : f32 to vector<4x8xf32>
    %727 = arith.mulf %59, %726 : vector<4x8xf32>
    %728 = arith.mulf %727, %60 : vector<4x8xf32>
    %cst_116 = arith.constant dense<0.000000e+00> : vector<4xf32>
    %729 = vector.multi_reduction <add>, %728, %cst_116 [1] : vector<4x8xf32> to vector<4xf32>
    %730 = vector.shape_cast %729 : vector<4xf32> to vector<4x1xf32>
    %731 = arith.mulf %727, %61 : vector<4x8xf32>
    %cst_117 = arith.constant dense<0.000000e+00> : vector<4xf32>
    %732 = vector.multi_reduction <add>, %731, %cst_117 [1] : vector<4x8xf32> to vector<4xf32>
    %733 = vector.shape_cast %732 : vector<4xf32> to vector<4x1xf32>
    %734 = arith.mulf %727, %62 : vector<4x8xf32>
    %cst_118 = arith.constant dense<0.000000e+00> : vector<4xf32>
    %735 = vector.multi_reduction <add>, %734, %cst_118 [1] : vector<4x8xf32> to vector<4xf32>
    %736 = vector.shape_cast %735 : vector<4xf32> to vector<4x1xf32>
    %737 = arith.mulf %727, %63 : vector<4x8xf32>
    %cst_119 = arith.constant dense<0.000000e+00> : vector<4xf32>
    %738 = vector.multi_reduction <add>, %737, %cst_119 [1] : vector<4x8xf32> to vector<4xf32>
    %739 = vector.shape_cast %738 : vector<4xf32> to vector<4x1xf32>
    %740 = arith.mulf %727, %64 : vector<4x8xf32>
    %cst_120 = arith.constant dense<0.000000e+00> : vector<4xf32>
    %741 = vector.multi_reduction <add>, %740, %cst_120 [1] : vector<4x8xf32> to vector<4xf32>
    %742 = vector.shape_cast %741 : vector<4xf32> to vector<4x1xf32>
    %743 = arith.mulf %727, %65 : vector<4x8xf32>
    %cst_121 = arith.constant dense<0.000000e+00> : vector<4xf32>
    %744 = vector.multi_reduction <add>, %743, %cst_121 [1] : vector<4x8xf32> to vector<4xf32>
    %745 = vector.shape_cast %744 : vector<4xf32> to vector<4x1xf32>
    %746 = arith.mulf %727, %66 : vector<4x8xf32>
    %cst_122 = arith.constant dense<0.000000e+00> : vector<4xf32>
    %747 = vector.multi_reduction <add>, %746, %cst_122 [1] : vector<4x8xf32> to vector<4xf32>
    %748 = vector.shape_cast %747 : vector<4xf32> to vector<4x1xf32>
    %749 = arith.mulf %727, %67 : vector<4x8xf32>
    %cst_123 = arith.constant dense<0.000000e+00> : vector<4xf32>
    %750 = vector.multi_reduction <add>, %749, %cst_123 [1] : vector<4x8xf32> to vector<4xf32>
    %751 = vector.shape_cast %750 : vector<4xf32> to vector<4x1xf32>
    %752 = arith.maximumf %730, %733 : vector<4x1xf32>
    %753 = arith.maximumf %752, %736 : vector<4x1xf32>
    %754 = arith.maximumf %753, %739 : vector<4x1xf32>
    %755 = arith.maximumf %754, %742 : vector<4x1xf32>
    %756 = arith.maximumf %755, %745 : vector<4x1xf32>
    %757 = arith.maximumf %756, %748 : vector<4x1xf32>
    %758 = arith.maximumf %757, %751 : vector<4x1xf32>
    %759 = arith.subf %730, %758 : vector<4x1xf32>
    %760 = math.exp %759 : vector<4x1xf32>
    %761 = arith.subf %733, %758 : vector<4x1xf32>
    %762 = math.exp %761 : vector<4x1xf32>
    %763 = arith.subf %736, %758 : vector<4x1xf32>
    %764 = math.exp %763 : vector<4x1xf32>
    %765 = arith.subf %739, %758 : vector<4x1xf32>
    %766 = math.exp %765 : vector<4x1xf32>
    %767 = arith.subf %742, %758 : vector<4x1xf32>
    %768 = math.exp %767 : vector<4x1xf32>
    %769 = arith.subf %745, %758 : vector<4x1xf32>
    %770 = math.exp %769 : vector<4x1xf32>
    %771 = arith.subf %748, %758 : vector<4x1xf32>
    %772 = math.exp %771 : vector<4x1xf32>
    %773 = arith.subf %751, %758 : vector<4x1xf32>
    %774 = math.exp %773 : vector<4x1xf32>
    %775 = arith.addf %760, %762 : vector<4x1xf32>
    %776 = arith.addf %775, %764 : vector<4x1xf32>
    %777 = arith.addf %776, %766 : vector<4x1xf32>
    %778 = arith.addf %777, %768 : vector<4x1xf32>
    %779 = arith.addf %778, %770 : vector<4x1xf32>
    %780 = arith.addf %779, %772 : vector<4x1xf32>
    %781 = arith.addf %780, %774 : vector<4x1xf32>
    %782 = tpu.reciprocal %781 {approx = true} : vector<4x1xf32> -> vector<4x1xf32>
    %cst_124 = arith.constant 0.000000e+00 : f32
    %783 = vector.broadcast %cst_124 : f32 to vector<4x8xf32>
    %784 = arith.mulf %760, %782 : vector<4x1xf32>
    %785 = vector.broadcast %784 : vector<4x1xf32> to vector<4x8xf32>
    %786 = arith.mulf %785, %68 : vector<4x8xf32>
    %787 = arith.addf %783, %786 : vector<4x8xf32>
    %788 = arith.mulf %762, %782 : vector<4x1xf32>
    %789 = vector.broadcast %788 : vector<4x1xf32> to vector<4x8xf32>
    %790 = arith.mulf %789, %69 : vector<4x8xf32>
    %791 = arith.addf %787, %790 : vector<4x8xf32>
    %792 = arith.mulf %764, %782 : vector<4x1xf32>
    %793 = vector.broadcast %792 : vector<4x1xf32> to vector<4x8xf32>
    %794 = arith.mulf %793, %70 : vector<4x8xf32>
    %795 = arith.addf %791, %794 : vector<4x8xf32>
    %796 = arith.mulf %766, %782 : vector<4x1xf32>
    %797 = vector.broadcast %796 : vector<4x1xf32> to vector<4x8xf32>
    %798 = arith.mulf %797, %71 : vector<4x8xf32>
    %799 = arith.addf %795, %798 : vector<4x8xf32>
    %800 = arith.mulf %768, %782 : vector<4x1xf32>
    %801 = vector.broadcast %800 : vector<4x1xf32> to vector<4x8xf32>
    %802 = arith.mulf %801, %72 : vector<4x8xf32>
    %803 = arith.addf %799, %802 : vector<4x8xf32>
    %804 = arith.mulf %770, %782 : vector<4x1xf32>
    %805 = vector.broadcast %804 : vector<4x1xf32> to vector<4x8xf32>
    %806 = arith.mulf %805, %73 : vector<4x8xf32>
    %807 = arith.addf %803, %806 : vector<4x8xf32>
    %808 = arith.mulf %772, %782 : vector<4x1xf32>
    %809 = vector.broadcast %808 : vector<4x1xf32> to vector<4x8xf32>
    %810 = arith.mulf %809, %74 : vector<4x8xf32>
    %811 = arith.addf %807, %810 : vector<4x8xf32>
    %812 = arith.mulf %774, %782 : vector<4x1xf32>
    %813 = vector.broadcast %812 : vector<4x1xf32> to vector<4x8xf32>
    %814 = arith.mulf %813, %75 : vector<4x8xf32>
    %815 = arith.addf %811, %814 : vector<4x8xf32>
    %cst_125 = arith.constant dense<0.000000e+00> : vector<4x32xf32>
    %816 = tpu.matmul %815, %79, %cst_125 {dimension_numbers = #tpu.dot_dimension_numbers<[1], [0], [0], [1], [0, 0, 1, 1], [], []>} : vector<4x8xf32>, vector<8x32xf32>, vector<4x32xf32> -> vector<4x32xf32>
    %817 = arith.addf %725, %816 : vector<4x32xf32>
    %cst_126 = arith.constant 0.000000e+00 : f32
    %818 = vector.broadcast %cst_126 : f32 to vector<8x32xf32>
    %cst_127 = arith.constant dense<0.000000e+00> : vector<8x32xf32>
    %819 = tpu.matmul %24, %449, %cst_127 {dimension_numbers = #tpu.dot_dimension_numbers<[1], [0], [0], [1], [0, 0, 1, 1], [], []>} : vector<8x4xf32>, vector<4x32xf32>, vector<8x32xf32> -> vector<8x32xf32>
    %820 = arith.addf %818, %819 : vector<8x32xf32>
    %cst_128 = arith.constant dense<0.000000e+00> : vector<8x32xf32>
    %821 = tpu.matmul %31, %817, %cst_128 {dimension_numbers = #tpu.dot_dimension_numbers<[1], [0], [0], [1], [0, 0, 1, 1], [], []>} : vector<8x4xf32>, vector<4x32xf32>, vector<8x32xf32> -> vector<8x32xf32>
    %822 = arith.addf %820, %821 : vector<8x32xf32>
    %823 = vector.broadcast %35 : vector<1x32xf32> to vector<8x32xf32>
    %824 = arith.addf %822, %823 : vector<8x32xf32>
    %825 = arith.addf %824, %46 : vector<8x32xf32>
    %cst_129 = arith.constant dense<0.000000e+00> : vector<8xf32>
    %826 = vector.multi_reduction <add>, %825, %cst_129 [1] : vector<8x32xf32> to vector<8xf32>
    %827 = vector.shape_cast %826 : vector<8xf32> to vector<8x1xf32>
    %cst_130 = arith.constant 3.200000e+01 : f32
    %828 = vector.broadcast %cst_130 : f32 to vector<8x1xf32>
    %829 = arith.divf %827, %828 : vector<8x1xf32>
    %830 = vector.broadcast %829 : vector<8x1xf32> to vector<8x32xf32>
    %831 = arith.subf %825, %830 : vector<8x32xf32>
    %832 = arith.mulf %831, %831 : vector<8x32xf32>
    %cst_131 = arith.constant dense<0.000000e+00> : vector<8xf32>
    %833 = vector.multi_reduction <add>, %832, %cst_131 [1] : vector<8x32xf32> to vector<8xf32>
    %834 = vector.shape_cast %833 : vector<8xf32> to vector<8x1xf32>
    %cst_132 = arith.constant 3.200000e+01 : f32
    %835 = vector.broadcast %cst_132 : f32 to vector<8x1xf32>
    %836 = arith.divf %834, %835 : vector<8x1xf32>
    %837 = vector.broadcast %829 : vector<8x1xf32> to vector<8x32xf32>
    %838 = arith.subf %825, %837 : vector<8x32xf32>
    %cst_133 = arith.constant 9.99999974E-6 : f32
    %839 = vector.broadcast %cst_133 : f32 to vector<8x1xf32>
    %840 = arith.addf %836, %839 : vector<8x1xf32>
    %841 = math.rsqrt %840 : vector<8x1xf32>
    %842 = vector.broadcast %841 : vector<8x1xf32> to vector<8x32xf32>
    %843 = arith.mulf %838, %842 : vector<8x32xf32>
    %844 = vector.broadcast %36 : vector<1x32xf32> to vector<8x32xf32>
    %845 = arith.mulf %843, %844 : vector<8x32xf32>
    %846 = vector.broadcast %37 : vector<1x32xf32> to vector<8x32xf32>
    %847 = arith.addf %845, %846 : vector<8x32xf32>
    %cst_134 = arith.constant dense<0.000000e+00> : vector<8x64xf32>
    %848 = tpu.matmul %847, %38, %cst_134 {dimension_numbers = #tpu.dot_dimension_numbers<[1], [0], [0], [1], [0, 0, 1, 1], [], []>} : vector<8x32xf32>, vector<32x64xf32>, vector<8x64xf32> -> vector<8x64xf32>
    %849 = vector.broadcast %39 : vector<1x64xf32> to vector<8x64xf32>
    %850 = arith.addf %848, %849 : vector<8x64xf32>
    %cst_135 = arith.constant 0.000000e+00 : f32
    %851 = vector.broadcast %cst_135 : f32 to vector<8x64xf32>
    %852 = arith.maximumf %850, %851 : vector<8x64xf32>
    %cst_136 = arith.constant dense<0.000000e+00> : vector<8x32xf32>
    %853 = tpu.matmul %852, %40, %cst_136 {dimension_numbers = #tpu.dot_dimension_numbers<[1], [0], [0], [1], [0, 0, 1, 1], [], []>} : vector<8x64xf32>, vector<64x32xf32>, vector<8x32xf32> -> vector<8x32xf32>
    %854 = vector.broadcast %41 : vector<1x32xf32> to vector<8x32xf32>
    %855 = arith.addf %853, %854 : vector<8x32xf32>
    %856 = arith.addf %855, %847 : vector<8x32xf32>
    %cst_137 = arith.constant dense<0.000000e+00> : vector<8xf32>
    %857 = vector.multi_reduction <add>, %856, %cst_137 [1] : vector<8x32xf32> to vector<8xf32>
    %858 = vector.shape_cast %857 : vector<8xf32> to vector<8x1xf32>
    %cst_138 = arith.constant 3.200000e+01 : f32
    %859 = vector.broadcast %cst_138 : f32 to vector<8x1xf32>
    %860 = arith.divf %858, %859 : vector<8x1xf32>
    %861 = vector.broadcast %860 : vector<8x1xf32> to vector<8x32xf32>
    %862 = arith.subf %856, %861 : vector<8x32xf32>
    %863 = arith.mulf %862, %862 : vector<8x32xf32>
    %cst_139 = arith.constant dense<0.000000e+00> : vector<8xf32>
    %864 = vector.multi_reduction <add>, %863, %cst_139 [1] : vector<8x32xf32> to vector<8xf32>
    %865 = vector.shape_cast %864 : vector<8xf32> to vector<8x1xf32>
    %cst_140 = arith.constant 3.200000e+01 : f32
    %866 = vector.broadcast %cst_140 : f32 to vector<8x1xf32>
    %867 = arith.divf %865, %866 : vector<8x1xf32>
    %868 = vector.broadcast %860 : vector<8x1xf32> to vector<8x32xf32>
    %869 = arith.subf %856, %868 : vector<8x32xf32>
    %cst_141 = arith.constant 9.99999974E-6 : f32
    %870 = vector.broadcast %cst_141 : f32 to vector<8x1xf32>
    %871 = arith.addf %867, %870 : vector<8x1xf32>
    %872 = math.rsqrt %871 : vector<8x1xf32>
    %873 = vector.broadcast %872 : vector<8x1xf32> to vector<8x32xf32>
    %874 = arith.mulf %869, %873 : vector<8x32xf32>
    %875 = vector.broadcast %42 : vector<1x32xf32> to vector<8x32xf32>
    %876 = arith.mulf %874, %875 : vector<8x32xf32>
    %877 = vector.broadcast %43 : vector<1x32xf32> to vector<8x32xf32>
    %878 = arith.addf %876, %877 : vector<8x32xf32>
    %cst_142 = arith.constant dense<0.000000e+00> : vector<8x96xf32>
    %879 = tpu.matmul %878, %32, %cst_142 {dimension_numbers = #tpu.dot_dimension_numbers<[1], [0], [0], [1], [0, 0, 1, 1], [], []>} : vector<8x32xf32>, vector<32x96xf32>, vector<8x96xf32> -> vector<8x96xf32>
    %880 = vector.broadcast %33 : vector<1x96xf32> to vector<8x96xf32>
    %881 = arith.addf %879, %880 : vector<8x96xf32>
    %cst_143 = arith.constant dense<0.000000e+00> : vector<4x96xf32>
    %882 = tpu.matmul %8, %881, %cst_143 {dimension_numbers = #tpu.dot_dimension_numbers<[1], [0], [0], [1], [0, 0, 1, 1], [], []>} : vector<4x8xf32>, vector<8x96xf32>, vector<4x96xf32> -> vector<4x96xf32>
    %cst_144 = arith.constant dense<0.000000e+00> : vector<4x96xf32>
    %883 = tpu.matmul %15, %881, %cst_144 {dimension_numbers = #tpu.dot_dimension_numbers<[1], [0], [0], [1], [0, 0, 1, 1], [], []>} : vector<4x8xf32>, vector<8x96xf32>, vector<4x96xf32> -> vector<4x96xf32>
    %884 = vector.extract_strided_slice %882 {offsets = [0, 0], sizes = [4, 8], strides = [1, 1]} : vector<4x96xf32> to vector<4x8xf32>
    %885 = vector.extract_strided_slice %882 {offsets = [0, 8], sizes = [4, 8], strides = [1, 1]} : vector<4x96xf32> to vector<4x8xf32>
    %886 = vector.extract_strided_slice %882 {offsets = [0, 16], sizes = [4, 8], strides = [1, 1]} : vector<4x96xf32> to vector<4x8xf32>
    %887 = vector.extract_strided_slice %882 {offsets = [0, 24], sizes = [4, 8], strides = [1, 1]} : vector<4x96xf32> to vector<4x8xf32>
    %888 = vector.extract_strided_slice %883 {offsets = [0, 0], sizes = [4, 8], strides = [1, 1]} : vector<4x96xf32> to vector<4x8xf32>
    %889 = vector.extract_strided_slice %883 {offsets = [0, 8], sizes = [4, 8], strides = [1, 1]} : vector<4x96xf32> to vector<4x8xf32>
    %890 = vector.extract_strided_slice %883 {offsets = [0, 16], sizes = [4, 8], strides = [1, 1]} : vector<4x96xf32> to vector<4x8xf32>
    %891 = vector.extract_strided_slice %883 {offsets = [0, 24], sizes = [4, 8], strides = [1, 1]} : vector<4x96xf32> to vector<4x8xf32>
    %892 = vector.extract_strided_slice %882 {offsets = [0, 32], sizes = [4, 8], strides = [1, 1]} : vector<4x96xf32> to vector<4x8xf32>
    %893 = vector.extract_strided_slice %882 {offsets = [0, 40], sizes = [4, 8], strides = [1, 1]} : vector<4x96xf32> to vector<4x8xf32>
    %894 = vector.extract_strided_slice %882 {offsets = [0, 48], sizes = [4, 8], strides = [1, 1]} : vector<4x96xf32> to vector<4x8xf32>
    %895 = vector.extract_strided_slice %882 {offsets = [0, 56], sizes = [4, 8], strides = [1, 1]} : vector<4x96xf32> to vector<4x8xf32>
    %896 = vector.extract_strided_slice %883 {offsets = [0, 32], sizes = [4, 8], strides = [1, 1]} : vector<4x96xf32> to vector<4x8xf32>
    %897 = vector.extract_strided_slice %883 {offsets = [0, 40], sizes = [4, 8], strides = [1, 1]} : vector<4x96xf32> to vector<4x8xf32>
    %898 = vector.extract_strided_slice %883 {offsets = [0, 48], sizes = [4, 8], strides = [1, 1]} : vector<4x96xf32> to vector<4x8xf32>
    %899 = vector.extract_strided_slice %883 {offsets = [0, 56], sizes = [4, 8], strides = [1, 1]} : vector<4x96xf32> to vector<4x8xf32>
    %900 = vector.extract_strided_slice %882 {offsets = [0, 64], sizes = [4, 8], strides = [1, 1]} : vector<4x96xf32> to vector<4x8xf32>
    %901 = vector.extract_strided_slice %882 {offsets = [0, 72], sizes = [4, 8], strides = [1, 1]} : vector<4x96xf32> to vector<4x8xf32>
    %902 = vector.extract_strided_slice %882 {offsets = [0, 80], sizes = [4, 8], strides = [1, 1]} : vector<4x96xf32> to vector<4x8xf32>
    %903 = vector.extract_strided_slice %882 {offsets = [0, 88], sizes = [4, 8], strides = [1, 1]} : vector<4x96xf32> to vector<4x8xf32>
    %904 = vector.extract_strided_slice %883 {offsets = [0, 64], sizes = [4, 8], strides = [1, 1]} : vector<4x96xf32> to vector<4x8xf32>
    %905 = vector.extract_strided_slice %883 {offsets = [0, 72], sizes = [4, 8], strides = [1, 1]} : vector<4x96xf32> to vector<4x8xf32>
    %906 = vector.extract_strided_slice %883 {offsets = [0, 80], sizes = [4, 8], strides = [1, 1]} : vector<4x96xf32> to vector<4x8xf32>
    %907 = vector.extract_strided_slice %883 {offsets = [0, 88], sizes = [4, 8], strides = [1, 1]} : vector<4x96xf32> to vector<4x8xf32>
    %908 = vector.extract_strided_slice %34 {offsets = [0, 0], sizes = [8, 32], strides = [1, 1]} : vector<32x32xf32> to vector<8x32xf32>
    %909 = vector.extract_strided_slice %34 {offsets = [8, 0], sizes = [8, 32], strides = [1, 1]} : vector<32x32xf32> to vector<8x32xf32>
    %910 = vector.extract_strided_slice %34 {offsets = [16, 0], sizes = [8, 32], strides = [1, 1]} : vector<32x32xf32> to vector<8x32xf32>
    %911 = vector.extract_strided_slice %34 {offsets = [24, 0], sizes = [8, 32], strides = [1, 1]} : vector<32x32xf32> to vector<8x32xf32>
    %cst_145 = arith.constant 0.000000e+00 : f32
    %912 = vector.broadcast %cst_145 : f32 to vector<4x32xf32>
    %cst_146 = arith.constant 0.000000e+00 : f32
    %913 = vector.broadcast %cst_146 : f32 to vector<4x32xf32>
    %cst_147 = arith.constant 0.353553385 : f32
    %914 = vector.broadcast %cst_147 : f32 to vector<4x8xf32>
    %915 = arith.mulf %884, %914 : vector<4x8xf32>
    %916 = arith.mulf %915, %892 : vector<4x8xf32>
    %cst_148 = arith.constant dense<0.000000e+00> : vector<4xf32>
    %917 = vector.multi_reduction <add>, %916, %cst_148 [1] : vector<4x8xf32> to vector<4xf32>
    %918 = vector.shape_cast %917 : vector<4xf32> to vector<4x1xf32>
    %919 = arith.mulf %915, %893 : vector<4x8xf32>
    %cst_149 = arith.constant dense<0.000000e+00> : vector<4xf32>
    %920 = vector.multi_reduction <add>, %919, %cst_149 [1] : vector<4x8xf32> to vector<4xf32>
    %921 = vector.shape_cast %920 : vector<4xf32> to vector<4x1xf32>
    %922 = arith.mulf %915, %894 : vector<4x8xf32>
    %cst_150 = arith.constant dense<0.000000e+00> : vector<4xf32>
    %923 = vector.multi_reduction <add>, %922, %cst_150 [1] : vector<4x8xf32> to vector<4xf32>
    %924 = vector.shape_cast %923 : vector<4xf32> to vector<4x1xf32>
    %925 = arith.mulf %915, %895 : vector<4x8xf32>
    %cst_151 = arith.constant dense<0.000000e+00> : vector<4xf32>
    %926 = vector.multi_reduction <add>, %925, %cst_151 [1] : vector<4x8xf32> to vector<4xf32>
    %927 = vector.shape_cast %926 : vector<4xf32> to vector<4x1xf32>
    %928 = arith.mulf %915, %896 : vector<4x8xf32>
    %cst_152 = arith.constant dense<0.000000e+00> : vector<4xf32>
    %929 = vector.multi_reduction <add>, %928, %cst_152 [1] : vector<4x8xf32> to vector<4xf32>
    %930 = vector.shape_cast %929 : vector<4xf32> to vector<4x1xf32>
    %931 = arith.mulf %915, %897 : vector<4x8xf32>
    %cst_153 = arith.constant dense<0.000000e+00> : vector<4xf32>
    %932 = vector.multi_reduction <add>, %931, %cst_153 [1] : vector<4x8xf32> to vector<4xf32>
    %933 = vector.shape_cast %932 : vector<4xf32> to vector<4x1xf32>
    %934 = arith.mulf %915, %898 : vector<4x8xf32>
    %cst_154 = arith.constant dense<0.000000e+00> : vector<4xf32>
    %935 = vector.multi_reduction <add>, %934, %cst_154 [1] : vector<4x8xf32> to vector<4xf32>
    %936 = vector.shape_cast %935 : vector<4xf32> to vector<4x1xf32>
    %937 = arith.mulf %915, %899 : vector<4x8xf32>
    %cst_155 = arith.constant dense<0.000000e+00> : vector<4xf32>
    %938 = vector.multi_reduction <add>, %937, %cst_155 [1] : vector<4x8xf32> to vector<4xf32>
    %939 = vector.shape_cast %938 : vector<4xf32> to vector<4x1xf32>
    %940 = arith.maximumf %918, %921 : vector<4x1xf32>
    %941 = arith.maximumf %940, %924 : vector<4x1xf32>
    %942 = arith.maximumf %941, %927 : vector<4x1xf32>
    %943 = arith.maximumf %942, %930 : vector<4x1xf32>
    %944 = arith.maximumf %943, %933 : vector<4x1xf32>
    %945 = arith.maximumf %944, %936 : vector<4x1xf32>
    %946 = arith.maximumf %945, %939 : vector<4x1xf32>
    %947 = arith.subf %918, %946 : vector<4x1xf32>
    %948 = math.exp %947 : vector<4x1xf32>
    %949 = arith.subf %921, %946 : vector<4x1xf32>
    %950 = math.exp %949 : vector<4x1xf32>
    %951 = arith.subf %924, %946 : vector<4x1xf32>
    %952 = math.exp %951 : vector<4x1xf32>
    %953 = arith.subf %927, %946 : vector<4x1xf32>
    %954 = math.exp %953 : vector<4x1xf32>
    %955 = arith.subf %930, %946 : vector<4x1xf32>
    %956 = math.exp %955 : vector<4x1xf32>
    %957 = arith.subf %933, %946 : vector<4x1xf32>
    %958 = math.exp %957 : vector<4x1xf32>
    %959 = arith.subf %936, %946 : vector<4x1xf32>
    %960 = math.exp %959 : vector<4x1xf32>
    %961 = arith.subf %939, %946 : vector<4x1xf32>
    %962 = math.exp %961 : vector<4x1xf32>
    %963 = arith.addf %948, %950 : vector<4x1xf32>
    %964 = arith.addf %963, %952 : vector<4x1xf32>
    %965 = arith.addf %964, %954 : vector<4x1xf32>
    %966 = arith.addf %965, %956 : vector<4x1xf32>
    %967 = arith.addf %966, %958 : vector<4x1xf32>
    %968 = arith.addf %967, %960 : vector<4x1xf32>
    %969 = arith.addf %968, %962 : vector<4x1xf32>
    %970 = tpu.reciprocal %969 {approx = true} : vector<4x1xf32> -> vector<4x1xf32>
    %cst_156 = arith.constant 0.000000e+00 : f32
    %971 = vector.broadcast %cst_156 : f32 to vector<4x8xf32>
    %972 = arith.mulf %948, %970 : vector<4x1xf32>
    %973 = vector.broadcast %972 : vector<4x1xf32> to vector<4x8xf32>
    %974 = arith.mulf %973, %900 : vector<4x8xf32>
    %975 = arith.addf %971, %974 : vector<4x8xf32>
    %976 = arith.mulf %950, %970 : vector<4x1xf32>
    %977 = vector.broadcast %976 : vector<4x1xf32> to vector<4x8xf32>
    %978 = arith.mulf %977, %901 : vector<4x8xf32>
    %979 = arith.addf %975, %978 : vector<4x8xf32>
    %980 = arith.mulf %952, %970 : vector<4x1xf32>
    %981 = vector.broadcast %980 : vector<4x1xf32> to vector<4x8xf32>
    %982 = arith.mulf %981, %902 : vector<4x8xf32>
    %983 = arith.addf %979, %982 : vector<4x8xf32>
    %984 = arith.mulf %954, %970 : vector<4x1xf32>
    %985 = vector.broadcast %984 : vector<4x1xf32> to vector<4x8xf32>
    %986 = arith.mulf %985, %903 : vector<4x8xf32>
    %987 = arith.addf %983, %986 : vector<4x8xf32>
    %988 = arith.mulf %956, %970 : vector<4x1xf32>
    %989 = vector.broadcast %988 : vector<4x1xf32> to vector<4x8xf32>
    %990 = arith.mulf %989, %904 : vector<4x8xf32>
    %991 = arith.addf %987, %990 : vector<4x8xf32>
    %992 = arith.mulf %958, %970 : vector<4x1xf32>
    %993 = vector.broadcast %992 : vector<4x1xf32> to vector<4x8xf32>
    %994 = arith.mulf %993, %905 : vector<4x8xf32>
    %995 = arith.addf %991, %994 : vector<4x8xf32>
    %996 = arith.mulf %960, %970 : vector<4x1xf32>
    %997 = vector.broadcast %996 : vector<4x1xf32> to vector<4x8xf32>
    %998 = arith.mulf %997, %906 : vector<4x8xf32>
    %999 = arith.addf %995, %998 : vector<4x8xf32>
    %1000 = arith.mulf %962, %970 : vector<4x1xf32>
    %1001 = vector.broadcast %1000 : vector<4x1xf32> to vector<4x8xf32>
    %1002 = arith.mulf %1001, %907 : vector<4x8xf32>
    %1003 = arith.addf %999, %1002 : vector<4x8xf32>
    %cst_157 = arith.constant dense<0.000000e+00> : vector<4x32xf32>
    %1004 = tpu.matmul %1003, %908, %cst_157 {dimension_numbers = #tpu.dot_dimension_numbers<[1], [0], [0], [1], [0, 0, 1, 1], [], []>} : vector<4x8xf32>, vector<8x32xf32>, vector<4x32xf32> -> vector<4x32xf32>
    %1005 = arith.addf %912, %1004 : vector<4x32xf32>
    %cst_158 = arith.constant 0.353553385 : f32
    %1006 = vector.broadcast %cst_158 : f32 to vector<4x8xf32>
    %1007 = arith.mulf %885, %1006 : vector<4x8xf32>
    %1008 = arith.mulf %1007, %892 : vector<4x8xf32>
    %cst_159 = arith.constant dense<0.000000e+00> : vector<4xf32>
    %1009 = vector.multi_reduction <add>, %1008, %cst_159 [1] : vector<4x8xf32> to vector<4xf32>
    %1010 = vector.shape_cast %1009 : vector<4xf32> to vector<4x1xf32>
    %1011 = arith.mulf %1007, %893 : vector<4x8xf32>
    %cst_160 = arith.constant dense<0.000000e+00> : vector<4xf32>
    %1012 = vector.multi_reduction <add>, %1011, %cst_160 [1] : vector<4x8xf32> to vector<4xf32>
    %1013 = vector.shape_cast %1012 : vector<4xf32> to vector<4x1xf32>
    %1014 = arith.mulf %1007, %894 : vector<4x8xf32>
    %cst_161 = arith.constant dense<0.000000e+00> : vector<4xf32>
    %1015 = vector.multi_reduction <add>, %1014, %cst_161 [1] : vector<4x8xf32> to vector<4xf32>
    %1016 = vector.shape_cast %1015 : vector<4xf32> to vector<4x1xf32>
    %1017 = arith.mulf %1007, %895 : vector<4x8xf32>
    %cst_162 = arith.constant dense<0.000000e+00> : vector<4xf32>
    %1018 = vector.multi_reduction <add>, %1017, %cst_162 [1] : vector<4x8xf32> to vector<4xf32>
    %1019 = vector.shape_cast %1018 : vector<4xf32> to vector<4x1xf32>
    %1020 = arith.mulf %1007, %896 : vector<4x8xf32>
    %cst_163 = arith.constant dense<0.000000e+00> : vector<4xf32>
    %1021 = vector.multi_reduction <add>, %1020, %cst_163 [1] : vector<4x8xf32> to vector<4xf32>
    %1022 = vector.shape_cast %1021 : vector<4xf32> to vector<4x1xf32>
    %1023 = arith.mulf %1007, %897 : vector<4x8xf32>
    %cst_164 = arith.constant dense<0.000000e+00> : vector<4xf32>
    %1024 = vector.multi_reduction <add>, %1023, %cst_164 [1] : vector<4x8xf32> to vector<4xf32>
    %1025 = vector.shape_cast %1024 : vector<4xf32> to vector<4x1xf32>
    %1026 = arith.mulf %1007, %898 : vector<4x8xf32>
    %cst_165 = arith.constant dense<0.000000e+00> : vector<4xf32>
    %1027 = vector.multi_reduction <add>, %1026, %cst_165 [1] : vector<4x8xf32> to vector<4xf32>
    %1028 = vector.shape_cast %1027 : vector<4xf32> to vector<4x1xf32>
    %1029 = arith.mulf %1007, %899 : vector<4x8xf32>
    %cst_166 = arith.constant dense<0.000000e+00> : vector<4xf32>
    %1030 = vector.multi_reduction <add>, %1029, %cst_166 [1] : vector<4x8xf32> to vector<4xf32>
    %1031 = vector.shape_cast %1030 : vector<4xf32> to vector<4x1xf32>
    %1032 = arith.maximumf %1010, %1013 : vector<4x1xf32>
    %1033 = arith.maximumf %1032, %1016 : vector<4x1xf32>
    %1034 = arith.maximumf %1033, %1019 : vector<4x1xf32>
    %1035 = arith.maximumf %1034, %1022 : vector<4x1xf32>
    %1036 = arith.maximumf %1035, %1025 : vector<4x1xf32>
    %1037 = arith.maximumf %1036, %1028 : vector<4x1xf32>
    %1038 = arith.maximumf %1037, %1031 : vector<4x1xf32>
    %1039 = arith.subf %1010, %1038 : vector<4x1xf32>
    %1040 = math.exp %1039 : vector<4x1xf32>
    %1041 = arith.subf %1013, %1038 : vector<4x1xf32>
    %1042 = math.exp %1041 : vector<4x1xf32>
    %1043 = arith.subf %1016, %1038 : vector<4x1xf32>
    %1044 = math.exp %1043 : vector<4x1xf32>
    %1045 = arith.subf %1019, %1038 : vector<4x1xf32>
    %1046 = math.exp %1045 : vector<4x1xf32>
    %1047 = arith.subf %1022, %1038 : vector<4x1xf32>
    %1048 = math.exp %1047 : vector<4x1xf32>
    %1049 = arith.subf %1025, %1038 : vector<4x1xf32>
    %1050 = math.exp %1049 : vector<4x1xf32>
    %1051 = arith.subf %1028, %1038 : vector<4x1xf32>
    %1052 = math.exp %1051 : vector<4x1xf32>
    %1053 = arith.subf %1031, %1038 : vector<4x1xf32>
    %1054 = math.exp %1053 : vector<4x1xf32>
    %1055 = arith.addf %1040, %1042 : vector<4x1xf32>
    %1056 = arith.addf %1055, %1044 : vector<4x1xf32>
    %1057 = arith.addf %1056, %1046 : vector<4x1xf32>
    %1058 = arith.addf %1057, %1048 : vector<4x1xf32>
    %1059 = arith.addf %1058, %1050 : vector<4x1xf32>
    %1060 = arith.addf %1059, %1052 : vector<4x1xf32>
    %1061 = arith.addf %1060, %1054 : vector<4x1xf32>
    %1062 = tpu.reciprocal %1061 {approx = true} : vector<4x1xf32> -> vector<4x1xf32>
    %cst_167 = arith.constant 0.000000e+00 : f32
    %1063 = vector.broadcast %cst_167 : f32 to vector<4x8xf32>
    %1064 = arith.mulf %1040, %1062 : vector<4x1xf32>
    %1065 = vector.broadcast %1064 : vector<4x1xf32> to vector<4x8xf32>
    %1066 = arith.mulf %1065, %900 : vector<4x8xf32>
    %1067 = arith.addf %1063, %1066 : vector<4x8xf32>
    %1068 = arith.mulf %1042, %1062 : vector<4x1xf32>
    %1069 = vector.broadcast %1068 : vector<4x1xf32> to vector<4x8xf32>
    %1070 = arith.mulf %1069, %901 : vector<4x8xf32>
    %1071 = arith.addf %1067, %1070 : vector<4x8xf32>
    %1072 = arith.mulf %1044, %1062 : vector<4x1xf32>
    %1073 = vector.broadcast %1072 : vector<4x1xf32> to vector<4x8xf32>
    %1074 = arith.mulf %1073, %902 : vector<4x8xf32>
    %1075 = arith.addf %1071, %1074 : vector<4x8xf32>
    %1076 = arith.mulf %1046, %1062 : vector<4x1xf32>
    %1077 = vector.broadcast %1076 : vector<4x1xf32> to vector<4x8xf32>
    %1078 = arith.mulf %1077, %903 : vector<4x8xf32>
    %1079 = arith.addf %1075, %1078 : vector<4x8xf32>
    %1080 = arith.mulf %1048, %1062 : vector<4x1xf32>
    %1081 = vector.broadcast %1080 : vector<4x1xf32> to vector<4x8xf32>
    %1082 = arith.mulf %1081, %904 : vector<4x8xf32>
    %1083 = arith.addf %1079, %1082 : vector<4x8xf32>
    %1084 = arith.mulf %1050, %1062 : vector<4x1xf32>
    %1085 = vector.broadcast %1084 : vector<4x1xf32> to vector<4x8xf32>
    %1086 = arith.mulf %1085, %905 : vector<4x8xf32>
    %1087 = arith.addf %1083, %1086 : vector<4x8xf32>
    %1088 = arith.mulf %1052, %1062 : vector<4x1xf32>
    %1089 = vector.broadcast %1088 : vector<4x1xf32> to vector<4x8xf32>
    %1090 = arith.mulf %1089, %906 : vector<4x8xf32>
    %1091 = arith.addf %1087, %1090 : vector<4x8xf32>
    %1092 = arith.mulf %1054, %1062 : vector<4x1xf32>
    %1093 = vector.broadcast %1092 : vector<4x1xf32> to vector<4x8xf32>
    %1094 = arith.mulf %1093, %907 : vector<4x8xf32>
    %1095 = arith.addf %1091, %1094 : vector<4x8xf32>
    %cst_168 = arith.constant dense<0.000000e+00> : vector<4x32xf32>
    %1096 = tpu.matmul %1095, %909, %cst_168 {dimension_numbers = #tpu.dot_dimension_numbers<[1], [0], [0], [1], [0, 0, 1, 1], [], []>} : vector<4x8xf32>, vector<8x32xf32>, vector<4x32xf32> -> vector<4x32xf32>
    %1097 = arith.addf %1005, %1096 : vector<4x32xf32>
    %cst_169 = arith.constant 0.353553385 : f32
    %1098 = vector.broadcast %cst_169 : f32 to vector<4x8xf32>
    %1099 = arith.mulf %886, %1098 : vector<4x8xf32>
    %1100 = arith.mulf %1099, %892 : vector<4x8xf32>
    %cst_170 = arith.constant dense<0.000000e+00> : vector<4xf32>
    %1101 = vector.multi_reduction <add>, %1100, %cst_170 [1] : vector<4x8xf32> to vector<4xf32>
    %1102 = vector.shape_cast %1101 : vector<4xf32> to vector<4x1xf32>
    %1103 = arith.mulf %1099, %893 : vector<4x8xf32>
    %cst_171 = arith.constant dense<0.000000e+00> : vector<4xf32>
    %1104 = vector.multi_reduction <add>, %1103, %cst_171 [1] : vector<4x8xf32> to vector<4xf32>
    %1105 = vector.shape_cast %1104 : vector<4xf32> to vector<4x1xf32>
    %1106 = arith.mulf %1099, %894 : vector<4x8xf32>
    %cst_172 = arith.constant dense<0.000000e+00> : vector<4xf32>
    %1107 = vector.multi_reduction <add>, %1106, %cst_172 [1] : vector<4x8xf32> to vector<4xf32>
    %1108 = vector.shape_cast %1107 : vector<4xf32> to vector<4x1xf32>
    %1109 = arith.mulf %1099, %895 : vector<4x8xf32>
    %cst_173 = arith.constant dense<0.000000e+00> : vector<4xf32>
    %1110 = vector.multi_reduction <add>, %1109, %cst_173 [1] : vector<4x8xf32> to vector<4xf32>
    %1111 = vector.shape_cast %1110 : vector<4xf32> to vector<4x1xf32>
    %1112 = arith.mulf %1099, %896 : vector<4x8xf32>
    %cst_174 = arith.constant dense<0.000000e+00> : vector<4xf32>
    %1113 = vector.multi_reduction <add>, %1112, %cst_174 [1] : vector<4x8xf32> to vector<4xf32>
    %1114 = vector.shape_cast %1113 : vector<4xf32> to vector<4x1xf32>
    %1115 = arith.mulf %1099, %897 : vector<4x8xf32>
    %cst_175 = arith.constant dense<0.000000e+00> : vector<4xf32>
    %1116 = vector.multi_reduction <add>, %1115, %cst_175 [1] : vector<4x8xf32> to vector<4xf32>
    %1117 = vector.shape_cast %1116 : vector<4xf32> to vector<4x1xf32>
    %1118 = arith.mulf %1099, %898 : vector<4x8xf32>
    %cst_176 = arith.constant dense<0.000000e+00> : vector<4xf32>
    %1119 = vector.multi_reduction <add>, %1118, %cst_176 [1] : vector<4x8xf32> to vector<4xf32>
    %1120 = vector.shape_cast %1119 : vector<4xf32> to vector<4x1xf32>
    %1121 = arith.mulf %1099, %899 : vector<4x8xf32>
    %cst_177 = arith.constant dense<0.000000e+00> : vector<4xf32>
    %1122 = vector.multi_reduction <add>, %1121, %cst_177 [1] : vector<4x8xf32> to vector<4xf32>
    %1123 = vector.shape_cast %1122 : vector<4xf32> to vector<4x1xf32>
    %1124 = arith.maximumf %1102, %1105 : vector<4x1xf32>
    %1125 = arith.maximumf %1124, %1108 : vector<4x1xf32>
    %1126 = arith.maximumf %1125, %1111 : vector<4x1xf32>
    %1127 = arith.maximumf %1126, %1114 : vector<4x1xf32>
    %1128 = arith.maximumf %1127, %1117 : vector<4x1xf32>
    %1129 = arith.maximumf %1128, %1120 : vector<4x1xf32>
    %1130 = arith.maximumf %1129, %1123 : vector<4x1xf32>
    %1131 = arith.subf %1102, %1130 : vector<4x1xf32>
    %1132 = math.exp %1131 : vector<4x1xf32>
    %1133 = arith.subf %1105, %1130 : vector<4x1xf32>
    %1134 = math.exp %1133 : vector<4x1xf32>
    %1135 = arith.subf %1108, %1130 : vector<4x1xf32>
    %1136 = math.exp %1135 : vector<4x1xf32>
    %1137 = arith.subf %1111, %1130 : vector<4x1xf32>
    %1138 = math.exp %1137 : vector<4x1xf32>
    %1139 = arith.subf %1114, %1130 : vector<4x1xf32>
    %1140 = math.exp %1139 : vector<4x1xf32>
    %1141 = arith.subf %1117, %1130 : vector<4x1xf32>
    %1142 = math.exp %1141 : vector<4x1xf32>
    %1143 = arith.subf %1120, %1130 : vector<4x1xf32>
    %1144 = math.exp %1143 : vector<4x1xf32>
    %1145 = arith.subf %1123, %1130 : vector<4x1xf32>
    %1146 = math.exp %1145 : vector<4x1xf32>
    %1147 = arith.addf %1132, %1134 : vector<4x1xf32>
    %1148 = arith.addf %1147, %1136 : vector<4x1xf32>
    %1149 = arith.addf %1148, %1138 : vector<4x1xf32>
    %1150 = arith.addf %1149, %1140 : vector<4x1xf32>
    %1151 = arith.addf %1150, %1142 : vector<4x1xf32>
    %1152 = arith.addf %1151, %1144 : vector<4x1xf32>
    %1153 = arith.addf %1152, %1146 : vector<4x1xf32>
    %1154 = tpu.reciprocal %1153 {approx = true} : vector<4x1xf32> -> vector<4x1xf32>
    %cst_178 = arith.constant 0.000000e+00 : f32
    %1155 = vector.broadcast %cst_178 : f32 to vector<4x8xf32>
    %1156 = arith.mulf %1132, %1154 : vector<4x1xf32>
    %1157 = vector.broadcast %1156 : vector<4x1xf32> to vector<4x8xf32>
    %1158 = arith.mulf %1157, %900 : vector<4x8xf32>
    %1159 = arith.addf %1155, %1158 : vector<4x8xf32>
    %1160 = arith.mulf %1134, %1154 : vector<4x1xf32>
    %1161 = vector.broadcast %1160 : vector<4x1xf32> to vector<4x8xf32>
    %1162 = arith.mulf %1161, %901 : vector<4x8xf32>
    %1163 = arith.addf %1159, %1162 : vector<4x8xf32>
    %1164 = arith.mulf %1136, %1154 : vector<4x1xf32>
    %1165 = vector.broadcast %1164 : vector<4x1xf32> to vector<4x8xf32>
    %1166 = arith.mulf %1165, %902 : vector<4x8xf32>
    %1167 = arith.addf %1163, %1166 : vector<4x8xf32>
    %1168 = arith.mulf %1138, %1154 : vector<4x1xf32>
    %1169 = vector.broadcast %1168 : vector<4x1xf32> to vector<4x8xf32>
    %1170 = arith.mulf %1169, %903 : vector<4x8xf32>
    %1171 = arith.addf %1167, %1170 : vector<4x8xf32>
    %1172 = arith.mulf %1140, %1154 : vector<4x1xf32>
    %1173 = vector.broadcast %1172 : vector<4x1xf32> to vector<4x8xf32>
    %1174 = arith.mulf %1173, %904 : vector<4x8xf32>
    %1175 = arith.addf %1171, %1174 : vector<4x8xf32>
    %1176 = arith.mulf %1142, %1154 : vector<4x1xf32>
    %1177 = vector.broadcast %1176 : vector<4x1xf32> to vector<4x8xf32>
    %1178 = arith.mulf %1177, %905 : vector<4x8xf32>
    %1179 = arith.addf %1175, %1178 : vector<4x8xf32>
    %1180 = arith.mulf %1144, %1154 : vector<4x1xf32>
    %1181 = vector.broadcast %1180 : vector<4x1xf32> to vector<4x8xf32>
    %1182 = arith.mulf %1181, %906 : vector<4x8xf32>
    %1183 = arith.addf %1179, %1182 : vector<4x8xf32>
    %1184 = arith.mulf %1146, %1154 : vector<4x1xf32>
    %1185 = vector.broadcast %1184 : vector<4x1xf32> to vector<4x8xf32>
    %1186 = arith.mulf %1185, %907 : vector<4x8xf32>
    %1187 = arith.addf %1183, %1186 : vector<4x8xf32>
    %cst_179 = arith.constant dense<0.000000e+00> : vector<4x32xf32>
    %1188 = tpu.matmul %1187, %910, %cst_179 {dimension_numbers = #tpu.dot_dimension_numbers<[1], [0], [0], [1], [0, 0, 1, 1], [], []>} : vector<4x8xf32>, vector<8x32xf32>, vector<4x32xf32> -> vector<4x32xf32>
    %1189 = arith.addf %1097, %1188 : vector<4x32xf32>
    %cst_180 = arith.constant 0.353553385 : f32
    %1190 = vector.broadcast %cst_180 : f32 to vector<4x8xf32>
    %1191 = arith.mulf %887, %1190 : vector<4x8xf32>
    %1192 = arith.mulf %1191, %892 : vector<4x8xf32>
    %cst_181 = arith.constant dense<0.000000e+00> : vector<4xf32>
    %1193 = vector.multi_reduction <add>, %1192, %cst_181 [1] : vector<4x8xf32> to vector<4xf32>
    %1194 = vector.shape_cast %1193 : vector<4xf32> to vector<4x1xf32>
    %1195 = arith.mulf %1191, %893 : vector<4x8xf32>
    %cst_182 = arith.constant dense<0.000000e+00> : vector<4xf32>
    %1196 = vector.multi_reduction <add>, %1195, %cst_182 [1] : vector<4x8xf32> to vector<4xf32>
    %1197 = vector.shape_cast %1196 : vector<4xf32> to vector<4x1xf32>
    %1198 = arith.mulf %1191, %894 : vector<4x8xf32>
    %cst_183 = arith.constant dense<0.000000e+00> : vector<4xf32>
    %1199 = vector.multi_reduction <add>, %1198, %cst_183 [1] : vector<4x8xf32> to vector<4xf32>
    %1200 = vector.shape_cast %1199 : vector<4xf32> to vector<4x1xf32>
    %1201 = arith.mulf %1191, %895 : vector<4x8xf32>
    %cst_184 = arith.constant dense<0.000000e+00> : vector<4xf32>
    %1202 = vector.multi_reduction <add>, %1201, %cst_184 [1] : vector<4x8xf32> to vector<4xf32>
    %1203 = vector.shape_cast %1202 : vector<4xf32> to vector<4x1xf32>
    %1204 = arith.mulf %1191, %896 : vector<4x8xf32>
    %cst_185 = arith.constant dense<0.000000e+00> : vector<4xf32>
    %1205 = vector.multi_reduction <add>, %1204, %cst_185 [1] : vector<4x8xf32> to vector<4xf32>
    %1206 = vector.shape_cast %1205 : vector<4xf32> to vector<4x1xf32>
    %1207 = arith.mulf %1191, %897 : vector<4x8xf32>
    %cst_186 = arith.constant dense<0.000000e+00> : vector<4xf32>
    %1208 = vector.multi_reduction <add>, %1207, %cst_186 [1] : vector<4x8xf32> to vector<4xf32>
    %1209 = vector.shape_cast %1208 : vector<4xf32> to vector<4x1xf32>
    %1210 = arith.mulf %1191, %898 : vector<4x8xf32>
    %cst_187 = arith.constant dense<0.000000e+00> : vector<4xf32>
    %1211 = vector.multi_reduction <add>, %1210, %cst_187 [1] : vector<4x8xf32> to vector<4xf32>
    %1212 = vector.shape_cast %1211 : vector<4xf32> to vector<4x1xf32>
    %1213 = arith.mulf %1191, %899 : vector<4x8xf32>
    %cst_188 = arith.constant dense<0.000000e+00> : vector<4xf32>
    %1214 = vector.multi_reduction <add>, %1213, %cst_188 [1] : vector<4x8xf32> to vector<4xf32>
    %1215 = vector.shape_cast %1214 : vector<4xf32> to vector<4x1xf32>
    %1216 = arith.maximumf %1194, %1197 : vector<4x1xf32>
    %1217 = arith.maximumf %1216, %1200 : vector<4x1xf32>
    %1218 = arith.maximumf %1217, %1203 : vector<4x1xf32>
    %1219 = arith.maximumf %1218, %1206 : vector<4x1xf32>
    %1220 = arith.maximumf %1219, %1209 : vector<4x1xf32>
    %1221 = arith.maximumf %1220, %1212 : vector<4x1xf32>
    %1222 = arith.maximumf %1221, %1215 : vector<4x1xf32>
    %1223 = arith.subf %1194, %1222 : vector<4x1xf32>
    %1224 = math.exp %1223 : vector<4x1xf32>
    %1225 = arith.subf %1197, %1222 : vector<4x1xf32>
    %1226 = math.exp %1225 : vector<4x1xf32>
    %1227 = arith.subf %1200, %1222 : vector<4x1xf32>
    %1228 = math.exp %1227 : vector<4x1xf32>
    %1229 = arith.subf %1203, %1222 : vector<4x1xf32>
    %1230 = math.exp %1229 : vector<4x1xf32>
    %1231 = arith.subf %1206, %1222 : vector<4x1xf32>
    %1232 = math.exp %1231 : vector<4x1xf32>
    %1233 = arith.subf %1209, %1222 : vector<4x1xf32>
    %1234 = math.exp %1233 : vector<4x1xf32>
    %1235 = arith.subf %1212, %1222 : vector<4x1xf32>
    %1236 = math.exp %1235 : vector<4x1xf32>
    %1237 = arith.subf %1215, %1222 : vector<4x1xf32>
    %1238 = math.exp %1237 : vector<4x1xf32>
    %1239 = arith.addf %1224, %1226 : vector<4x1xf32>
    %1240 = arith.addf %1239, %1228 : vector<4x1xf32>
    %1241 = arith.addf %1240, %1230 : vector<4x1xf32>
    %1242 = arith.addf %1241, %1232 : vector<4x1xf32>
    %1243 = arith.addf %1242, %1234 : vector<4x1xf32>
    %1244 = arith.addf %1243, %1236 : vector<4x1xf32>
    %1245 = arith.addf %1244, %1238 : vector<4x1xf32>
    %1246 = tpu.reciprocal %1245 {approx = true} : vector<4x1xf32> -> vector<4x1xf32>
    %cst_189 = arith.constant 0.000000e+00 : f32
    %1247 = vector.broadcast %cst_189 : f32 to vector<4x8xf32>
    %1248 = arith.mulf %1224, %1246 : vector<4x1xf32>
    %1249 = vector.broadcast %1248 : vector<4x1xf32> to vector<4x8xf32>
    %1250 = arith.mulf %1249, %900 : vector<4x8xf32>
    %1251 = arith.addf %1247, %1250 : vector<4x8xf32>
    %1252 = arith.mulf %1226, %1246 : vector<4x1xf32>
    %1253 = vector.broadcast %1252 : vector<4x1xf32> to vector<4x8xf32>
    %1254 = arith.mulf %1253, %901 : vector<4x8xf32>
    %1255 = arith.addf %1251, %1254 : vector<4x8xf32>
    %1256 = arith.mulf %1228, %1246 : vector<4x1xf32>
    %1257 = vector.broadcast %1256 : vector<4x1xf32> to vector<4x8xf32>
    %1258 = arith.mulf %1257, %902 : vector<4x8xf32>
    %1259 = arith.addf %1255, %1258 : vector<4x8xf32>
    %1260 = arith.mulf %1230, %1246 : vector<4x1xf32>
    %1261 = vector.broadcast %1260 : vector<4x1xf32> to vector<4x8xf32>
    %1262 = arith.mulf %1261, %903 : vector<4x8xf32>
    %1263 = arith.addf %1259, %1262 : vector<4x8xf32>
    %1264 = arith.mulf %1232, %1246 : vector<4x1xf32>
    %1265 = vector.broadcast %1264 : vector<4x1xf32> to vector<4x8xf32>
    %1266 = arith.mulf %1265, %904 : vector<4x8xf32>
    %1267 = arith.addf %1263, %1266 : vector<4x8xf32>
    %1268 = arith.mulf %1234, %1246 : vector<4x1xf32>
    %1269 = vector.broadcast %1268 : vector<4x1xf32> to vector<4x8xf32>
    %1270 = arith.mulf %1269, %905 : vector<4x8xf32>
    %1271 = arith.addf %1267, %1270 : vector<4x8xf32>
    %1272 = arith.mulf %1236, %1246 : vector<4x1xf32>
    %1273 = vector.broadcast %1272 : vector<4x1xf32> to vector<4x8xf32>
    %1274 = arith.mulf %1273, %906 : vector<4x8xf32>
    %1275 = arith.addf %1271, %1274 : vector<4x8xf32>
    %1276 = arith.mulf %1238, %1246 : vector<4x1xf32>
    %1277 = vector.broadcast %1276 : vector<4x1xf32> to vector<4x8xf32>
    %1278 = arith.mulf %1277, %907 : vector<4x8xf32>
    %1279 = arith.addf %1275, %1278 : vector<4x8xf32>
    %cst_190 = arith.constant dense<0.000000e+00> : vector<4x32xf32>
    %1280 = tpu.matmul %1279, %911, %cst_190 {dimension_numbers = #tpu.dot_dimension_numbers<[1], [0], [0], [1], [0, 0, 1, 1], [], []>} : vector<4x8xf32>, vector<8x32xf32>, vector<4x32xf32> -> vector<4x32xf32>
    %1281 = arith.addf %1189, %1280 : vector<4x32xf32>
    %cst_191 = arith.constant 0.353553385 : f32
    %1282 = vector.broadcast %cst_191 : f32 to vector<4x8xf32>
    %1283 = arith.mulf %888, %1282 : vector<4x8xf32>
    %1284 = arith.mulf %1283, %892 : vector<4x8xf32>
    %cst_192 = arith.constant dense<0.000000e+00> : vector<4xf32>
    %1285 = vector.multi_reduction <add>, %1284, %cst_192 [1] : vector<4x8xf32> to vector<4xf32>
    %1286 = vector.shape_cast %1285 : vector<4xf32> to vector<4x1xf32>
    %1287 = arith.mulf %1283, %893 : vector<4x8xf32>
    %cst_193 = arith.constant dense<0.000000e+00> : vector<4xf32>
    %1288 = vector.multi_reduction <add>, %1287, %cst_193 [1] : vector<4x8xf32> to vector<4xf32>
    %1289 = vector.shape_cast %1288 : vector<4xf32> to vector<4x1xf32>
    %1290 = arith.mulf %1283, %894 : vector<4x8xf32>
    %cst_194 = arith.constant dense<0.000000e+00> : vector<4xf32>
    %1291 = vector.multi_reduction <add>, %1290, %cst_194 [1] : vector<4x8xf32> to vector<4xf32>
    %1292 = vector.shape_cast %1291 : vector<4xf32> to vector<4x1xf32>
    %1293 = arith.mulf %1283, %895 : vector<4x8xf32>
    %cst_195 = arith.constant dense<0.000000e+00> : vector<4xf32>
    %1294 = vector.multi_reduction <add>, %1293, %cst_195 [1] : vector<4x8xf32> to vector<4xf32>
    %1295 = vector.shape_cast %1294 : vector<4xf32> to vector<4x1xf32>
    %1296 = arith.mulf %1283, %896 : vector<4x8xf32>
    %cst_196 = arith.constant dense<0.000000e+00> : vector<4xf32>
    %1297 = vector.multi_reduction <add>, %1296, %cst_196 [1] : vector<4x8xf32> to vector<4xf32>
    %1298 = vector.shape_cast %1297 : vector<4xf32> to vector<4x1xf32>
    %1299 = arith.mulf %1283, %897 : vector<4x8xf32>
    %cst_197 = arith.constant dense<0.000000e+00> : vector<4xf32>
    %1300 = vector.multi_reduction <add>, %1299, %cst_197 [1] : vector<4x8xf32> to vector<4xf32>
    %1301 = vector.shape_cast %1300 : vector<4xf32> to vector<4x1xf32>
    %1302 = arith.mulf %1283, %898 : vector<4x8xf32>
    %cst_198 = arith.constant dense<0.000000e+00> : vector<4xf32>
    %1303 = vector.multi_reduction <add>, %1302, %cst_198 [1] : vector<4x8xf32> to vector<4xf32>
    %1304 = vector.shape_cast %1303 : vector<4xf32> to vector<4x1xf32>
    %1305 = arith.mulf %1283, %899 : vector<4x8xf32>
    %cst_199 = arith.constant dense<0.000000e+00> : vector<4xf32>
    %1306 = vector.multi_reduction <add>, %1305, %cst_199 [1] : vector<4x8xf32> to vector<4xf32>
    %1307 = vector.shape_cast %1306 : vector<4xf32> to vector<4x1xf32>
    %1308 = arith.maximumf %1286, %1289 : vector<4x1xf32>
    %1309 = arith.maximumf %1308, %1292 : vector<4x1xf32>
    %1310 = arith.maximumf %1309, %1295 : vector<4x1xf32>
    %1311 = arith.maximumf %1310, %1298 : vector<4x1xf32>
    %1312 = arith.maximumf %1311, %1301 : vector<4x1xf32>
    %1313 = arith.maximumf %1312, %1304 : vector<4x1xf32>
    %1314 = arith.maximumf %1313, %1307 : vector<4x1xf32>
    %1315 = arith.subf %1286, %1314 : vector<4x1xf32>
    %1316 = math.exp %1315 : vector<4x1xf32>
    %1317 = arith.subf %1289, %1314 : vector<4x1xf32>
    %1318 = math.exp %1317 : vector<4x1xf32>
    %1319 = arith.subf %1292, %1314 : vector<4x1xf32>
    %1320 = math.exp %1319 : vector<4x1xf32>
    %1321 = arith.subf %1295, %1314 : vector<4x1xf32>
    %1322 = math.exp %1321 : vector<4x1xf32>
    %1323 = arith.subf %1298, %1314 : vector<4x1xf32>
    %1324 = math.exp %1323 : vector<4x1xf32>
    %1325 = arith.subf %1301, %1314 : vector<4x1xf32>
    %1326 = math.exp %1325 : vector<4x1xf32>
    %1327 = arith.subf %1304, %1314 : vector<4x1xf32>
    %1328 = math.exp %1327 : vector<4x1xf32>
    %1329 = arith.subf %1307, %1314 : vector<4x1xf32>
    %1330 = math.exp %1329 : vector<4x1xf32>
    %1331 = arith.addf %1316, %1318 : vector<4x1xf32>
    %1332 = arith.addf %1331, %1320 : vector<4x1xf32>
    %1333 = arith.addf %1332, %1322 : vector<4x1xf32>
    %1334 = arith.addf %1333, %1324 : vector<4x1xf32>
    %1335 = arith.addf %1334, %1326 : vector<4x1xf32>
    %1336 = arith.addf %1335, %1328 : vector<4x1xf32>
    %1337 = arith.addf %1336, %1330 : vector<4x1xf32>
    %1338 = tpu.reciprocal %1337 {approx = true} : vector<4x1xf32> -> vector<4x1xf32>
    %cst_200 = arith.constant 0.000000e+00 : f32
    %1339 = vector.broadcast %cst_200 : f32 to vector<4x8xf32>
    %1340 = arith.mulf %1316, %1338 : vector<4x1xf32>
    %1341 = vector.broadcast %1340 : vector<4x1xf32> to vector<4x8xf32>
    %1342 = arith.mulf %1341, %900 : vector<4x8xf32>
    %1343 = arith.addf %1339, %1342 : vector<4x8xf32>
    %1344 = arith.mulf %1318, %1338 : vector<4x1xf32>
    %1345 = vector.broadcast %1344 : vector<4x1xf32> to vector<4x8xf32>
    %1346 = arith.mulf %1345, %901 : vector<4x8xf32>
    %1347 = arith.addf %1343, %1346 : vector<4x8xf32>
    %1348 = arith.mulf %1320, %1338 : vector<4x1xf32>
    %1349 = vector.broadcast %1348 : vector<4x1xf32> to vector<4x8xf32>
    %1350 = arith.mulf %1349, %902 : vector<4x8xf32>
    %1351 = arith.addf %1347, %1350 : vector<4x8xf32>
    %1352 = arith.mulf %1322, %1338 : vector<4x1xf32>
    %1353 = vector.broadcast %1352 : vector<4x1xf32> to vector<4x8xf32>
    %1354 = arith.mulf %1353, %903 : vector<4x8xf32>
    %1355 = arith.addf %1351, %1354 : vector<4x8xf32>
    %1356 = arith.mulf %1324, %1338 : vector<4x1xf32>
    %1357 = vector.broadcast %1356 : vector<4x1xf32> to vector<4x8xf32>
    %1358 = arith.mulf %1357, %904 : vector<4x8xf32>
    %1359 = arith.addf %1355, %1358 : vector<4x8xf32>
    %1360 = arith.mulf %1326, %1338 : vector<4x1xf32>
    %1361 = vector.broadcast %1360 : vector<4x1xf32> to vector<4x8xf32>
    %1362 = arith.mulf %1361, %905 : vector<4x8xf32>
    %1363 = arith.addf %1359, %1362 : vector<4x8xf32>
    %1364 = arith.mulf %1328, %1338 : vector<4x1xf32>
    %1365 = vector.broadcast %1364 : vector<4x1xf32> to vector<4x8xf32>
    %1366 = arith.mulf %1365, %906 : vector<4x8xf32>
    %1367 = arith.addf %1363, %1366 : vector<4x8xf32>
    %1368 = arith.mulf %1330, %1338 : vector<4x1xf32>
    %1369 = vector.broadcast %1368 : vector<4x1xf32> to vector<4x8xf32>
    %1370 = arith.mulf %1369, %907 : vector<4x8xf32>
    %1371 = arith.addf %1367, %1370 : vector<4x8xf32>
    %cst_201 = arith.constant dense<0.000000e+00> : vector<4x32xf32>
    %1372 = tpu.matmul %1371, %908, %cst_201 {dimension_numbers = #tpu.dot_dimension_numbers<[1], [0], [0], [1], [0, 0, 1, 1], [], []>} : vector<4x8xf32>, vector<8x32xf32>, vector<4x32xf32> -> vector<4x32xf32>
    %1373 = arith.addf %913, %1372 : vector<4x32xf32>
    %cst_202 = arith.constant 0.353553385 : f32
    %1374 = vector.broadcast %cst_202 : f32 to vector<4x8xf32>
    %1375 = arith.mulf %889, %1374 : vector<4x8xf32>
    %1376 = arith.mulf %1375, %892 : vector<4x8xf32>
    %cst_203 = arith.constant dense<0.000000e+00> : vector<4xf32>
    %1377 = vector.multi_reduction <add>, %1376, %cst_203 [1] : vector<4x8xf32> to vector<4xf32>
    %1378 = vector.shape_cast %1377 : vector<4xf32> to vector<4x1xf32>
    %1379 = arith.mulf %1375, %893 : vector<4x8xf32>
    %cst_204 = arith.constant dense<0.000000e+00> : vector<4xf32>
    %1380 = vector.multi_reduction <add>, %1379, %cst_204 [1] : vector<4x8xf32> to vector<4xf32>
    %1381 = vector.shape_cast %1380 : vector<4xf32> to vector<4x1xf32>
    %1382 = arith.mulf %1375, %894 : vector<4x8xf32>
    %cst_205 = arith.constant dense<0.000000e+00> : vector<4xf32>
    %1383 = vector.multi_reduction <add>, %1382, %cst_205 [1] : vector<4x8xf32> to vector<4xf32>
    %1384 = vector.shape_cast %1383 : vector<4xf32> to vector<4x1xf32>
    %1385 = arith.mulf %1375, %895 : vector<4x8xf32>
    %cst_206 = arith.constant dense<0.000000e+00> : vector<4xf32>
    %1386 = vector.multi_reduction <add>, %1385, %cst_206 [1] : vector<4x8xf32> to vector<4xf32>
    %1387 = vector.shape_cast %1386 : vector<4xf32> to vector<4x1xf32>
    %1388 = arith.mulf %1375, %896 : vector<4x8xf32>
    %cst_207 = arith.constant dense<0.000000e+00> : vector<4xf32>
    %1389 = vector.multi_reduction <add>, %1388, %cst_207 [1] : vector<4x8xf32> to vector<4xf32>
    %1390 = vector.shape_cast %1389 : vector<4xf32> to vector<4x1xf32>
    %1391 = arith.mulf %1375, %897 : vector<4x8xf32>
    %cst_208 = arith.constant dense<0.000000e+00> : vector<4xf32>
    %1392 = vector.multi_reduction <add>, %1391, %cst_208 [1] : vector<4x8xf32> to vector<4xf32>
    %1393 = vector.shape_cast %1392 : vector<4xf32> to vector<4x1xf32>
    %1394 = arith.mulf %1375, %898 : vector<4x8xf32>
    %cst_209 = arith.constant dense<0.000000e+00> : vector<4xf32>
    %1395 = vector.multi_reduction <add>, %1394, %cst_209 [1] : vector<4x8xf32> to vector<4xf32>
    %1396 = vector.shape_cast %1395 : vector<4xf32> to vector<4x1xf32>
    %1397 = arith.mulf %1375, %899 : vector<4x8xf32>
    %cst_210 = arith.constant dense<0.000000e+00> : vector<4xf32>
    %1398 = vector.multi_reduction <add>, %1397, %cst_210 [1] : vector<4x8xf32> to vector<4xf32>
    %1399 = vector.shape_cast %1398 : vector<4xf32> to vector<4x1xf32>
    %1400 = arith.maximumf %1378, %1381 : vector<4x1xf32>
    %1401 = arith.maximumf %1400, %1384 : vector<4x1xf32>
    %1402 = arith.maximumf %1401, %1387 : vector<4x1xf32>
    %1403 = arith.maximumf %1402, %1390 : vector<4x1xf32>
    %1404 = arith.maximumf %1403, %1393 : vector<4x1xf32>
    %1405 = arith.maximumf %1404, %1396 : vector<4x1xf32>
    %1406 = arith.maximumf %1405, %1399 : vector<4x1xf32>
    %1407 = arith.subf %1378, %1406 : vector<4x1xf32>
    %1408 = math.exp %1407 : vector<4x1xf32>
    %1409 = arith.subf %1381, %1406 : vector<4x1xf32>
    %1410 = math.exp %1409 : vector<4x1xf32>
    %1411 = arith.subf %1384, %1406 : vector<4x1xf32>
    %1412 = math.exp %1411 : vector<4x1xf32>
    %1413 = arith.subf %1387, %1406 : vector<4x1xf32>
    %1414 = math.exp %1413 : vector<4x1xf32>
    %1415 = arith.subf %1390, %1406 : vector<4x1xf32>
    %1416 = math.exp %1415 : vector<4x1xf32>
    %1417 = arith.subf %1393, %1406 : vector<4x1xf32>
    %1418 = math.exp %1417 : vector<4x1xf32>
    %1419 = arith.subf %1396, %1406 : vector<4x1xf32>
    %1420 = math.exp %1419 : vector<4x1xf32>
    %1421 = arith.subf %1399, %1406 : vector<4x1xf32>
    %1422 = math.exp %1421 : vector<4x1xf32>
    %1423 = arith.addf %1408, %1410 : vector<4x1xf32>
    %1424 = arith.addf %1423, %1412 : vector<4x1xf32>
    %1425 = arith.addf %1424, %1414 : vector<4x1xf32>
    %1426 = arith.addf %1425, %1416 : vector<4x1xf32>
    %1427 = arith.addf %1426, %1418 : vector<4x1xf32>
    %1428 = arith.addf %1427, %1420 : vector<4x1xf32>
    %1429 = arith.addf %1428, %1422 : vector<4x1xf32>
    %1430 = tpu.reciprocal %1429 {approx = true} : vector<4x1xf32> -> vector<4x1xf32>
    %cst_211 = arith.constant 0.000000e+00 : f32
    %1431 = vector.broadcast %cst_211 : f32 to vector<4x8xf32>
    %1432 = arith.mulf %1408, %1430 : vector<4x1xf32>
    %1433 = vector.broadcast %1432 : vector<4x1xf32> to vector<4x8xf32>
    %1434 = arith.mulf %1433, %900 : vector<4x8xf32>
    %1435 = arith.addf %1431, %1434 : vector<4x8xf32>
    %1436 = arith.mulf %1410, %1430 : vector<4x1xf32>
    %1437 = vector.broadcast %1436 : vector<4x1xf32> to vector<4x8xf32>
    %1438 = arith.mulf %1437, %901 : vector<4x8xf32>
    %1439 = arith.addf %1435, %1438 : vector<4x8xf32>
    %1440 = arith.mulf %1412, %1430 : vector<4x1xf32>
    %1441 = vector.broadcast %1440 : vector<4x1xf32> to vector<4x8xf32>
    %1442 = arith.mulf %1441, %902 : vector<4x8xf32>
    %1443 = arith.addf %1439, %1442 : vector<4x8xf32>
    %1444 = arith.mulf %1414, %1430 : vector<4x1xf32>
    %1445 = vector.broadcast %1444 : vector<4x1xf32> to vector<4x8xf32>
    %1446 = arith.mulf %1445, %903 : vector<4x8xf32>
    %1447 = arith.addf %1443, %1446 : vector<4x8xf32>
    %1448 = arith.mulf %1416, %1430 : vector<4x1xf32>
    %1449 = vector.broadcast %1448 : vector<4x1xf32> to vector<4x8xf32>
    %1450 = arith.mulf %1449, %904 : vector<4x8xf32>
    %1451 = arith.addf %1447, %1450 : vector<4x8xf32>
    %1452 = arith.mulf %1418, %1430 : vector<4x1xf32>
    %1453 = vector.broadcast %1452 : vector<4x1xf32> to vector<4x8xf32>
    %1454 = arith.mulf %1453, %905 : vector<4x8xf32>
    %1455 = arith.addf %1451, %1454 : vector<4x8xf32>
    %1456 = arith.mulf %1420, %1430 : vector<4x1xf32>
    %1457 = vector.broadcast %1456 : vector<4x1xf32> to vector<4x8xf32>
    %1458 = arith.mulf %1457, %906 : vector<4x8xf32>
    %1459 = arith.addf %1455, %1458 : vector<4x8xf32>
    %1460 = arith.mulf %1422, %1430 : vector<4x1xf32>
    %1461 = vector.broadcast %1460 : vector<4x1xf32> to vector<4x8xf32>
    %1462 = arith.mulf %1461, %907 : vector<4x8xf32>
    %1463 = arith.addf %1459, %1462 : vector<4x8xf32>
    %cst_212 = arith.constant dense<0.000000e+00> : vector<4x32xf32>
    %1464 = tpu.matmul %1463, %909, %cst_212 {dimension_numbers = #tpu.dot_dimension_numbers<[1], [0], [0], [1], [0, 0, 1, 1], [], []>} : vector<4x8xf32>, vector<8x32xf32>, vector<4x32xf32> -> vector<4x32xf32>
    %1465 = arith.addf %1373, %1464 : vector<4x32xf32>
    %cst_213 = arith.constant 0.353553385 : f32
    %1466 = vector.broadcast %cst_213 : f32 to vector<4x8xf32>
    %1467 = arith.mulf %890, %1466 : vector<4x8xf32>
    %1468 = arith.mulf %1467, %892 : vector<4x8xf32>
    %cst_214 = arith.constant dense<0.000000e+00> : vector<4xf32>
    %1469 = vector.multi_reduction <add>, %1468, %cst_214 [1] : vector<4x8xf32> to vector<4xf32>
    %1470 = vector.shape_cast %1469 : vector<4xf32> to vector<4x1xf32>
    %1471 = arith.mulf %1467, %893 : vector<4x8xf32>
    %cst_215 = arith.constant dense<0.000000e+00> : vector<4xf32>
    %1472 = vector.multi_reduction <add>, %1471, %cst_215 [1] : vector<4x8xf32> to vector<4xf32>
    %1473 = vector.shape_cast %1472 : vector<4xf32> to vector<4x1xf32>
    %1474 = arith.mulf %1467, %894 : vector<4x8xf32>
    %cst_216 = arith.constant dense<0.000000e+00> : vector<4xf32>
    %1475 = vector.multi_reduction <add>, %1474, %cst_216 [1] : vector<4x8xf32> to vector<4xf32>
    %1476 = vector.shape_cast %1475 : vector<4xf32> to vector<4x1xf32>
    %1477 = arith.mulf %1467, %895 : vector<4x8xf32>
    %cst_217 = arith.constant dense<0.000000e+00> : vector<4xf32>
    %1478 = vector.multi_reduction <add>, %1477, %cst_217 [1] : vector<4x8xf32> to vector<4xf32>
    %1479 = vector.shape_cast %1478 : vector<4xf32> to vector<4x1xf32>
    %1480 = arith.mulf %1467, %896 : vector<4x8xf32>
    %cst_218 = arith.constant dense<0.000000e+00> : vector<4xf32>
    %1481 = vector.multi_reduction <add>, %1480, %cst_218 [1] : vector<4x8xf32> to vector<4xf32>
    %1482 = vector.shape_cast %1481 : vector<4xf32> to vector<4x1xf32>
    %1483 = arith.mulf %1467, %897 : vector<4x8xf32>
    %cst_219 = arith.constant dense<0.000000e+00> : vector<4xf32>
    %1484 = vector.multi_reduction <add>, %1483, %cst_219 [1] : vector<4x8xf32> to vector<4xf32>
    %1485 = vector.shape_cast %1484 : vector<4xf32> to vector<4x1xf32>
    %1486 = arith.mulf %1467, %898 : vector<4x8xf32>
    %cst_220 = arith.constant dense<0.000000e+00> : vector<4xf32>
    %1487 = vector.multi_reduction <add>, %1486, %cst_220 [1] : vector<4x8xf32> to vector<4xf32>
    %1488 = vector.shape_cast %1487 : vector<4xf32> to vector<4x1xf32>
    %1489 = arith.mulf %1467, %899 : vector<4x8xf32>
    %cst_221 = arith.constant dense<0.000000e+00> : vector<4xf32>
    %1490 = vector.multi_reduction <add>, %1489, %cst_221 [1] : vector<4x8xf32> to vector<4xf32>
    %1491 = vector.shape_cast %1490 : vector<4xf32> to vector<4x1xf32>
    %1492 = arith.maximumf %1470, %1473 : vector<4x1xf32>
    %1493 = arith.maximumf %1492, %1476 : vector<4x1xf32>
    %1494 = arith.maximumf %1493, %1479 : vector<4x1xf32>
    %1495 = arith.maximumf %1494, %1482 : vector<4x1xf32>
    %1496 = arith.maximumf %1495, %1485 : vector<4x1xf32>
    %1497 = arith.maximumf %1496, %1488 : vector<4x1xf32>
    %1498 = arith.maximumf %1497, %1491 : vector<4x1xf32>
    %1499 = arith.subf %1470, %1498 : vector<4x1xf32>
    %1500 = math.exp %1499 : vector<4x1xf32>
    %1501 = arith.subf %1473, %1498 : vector<4x1xf32>
    %1502 = math.exp %1501 : vector<4x1xf32>
    %1503 = arith.subf %1476, %1498 : vector<4x1xf32>
    %1504 = math.exp %1503 : vector<4x1xf32>
    %1505 = arith.subf %1479, %1498 : vector<4x1xf32>
    %1506 = math.exp %1505 : vector<4x1xf32>
    %1507 = arith.subf %1482, %1498 : vector<4x1xf32>
    %1508 = math.exp %1507 : vector<4x1xf32>
    %1509 = arith.subf %1485, %1498 : vector<4x1xf32>
    %1510 = math.exp %1509 : vector<4x1xf32>
    %1511 = arith.subf %1488, %1498 : vector<4x1xf32>
    %1512 = math.exp %1511 : vector<4x1xf32>
    %1513 = arith.subf %1491, %1498 : vector<4x1xf32>
    %1514 = math.exp %1513 : vector<4x1xf32>
    %1515 = arith.addf %1500, %1502 : vector<4x1xf32>
    %1516 = arith.addf %1515, %1504 : vector<4x1xf32>
    %1517 = arith.addf %1516, %1506 : vector<4x1xf32>
    %1518 = arith.addf %1517, %1508 : vector<4x1xf32>
    %1519 = arith.addf %1518, %1510 : vector<4x1xf32>
    %1520 = arith.addf %1519, %1512 : vector<4x1xf32>
    %1521 = arith.addf %1520, %1514 : vector<4x1xf32>
    %1522 = tpu.reciprocal %1521 {approx = true} : vector<4x1xf32> -> vector<4x1xf32>
    %cst_222 = arith.constant 0.000000e+00 : f32
    %1523 = vector.broadcast %cst_222 : f32 to vector<4x8xf32>
    %1524 = arith.mulf %1500, %1522 : vector<4x1xf32>
    %1525 = vector.broadcast %1524 : vector<4x1xf32> to vector<4x8xf32>
    %1526 = arith.mulf %1525, %900 : vector<4x8xf32>
    %1527 = arith.addf %1523, %1526 : vector<4x8xf32>
    %1528 = arith.mulf %1502, %1522 : vector<4x1xf32>
    %1529 = vector.broadcast %1528 : vector<4x1xf32> to vector<4x8xf32>
    %1530 = arith.mulf %1529, %901 : vector<4x8xf32>
    %1531 = arith.addf %1527, %1530 : vector<4x8xf32>
    %1532 = arith.mulf %1504, %1522 : vector<4x1xf32>
    %1533 = vector.broadcast %1532 : vector<4x1xf32> to vector<4x8xf32>
    %1534 = arith.mulf %1533, %902 : vector<4x8xf32>
    %1535 = arith.addf %1531, %1534 : vector<4x8xf32>
    %1536 = arith.mulf %1506, %1522 : vector<4x1xf32>
    %1537 = vector.broadcast %1536 : vector<4x1xf32> to vector<4x8xf32>
    %1538 = arith.mulf %1537, %903 : vector<4x8xf32>
    %1539 = arith.addf %1535, %1538 : vector<4x8xf32>
    %1540 = arith.mulf %1508, %1522 : vector<4x1xf32>
    %1541 = vector.broadcast %1540 : vector<4x1xf32> to vector<4x8xf32>
    %1542 = arith.mulf %1541, %904 : vector<4x8xf32>
    %1543 = arith.addf %1539, %1542 : vector<4x8xf32>
    %1544 = arith.mulf %1510, %1522 : vector<4x1xf32>
    %1545 = vector.broadcast %1544 : vector<4x1xf32> to vector<4x8xf32>
    %1546 = arith.mulf %1545, %905 : vector<4x8xf32>
    %1547 = arith.addf %1543, %1546 : vector<4x8xf32>
    %1548 = arith.mulf %1512, %1522 : vector<4x1xf32>
    %1549 = vector.broadcast %1548 : vector<4x1xf32> to vector<4x8xf32>
    %1550 = arith.mulf %1549, %906 : vector<4x8xf32>
    %1551 = arith.addf %1547, %1550 : vector<4x8xf32>
    %1552 = arith.mulf %1514, %1522 : vector<4x1xf32>
    %1553 = vector.broadcast %1552 : vector<4x1xf32> to vector<4x8xf32>
    %1554 = arith.mulf %1553, %907 : vector<4x8xf32>
    %1555 = arith.addf %1551, %1554 : vector<4x8xf32>
    %cst_223 = arith.constant dense<0.000000e+00> : vector<4x32xf32>
    %1556 = tpu.matmul %1555, %910, %cst_223 {dimension_numbers = #tpu.dot_dimension_numbers<[1], [0], [0], [1], [0, 0, 1, 1], [], []>} : vector<4x8xf32>, vector<8x32xf32>, vector<4x32xf32> -> vector<4x32xf32>
    %1557 = arith.addf %1465, %1556 : vector<4x32xf32>
    %cst_224 = arith.constant 0.353553385 : f32
    %1558 = vector.broadcast %cst_224 : f32 to vector<4x8xf32>
    %1559 = arith.mulf %891, %1558 : vector<4x8xf32>
    %1560 = arith.mulf %1559, %892 : vector<4x8xf32>
    %cst_225 = arith.constant dense<0.000000e+00> : vector<4xf32>
    %1561 = vector.multi_reduction <add>, %1560, %cst_225 [1] : vector<4x8xf32> to vector<4xf32>
    %1562 = vector.shape_cast %1561 : vector<4xf32> to vector<4x1xf32>
    %1563 = arith.mulf %1559, %893 : vector<4x8xf32>
    %cst_226 = arith.constant dense<0.000000e+00> : vector<4xf32>
    %1564 = vector.multi_reduction <add>, %1563, %cst_226 [1] : vector<4x8xf32> to vector<4xf32>
    %1565 = vector.shape_cast %1564 : vector<4xf32> to vector<4x1xf32>
    %1566 = arith.mulf %1559, %894 : vector<4x8xf32>
    %cst_227 = arith.constant dense<0.000000e+00> : vector<4xf32>
    %1567 = vector.multi_reduction <add>, %1566, %cst_227 [1] : vector<4x8xf32> to vector<4xf32>
    %1568 = vector.shape_cast %1567 : vector<4xf32> to vector<4x1xf32>
    %1569 = arith.mulf %1559, %895 : vector<4x8xf32>
    %cst_228 = arith.constant dense<0.000000e+00> : vector<4xf32>
    %1570 = vector.multi_reduction <add>, %1569, %cst_228 [1] : vector<4x8xf32> to vector<4xf32>
    %1571 = vector.shape_cast %1570 : vector<4xf32> to vector<4x1xf32>
    %1572 = arith.mulf %1559, %896 : vector<4x8xf32>
    %cst_229 = arith.constant dense<0.000000e+00> : vector<4xf32>
    %1573 = vector.multi_reduction <add>, %1572, %cst_229 [1] : vector<4x8xf32> to vector<4xf32>
    %1574 = vector.shape_cast %1573 : vector<4xf32> to vector<4x1xf32>
    %1575 = arith.mulf %1559, %897 : vector<4x8xf32>
    %cst_230 = arith.constant dense<0.000000e+00> : vector<4xf32>
    %1576 = vector.multi_reduction <add>, %1575, %cst_230 [1] : vector<4x8xf32> to vector<4xf32>
    %1577 = vector.shape_cast %1576 : vector<4xf32> to vector<4x1xf32>
    %1578 = arith.mulf %1559, %898 : vector<4x8xf32>
    %cst_231 = arith.constant dense<0.000000e+00> : vector<4xf32>
    %1579 = vector.multi_reduction <add>, %1578, %cst_231 [1] : vector<4x8xf32> to vector<4xf32>
    %1580 = vector.shape_cast %1579 : vector<4xf32> to vector<4x1xf32>
    %1581 = arith.mulf %1559, %899 : vector<4x8xf32>
    %cst_232 = arith.constant dense<0.000000e+00> : vector<4xf32>
    %1582 = vector.multi_reduction <add>, %1581, %cst_232 [1] : vector<4x8xf32> to vector<4xf32>
    %1583 = vector.shape_cast %1582 : vector<4xf32> to vector<4x1xf32>
    %1584 = arith.maximumf %1562, %1565 : vector<4x1xf32>
    %1585 = arith.maximumf %1584, %1568 : vector<4x1xf32>
    %1586 = arith.maximumf %1585, %1571 : vector<4x1xf32>
    %1587 = arith.maximumf %1586, %1574 : vector<4x1xf32>
    %1588 = arith.maximumf %1587, %1577 : vector<4x1xf32>
    %1589 = arith.maximumf %1588, %1580 : vector<4x1xf32>
    %1590 = arith.maximumf %1589, %1583 : vector<4x1xf32>
    %1591 = arith.subf %1562, %1590 : vector<4x1xf32>
    %1592 = math.exp %1591 : vector<4x1xf32>
    %1593 = arith.subf %1565, %1590 : vector<4x1xf32>
    %1594 = math.exp %1593 : vector<4x1xf32>
    %1595 = arith.subf %1568, %1590 : vector<4x1xf32>
    %1596 = math.exp %1595 : vector<4x1xf32>
    %1597 = arith.subf %1571, %1590 : vector<4x1xf32>
    %1598 = math.exp %1597 : vector<4x1xf32>
    %1599 = arith.subf %1574, %1590 : vector<4x1xf32>
    %1600 = math.exp %1599 : vector<4x1xf32>
    %1601 = arith.subf %1577, %1590 : vector<4x1xf32>
    %1602 = math.exp %1601 : vector<4x1xf32>
    %1603 = arith.subf %1580, %1590 : vector<4x1xf32>
    %1604 = math.exp %1603 : vector<4x1xf32>
    %1605 = arith.subf %1583, %1590 : vector<4x1xf32>
    %1606 = math.exp %1605 : vector<4x1xf32>
    %1607 = arith.addf %1592, %1594 : vector<4x1xf32>
    %1608 = arith.addf %1607, %1596 : vector<4x1xf32>
    %1609 = arith.addf %1608, %1598 : vector<4x1xf32>
    %1610 = arith.addf %1609, %1600 : vector<4x1xf32>
    %1611 = arith.addf %1610, %1602 : vector<4x1xf32>
    %1612 = arith.addf %1611, %1604 : vector<4x1xf32>
    %1613 = arith.addf %1612, %1606 : vector<4x1xf32>
    %1614 = tpu.reciprocal %1613 {approx = true} : vector<4x1xf32> -> vector<4x1xf32>
    %cst_233 = arith.constant 0.000000e+00 : f32
    %1615 = vector.broadcast %cst_233 : f32 to vector<4x8xf32>
    %1616 = arith.mulf %1592, %1614 : vector<4x1xf32>
    %1617 = vector.broadcast %1616 : vector<4x1xf32> to vector<4x8xf32>
    %1618 = arith.mulf %1617, %900 : vector<4x8xf32>
    %1619 = arith.addf %1615, %1618 : vector<4x8xf32>
    %1620 = arith.mulf %1594, %1614 : vector<4x1xf32>
    %1621 = vector.broadcast %1620 : vector<4x1xf32> to vector<4x8xf32>
    %1622 = arith.mulf %1621, %901 : vector<4x8xf32>
    %1623 = arith.addf %1619, %1622 : vector<4x8xf32>
    %1624 = arith.mulf %1596, %1614 : vector<4x1xf32>
    %1625 = vector.broadcast %1624 : vector<4x1xf32> to vector<4x8xf32>
    %1626 = arith.mulf %1625, %902 : vector<4x8xf32>
    %1627 = arith.addf %1623, %1626 : vector<4x8xf32>
    %1628 = arith.mulf %1598, %1614 : vector<4x1xf32>
    %1629 = vector.broadcast %1628 : vector<4x1xf32> to vector<4x8xf32>
    %1630 = arith.mulf %1629, %903 : vector<4x8xf32>
    %1631 = arith.addf %1627, %1630 : vector<4x8xf32>
    %1632 = arith.mulf %1600, %1614 : vector<4x1xf32>
    %1633 = vector.broadcast %1632 : vector<4x1xf32> to vector<4x8xf32>
    %1634 = arith.mulf %1633, %904 : vector<4x8xf32>
    %1635 = arith.addf %1631, %1634 : vector<4x8xf32>
    %1636 = arith.mulf %1602, %1614 : vector<4x1xf32>
    %1637 = vector.broadcast %1636 : vector<4x1xf32> to vector<4x8xf32>
    %1638 = arith.mulf %1637, %905 : vector<4x8xf32>
    %1639 = arith.addf %1635, %1638 : vector<4x8xf32>
    %1640 = arith.mulf %1604, %1614 : vector<4x1xf32>
    %1641 = vector.broadcast %1640 : vector<4x1xf32> to vector<4x8xf32>
    %1642 = arith.mulf %1641, %906 : vector<4x8xf32>
    %1643 = arith.addf %1639, %1642 : vector<4x8xf32>
    %1644 = arith.mulf %1606, %1614 : vector<4x1xf32>
    %1645 = vector.broadcast %1644 : vector<4x1xf32> to vector<4x8xf32>
    %1646 = arith.mulf %1645, %907 : vector<4x8xf32>
    %1647 = arith.addf %1643, %1646 : vector<4x8xf32>
    %cst_234 = arith.constant dense<0.000000e+00> : vector<4x32xf32>
    %1648 = tpu.matmul %1647, %911, %cst_234 {dimension_numbers = #tpu.dot_dimension_numbers<[1], [0], [0], [1], [0, 0, 1, 1], [], []>} : vector<4x8xf32>, vector<8x32xf32>, vector<4x32xf32> -> vector<4x32xf32>
    %1649 = arith.addf %1557, %1648 : vector<4x32xf32>
    %cst_235 = arith.constant 0.000000e+00 : f32
    %1650 = vector.broadcast %cst_235 : f32 to vector<8x32xf32>
    %cst_236 = arith.constant dense<0.000000e+00> : vector<8x32xf32>
    %1651 = tpu.matmul %24, %1281, %cst_236 {dimension_numbers = #tpu.dot_dimension_numbers<[1], [0], [0], [1], [0, 0, 1, 1], [], []>} : vector<8x4xf32>, vector<4x32xf32>, vector<8x32xf32> -> vector<8x32xf32>
    %1652 = arith.addf %1650, %1651 : vector<8x32xf32>
    %cst_237 = arith.constant dense<0.000000e+00> : vector<8x32xf32>
    %1653 = tpu.matmul %31, %1649, %cst_237 {dimension_numbers = #tpu.dot_dimension_numbers<[1], [0], [0], [1], [0, 0, 1, 1], [], []>} : vector<8x4xf32>, vector<4x32xf32>, vector<8x32xf32> -> vector<8x32xf32>
    %1654 = arith.addf %1652, %1653 : vector<8x32xf32>
    %1655 = vector.broadcast %35 : vector<1x32xf32> to vector<8x32xf32>
    %1656 = arith.addf %1654, %1655 : vector<8x32xf32>
    %1657 = arith.addf %1656, %878 : vector<8x32xf32>
    %cst_238 = arith.constant dense<0.000000e+00> : vector<8xf32>
    %1658 = vector.multi_reduction <add>, %1657, %cst_238 [1] : vector<8x32xf32> to vector<8xf32>
    %1659 = vector.shape_cast %1658 : vector<8xf32> to vector<8x1xf32>
    %cst_239 = arith.constant 3.200000e+01 : f32
    %1660 = vector.broadcast %cst_239 : f32 to vector<8x1xf32>
    %1661 = arith.divf %1659, %1660 : vector<8x1xf32>
    %1662 = vector.broadcast %1661 : vector<8x1xf32> to vector<8x32xf32>
    %1663 = arith.subf %1657, %1662 : vector<8x32xf32>
    %1664 = arith.mulf %1663, %1663 : vector<8x32xf32>
    %cst_240 = arith.constant dense<0.000000e+00> : vector<8xf32>
    %1665 = vector.multi_reduction <add>, %1664, %cst_240 [1] : vector<8x32xf32> to vector<8xf32>
    %1666 = vector.shape_cast %1665 : vector<8xf32> to vector<8x1xf32>
    %cst_241 = arith.constant 3.200000e+01 : f32
    %1667 = vector.broadcast %cst_241 : f32 to vector<8x1xf32>
    %1668 = arith.divf %1666, %1667 : vector<8x1xf32>
    %1669 = vector.broadcast %1661 : vector<8x1xf32> to vector<8x32xf32>
    %1670 = arith.subf %1657, %1669 : vector<8x32xf32>
    %cst_242 = arith.constant 9.99999974E-6 : f32
    %1671 = vector.broadcast %cst_242 : f32 to vector<8x1xf32>
    %1672 = arith.addf %1668, %1671 : vector<8x1xf32>
    %1673 = math.rsqrt %1672 : vector<8x1xf32>
    %1674 = vector.broadcast %1673 : vector<8x1xf32> to vector<8x32xf32>
    %1675 = arith.mulf %1670, %1674 : vector<8x32xf32>
    %1676 = vector.broadcast %36 : vector<1x32xf32> to vector<8x32xf32>
    %1677 = arith.mulf %1675, %1676 : vector<8x32xf32>
    %1678 = vector.broadcast %37 : vector<1x32xf32> to vector<8x32xf32>
    %1679 = arith.addf %1677, %1678 : vector<8x32xf32>
    %cst_243 = arith.constant dense<0.000000e+00> : vector<8x64xf32>
    %1680 = tpu.matmul %1679, %38, %cst_243 {dimension_numbers = #tpu.dot_dimension_numbers<[1], [0], [0], [1], [0, 0, 1, 1], [], []>} : vector<8x32xf32>, vector<32x64xf32>, vector<8x64xf32> -> vector<8x64xf32>
    %1681 = vector.broadcast %39 : vector<1x64xf32> to vector<8x64xf32>
    %1682 = arith.addf %1680, %1681 : vector<8x64xf32>
    %cst_244 = arith.constant 0.000000e+00 : f32
    %1683 = vector.broadcast %cst_244 : f32 to vector<8x64xf32>
    %1684 = arith.maximumf %1682, %1683 : vector<8x64xf32>
    %cst_245 = arith.constant dense<0.000000e+00> : vector<8x32xf32>
    %1685 = tpu.matmul %1684, %40, %cst_245 {dimension_numbers = #tpu.dot_dimension_numbers<[1], [0], [0], [1], [0, 0, 1, 1], [], []>} : vector<8x64xf32>, vector<64x32xf32>, vector<8x32xf32> -> vector<8x32xf32>
    %1686 = vector.broadcast %41 : vector<1x32xf32> to vector<8x32xf32>
    %1687 = arith.addf %1685, %1686 : vector<8x32xf32>
    %1688 = arith.addf %1687, %1679 : vector<8x32xf32>
    %cst_246 = arith.constant dense<0.000000e+00> : vector<8xf32>
    %1689 = vector.multi_reduction <add>, %1688, %cst_246 [1] : vector<8x32xf32> to vector<8xf32>
    %1690 = vector.shape_cast %1689 : vector<8xf32> to vector<8x1xf32>
    %cst_247 = arith.constant 3.200000e+01 : f32
    %1691 = vector.broadcast %cst_247 : f32 to vector<8x1xf32>
    %1692 = arith.divf %1690, %1691 : vector<8x1xf32>
    %1693 = vector.broadcast %1692 : vector<8x1xf32> to vector<8x32xf32>
    %1694 = arith.subf %1688, %1693 : vector<8x32xf32>
    %1695 = arith.mulf %1694, %1694 : vector<8x32xf32>
    %cst_248 = arith.constant dense<0.000000e+00> : vector<8xf32>
    %1696 = vector.multi_reduction <add>, %1695, %cst_248 [1] : vector<8x32xf32> to vector<8xf32>
    %1697 = vector.shape_cast %1696 : vector<8xf32> to vector<8x1xf32>
    %cst_249 = arith.constant 3.200000e+01 : f32
    %1698 = vector.broadcast %cst_249 : f32 to vector<8x1xf32>
    %1699 = arith.divf %1697, %1698 : vector<8x1xf32>
    %1700 = vector.broadcast %1692 : vector<8x1xf32> to vector<8x32xf32>
    %1701 = arith.subf %1688, %1700 : vector<8x32xf32>
    %cst_250 = arith.constant 9.99999974E-6 : f32
    %1702 = vector.broadcast %cst_250 : f32 to vector<8x1xf32>
    %1703 = arith.addf %1699, %1702 : vector<8x1xf32>
    %1704 = math.rsqrt %1703 : vector<8x1xf32>
    %1705 = vector.broadcast %1704 : vector<8x1xf32> to vector<8x32xf32>
    %1706 = arith.mulf %1701, %1705 : vector<8x32xf32>
    %1707 = vector.broadcast %42 : vector<1x32xf32> to vector<8x32xf32>
    %1708 = arith.mulf %1706, %1707 : vector<8x32xf32>
    %1709 = vector.broadcast %43 : vector<1x32xf32> to vector<8x32xf32>
    %1710 = arith.addf %1708, %1709 : vector<8x32xf32>
    %1711 = vector.extract_strided_slice %1710 {offsets = [0, 0], sizes = [1, 32], strides = [1, 1]} : vector<8x32xf32> to vector<1x32xf32>
    %1712 = vector.extract_strided_slice %44 {offsets = [0, 0], sizes = [32, 4], strides = [1, 1]} : vector<256x4xf32> to vector<32x4xf32>
    %cst_251 = arith.constant dense<0.000000e+00> : vector<1x4xf32>
    %1713 = tpu.matmul %1711, %1712, %cst_251 {dimension_numbers = #tpu.dot_dimension_numbers<[1], [0], [0], [1], [0, 0, 1, 1], [], []>} : vector<1x32xf32>, vector<32x4xf32>, vector<1x4xf32> -> vector<1x4xf32>
    %1714 = arith.addf %45, %1713 : vector<1x4xf32>
    %1715 = vector.extract_strided_slice %1710 {offsets = [1, 0], sizes = [1, 32], strides = [1, 1]} : vector<8x32xf32> to vector<1x32xf32>
    %1716 = vector.extract_strided_slice %44 {offsets = [32, 0], sizes = [32, 4], strides = [1, 1]} : vector<256x4xf32> to vector<32x4xf32>
    %cst_252 = arith.constant dense<0.000000e+00> : vector<1x4xf32>
    %1717 = tpu.matmul %1715, %1716, %cst_252 {dimension_numbers = #tpu.dot_dimension_numbers<[1], [0], [0], [1], [0, 0, 1, 1], [], []>} : vector<1x32xf32>, vector<32x4xf32>, vector<1x4xf32> -> vector<1x4xf32>
    %1718 = arith.addf %1714, %1717 : vector<1x4xf32>
    %1719 = vector.extract_strided_slice %1710 {offsets = [2, 0], sizes = [1, 32], strides = [1, 1]} : vector<8x32xf32> to vector<1x32xf32>
    %1720 = vector.extract_strided_slice %44 {offsets = [64, 0], sizes = [32, 4], strides = [1, 1]} : vector<256x4xf32> to vector<32x4xf32>
    %cst_253 = arith.constant dense<0.000000e+00> : vector<1x4xf32>
    %1721 = tpu.matmul %1719, %1720, %cst_253 {dimension_numbers = #tpu.dot_dimension_numbers<[1], [0], [0], [1], [0, 0, 1, 1], [], []>} : vector<1x32xf32>, vector<32x4xf32>, vector<1x4xf32> -> vector<1x4xf32>
    %1722 = arith.addf %1718, %1721 : vector<1x4xf32>
    %1723 = vector.extract_strided_slice %1710 {offsets = [3, 0], sizes = [1, 32], strides = [1, 1]} : vector<8x32xf32> to vector<1x32xf32>
    %1724 = vector.extract_strided_slice %44 {offsets = [96, 0], sizes = [32, 4], strides = [1, 1]} : vector<256x4xf32> to vector<32x4xf32>
    %cst_254 = arith.constant dense<0.000000e+00> : vector<1x4xf32>
    %1725 = tpu.matmul %1723, %1724, %cst_254 {dimension_numbers = #tpu.dot_dimension_numbers<[1], [0], [0], [1], [0, 0, 1, 1], [], []>} : vector<1x32xf32>, vector<32x4xf32>, vector<1x4xf32> -> vector<1x4xf32>
    %1726 = arith.addf %1722, %1725 : vector<1x4xf32>
    %1727 = vector.extract_strided_slice %1710 {offsets = [4, 0], sizes = [1, 32], strides = [1, 1]} : vector<8x32xf32> to vector<1x32xf32>
    %1728 = vector.extract_strided_slice %44 {offsets = [128, 0], sizes = [32, 4], strides = [1, 1]} : vector<256x4xf32> to vector<32x4xf32>
    %cst_255 = arith.constant dense<0.000000e+00> : vector<1x4xf32>
    %1729 = tpu.matmul %1727, %1728, %cst_255 {dimension_numbers = #tpu.dot_dimension_numbers<[1], [0], [0], [1], [0, 0, 1, 1], [], []>} : vector<1x32xf32>, vector<32x4xf32>, vector<1x4xf32> -> vector<1x4xf32>
    %1730 = arith.addf %1726, %1729 : vector<1x4xf32>
    %1731 = vector.extract_strided_slice %1710 {offsets = [5, 0], sizes = [1, 32], strides = [1, 1]} : vector<8x32xf32> to vector<1x32xf32>
    %1732 = vector.extract_strided_slice %44 {offsets = [160, 0], sizes = [32, 4], strides = [1, 1]} : vector<256x4xf32> to vector<32x4xf32>
    %cst_256 = arith.constant dense<0.000000e+00> : vector<1x4xf32>
    %1733 = tpu.matmul %1731, %1732, %cst_256 {dimension_numbers = #tpu.dot_dimension_numbers<[1], [0], [0], [1], [0, 0, 1, 1], [], []>} : vector<1x32xf32>, vector<32x4xf32>, vector<1x4xf32> -> vector<1x4xf32>
    %1734 = arith.addf %1730, %1733 : vector<1x4xf32>
    %1735 = vector.extract_strided_slice %1710 {offsets = [6, 0], sizes = [1, 32], strides = [1, 1]} : vector<8x32xf32> to vector<1x32xf32>
    %1736 = vector.extract_strided_slice %44 {offsets = [192, 0], sizes = [32, 4], strides = [1, 1]} : vector<256x4xf32> to vector<32x4xf32>
    %cst_257 = arith.constant dense<0.000000e+00> : vector<1x4xf32>
    %1737 = tpu.matmul %1735, %1736, %cst_257 {dimension_numbers = #tpu.dot_dimension_numbers<[1], [0], [0], [1], [0, 0, 1, 1], [], []>} : vector<1x32xf32>, vector<32x4xf32>, vector<1x4xf32> -> vector<1x4xf32>
    %1738 = arith.addf %1734, %1737 : vector<1x4xf32>
    %1739 = vector.extract_strided_slice %1710 {offsets = [7, 0], sizes = [1, 32], strides = [1, 1]} : vector<8x32xf32> to vector<1x32xf32>
    %1740 = vector.extract_strided_slice %44 {offsets = [224, 0], sizes = [32, 4], strides = [1, 1]} : vector<256x4xf32> to vector<32x4xf32>
    %cst_258 = arith.constant dense<0.000000e+00> : vector<1x4xf32>
    %1741 = tpu.matmul %1739, %1740, %cst_258 {dimension_numbers = #tpu.dot_dimension_numbers<[1], [0], [0], [1], [0, 0, 1, 1], [], []>} : vector<1x32xf32>, vector<32x4xf32>, vector<1x4xf32> -> vector<1x4xf32>
    %1742 = arith.addf %1738, %1741 : vector<1x4xf32>
    %c0_259 = arith.constant 0 : index
    %c0_260 = arith.constant 0 : index
    %c0_261 = arith.constant 0 : index
    %1743 = vector.load %arg16[%c0_259, %c0_260, %c0_261] : memref<1x1x4xf32, #tpu.memory_space<vmem>>, vector<1x1x4xf32>
    %1744 = vector.shape_cast %1743 : vector<1x1x4xf32> to vector<1x4xf32>
    %1745 = vector.shape_cast %1742 : vector<1x4xf32> to vector<1x1x4xf32>
    tpu.vector_store %arg16[%c0_259, %c0_260, %c0_261], %1745 {strides = array<i32>} : memref<1x1x4xf32, #tpu.memory_space<vmem>>, vector<1x1x4xf32>,
    return
  }
  func.func @transform_0(%arg0: i32) -> (i32, i32) {
    %c0_i32 = arith.constant 0 : i32
    %c0_i32_0 = arith.constant 0 : i32
    return %arg0, %c0_i32 : i32, i32
  }
  func.func @transform_1(%arg0: i32) -> (i32, i32) {
    %c0_i32 = arith.constant 0 : i32
    %c0_i32_0 = arith.constant 0 : i32
    %c0_i32_1 = arith.constant 0 : i32
    return %c0_i32, %c0_i32_0 : i32, i32
  }
  func.func @transform_2(%arg0: i32) -> (i32, i32) {
    %c0_i32 = arith.constant 0 : i32
    %c0_i32_0 = arith.constant 0 : i32
    %c0_i32_1 = arith.constant 0 : i32
    return %c0_i32, %c0_i32_0 : i32, i32
  }
  func.func @transform_3(%arg0: i32) -> (i32, i32) {
    %c0_i32 = arith.constant 0 : i32
    %c0_i32_0 = arith.constant 0 : i32
    %c0_i32_1 = arith.constant 0 : i32
    return %c0_i32, %c0_i32_0 : i32, i32
  }
  func.func @transform_4(%arg0: i32) -> (i32, i32) {
    %c0_i32 = arith.constant 0 : i32
    %c0_i32_0 = arith.constant 0 : i32
    %c0_i32_1 = arith.constant 0 : i32
    return %c0_i32, %c0_i32_0 : i32, i32
  }
  func.func @transform_5(%arg0: i32) -> (i32, i32) {
    %c0_i32 = arith.constant 0 : i32
    %c0_i32_0 = arith.constant 0 : i32
    %c0_i32_1 = arith.constant 0 : i32
    return %c0_i32, %c0_i32_0 : i32, i32
  }
  func.func @transform_6(%arg0: i32) -> (i32, i32) {
    %c0_i32 = arith.constant 0 : i32
    %c0_i32_0 = arith.constant 0 : i32
    %c0_i32_1 = arith.constant 0 : i32
    return %c0_i32, %c0_i32_0 : i32, i32
  }
  func.func @transform_7(%arg0: i32) -> (i32, i32) {
    %c0_i32 = arith.constant 0 : i32
    %c0_i32_0 = arith.constant 0 : i32
    %c0_i32_1 = arith.constant 0 : i32
    return %c0_i32, %c0_i32_0 : i32, i32
  }
  func.func @transform_8(%arg0: i32) -> (i32, i32) {
    %c0_i32 = arith.constant 0 : i32
    %c0_i32_0 = arith.constant 0 : i32
    %c0_i32_1 = arith.constant 0 : i32
    return %c0_i32, %c0_i32_0 : i32, i32
  }
  func.func @transform_9(%arg0: i32) -> (i32, i32) {
    %c0_i32 = arith.constant 0 : i32
    %c0_i32_0 = arith.constant 0 : i32
    %c0_i32_1 = arith.constant 0 : i32
    return %c0_i32, %c0_i32_0 : i32, i32
  }
  func.func @transform_10(%arg0: i32) -> (i32, i32) {
    %c0_i32 = arith.constant 0 : i32
    %c0_i32_0 = arith.constant 0 : i32
    %c0_i32_1 = arith.constant 0 : i32
    return %c0_i32, %c0_i32_0 : i32, i32
  }
  func.func @transform_11(%arg0: i32) -> (i32, i32) {
    %c0_i32 = arith.constant 0 : i32
    %c0_i32_0 = arith.constant 0 : i32
    %c0_i32_1 = arith.constant 0 : i32
    return %c0_i32, %c0_i32_0 : i32, i32
  }
  func.func @transform_12(%arg0: i32) -> (i32, i32) {
    %c0_i32 = arith.constant 0 : i32
    %c0_i32_0 = arith.constant 0 : i32
    %c0_i32_1 = arith.constant 0 : i32
    return %c0_i32, %c0_i32_0 : i32, i32
  }
  func.func @transform_13(%arg0: i32) -> (i32, i32) {
    %c0_i32 = arith.constant 0 : i32
    %c0_i32_0 = arith.constant 0 : i32
    %c0_i32_1 = arith.constant 0 : i32
    return %c0_i32, %c0_i32_0 : i32, i32
  }
  func.func @transform_14(%arg0: i32) -> (i32, i32) {
    %c0_i32 = arith.constant 0 : i32
    %c0_i32_0 = arith.constant 0 : i32
    %c0_i32_1 = arith.constant 0 : i32
    return %c0_i32, %c0_i32_0 : i32, i32
  }
  func.func @transform_15(%arg0: i32) -> (i32, i32, i32) {
    %c0_i32 = arith.constant 0 : i32
    %c0_i32_0 = arith.constant 0 : i32
    %c0_i32_1 = arith.constant 0 : i32
    return %arg0, %c0_i32, %c0_i32_0 : i32, i32, i32
  }
}

</mosaic_0001>

<llo_original>
// kernel: transformer_forward.1
$region0: #{transformer_forward.1}
  #allocation0 [shape = 'u32[]', space=smem, size = 0x4, offset = 0x4, fixed_abs, tag = 'smem constant byte address 0x4 - core index']
  #allocation1 [shape = 'u32[144,128]{1,0:T(1,128)}', space=vmem, size = 0x12000, scoped, tag = 'internal scratch']
  %s0 = inlined_call_operand.vmem [shape: f32[16,32], index: 0, kind: input, shape index: {}]
  %s1 = inlined_call_operand.vmem [shape: f32[32,96], index: 1, kind: input, shape index: {}]
  %s2 = inlined_call_operand.vmem [shape: f32[1,96], index: 2, kind: input, shape index: {}]
  %s3 = inlined_call_operand.vmem [shape: f32[32,32], index: 3, kind: input, shape index: {}]
  %s4 = inlined_call_operand.vmem [shape: f32[1,32], index: 4, kind: input, shape index: {}]
  %s5 = inlined_call_operand.vmem [shape: f32[1,32], index: 5, kind: input, shape index: {}]
  %s6 = inlined_call_operand.vmem [shape: f32[1,32], index: 6, kind: input, shape index: {}]
  %s7 = inlined_call_operand.vmem [shape: f32[32,64], index: 7, kind: input, shape index: {}]
  %s8 = inlined_call_operand.vmem [shape: f32[1,64], index: 8, kind: input, shape index: {}]
  %s9 = inlined_call_operand.vmem [shape: f32[64,32], index: 9, kind: input, shape index: {}]
  %s10 = inlined_call_operand.vmem [shape: f32[1,32], index: 10, kind: input, shape index: {}]
  %s11 = inlined_call_operand.vmem [shape: f32[1,32], index: 11, kind: input, shape index: {}]
  %s12 = inlined_call_operand.vmem [shape: f32[1,32], index: 12, kind: input, shape index: {}]
  %s13 = inlined_call_operand.vmem [shape: f32[256,4], index: 13, kind: input, shape index: {}]
  %s14 = inlined_call_operand.vmem [shape: f32[1,4], index: 14, kind: input, shape index: {}]
  %s15 = inlined_call_operand.hbm [shape: f32[2,1,4], index: 15, kind: output, shape index: {}]
  %s16 = sld [smem:[#allocation0]]
  $region93: #{transformer_forward.1} parent=0
    _
  %s18 = ssub.s32 1, %s16
  %s19 = scalar_select 0, %s18, %s16
  $region1: #{transformer_forward.1} parent=0
    #allocation2 [shape = 'u8[1024]{0}', space=vmem, size = 0x400, scoped, tag = 'output window, operand 0']
    #allocation3 [shape = 's32[2]{0}', space=sflag, size = 0x8, scoped, tag = 'scoped memory for transformer_forward.1']
    %20 = vsyncpa [#allocation3], 0
    %s21 = scalar_lea.sflag [#allocation3], 1
    %22 = vsyncpa %s21, 0
    loop: start=0, step=1, limit=4
    $region2: #{transformer_forward.1} parent=1 // loop_pre_header
      _
    $region3: #{transformer_forward.1} parent=1 // loop_header
      %s24 = sphi 0, %s28
      %p25 = scmp.ge.s32.totalorder %s24, 4
      %s34 = sphi 0, %s36
      %s37 = sphi 0, %s34
      %s38 = sphi 0, %s37
      %s54 = sphi 0, %s38
      %s58 = sphi 0, %s58
      %s60 = sphi 0, %s58
      %s61 = sphi 0, %s60
      %s75 = sphi 0, %s61
      %s79 = sphi 0, %s79
      %s81 = sphi 0, %s79
      %s82 = sphi 0, %s81
      %s96 = sphi 0, %s82
      %s100 = sphi 0, %s100
      %s102 = sphi 0, %s100
      %s103 = sphi 0, %s102
      %s117 = sphi 0, %s103
      %s121 = sphi 0, %s121
      %s123 = sphi 0, %s121
      %s124 = sphi 0, %s123
      %s138 = sphi 0, %s124
      %s142 = sphi 0, %s142
      %s144 = sphi 0, %s142
      %s145 = sphi 0, %s144
      %s159 = sphi 0, %s145
      %s163 = sphi 0, %s163
      %s165 = sphi 0, %s163
      %s166 = sphi 0, %s165
      %s180 = sphi 0, %s166
      %s184 = sphi 0, %s184
      %s186 = sphi 0, %s184
      %s187 = sphi 0, %s186
      %s201 = sphi 0, %s187
      %s205 = sphi 0, %s205
      %s207 = sphi 0, %s205
      %s208 = sphi 0, %s207
      %s222 = sphi 0, %s208
      %s226 = sphi 0, %s226
      %s228 = sphi 0, %s226
      %s229 = sphi 0, %s228
      %s243 = sphi 0, %s229
      %s247 = sphi 0, %s247
      %s249 = sphi 0, %s247
      %s250 = sphi 0, %s249
      %s264 = sphi 0, %s250
      %s268 = sphi 0, %s268
      %s270 = sphi 0, %s268
      %s271 = sphi 0, %s270
      %s285 = sphi 0, %s271
      %s289 = sphi 0, %s289
      %s291 = sphi 0, %s289
      %s292 = sphi 0, %s291
      %s306 = sphi 0, %s292
      %s310 = sphi 0, %s310
      %s312 = sphi 0, %s310
      %s313 = sphi 0, %s312
      %s327 = sphi 0, %s313
      %s331 = sphi 0, %s331
      %s333 = sphi 0, %s331
      %s334 = sphi 0, %s333
      %s348 = sphi 0, %s334
      %s354 = sphi 0, %s356
      %s357 = sphi 0, %s354
      %s358 = sphi 0, %s357
      %s374 = sphi 0, %s358
    $region4: #{transformer_forward.1} parent=1 // loop_header_branch
      %27 = sbr.rel (%p25) target = $region8
    $region5: #{transformer_forward.1} parent=1 // loop_body
      %s29 = ssub.s32 %s24, 1
      %s30 = ssub.s32 %s24, 2
      %s31 = sadd.s32 %s24, 1
      %s32 = ssub.s32 %s24, %s31
      %p33 = scmp.eq.s32.totalorder %s32, 0
      %s35 = sadd.s32 %s34, 1
      %s36 = scalar_select %p33, %s34, %s35
      %p39 = pneg %p33
      %p40 = scmp.eq.s32.totalorder %s24, 1
      %p41 = por %p39, %p40
      %p42 = scmp.ne.s32.totalorder %s34, %s37
      %p43 = scmp.eq.s32.totalorder %s24, 0
      %p44 = por %p42, %p43
      %p45 = scmp.ne.s32.totalorder %s34, %s37
      %p46 = scmp.eq.s32.totalorder %s29, 1
      %p47 = por %p45, %p46
      %p48 = scmp.ne.s32.totalorder %s37, %s38
      %p49 = scmp.eq.s32.totalorder %s29, 0
      %p50 = por %p48, %p49
      %p51 = scmp.ne.s32.totalorder %s37, %s38
      %p52 = scmp.eq.s32.totalorder %s30, 1
      %p53 = por %p51, %p52
      %p55 = scmp.ne.s32.totalorder %s38, %s54
      %p56 = scmp.eq.s32.totalorder %s30, 0
      %p57 = por %p55, %p56
      %s59 = sadd.s32 %s58, 1
      %p62 = scmp.eq.s32.totalorder %s24, 1
      %p63 = scmp.ne.s32.totalorder %s58, %s60
      %p64 = scmp.eq.s32.totalorder %s24, 0
      %p65 = por %p63, %p64
      %p66 = scmp.ne.s32.totalorder %s58, %s60
      %p67 = scmp.eq.s32.totalorder %s29, 1
      %p68 = por %p66, %p67
      %p69 = scmp.ne.s32.totalorder %s60, %s61
      %p70 = scmp.eq.s32.totalorder %s29, 0
      %p71 = por %p69, %p70
      %p72 = scmp.ne.s32.totalorder %s60, %s61
      %p73 = scmp.eq.s32.totalorder %s30, 1
      %p74 = por %p72, %p73
      %p76 = scmp.ne.s32.totalorder %s61, %s75
      %p77 = scmp.eq.s32.totalorder %s30, 0
      %p78 = por %p76, %p77
      %s80 = sadd.s32 %s79, 1
      %p83 = scmp.eq.s32.totalorder %s24, 1
      %p84 = scmp.ne.s32.totalorder %s79, %s81
      %p85 = scmp.eq.s32.totalorder %s24, 0
      %p86 = por %p84, %p85
      %p87 = scmp.ne.s32.totalorder %s79, %s81
      %p88 = scmp.eq.s32.totalorder %s29, 1
      %p89 = por %p87, %p88
      %p90 = scmp.ne.s32.totalorder %s81, %s82
      %p91 = scmp.eq.s32.totalorder %s29, 0
      %p92 = por %p90, %p91
      %p93 = scmp.ne.s32.totalorder %s81, %s82
      %p94 = scmp.eq.s32.totalorder %s30, 1
      %p95 = por %p93, %p94
      %p97 = scmp.ne.s32.totalorder %s82, %s96
      %p98 = scmp.eq.s32.totalorder %s30, 0
      %p99 = por %p97, %p98
      %s101 = sadd.s32 %s100, 1
      %p104 = scmp.eq.s32.totalorder %s24, 1
      %p105 = scmp.ne.s32.totalorder %s100, %s102
      %p106 = scmp.eq.s32.totalorder %s24, 0
      %p107 = por %p105, %p106
      %p108 = scmp.ne.s32.totalorder %s100, %s102
      %p109 = scmp.eq.s32.totalorder %s29, 1
      %p110 = por %p108, %p109
      %p111 = scmp.ne.s32.totalorder %s102, %s103
      %p112 = scmp.eq.s32.totalorder %s29, 0
      %p113 = por %p111, %p112
      %p114 = scmp.ne.s32.totalorder %s102, %s103
      %p115 = scmp.eq.s32.totalorder %s30, 1
      %p116 = por %p114, %p115
      %p118 = scmp.ne.s32.totalorder %s103, %s117
      %p119 = scmp.eq.s32.totalorder %s30, 0
      %p120 = por %p118, %p119
      %s122 = sadd.s32 %s121, 1
      %p125 = scmp.eq.s32.totalorder %s24, 1
      %p126 = scmp.ne.s32.totalorder %s121, %s123
      %p127 = scmp.eq.s32.totalorder %s24, 0
      %p128 = por %p126, %p127
      %p129 = scmp.ne.s32.totalorder %s121, %s123
      %p130 = scmp.eq.s32.totalorder %s29, 1
      %p131 = por %p129, %p130
      %p132 = scmp.ne.s32.totalorder %s123, %s124
      %p133 = scmp.eq.s32.totalorder %s29, 0
      %p134 = por %p132, %p133
      %p135 = scmp.ne.s32.totalorder %s123, %s124
      %p136 = scmp.eq.s32.totalorder %s30, 1
      %p137 = por %p135, %p136
      %p139 = scmp.ne.s32.totalorder %s124, %s138
      %p140 = scmp.eq.s32.totalorder %s30, 0
      %p141 = por %p139, %p140
      %s143 = sadd.s32 %s142, 1
      %p146 = scmp.eq.s32.totalorder %s24, 1
      %p147 = scmp.ne.s32.totalorder %s142, %s144
      %p148 = scmp.eq.s32.totalorder %s24, 0
      %p149 = por %p147, %p148
      %p150 = scmp.ne.s32.totalorder %s142, %s144
      %p151 = scmp.eq.s32.totalorder %s29, 1
      %p152 = por %p150, %p151
      %p153 = scmp.ne.s32.totalorder %s144, %s145
      %p154 = scmp.eq.s32.totalorder %s29, 0
      %p155 = por %p153, %p154
      %p156 = scmp.ne.s32.totalorder %s144, %s145
      %p157 = scmp.eq.s32.totalorder %s30, 1
      %p158 = por %p156, %p157
      %p160 = scmp.ne.s32.totalorder %s145, %s159
      %p161 = scmp.eq.s32.totalorder %s30, 0
      %p162 = por %p160, %p161
      %s164 = sadd.s32 %s163, 1
      %p167 = scmp.eq.s32.totalorder %s24, 1
      %p168 = scmp.ne.s32.totalorder %s163, %s165
      %p169 = scmp.eq.s32.totalorder %s24, 0
      %p170 = por %p168, %p169
      %p171 = scmp.ne.s32.totalorder %s163, %s165
      %p172 = scmp.eq.s32.totalorder %s29, 1
      %p173 = por %p171, %p172
      %p174 = scmp.ne.s32.totalorder %s165, %s166
      %p175 = scmp.eq.s32.totalorder %s29, 0
      %p176 = por %p174, %p175
      %p177 = scmp.ne.s32.totalorder %s165, %s166
      %p178 = scmp.eq.s32.totalorder %s30, 1
      %p179 = por %p177, %p178
      %p181 = scmp.ne.s32.totalorder %s166, %s180
      %p182 = scmp.eq.s32.totalorder %s30, 0
      %p183 = por %p181, %p182
      %s185 = sadd.s32 %s184, 1
      %p188 = scmp.eq.s32.totalorder %s24, 1
      %p189 = scmp.ne.s32.totalorder %s184, %s186
      %p190 = scmp.eq.s32.totalorder %s24, 0
      %p191 = por %p189, %p190
      %p192 = scmp.ne.s32.totalorder %s184, %s186
      %p193 = scmp.eq.s32.totalorder %s29, 1
      %p194 = por %p192, %p193
      %p195 = scmp.ne.s32.totalorder %s186, %s187
      %p196 = scmp.eq.s32.totalorder %s29, 0
      %p197 = por %p195, %p196
      %p198 = scmp.ne.s32.totalorder %s186, %s187
      %p199 = scmp.eq.s32.totalorder %s30, 1
      %p200 = por %p198, %p199
      %p202 = scmp.ne.s32.totalorder %s187, %s201
      %p203 = scmp.eq.s32.totalorder %s30, 0
      %p204 = por %p202, %p203
      %s206 = sadd.s32 %s205, 1
      %p209 = scmp.eq.s32.totalorder %s24, 1
      %p210 = scmp.ne.s32.totalorder %s205, %s207
      %p211 = scmp.eq.s32.totalorder %s24, 0
      %p212 = por %p210, %p211
      %p213 = scmp.ne.s32.totalorder %s205, %s207
      %p214 = scmp.eq.s32.totalorder %s29, 1
      %p215 = por %p213, %p214
      %p216 = scmp.ne.s32.totalorder %s207, %s208
      %p217 = scmp.eq.s32.totalorder %s29, 0
      %p218 = por %p216, %p217
      %p219 = scmp.ne.s32.totalorder %s207, %s208
      %p220 = scmp.eq.s32.totalorder %s30, 1
      %p221 = por %p219, %p220
      %p223 = scmp.ne.s32.totalorder %s208, %s222
      %p224 = scmp.eq.s32.totalorder %s30, 0
      %p225 = por %p223, %p224
      %s227 = sadd.s32 %s226, 1
      %p230 = scmp.eq.s32.totalorder %s24, 1
      %p231 = scmp.ne.s32.totalorder %s226, %s228
      %p232 = scmp.eq.s32.totalorder %s24, 0
      %p233 = por %p231, %p232
      %p234 = scmp.ne.s32.totalorder %s226, %s228
      %p235 = scmp.eq.s32.totalorder %s29, 1
      %p236 = por %p234, %p235
      %p237 = scmp.ne.s32.totalorder %s228, %s229
      %p238 = scmp.eq.s32.totalorder %s29, 0
      %p239 = por %p237, %p238
      %p240 = scmp.ne.s32.totalorder %s228, %s229
      %p241 = scmp.eq.s32.totalorder %s30, 1
      %p242 = por %p240, %p241
      %p244 = scmp.ne.s32.totalorder %s229, %s243
      %p245 = scmp.eq.s32.totalorder %s30, 0
      %p246 = por %p244, %p245
      %s248 = sadd.s32 %s247, 1
      %p251 = scmp.eq.s32.totalorder %s24, 1
      %p252 = scmp.ne.s32.totalorder %s247, %s249
      %p253 = scmp.eq.s32.totalorder %s24, 0
      %p254 = por %p252, %p253
      %p255 = scmp.ne.s32.totalorder %s247, %s249
      %p256 = scmp.eq.s32.totalorder %s29, 1
      %p257 = por %p255, %p256
      %p258 = scmp.ne.s32.totalorder %s249, %s250
      %p259 = scmp.eq.s32.totalorder %s29, 0
      %p260 = por %p258, %p259
      %p261 = scmp.ne.s32.totalorder %s249, %s250
      %p262 = scmp.eq.s32.totalorder %s30, 1
      %p263 = por %p261, %p262
      %p265 = scmp.ne.s32.totalorder %s250, %s264
      %p266 = scmp.eq.s32.totalorder %s30, 0
      %p267 = por %p265, %p266
      %s269 = sadd.s32 %s268, 1
      %p272 = scmp.eq.s32.totalorder %s24, 1
      %p273 = scmp.ne.s32.totalorder %s268, %s270
      %p274 = scmp.eq.s32.totalorder %s24, 0
      %p275 = por %p273, %p274
      %p276 = scmp.ne.s32.totalorder %s268, %s270
      %p277 = scmp.eq.s32.totalorder %s29, 1
      %p278 = por %p276, %p277
      %p279 = scmp.ne.s32.totalorder %s270, %s271
      %p280 = scmp.eq.s32.totalorder %s29, 0
      %p281 = por %p279, %p280
      %p282 = scmp.ne.s32.totalorder %s270, %s271
      %p283 = scmp.eq.s32.totalorder %s30, 1
      %p284 = por %p282, %p283
      %p286 = scmp.ne.s32.totalorder %s271, %s285
      %p287 = scmp.eq.s32.totalorder %s30, 0
      %p288 = por %p286, %p287
      %s290 = sadd.s32 %s289, 1
      %p293 = scmp.eq.s32.totalorder %s24, 1
      %p294 = scmp.ne.s32.totalorder %s289, %s291
      %p295 = scmp.eq.s32.totalorder %s24, 0
      %p296 = por %p294, %p295
      %p297 = scmp.ne.s32.totalorder %s289, %s291
      %p298 = scmp.eq.s32.totalorder %s29, 1
      %p299 = por %p297, %p298
      %p300 = scmp.ne.s32.totalorder %s291, %s292
      %p301 = scmp.eq.s32.totalorder %s29, 0
      %p302 = por %p300, %p301
      %p303 = scmp.ne.s32.totalorder %s291, %s292
      %p304 = scmp.eq.s32.totalorder %s30, 1
      %p305 = por %p303, %p304
      %p307 = scmp.ne.s32.totalorder %s292, %s306
      %p308 = scmp.eq.s32.totalorder %s30, 0
      %p309 = por %p307, %p308
      %s311 = sadd.s32 %s310, 1
      %p314 = scmp.eq.s32.totalorder %s24, 1
      %p315 = scmp.ne.s32.totalorder %s310, %s312
      %p316 = scmp.eq.s32.totalorder %s24, 0
      %p317 = por %p315, %p316
      %p318 = scmp.ne.s32.totalorder %s310, %s312
      %p319 = scmp.eq.s32.totalorder %s29, 1
      %p320 = por %p318, %p319
      %p321 = scmp.ne.s32.totalorder %s312, %s313
      %p322 = scmp.eq.s32.totalorder %s29, 0
      %p323 = por %p321, %p322
      %p324 = scmp.ne.s32.totalorder %s312, %s313
      %p325 = scmp.eq.s32.totalorder %s30, 1
      %p326 = por %p324, %p325
      %p328 = scmp.ne.s32.totalorder %s313, %s327
      %p329 = scmp.eq.s32.totalorder %s30, 0
      %p330 = por %p328, %p329
      %s332 = sadd.s32 %s331, 1
      %p335 = scmp.eq.s32.totalorder %s24, 1
      %p336 = scmp.ne.s32.totalorder %s331, %s333
      %p337 = scmp.eq.s32.totalorder %s24, 0
      %p338 = por %p336, %p337
      %p339 = scmp.ne.s32.totalorder %s331, %s333
      %p340 = scmp.eq.s32.totalorder %s29, 1
      %p341 = por %p339, %p340
      %p342 = scmp.ne.s32.totalorder %s333, %s334
      %p343 = scmp.eq.s32.totalorder %s29, 0
      %p344 = por %p342, %p343
      %p345 = scmp.ne.s32.totalorder %s333, %s334
      %p346 = scmp.eq.s32.totalorder %s30, 1
      %p347 = por %p345, %p346
      %p349 = scmp.ne.s32.totalorder %s334, %s348
      %p350 = scmp.eq.s32.totalorder %s30, 0
      %p351 = por %p349, %p350
      %s352 = ssub.s32 %s24, %s31
      %p353 = scmp.eq.s32.totalorder %s352, 0
      %s355 = sadd.s32 %s354, 1
      %s356 = scalar_select %p353, %s354, %s355
      %p359 = pneg %p353
      %p360 = scmp.eq.s32.totalorder %s24, 1
      %p361 = por %p359, %p360
      %p362 = scmp.ne.s32.totalorder %s354, %s357
      %p363 = scmp.eq.s32.totalorder %s24, 0
      %p364 = por %p362, %p363
      %p365 = scmp.ne.s32.totalorder %s354, %s357
      %p366 = scmp.eq.s32.totalorder %s29, 1
      %p367 = por %p365, %p366
      %p368 = scmp.ne.s32.totalorder %s357, %s358
      %p369 = scmp.eq.s32.totalorder %s29, 0
      %p370 = por %p368, %p369
      %p371 = scmp.ne.s32.totalorder %s357, %s358
      %p372 = scmp.eq.s32.totalorder %s30, 1
      %p373 = por %p371, %p372
      %p375 = scmp.ne.s32.totalorder %s358, %s374
      %p376 = scmp.eq.s32.totalorder %s30, 0
      %p377 = por %p375, %p376
      %p378 = scmp.le.s32.totalorder 1, %s24
      %p379 = scmp.lt.s32.totalorder %s24, 3
      %p380 = pnand %p378, %p379
      %p381 = pneg %p380
      // Predicated region
      $region9: #{transformer_forward.1} parent=5 // pred_check
        _
      $region10: #{transformer_forward.1} parent=5 // pred_check_branch
        %383 = sbr.rel (%p380) target = $region12
      $region11: #{transformer_forward.1} parent=5 // pred_region
        %s384 = ssub.s32 %s24, 1
        // Predicated region
        $region13: #{transformer_forward.1} parent=11 // pred_check
          %p385 = pneg %p71
        $region14: #{transformer_forward.1} parent=11 // pred_check_branch
          %387 = sbr.rel (%p385) target = $region16
        $region15: #{transformer_forward.1} parent=11 // pred_region
          _
        $region16: #{transformer_forward.1} parent=11 // pred_fallthru
          _
        // Predicated region
        $region17: #{transformer_forward.1} parent=11 // pred_check
          %p388 = pneg %p92
        $region18: #{transformer_forward.1} parent=11 // pred_check_branch
          %390 = sbr.rel (%p388) target = $region20
        $region19: #{transformer_forward.1} parent=11 // pred_region
          _
        $region20: #{transformer_forward.1} parent=11 // pred_fallthru
          _
        // Predicated region
        $region21: #{transformer_forward.1} parent=11 // pred_check
          %p391 = pneg %p113
        $region22: #{transformer_forward.1} parent=11 // pred_check_branch
          %393 = sbr.rel (%p391) target = $region24
        $region23: #{transformer_forward.1} parent=11 // pred_region
          _
        $region24: #{transformer_forward.1} parent=11 // pred_fallthru
          _
        // Predicated region
        $region25: #{transformer_forward.1} parent=11 // pred_check
          %p394 = pneg %p134
        $region26: #{transformer_forward.1} parent=11 // pred_check_branch
          %396 = sbr.rel (%p394) target = $region28
        $region27: #{transformer_forward.1} parent=11 // pred_region
          _
        $region28: #{transformer_forward.1} parent=11 // pred_fallthru
          _
        // Predicated region
        $region29: #{transformer_forward.1} parent=11 // pred_check
          %p397 = pneg %p155
        $region30: #{transformer_forward.1} parent=11 // pred_check_branch
          %399 = sbr.rel (%p397) target = $region32
        $region31: #{transformer_forward.1} parent=11 // pred_region
          _
        $region32: #{transformer_forward.1} parent=11 // pred_fallthru
          _
        // Predicated region
        $region33: #{transformer_forward.1} parent=11 // pred_check
          %p400 = pneg %p176
        $region34: #{transformer_forward.1} parent=11 // pred_check_branch
          %402 = sbr.rel (%p400) target = $region36
        $region35: #{transformer_forward.1} parent=11 // pred_region
          _
        $region36: #{transformer_forward.1} parent=11 // pred_fallthru
          _
        // Predicated region
        $region37: #{transformer_forward.1} parent=11 // pred_check
          %p403 = pneg %p197
        $region38: #{transformer_forward.1} parent=11 // pred_check_branch
          %405 = sbr.rel (%p403) target = $region40
        $region39: #{transformer_forward.1} parent=11 // pred_region
          _
        $region40: #{transformer_forward.1} parent=11 // pred_fallthru
          _
        // Predicated region
        $region41: #{transformer_forward.1} parent=11 // pred_check
          %p406 = pneg %p218
        $region42: #{transformer_forward.1} parent=11 // pred_check_branch
          %408 = sbr.rel (%p406) target = $region44
        $region43: #{transformer_forward.1} parent=11 // pred_region
          _
        $region44: #{transformer_forward.1} parent=11 // pred_fallthru
          _
        // Predicated region
        $region45: #{transformer_forward.1} parent=11 // pred_check
          %p409 = pneg %p239
        $region46: #{transformer_forward.1} parent=11 // pred_check_branch
          %411 = sbr.rel (%p409) target = $region48
        $region47: #{transformer_forward.1} parent=11 // pred_region
          _
        $region48: #{transformer_forward.1} parent=11 // pred_fallthru
          _
        // Predicated region
        $region49: #{transformer_forward.1} parent=11 // pred_check
          %p412 = pneg %p260
        $region50: #{transformer_forward.1} parent=11 // pred_check_branch
          %414 = sbr.rel (%p412) target = $region52
        $region51: #{transformer_forward.1} parent=11 // pred_region
          _
        $region52: #{transformer_forward.1} parent=11 // pred_fallthru
          _
        // Predicated region
        $region53: #{transformer_forward.1} parent=11 // pred_check
          %p415 = pneg %p281
        $region54: #{transformer_forward.1} parent=11 // pred_check_branch
          %417 = sbr.rel (%p415) target = $region56
        $region55: #{transformer_forward.1} parent=11 // pred_region
          _
        $region56: #{transformer_forward.1} parent=11 // pred_fallthru
          _
        // Predicated region
        $region57: #{transformer_forward.1} parent=11 // pred_check
          %p418 = pneg %p302
        $region58: #{transformer_forward.1} parent=11 // pred_check_branch
          %420 = sbr.rel (%p418) target = $region60
        $region59: #{transformer_forward.1} parent=11 // pred_region
          _
        $region60: #{transformer_forward.1} parent=11 // pred_fallthru
          _
        // Predicated region
        $region61: #{transformer_forward.1} parent=11 // pred_check
          %p421 = pneg %p323
        $region62: #{transformer_forward.1} parent=11 // pred_check_branch
          %423 = sbr.rel (%p421) target = $region64
        $region63: #{transformer_forward.1} parent=11 // pred_region
          _
        $region64: #{transformer_forward.1} parent=11 // pred_fallthru
          _
        // Predicated region
        $region65: #{transformer_forward.1} parent=11 // pred_check
          %p424 = pneg %p344
        $region66: #{transformer_forward.1} parent=11 // pred_check_branch
          %426 = sbr.rel (%p424) target = $region68
        $region67: #{transformer_forward.1} parent=11 // pred_region
          _
        $region68: #{transformer_forward.1} parent=11 // pred_fallthru
          _
      $region12: #{transformer_forward.1} parent=5 // pred_fallthru
        _
      %p427 = scmp.lt.s32.totalorder %s24, 2
      // Predicated region
      $region69: #{transformer_forward.1} parent=5 // pred_check
        %p428 = pneg %p427
      $region70: #{transformer_forward.1} parent=5 // pred_check_branch
        %430 = sbr.rel (%p428) target = $region72
      $region71: #{transformer_forward.1} parent=5 // pred_region
        // Predicated region
        $region73: #{transformer_forward.1} parent=71 // pred_check
          %p431 = pneg %p44
        $region74: #{transformer_forward.1} parent=71 // pred_check_branch
          %433 = sbr.rel (%p431) target = $region76
        $region75: #{transformer_forward.1} parent=71 // pred_region
          %p434 = scmp.lt.s32.totalorder %s24, 1
          %s435 = scalar_select %p434, %s24, 1
          %s436 = smul.addr %s435, 8
          %s437 = scalar_lea.vmem %s0, %s436
        $region76: #{transformer_forward.1} parent=71 // pred_fallthru
          _
      $region72: #{transformer_forward.1} parent=5 // pred_fallthru
        _
      %p438 = scmp.le.s32.totalorder 1, %s24
      %p439 = scmp.lt.s32.totalorder %s24, 3
      %p440 = pnand %p438, %p439
      %p441 = pneg %p440
      // Predicated region
      $region77: #{transformer_forward.1} parent=5 // pred_check
        _
      $region78: #{transformer_forward.1} parent=5 // pred_check_branch
        %443 = sbr.rel (%p440) target = $region80
      $region79: #{transformer_forward.1} parent=5 // pred_region
        %s444 = ssub.s32 %s24, 1
        %p445 = scmp.lt.s32.totalorder %s29, 1
        %s446 = scalar_select %p445, %s29, 1
        %s447 = smul.addr %s446, 8
        %s448 = scalar_lea.vmem %s0, %s447
        %p449 = pneg %p50
        %p450 = pneg %p47
        %p451 = pneg %p71
        %p452 = pneg %p68
        %p453 = pneg %p92
        %p454 = pneg %p89
        %p455 = pneg %p113
        %p456 = pneg %p110
        %p457 = pneg %p134
        %p458 = pneg %p131
        %p459 = pneg %p155
        %p460 = pneg %p152
        %p461 = pneg %p176
        %p462 = pneg %p173
        %p463 = pneg %p197
        %p464 = pneg %p194
        %p465 = pneg %p218
        %p466 = pneg %p215
        %p467 = pneg %p239
        %p468 = pneg %p236
        %p469 = pneg %p260
        %p470 = pneg %p257
        %p471 = pneg %p281
        %p472 = pneg %p278
        %p473 = pneg %p302
        %p474 = pneg %p299
        %p475 = pneg %p323
        %p476 = pneg %p320
        %p477 = pneg %p344
        %p478 = pneg %p341
        %p479 = pneg %p370
        %p480 = pneg %p367
        %s481 = sand.u32 %s357, 1
        %s482 = scalar_lea.sflag [#allocation3], %s481
        %s483 = sand.u32 %s357, 1
        %s484 = scalar_lea.vmem [#allocation2], %s483
        %p485 = scmp.lt.s32.totalorder %s29, 1
        %s486 = scalar_select %p485, %s29, 1
        %s487 = smul.addr %s486, 8
        %s488 = scalar_lea.vmem %s0, %s487
        %v489 = vlaneseq
        %v490 = vshrl.u32 %v489, 7
        %v491 = vlaneseq
        %v492 = vand.u32 %v491, 127
        %v493 = vmul.u32 %v490, 2
        %vm494 = vcmp.eq.s32.totalorder %v492, %v493
        %v495 = vsel %vm494, 1, 0
        %v496 = vcvt.s32.f32 %v495
        %v497 = vadd.s32 %v493, 1
        %vm498 = vcmp.eq.s32.totalorder %v492, %v497
        %v499 = vsel %vm498, 1, 0
        %v500 = vcvt.s32.f32 %v499
        %v501 = vmul.u32 %v492, 2
        %vm502 = vcmp.eq.s32.totalorder %v490, %v501
        %v503 = vsel %vm502, 1, 0
        %v504 = vcvt.s32.f32 %v503
        %v505 = vadd.s32 %v501, 1
        %vm506 = vcmp.eq.s32.totalorder %v490, %v505
        %v507 = vsel %vm506, 1, 0
        %v508 = vcvt.s32.f32 %v507
        %v509 = vld [vmem:[%s1] sm:$0xff]
        %v510 = vld [vmem:[%s1 + $0x8] sm:$0xff]
        %v511 = vld [vmem:[%s1 + $0x10] sm:$0xff]
        %v512 = vld [vmem:[%s1 + $0x18] sm:$0xff]
        %v513 = vld [vmem:[%s2] sm:$0x1]
        %v514 = vld [vmem:[%s3] sm:$0xff]
        %v515 = vld [vmem:[%s3 + $0x8] sm:$0xff]
        %v516 = vld [vmem:[%s3 + $0x10] sm:$0xff]
        %v517 = vld [vmem:[%s3 + $0x18] sm:$0xff]
        %v518 = vld [vmem:[%s4] sm:$0x1]
        %v519 = vld [vmem:[%s5] sm:$0x1]
        %v520 = vld [vmem:[%s6] sm:$0x1]
        %v521 = vld [vmem:[%s7] sm:$0xff]
        %v522 = vld [vmem:[%s7 + $0x8] sm:$0xff]
        %v523 = vld [vmem:[%s7 + $0x10] sm:$0xff]
        %v524 = vld [vmem:[%s7 + $0x18] sm:$0xff]
        %v525 = vld [vmem:[%s8] sm:$0x1]
        %v526 = vld [vmem:[%s9] sm:$0xff]
        %v527 = vld [vmem:[%s9 + $0x8] sm:$0xff]
        %v528 = vld [vmem:[%s9 + $0x10] sm:$0xff]
        %v529 = vld [vmem:[%s9 + $0x18] sm:$0xff]
        %v530 = vld [vmem:[%s9 + $0x20] sm:$0xff]
        %v531 = vld [vmem:[%s9 + $0x28] sm:$0xff]
        %v532 = vld [vmem:[%s9 + $0x30] sm:$0xff]
        %v533 = vld [vmem:[%s9 + $0x38] sm:$0xff]
        %v534 = vld [vmem:[%s10] sm:$0x1]
        %v535 = vld [vmem:[%s11] sm:$0x1]
        %v536 = vld [vmem:[%s12] sm:$0x1]
        %v537 = vld [vmem:[%s13] sm:$0xff]
        %v538 = vld [vmem:[%s13 + $0x8] sm:$0xff]
        %v539 = vld [vmem:[%s13 + $0x10] sm:$0xff]
        %v540 = vld [vmem:[%s13 + $0x18] sm:$0xff]
        %v541 = vld [vmem:[%s13 + $0x20] sm:$0xff]
        %v542 = vld [vmem:[%s13 + $0x28] sm:$0xff]
        %v543 = vld [vmem:[%s13 + $0x30] sm:$0xff]
        %v544 = vld [vmem:[%s13 + $0x38] sm:$0xff]
        %v545 = vld [vmem:[%s13 + $0x40] sm:$0xff]
        %v546 = vld [vmem:[%s13 + $0x48] sm:$0xff]
        %v547 = vld [vmem:[%s13 + $0x50] sm:$0xff]
        %v548 = vld [vmem:[%s13 + $0x58] sm:$0xff]
        %v549 = vld [vmem:[%s13 + $0x60] sm:$0xff]
        %v550 = vld [vmem:[%s13 + $0x68] sm:$0xff]
        %v551 = vld [vmem:[%s13 + $0x70] sm:$0xff]
        %v552 = vld [vmem:[%s13 + $0x78] sm:$0xff]
        %v553 = vld [vmem:[%s13 + $0x80] sm:$0xff]
        %v554 = vld [vmem:[%s13 + $0x88] sm:$0xff]
        %v555 = vld [vmem:[%s13 + $0x90] sm:$0xff]
        %v556 = vld [vmem:[%s13 + $0x98] sm:$0xff]
        %v557 = vld [vmem:[%s13 + $0xa0] sm:$0xff]
        %v558 = vld [vmem:[%s13 + $0xa8] sm:$0xff]
        %v559 = vld [vmem:[%s13 + $0xb0] sm:$0xff]
        %v560 = vld [vmem:[%s13 + $0xb8] sm:$0xff]
        %v561 = vld [vmem:[%s13 + $0xc0] sm:$0xff]
        %v562 = vld [vmem:[%s13 + $0xc8] sm:$0xff]
        %v563 = vld [vmem:[%s13 + $0xd0] sm:$0xff]
        %v564 = vld [vmem:[%s13 + $0xd8] sm:$0xff]
        %v565 = vld [vmem:[%s13 + $0xe0] sm:$0xff]
        %v566 = vld [vmem:[%s13 + $0xe8] sm:$0xff]
        %v567 = vld [vmem:[%s13 + $0xf0] sm:$0xff]
        %v568 = vld [vmem:[%s13 + $0xf8] sm:$0xff]
        %v569 = vld [vmem:[%s14] sm:$0x1]
        %v570 = vld [vmem:[%s488] sm:$0xff]
        %v572 = vlaneseq
        %v573 = vshrl.u32 %v572, 7
        %v574 = vsub.s32 0, %v573
        %v575 = vrot.slane %v513, %v574
        %vm577 = vcmask 261120
        %v579 = vsel %vm577, %v570, 0
        %581 = vmatprep.subr.mxu0 0.0
        %582 = vmatpush1.msra.mxu0 %v509
        %583 = vmatprep.subr.mxu0 0.0
        %584 = vmatpush1.msra.mxu0 %v510
        %585 = vmatprep.subr.mxu0 0.0
        %586 = vmatpush1.msra.mxu0 %v511
        %587 = vmatprep.subr.mxu0 0.0
        %588 = vmatpush1.msra.mxu0 %v512
        %589 = vmatprep.subr.mxu0 0.0
        %590 = vmatpush1.msra.mxu0 0.0
        %591 = vmatprep.subr.mxu0 0.0
        %592 = vmatpush1.msra.mxu0 0.0
        %593 = vmatprep.subr.mxu0 0.0
        %594 = vmatpush1.msra.mxu0 0.0
        %595 = vmatprep.subr.mxu0 0.0
        %596 = vmatpush1.msra.mxu0 0.0
        %597 = vmatprep.subr.mxu0 0.0
        %598 = vmatpush1.msra.mxu0 0.0
        %599 = vmatprep.subr.mxu0 0.0
        %600 = vmatpush1.msra.mxu0 0.0
        %601 = vmatprep.subr.mxu0 0.0
        %602 = vmatpush1.msra.mxu0 0.0
        %603 = vmatprep.subr.mxu0 0.0
        %604 = vmatpush1.msra.mxu0 0.0
        %605 = vmatprep.subr.mxu0 0.0
        %606 = vmatpush1.msra.mxu0 0.0
        %607 = vmatprep.subr.mxu0 0.0
        %608 = vmatpush1.msra.mxu0 0.0
        %609 = vmatprep.subr.mxu0 0.0
        %610 = vmatpush1.msra.mxu0 0.0
        %611 = vmatprep.subr.mxu0 0.0
        %612 = vmatpush1.msra.mxu0 0.0
        %613 = vmatprep.subr.mxu0 0.0
        %614 = vmatpush1.msra.mxu0 0.0
        %615 = vmatprep.subr.mxu0 0.0
        %616 = vmatpush1.msra.mxu0 0.0
        %617 = vmatprep.subr.mxu0 0.0
        %618 = vmatpush1.msra.mxu0 0.0
        %619 = vmatprep.subr.mxu0 0.0
        %620 = vmatpush1.msra.mxu0 0.0
        %621 = vmatprep.subr.mxu0 0.0
        %622 = vmatpush1.msra.mxu0 0.0
        %623 = vmatprep.subr.mxu0 0.0
        %624 = vmatpush1.msra.mxu0 0.0
        %625 = vmatprep.subr.mxu0 0.0
        %626 = vmatpush1.msra.mxu0 0.0
        %627 = vmatprep.subr.mxu0 0.0
        %628 = vmatpush1.msra.mxu0 0.0
        %629 = vmatprep.subr.mxu0 0.0
        %630 = vmatpush1.msra.mxu0 0.0
        %631 = vmatprep.subr.mxu0 0.0
        %632 = vmatpush1.msra.mxu0 0.0
        %633 = vmatprep.subr.mxu0 0.0
        %634 = vmatpush1.msra.mxu0 0.0
        %635 = vmatprep.subr.mxu0 0.0
        %636 = vmatpush1.msra.mxu0 0.0
        %637 = vmatprep.subr.mxu0 0.0
        %638 = vmatpush1.msra.mxu0 0.0
        %639 = vmatprep.subr.mxu0 0.0
        %640 = vmatpush1.msra.mxu0 0.0
        %641 = vmatprep.subr.mxu0 0.0
        %642 = vmatpush1.msra.mxu0 0.0
        %643 = vmatprep.subr.mxu0 0.0
        %644 = vmatpush1.msra.mxu0 0.0
        %645 = vmatprep.mubr.f32.mxu0 0.0
        %646 = vmatmul.mubr.f32.gmra.mrb[0].mxu0 %v579
        %v647 = vpop.f32.mrb[0].mxu0
        %v648 = vadd.f32 %v575, %v647
        %v649 = vpop.f32.mrb[0].mxu0
        %650 = vdwg.mxu0
        %vm651 = vcmask 64512
        %v653 = vsel %vm651, %v496, 0
        %655 = vmatprep.subr.mxu0 0.0
        %656 = vmatpush1.msra.mxu0 %v648
        %657 = vmatprep.subr.mxu0 0.0
        %658 = vmatpush1.msra.mxu0 0.0
        %659 = vmatprep.subr.mxu0 0.0
        %660 = vmatpush1.msra.mxu0 0.0
        %661 = vmatprep.subr.mxu0 0.0
        %662 = vmatpush1.msra.mxu0 0.0
        %663 = vmatprep.subr.mxu0 0.0
        %664 = vmatpush1.msra.mxu0 0.0
        %665 = vmatprep.subr.mxu0 0.0
        %666 = vmatpush1.msra.mxu0 0.0
        %667 = vmatprep.subr.mxu0 0.0
        %668 = vmatpush1.msra.mxu0 0.0
        %669 = vmatprep.subr.mxu0 0.0
        %670 = vmatpush1.msra.mxu0 0.0
        %671 = vmatprep.subr.mxu0 0.0
        %672 = vmatpush1.msra.mxu0 0.0
        %673 = vmatprep.subr.mxu0 0.0
        %674 = vmatpush1.msra.mxu0 0.0
        %675 = vmatprep.subr.mxu0 0.0
        %676 = vmatpush1.msra.mxu0 0.0
        %677 = vmatprep.subr.mxu0 0.0
        %678 = vmatpush1.msra.mxu0 0.0
        %679 = vmatprep.subr.mxu0 0.0
        %680 = vmatpush1.msra.mxu0 0.0
        %681 = vmatprep.subr.mxu0 0.0
        %682 = vmatpush1.msra.mxu0 0.0
        %683 = vmatprep.subr.mxu0 0.0
        %684 = vmatpush1.msra.mxu0 0.0
        %685 = vmatprep.subr.mxu0 0.0
        %686 = vmatpush1.msra.mxu0 0.0
        %687 = vmatprep.subr.mxu0 0.0
        %688 = vmatpush1.msra.mxu0 0.0
        %689 = vmatprep.subr.mxu0 0.0
        %690 = vmatpush1.msra.mxu0 0.0
        %691 = vmatprep.subr.mxu0 0.0
        %692 = vmatpush1.msra.mxu0 0.0
        %693 = vmatprep.subr.mxu0 0.0
        %694 = vmatpush1.msra.mxu0 0.0
        %695 = vmatprep.subr.mxu0 0.0
        %696 = vmatpush1.msra.mxu0 0.0
        %697 = vmatprep.subr.mxu0 0.0
        %698 = vmatpush1.msra.mxu0 0.0
        %699 = vmatprep.subr.mxu0 0.0
        %700 = vmatpush1.msra.mxu0 0.0
        %701 = vmatprep.subr.mxu0 0.0
        %702 = vmatpush1.msra.mxu0 0.0
        %703 = vmatprep.subr.mxu0 0.0
        %704 = vmatpush1.msra.mxu0 0.0
        %705 = vmatprep.subr.mxu0 0.0
        %706 = vmatpush1.msra.mxu0 0.0
        %707 = vmatprep.subr.mxu0 0.0
        %708 = vmatpush1.msra.mxu0 0.0
        %709 = vmatprep.subr.mxu0 0.0
        %710 = vmatpush1.msra.mxu0 0.0
        %711 = vmatprep.subr.mxu0 0.0
        %712 = vmatpush1.msra.mxu0 0.0
        %713 = vmatprep.subr.mxu0 0.0
        %714 = vmatpush1.msra.mxu0 0.0
        %715 = vmatprep.subr.mxu0 0.0
        %716 = vmatpush1.msra.mxu0 0.0
        %717 = vmatprep.subr.mxu0 0.0
        %718 = vmatpush1.msra.mxu0 0.0
        %719 = vmatprep.mubr.f32.mxu0 0.0
        %720 = vmatmul.mubr.f32.gmra.mrb[0].mxu0 %v653
        %v721 = vpop.f32.mrb[0].mxu0
        %v722 = vadd.f32 0.0, %v721
        %v723 = vpop.f32.mrb[0].mxu0
        %724 = vdwg.mxu0
        %v726 = vsel %vm651, %v500, 0
        %728 = vmatprep.subr.mxu0 0.0
        %729 = vmatpush1.msra.mxu0 %v648
        %730 = vmatprep.subr.mxu0 0.0
        %731 = vmatpush1.msra.mxu0 0.0
        %732 = vmatprep.subr.mxu0 0.0
        %733 = vmatpush1.msra.mxu0 0.0
        %734 = vmatprep.subr.mxu0 0.0
        %735 = vmatpush1.msra.mxu0 0.0
        %736 = vmatprep.subr.mxu0 0.0
        %737 = vmatpush1.msra.mxu0 0.0
        %738 = vmatprep.subr.mxu0 0.0
        %739 = vmatpush1.msra.mxu0 0.0
        %740 = vmatprep.subr.mxu0 0.0
        %741 = vmatpush1.msra.mxu0 0.0
        %742 = vmatprep.subr.mxu0 0.0
        %743 = vmatpush1.msra.mxu0 0.0
        %744 = vmatprep.subr.mxu0 0.0
        %745 = vmatpush1.msra.mxu0 0.0
        %746 = vmatprep.subr.mxu0 0.0
        %747 = vmatpush1.msra.mxu0 0.0
        %748 = vmatprep.subr.mxu0 0.0
        %749 = vmatpush1.msra.mxu0 0.0
        %750 = vmatprep.subr.mxu0 0.0
        %751 = vmatpush1.msra.mxu0 0.0
        %752 = vmatprep.subr.mxu0 0.0
        %753 = vmatpush1.msra.mxu0 0.0
        %754 = vmatprep.subr.mxu0 0.0
        %755 = vmatpush1.msra.mxu0 0.0
        %756 = vmatprep.subr.mxu0 0.0
        %757 = vmatpush1.msra.mxu0 0.0
        %758 = vmatprep.subr.mxu0 0.0
        %759 = vmatpush1.msra.mxu0 0.0
        %760 = vmatprep.subr.mxu0 0.0
        %761 = vmatpush1.msra.mxu0 0.0
        %762 = vmatprep.subr.mxu0 0.0
        %763 = vmatpush1.msra.mxu0 0.0
        %764 = vmatprep.subr.mxu0 0.0
        %765 = vmatpush1.msra.mxu0 0.0
        %766 = vmatprep.subr.mxu0 0.0
        %767 = vmatpush1.msra.mxu0 0.0
        %768 = vmatprep.subr.mxu0 0.0
        %769 = vmatpush1.msra.mxu0 0.0
        %770 = vmatprep.subr.mxu0 0.0
        %771 = vmatpush1.msra.mxu0 0.0
        %772 = vmatprep.subr.mxu0 0.0
        %773 = vmatpush1.msra.mxu0 0.0
        %774 = vmatprep.subr.mxu0 0.0
        %775 = vmatpush1.msra.mxu0 0.0
        %776 = vmatprep.subr.mxu0 0.0
        %777 = vmatpush1.msra.mxu0 0.0
        %778 = vmatprep.subr.mxu0 0.0
        %779 = vmatpush1.msra.mxu0 0.0
        %780 = vmatprep.subr.mxu0 0.0
        %781 = vmatpush1.msra.mxu0 0.0
        %782 = vmatprep.subr.mxu0 0.0
        %783 = vmatpush1.msra.mxu0 0.0
        %784 = vmatprep.subr.mxu0 0.0
        %785 = vmatpush1.msra.mxu0 0.0
        %786 = vmatprep.subr.mxu0 0.0
        %787 = vmatpush1.msra.mxu0 0.0
        %788 = vmatprep.subr.mxu0 0.0
        %789 = vmatpush1.msra.mxu0 0.0
        %790 = vmatprep.subr.mxu0 0.0
        %791 = vmatpush1.msra.mxu0 0.0
        %792 = vmatprep.mubr.f32.mxu0 0.0
        %793 = vmatmul.mubr.f32.gmra.mrb[0].mxu0 %v726
        %v794 = vpop.f32.mrb[0].mxu0
        %v795 = vadd.f32 0.0, %v794
        %v796 = vpop.f32.mrb[0].mxu0
        %797 = vdwg.mxu0
        %v798 = vmul.f32 %v722, 0.35355338
        %800 = vrot.lane.b32.xlu0 %v722, 96
        %v801 = vpop.permute.xlu0 %800
        %v803 = vmul.f32 %v798, %v801
        %vm804 = vcmask 60416
        %v805 = vsel %vm804, %v803, 0.0
        %806 = vadd.xlane.f32.xlu0 %v805
        %v807 = vpop.xlane.xlu0 %806
        %808 = vrot.lane.b32.xlu0 %v722, 88
        %v809 = vpop.permute.xlu0 %808
        %v811 = vmul.f32 %v798, %v809
        %v812 = vsel %vm804, %v811, 0.0
        %813 = vadd.xlane.f32.xlu0 %v812
        %v814 = vpop.xlane.xlu0 %813
        %815 = vrot.lane.b32.xlu0 %v722, 80
        %v816 = vpop.permute.xlu0 %815
        %v818 = vmul.f32 %v798, %v816
        %v819 = vsel %vm804, %v818, 0.0
        %820 = vadd.xlane.f32.xlu0 %v819
        %v821 = vpop.xlane.xlu0 %820
        %822 = vrot.lane.b32.xlu0 %v722, 72
        %v823 = vpop.permute.xlu0 %822
        %v825 = vmul.f32 %v798, %v823
        %v826 = vsel %vm804, %v825, 0.0
        %827 = vadd.xlane.f32.xlu0 %v826
        %v828 = vpop.xlane.xlu0 %827
        %830 = vrot.lane.b32.xlu0 %v795, 96
        %v831 = vpop.permute.xlu0 %830
        %v833 = vmul.f32 %v798, %v831
        %v834 = vsel %vm804, %v833, 0.0
        %835 = vadd.xlane.f32.xlu0 %v834
        %v836 = vpop.xlane.xlu0 %835
        %837 = vrot.lane.b32.xlu0 %v795, 88
        %v838 = vpop.permute.xlu0 %837
        %v840 = vmul.f32 %v798, %v838
        %v841 = vsel %vm804, %v840, 0.0
        %842 = vadd.xlane.f32.xlu0 %v841
        %v843 = vpop.xlane.xlu0 %842
        %844 = vrot.lane.b32.xlu0 %v795, 80
        %v845 = vpop.permute.xlu0 %844
        %v847 = vmul.f32 %v798, %v845
        %v848 = vsel %vm804, %v847, 0.0
        %849 = vadd.xlane.f32.xlu0 %v848
        %v850 = vpop.xlane.xlu0 %849
        %851 = vrot.lane.b32.xlu0 %v795, 72
        %v852 = vpop.permute.xlu0 %851
        %v854 = vmul.f32 %v798, %v852
        %v855 = vsel %vm804, %v854, 0.0
        %856 = vadd.xlane.f32.xlu0 %v855
        %v857 = vpop.xlane.xlu0 %856
        %v858 = vmax.f32 %v807, %v814
        %v859 = vmax.f32 %v858, %v821
        %v860 = vmax.f32 %v859, %v828
        %v861 = vmax.f32 %v860, %v836
        %v862 = vmax.f32 %v861, %v843
        %v863 = vmax.f32 %v862, %v850
        %v864 = vmax.f32 %v863, %v857
        %v865 = vsub.f32 %v807, %v864
        %v866 = vmul.f32 %v865, 1.442695
        %v867 = vpow.pop %v866
        %v868 = vsub.f32 %v814, %v864
        %v869 = vmul.f32 %v868, 1.442695
        %v870 = vpow.pop %v869
        %v871 = vsub.f32 %v821, %v864
        %v872 = vmul.f32 %v871, 1.442695
        %v873 = vpow.pop %v872
        %v874 = vsub.f32 %v828, %v864
        %v875 = vmul.f32 %v874, 1.442695
        %v876 = vpow.pop %v875
        %v877 = vsub.f32 %v836, %v864
        %v878 = vmul.f32 %v877, 1.442695
        %v879 = vpow.pop %v878
        %v880 = vsub.f32 %v843, %v864
        %v881 = vmul.f32 %v880, 1.442695
        %v882 = vpow.pop %v881
        %v883 = vsub.f32 %v850, %v864
        %v884 = vmul.f32 %v883, 1.442695
        %v885 = vpow.pop %v884
        %v886 = vsub.f32 %v857, %v864
        %v887 = vmul.f32 %v886, 1.442695
        %v888 = vpow.pop %v887
        %v889 = vadd.f32 %v867, %v870
        %v890 = vadd.f32 %v889, %v873
        %v891 = vadd.f32 %v890, %v876
        %v892 = vadd.f32 %v891, %v879
        %v893 = vadd.f32 %v892, %v882
        %v894 = vadd.f32 %v893, %v885
        %v895 = vadd.f32 %v894, %v888
        %v896 = vrcp.pop %v895
        %v897 = vmul.f32 %v867, %v896
        %v898 = vmul.f32 %v897, %v722
        %v899 = vadd.f32 %v898, 0.0
        %v900 = vmul.f32 %v870, %v896
        %v901 = vmul.f32 %v900, %v722
        %903 = vrot.lane.b32.xlu0 %v901, 120
        %v904 = vpop.permute.xlu0 %903
        %v906 = vadd.f32 %v899, %v904
        %v907 = vmul.f32 %v873, %v896
        %v908 = vmul.f32 %v907, %v722
        %910 = vrot.lane.b32.xlu0 %v908, 112
        %v911 = vpop.permute.xlu0 %910
        %v913 = vadd.f32 %v906, %v911
        %v914 = vmul.f32 %v876, %v896
        %v915 = vmul.f32 %v914, %v722
        %917 = vrot.lane.b32.xlu0 %v915, 104
        %v918 = vpop.permute.xlu0 %917
        %v920 = vadd.f32 %v913, %v918
        %v921 = vmul.f32 %v879, %v896
        %v922 = vmul.f32 %v921, %v795
        %v923 = vadd.f32 %v920, %v922
        %v924 = vmul.f32 %v882, %v896
        %v925 = vmul.f32 %v924, %v795
        %927 = vrot.lane.b32.xlu0 %v925, 120
        %v928 = vpop.permute.xlu0 %927
        %v930 = vadd.f32 %v923, %v928
        %v931 = vmul.f32 %v885, %v896
        %v932 = vmul.f32 %v931, %v795
        %934 = vrot.lane.b32.xlu0 %v932, 112
        %v935 = vpop.permute.xlu0 %934
        %v937 = vadd.f32 %v930, %v935
        %v938 = vmul.f32 %v888, %v896
        %v939 = vmul.f32 %v938, %v795
        %941 = vrot.lane.b32.xlu0 %v939, 104
        %v942 = vpop.permute.xlu0 %941
        %v944 = vadd.f32 %v937, %v942
        %945 = vrot.lane.b32.xlu0 %v722, 104
        %v946 = vpop.permute.xlu0 %945
        %v948 = vmul.f32 %v798, %v946
        %950 = vrot.lane.b32.xlu0 %v948, 120
        %v951 = vpop.permute.xlu0 %950
        %v953 = vsel %vm804, %v951, 0.0
        %954 = vadd.xlane.f32.xlu0 %v953
        %v955 = vpop.xlane.xlu0 %954
        %957 = vrot.lane.b32.xlu0 %v803, 120
        %v958 = vpop.permute.xlu0 %957
        %v960 = vsel %vm804, %v958, 0.0
        %961 = vadd.xlane.f32.xlu0 %v960
        %v962 = vpop.xlane.xlu0 %961
        %964 = vrot.lane.b32.xlu0 %v811, 120
        %v965 = vpop.permute.xlu0 %964
        %v967 = vsel %vm804, %v965, 0.0
        %968 = vadd.xlane.f32.xlu0 %v967
        %v969 = vpop.xlane.xlu0 %968
        %971 = vrot.lane.b32.xlu0 %v818, 120
        %v972 = vpop.permute.xlu0 %971
        %v974 = vsel %vm804, %v972, 0.0
        %975 = vadd.xlane.f32.xlu0 %v974
        %v976 = vpop.xlane.xlu0 %975
        %977 = vrot.lane.b32.xlu0 %v795, 104
        %v978 = vpop.permute.xlu0 %977
        %v980 = vmul.f32 %v798, %v978
        %982 = vrot.lane.b32.xlu0 %v980, 120
        %v983 = vpop.permute.xlu0 %982
        %v985 = vsel %vm804, %v983, 0.0
        %986 = vadd.xlane.f32.xlu0 %v985
        %v987 = vpop.xlane.xlu0 %986
        %989 = vrot.lane.b32.xlu0 %v833, 120
        %v990 = vpop.permute.xlu0 %989
        %v992 = vsel %vm804, %v990, 0.0
        %993 = vadd.xlane.f32.xlu0 %v992
        %v994 = vpop.xlane.xlu0 %993
        %996 = vrot.lane.b32.xlu0 %v840, 120
        %v997 = vpop.permute.xlu0 %996
        %v999 = vsel %vm804, %v997, 0.0
        %1000 = vadd.xlane.f32.xlu0 %v999
        %v1001 = vpop.xlane.xlu0 %1000
        %1003 = vrot.lane.b32.xlu0 %v847, 120
        %v1004 = vpop.permute.xlu0 %1003
        %v1006 = vsel %vm804, %v1004, 0.0
        %1007 = vadd.xlane.f32.xlu0 %v1006
        %v1008 = vpop.xlane.xlu0 %1007
        %v1009 = vmax.f32 %v955, %v962
        %v1010 = vmax.f32 %v1009, %v969
        %v1011 = vmax.f32 %v1010, %v976
        %v1012 = vmax.f32 %v1011, %v987
        %v1013 = vmax.f32 %v1012, %v994
        %v1014 = vmax.f32 %v1013, %v1001
        %v1015 = vmax.f32 %v1014, %v1008
        %v1016 = vsub.f32 %v955, %v1015
        %v1017 = vmul.f32 %v1016, 1.442695
        %v1018 = vpow.pop %v1017
        %v1019 = vsub.f32 %v962, %v1015
        %v1020 = vmul.f32 %v1019, 1.442695
        %v1021 = vpow.pop %v1020
        %v1022 = vsub.f32 %v969, %v1015
        %v1023 = vmul.f32 %v1022, 1.442695
        %v1024 = vpow.pop %v1023
        %v1025 = vsub.f32 %v976, %v1015
        %v1026 = vmul.f32 %v1025, 1.442695
        %v1027 = vpow.pop %v1026
        %v1028 = vsub.f32 %v987, %v1015
        %v1029 = vmul.f32 %v1028, 1.442695
        %v1030 = vpow.pop %v1029
        %v1031 = vsub.f32 %v994, %v1015
        %v1032 = vmul.f32 %v1031, 1.442695
        %v1033 = vpow.pop %v1032
        %v1034 = vsub.f32 %v1001, %v1015
        %v1035 = vmul.f32 %v1034, 1.442695
        %v1036 = vpow.pop %v1035
        %v1037 = vsub.f32 %v1008, %v1015
        %v1038 = vmul.f32 %v1037, 1.442695
        %v1039 = vpow.pop %v1038
        %v1040 = vadd.f32 %v1018, %v1021
        %v1041 = vadd.f32 %v1040, %v1024
        %v1042 = vadd.f32 %v1041, %v1027
        %v1043 = vadd.f32 %v1042, %v1030
        %v1044 = vadd.f32 %v1043, %v1033
        %v1045 = vadd.f32 %v1044, %v1036
        %v1046 = vadd.f32 %v1045, %v1039
        %v1047 = vrcp.pop %v1046
        %v1048 = vmul.f32 %v1018, %v1047
        %v1049 = vmul.f32 %v1048, %v722
        %v1050 = vadd.f32 %v1049, 0.0
        %v1051 = vmul.f32 %v1021, %v1047
        %v1052 = vmul.f32 %v1051, %v722
        %1054 = vrot.lane.b32.xlu0 %v1052, 120
        %v1055 = vpop.permute.xlu0 %1054
        %v1057 = vadd.f32 %v1050, %v1055
        %v1058 = vmul.f32 %v1024, %v1047
        %v1059 = vmul.f32 %v1058, %v722
        %1061 = vrot.lane.b32.xlu0 %v1059, 112
        %v1062 = vpop.permute.xlu0 %1061
        %v1064 = vadd.f32 %v1057, %v1062
        %v1065 = vmul.f32 %v1027, %v1047
        %v1066 = vmul.f32 %v1065, %v722
        %1068 = vrot.lane.b32.xlu0 %v1066, 104
        %v1069 = vpop.permute.xlu0 %1068
        %v1071 = vadd.f32 %v1064, %v1069
        %v1072 = vmul.f32 %v1030, %v1047
        %v1073 = vmul.f32 %v1072, %v795
        %v1074 = vadd.f32 %v1071, %v1073
        %v1075 = vmul.f32 %v1033, %v1047
        %v1076 = vmul.f32 %v1075, %v795
        %1078 = vrot.lane.b32.xlu0 %v1076, 120
        %v1079 = vpop.permute.xlu0 %1078
        %v1081 = vadd.f32 %v1074, %v1079
        %v1082 = vmul.f32 %v1036, %v1047
        %v1083 = vmul.f32 %v1082, %v795
        %1085 = vrot.lane.b32.xlu0 %v1083, 112
        %v1086 = vpop.permute.xlu0 %1085
        %v1088 = vadd.f32 %v1081, %v1086
        %v1089 = vmul.f32 %v1039, %v1047
        %v1090 = vmul.f32 %v1089, %v795
        %1092 = vrot.lane.b32.xlu0 %v1090, 104
        %v1093 = vpop.permute.xlu0 %1092
        %v1095 = vadd.f32 %v1088, %v1093
        %1097 = vrot.lane.b32.xlu0 %v1095, 64
        %v1098 = vpop.permute.xlu0 %1097
        %v1099 = vsel %vm651, %v1098, 0
        %1101 = vmatprep.subr.mxu0 0.0
        %1102 = vmatpush1.msra.mxu0 %v515
        %1103 = vmatprep.subr.mxu0 0.0
        %1104 = vmatpush1.msra.mxu0 0.0
        %1105 = vmatprep.subr.mxu0 0.0
        %1106 = vmatpush1.msra.mxu0 0.0
        %1107 = vmatprep.subr.mxu0 0.0
        %1108 = vmatpush1.msra.mxu0 0.0
        %1109 = vmatprep.subr.mxu0 0.0
        %1110 = vmatpush1.msra.mxu0 0.0
        %1111 = vmatprep.subr.mxu0 0.0
        %1112 = vmatpush1.msra.mxu0 0.0
        %1113 = vmatprep.subr.mxu0 0.0
        %1114 = vmatpush1.msra.mxu0 0.0
        %1115 = vmatprep.subr.mxu0 0.0
        %1116 = vmatpush1.msra.mxu0 0.0
        %1117 = vmatprep.subr.mxu0 0.0
        %1118 = vmatpush1.msra.mxu0 0.0
        %1119 = vmatprep.subr.mxu0 0.0
        %1120 = vmatpush1.msra.mxu0 0.0
        %1121 = vmatprep.subr.mxu0 0.0
        %1122 = vmatpush1.msra.mxu0 0.0
        %1123 = vmatprep.subr.mxu0 0.0
        %1124 = vmatpush1.msra.mxu0 0.0
        %1125 = vmatprep.subr.mxu0 0.0
        %1126 = vmatpush1.msra.mxu0 0.0
        %1127 = vmatprep.subr.mxu0 0.0
        %1128 = vmatpush1.msra.mxu0 0.0
        %1129 = vmatprep.subr.mxu0 0.0
        %1130 = vmatpush1.msra.mxu0 0.0
        %1131 = vmatprep.subr.mxu0 0.0
        %1132 = vmatpush1.msra.mxu0 0.0
        %1133 = vmatprep.subr.mxu0 0.0
        %1134 = vmatpush1.msra.mxu0 0.0
        %1135 = vmatprep.subr.mxu0 0.0
        %1136 = vmatpush1.msra.mxu0 0.0
        %1137 = vmatprep.subr.mxu0 0.0
        %1138 = vmatpush1.msra.mxu0 0.0
        %1139 = vmatprep.subr.mxu0 0.0
        %1140 = vmatpush1.msra.mxu0 0.0
        %1141 = vmatprep.subr.mxu0 0.0
        %1142 = vmatpush1.msra.mxu0 0.0
        %1143 = vmatprep.subr.mxu0 0.0
        %1144 = vmatpush1.msra.mxu0 0.0
        %1145 = vmatprep.subr.mxu0 0.0
        %1146 = vmatpush1.msra.mxu0 0.0
        %1147 = vmatprep.subr.mxu0 0.0
        %1148 = vmatpush1.msra.mxu0 0.0
        %1149 = vmatprep.subr.mxu0 0.0
        %1150 = vmatpush1.msra.mxu0 0.0
        %1151 = vmatprep.subr.mxu0 0.0
        %1152 = vmatpush1.msra.mxu0 0.0
        %1153 = vmatprep.subr.mxu0 0.0
        %1154 = vmatpush1.msra.mxu0 0.0
        %1155 = vmatprep.subr.mxu0 0.0
        %1156 = vmatpush1.msra.mxu0 0.0
        %1157 = vmatprep.subr.mxu0 0.0
        %1158 = vmatpush1.msra.mxu0 0.0
        %1159 = vmatprep.subr.mxu0 0.0
        %1160 = vmatpush1.msra.mxu0 0.0
        %1161 = vmatprep.subr.mxu0 0.0
        %1162 = vmatpush1.msra.mxu0 0.0
        %1163 = vmatprep.subr.mxu0 0.0
        %1164 = vmatpush1.msra.mxu0 0.0
        %1165 = vmatprep.mubr.f32.mxu0 0.0
        %1166 = vmatmul.mubr.f32.gmra.mrb[0].mxu0 %v1099
        %v1167 = vpop.f32.mrb[0].mxu0
        %v1168 = vadd.f32 0.0, %v1167
        %v1169 = vpop.f32.mrb[0].mxu0
        %1170 = vdwg.mxu0
        %1172 = vrot.lane.b32.xlu0 %v944, 64
        %v1173 = vpop.permute.xlu0 %1172
        %v1174 = vsel %vm651, %v1173, 0
        %1176 = vmatprep.subr.mxu0 0.0
        %1177 = vmatpush1.msra.mxu0 %v514
        %1178 = vmatprep.subr.mxu0 0.0
        %1179 = vmatpush1.msra.mxu0 0.0
        %1180 = vmatprep.subr.mxu0 0.0
        %1181 = vmatpush1.msra.mxu0 0.0
        %1182 = vmatprep.subr.mxu0 0.0
        %1183 = vmatpush1.msra.mxu0 0.0
        %1184 = vmatprep.subr.mxu0 0.0
        %1185 = vmatpush1.msra.mxu0 0.0
        %1186 = vmatprep.subr.mxu0 0.0
        %1187 = vmatpush1.msra.mxu0 0.0
        %1188 = vmatprep.subr.mxu0 0.0
        %1189 = vmatpush1.msra.mxu0 0.0
        %1190 = vmatprep.subr.mxu0 0.0
        %1191 = vmatpush1.msra.mxu0 0.0
        %1192 = vmatprep.subr.mxu0 0.0
        %1193 = vmatpush1.msra.mxu0 0.0
        %1194 = vmatprep.subr.mxu0 0.0
        %1195 = vmatpush1.msra.mxu0 0.0
        %1196 = vmatprep.subr.mxu0 0.0
        %1197 = vmatpush1.msra.mxu0 0.0
        %1198 = vmatprep.subr.mxu0 0.0
        %1199 = vmatpush1.msra.mxu0 0.0
        %1200 = vmatprep.subr.mxu0 0.0
        %1201 = vmatpush1.msra.mxu0 0.0
        %1202 = vmatprep.subr.mxu0 0.0
        %1203 = vmatpush1.msra.mxu0 0.0
        %1204 = vmatprep.subr.mxu0 0.0
        %1205 = vmatpush1.msra.mxu0 0.0
        %1206 = vmatprep.subr.mxu0 0.0
        %1207 = vmatpush1.msra.mxu0 0.0
        %1208 = vmatprep.subr.mxu0 0.0
        %1209 = vmatpush1.msra.mxu0 0.0
        %1210 = vmatprep.subr.mxu0 0.0
        %1211 = vmatpush1.msra.mxu0 0.0
        %1212 = vmatprep.subr.mxu0 0.0
        %1213 = vmatpush1.msra.mxu0 0.0
        %1214 = vmatprep.subr.mxu0 0.0
        %1215 = vmatpush1.msra.mxu0 0.0
        %1216 = vmatprep.subr.mxu0 0.0
        %1217 = vmatpush1.msra.mxu0 0.0
        %1218 = vmatprep.subr.mxu0 0.0
        %1219 = vmatpush1.msra.mxu0 0.0
        %1220 = vmatprep.subr.mxu0 0.0
        %1221 = vmatpush1.msra.mxu0 0.0
        %1222 = vmatprep.subr.mxu0 0.0
        %1223 = vmatpush1.msra.mxu0 0.0
        %1224 = vmatprep.subr.mxu0 0.0
        %1225 = vmatpush1.msra.mxu0 0.0
        %1226 = vmatprep.subr.mxu0 0.0
        %1227 = vmatpush1.msra.mxu0 0.0
        %1228 = vmatprep.subr.mxu0 0.0
        %1229 = vmatpush1.msra.mxu0 0.0
        %1230 = vmatprep.subr.mxu0 0.0
        %1231 = vmatpush1.msra.mxu0 0.0
        %1232 = vmatprep.subr.mxu0 0.0
        %1233 = vmatpush1.msra.mxu0 0.0
        %1234 = vmatprep.subr.mxu0 0.0
        %1235 = vmatpush1.msra.mxu0 0.0
        %1236 = vmatprep.subr.mxu0 0.0
        %1237 = vmatpush1.msra.mxu0 0.0
        %1238 = vmatprep.subr.mxu0 0.0
        %1239 = vmatpush1.msra.mxu0 0.0
        %1240 = vmatprep.mubr.f32.mxu0 0.0
        %1241 = vmatmul.mubr.f32.gmra.mrb[0].mxu0 %v1174
        %v1242 = vpop.f32.mrb[0].mxu0
        %v1243 = vadd.f32 %v1168, %v1242
        %v1244 = vpop.f32.mrb[0].mxu0
        %1245 = vdwg.mxu0
        %1246 = vrot.lane.b32.xlu0 %v722, 112
        %v1247 = vpop.permute.xlu0 %1246
        %v1249 = vmul.f32 %v798, %v1247
        %1251 = vrot.lane.b32.xlu0 %v1249, 112
        %v1252 = vpop.permute.xlu0 %1251
        %v1254 = vsel %vm804, %v1252, 0.0
        %1255 = vadd.xlane.f32.xlu0 %v1254
        %v1256 = vpop.xlane.xlu0 %1255
        %1257 = vrot.lane.b32.xlu0 %v948, 112
        %v1258 = vpop.permute.xlu0 %1257
        %v1260 = vsel %vm804, %v1258, 0.0
        %1261 = vadd.xlane.f32.xlu0 %v1260
        %v1262 = vpop.xlane.xlu0 %1261
        %1263 = vrot.lane.b32.xlu0 %v803, 112
        %v1264 = vpop.permute.xlu0 %1263
        %v1266 = vsel %vm804, %v1264, 0.0
        %1267 = vadd.xlane.f32.xlu0 %v1266
        %v1268 = vpop.xlane.xlu0 %1267
        %1269 = vrot.lane.b32.xlu0 %v811, 112
        %v1270 = vpop.permute.xlu0 %1269
        %v1272 = vsel %vm804, %v1270, 0.0
        %1273 = vadd.xlane.f32.xlu0 %v1272
        %v1274 = vpop.xlane.xlu0 %1273
        %1275 = vrot.lane.b32.xlu0 %v795, 112
        %v1276 = vpop.permute.xlu0 %1275
        %v1278 = vmul.f32 %v798, %v1276
        %1280 = vrot.lane.b32.xlu0 %v1278, 112
        %v1281 = vpop.permute.xlu0 %1280
        %v1283 = vsel %vm804, %v1281, 0.0
        %1284 = vadd.xlane.f32.xlu0 %v1283
        %v1285 = vpop.xlane.xlu0 %1284
        %1286 = vrot.lane.b32.xlu0 %v980, 112
        %v1287 = vpop.permute.xlu0 %1286
        %v1289 = vsel %vm804, %v1287, 0.0
        %1290 = vadd.xlane.f32.xlu0 %v1289
        %v1291 = vpop.xlane.xlu0 %1290
        %1292 = vrot.lane.b32.xlu0 %v833, 112
        %v1293 = vpop.permute.xlu0 %1292
        %v1295 = vsel %vm804, %v1293, 0.0
        %1296 = vadd.xlane.f32.xlu0 %v1295
        %v1297 = vpop.xlane.xlu0 %1296
        %1298 = vrot.lane.b32.xlu0 %v840, 112
        %v1299 = vpop.permute.xlu0 %1298
        %v1301 = vsel %vm804, %v1299, 0.0
        %1302 = vadd.xlane.f32.xlu0 %v1301
        %v1303 = vpop.xlane.xlu0 %1302
        %v1304 = vmax.f32 %v1256, %v1262
        %v1305 = vmax.f32 %v1304, %v1268
        %v1306 = vmax.f32 %v1305, %v1274
        %v1307 = vmax.f32 %v1306, %v1285
        %v1308 = vmax.f32 %v1307, %v1291
        %v1309 = vmax.f32 %v1308, %v1297
        %v1310 = vmax.f32 %v1309, %v1303
        %v1311 = vsub.f32 %v1256, %v1310
        %v1312 = vmul.f32 %v1311, 1.442695
        %v1313 = vpow.pop %v1312
        %v1314 = vsub.f32 %v1262, %v1310
        %v1315 = vmul.f32 %v1314, 1.442695
        %v1316 = vpow.pop %v1315
        %v1317 = vsub.f32 %v1268, %v1310
        %v1318 = vmul.f32 %v1317, 1.442695
        %v1319 = vpow.pop %v1318
        %v1320 = vsub.f32 %v1274, %v1310
        %v1321 = vmul.f32 %v1320, 1.442695
        %v1322 = vpow.pop %v1321
        %v1323 = vsub.f32 %v1285, %v1310
        %v1324 = vmul.f32 %v1323, 1.442695
        %v1325 = vpow.pop %v1324
        %v1326 = vsub.f32 %v1291, %v1310
        %v1327 = vmul.f32 %v1326, 1.442695
        %v1328 = vpow.pop %v1327
        %v1329 = vsub.f32 %v1297, %v1310
        %v1330 = vmul.f32 %v1329, 1.442695
        %v1331 = vpow.pop %v1330
        %v1332 = vsub.f32 %v1303, %v1310
        %v1333 = vmul.f32 %v1332, 1.442695
        %v1334 = vpow.pop %v1333
        %v1335 = vadd.f32 %v1313, %v1316
        %v1336 = vadd.f32 %v1335, %v1319
        %v1337 = vadd.f32 %v1336, %v1322
        %v1338 = vadd.f32 %v1337, %v1325
        %v1339 = vadd.f32 %v1338, %v1328
        %v1340 = vadd.f32 %v1339, %v1331
        %v1341 = vadd.f32 %v1340, %v1334
        %v1342 = vrcp.pop %v1341
        %v1343 = vmul.f32 %v1313, %v1342
        %v1344 = vmul.f32 %v1343, %v722
        %v1345 = vadd.f32 %v1344, 0.0
        %v1346 = vmul.f32 %v1316, %v1342
        %v1347 = vmul.f32 %v1346, %v722
        %1349 = vrot.lane.b32.xlu0 %v1347, 120
        %v1350 = vpop.permute.xlu0 %1349
        %v1352 = vadd.f32 %v1345, %v1350
        %v1353 = vmul.f32 %v1319, %v1342
        %v1354 = vmul.f32 %v1353, %v722
        %1356 = vrot.lane.b32.xlu0 %v1354, 112
        %v1357 = vpop.permute.xlu0 %1356
        %v1359 = vadd.f32 %v1352, %v1357
        %v1360 = vmul.f32 %v1322, %v1342
        %v1361 = vmul.f32 %v1360, %v722
        %1363 = vrot.lane.b32.xlu0 %v1361, 104
        %v1364 = vpop.permute.xlu0 %1363
        %v1366 = vadd.f32 %v1359, %v1364
        %v1367 = vmul.f32 %v1325, %v1342
        %v1368 = vmul.f32 %v1367, %v795
        %v1369 = vadd.f32 %v1366, %v1368
        %v1370 = vmul.f32 %v1328, %v1342
        %v1371 = vmul.f32 %v1370, %v795
        %1373 = vrot.lane.b32.xlu0 %v1371, 120
        %v1374 = vpop.permute.xlu0 %1373
        %v1376 = vadd.f32 %v1369, %v1374
        %v1377 = vmul.f32 %v1331, %v1342
        %v1378 = vmul.f32 %v1377, %v795
        %1380 = vrot.lane.b32.xlu0 %v1378, 112
        %v1381 = vpop.permute.xlu0 %1380
        %v1383 = vadd.f32 %v1376, %v1381
        %v1384 = vmul.f32 %v1334, %v1342
        %v1385 = vmul.f32 %v1384, %v795
        %1387 = vrot.lane.b32.xlu0 %v1385, 104
        %v1388 = vpop.permute.xlu0 %1387
        %v1390 = vadd.f32 %v1383, %v1388
        %1392 = vrot.lane.b32.xlu0 %v1390, 64
        %v1393 = vpop.permute.xlu0 %1392
        %v1394 = vsel %vm651, %v1393, 0
        %1396 = vmatprep.subr.mxu0 0.0
        %1397 = vmatpush1.msra.mxu0 %v516
        %1398 = vmatprep.subr.mxu0 0.0
        %1399 = vmatpush1.msra.mxu0 0.0
        %1400 = vmatprep.subr.mxu0 0.0
        %1401 = vmatpush1.msra.mxu0 0.0
        %1402 = vmatprep.subr.mxu0 0.0
        %1403 = vmatpush1.msra.mxu0 0.0
        %1404 = vmatprep.subr.mxu0 0.0
        %1405 = vmatpush1.msra.mxu0 0.0
        %1406 = vmatprep.subr.mxu0 0.0
        %1407 = vmatpush1.msra.mxu0 0.0
        %1408 = vmatprep.subr.mxu0 0.0
        %1409 = vmatpush1.msra.mxu0 0.0
        %1410 = vmatprep.subr.mxu0 0.0
        %1411 = vmatpush1.msra.mxu0 0.0
        %1412 = vmatprep.subr.mxu0 0.0
        %1413 = vmatpush1.msra.mxu0 0.0
        %1414 = vmatprep.subr.mxu0 0.0
        %1415 = vmatpush1.msra.mxu0 0.0
        %1416 = vmatprep.subr.mxu0 0.0
        %1417 = vmatpush1.msra.mxu0 0.0
        %1418 = vmatprep.subr.mxu0 0.0
        %1419 = vmatpush1.msra.mxu0 0.0
        %1420 = vmatprep.subr.mxu0 0.0
        %1421 = vmatpush1.msra.mxu0 0.0
        %1422 = vmatprep.subr.mxu0 0.0
        %1423 = vmatpush1.msra.mxu0 0.0
        %1424 = vmatprep.subr.mxu0 0.0
        %1425 = vmatpush1.msra.mxu0 0.0
        %1426 = vmatprep.subr.mxu0 0.0
        %1427 = vmatpush1.msra.mxu0 0.0
        %1428 = vmatprep.subr.mxu0 0.0
        %1429 = vmatpush1.msra.mxu0 0.0
        %1430 = vmatprep.subr.mxu0 0.0
        %1431 = vmatpush1.msra.mxu0 0.0
        %1432 = vmatprep.subr.mxu0 0.0
        %1433 = vmatpush1.msra.mxu0 0.0
        %1434 = vmatprep.subr.mxu0 0.0
        %1435 = vmatpush1.msra.mxu0 0.0
        %1436 = vmatprep.subr.mxu0 0.0
        %1437 = vmatpush1.msra.mxu0 0.0
        %1438 = vmatprep.subr.mxu0 0.0
        %1439 = vmatpush1.msra.mxu0 0.0
        %1440 = vmatprep.subr.mxu0 0.0
        %1441 = vmatpush1.msra.mxu0 0.0
        %1442 = vmatprep.subr.mxu0 0.0
        %1443 = vmatpush1.msra.mxu0 0.0
        %1444 = vmatprep.subr.mxu0 0.0
        %1445 = vmatpush1.msra.mxu0 0.0
        %1446 = vmatprep.subr.mxu0 0.0
        %1447 = vmatpush1.msra.mxu0 0.0
        %1448 = vmatprep.subr.mxu0 0.0
        %1449 = vmatpush1.msra.mxu0 0.0
        %1450 = vmatprep.subr.mxu0 0.0
        %1451 = vmatpush1.msra.mxu0 0.0
        %1452 = vmatprep.subr.mxu0 0.0
        %1453 = vmatpush1.msra.mxu0 0.0
        %1454 = vmatprep.subr.mxu0 0.0
        %1455 = vmatpush1.msra.mxu0 0.0
        %1456 = vmatprep.subr.mxu0 0.0
        %1457 = vmatpush1.msra.mxu0 0.0
        %1458 = vmatprep.subr.mxu0 0.0
        %1459 = vmatpush1.msra.mxu0 0.0
        %1460 = vmatprep.mubr.f32.mxu0 0.0
        %1461 = vmatmul.mubr.f32.gmra.mrb[0].mxu0 %v1394
        %v1462 = vpop.f32.mrb[0].mxu0
        %v1463 = vadd.f32 0.0, %v1462
        %v1464 = vpop.f32.mrb[0].mxu0
        %1465 = vdwg.mxu0
        %v1466 = vadd.f32 %v1243, %v1463
        %1467 = vrot.lane.b32.xlu0 %v722, 120
        %v1468 = vpop.permute.xlu0 %1467
        %v1470 = vmul.f32 %v798, %v1468
        %1472 = vrot.lane.b32.xlu0 %v1470, 104
        %v1473 = vpop.permute.xlu0 %1472
        %v1475 = vsel %vm804, %v1473, 0.0
        %1476 = vadd.xlane.f32.xlu0 %v1475
        %v1477 = vpop.xlane.xlu0 %1476
        %1478 = vrot.lane.b32.xlu0 %v1249, 104
        %v1479 = vpop.permute.xlu0 %1478
        %v1481 = vsel %vm804, %v1479, 0.0
        %1482 = vadd.xlane.f32.xlu0 %v1481
        %v1483 = vpop.xlane.xlu0 %1482
        %1484 = vrot.lane.b32.xlu0 %v948, 104
        %v1485 = vpop.permute.xlu0 %1484
        %v1487 = vsel %vm804, %v1485, 0.0
        %1488 = vadd.xlane.f32.xlu0 %v1487
        %v1489 = vpop.xlane.xlu0 %1488
        %1490 = vrot.lane.b32.xlu0 %v803, 104
        %v1491 = vpop.permute.xlu0 %1490
        %v1493 = vsel %vm804, %v1491, 0.0
        %1494 = vadd.xlane.f32.xlu0 %v1493
        %v1495 = vpop.xlane.xlu0 %1494
        %1496 = vrot.lane.b32.xlu0 %v795, 120
        %v1497 = vpop.permute.xlu0 %1496
        %v1499 = vmul.f32 %v798, %v1497
        %1501 = vrot.lane.b32.xlu0 %v1499, 104
        %v1502 = vpop.permute.xlu0 %1501
        %v1504 = vsel %vm804, %v1502, 0.0
        %1505 = vadd.xlane.f32.xlu0 %v1504
        %v1506 = vpop.xlane.xlu0 %1505
        %1507 = vrot.lane.b32.xlu0 %v1278, 104
        %v1508 = vpop.permute.xlu0 %1507
        %v1510 = vsel %vm804, %v1508, 0.0
        %1511 = vadd.xlane.f32.xlu0 %v1510
        %v1512 = vpop.xlane.xlu0 %1511
        %1513 = vrot.lane.b32.xlu0 %v980, 104
        %v1514 = vpop.permute.xlu0 %1513
        %v1516 = vsel %vm804, %v1514, 0.0
        %1517 = vadd.xlane.f32.xlu0 %v1516
        %v1518 = vpop.xlane.xlu0 %1517
        %1519 = vrot.lane.b32.xlu0 %v833, 104
        %v1520 = vpop.permute.xlu0 %1519
        %v1522 = vsel %vm804, %v1520, 0.0
        %1523 = vadd.xlane.f32.xlu0 %v1522
        %v1524 = vpop.xlane.xlu0 %1523
        %v1525 = vmax.f32 %v1477, %v1483
        %v1526 = vmax.f32 %v1525, %v1489
        %v1527 = vmax.f32 %v1526, %v1495
        %v1528 = vmax.f32 %v1527, %v1506
        %v1529 = vmax.f32 %v1528, %v1512
        %v1530 = vmax.f32 %v1529, %v1518
        %v1531 = vmax.f32 %v1530, %v1524
        %v1532 = vsub.f32 %v1477, %v1531
        %v1533 = vmul.f32 %v1532, 1.442695
        %v1534 = vpow.pop %v1533
        %v1535 = vsub.f32 %v1483, %v1531
        %v1536 = vmul.f32 %v1535, 1.442695
        %v1537 = vpow.pop %v1536
        %v1538 = vsub.f32 %v1489, %v1531
        %v1539 = vmul.f32 %v1538, 1.442695
        %v1540 = vpow.pop %v1539
        %v1541 = vsub.f32 %v1495, %v1531
        %v1542 = vmul.f32 %v1541, 1.442695
        %v1543 = vpow.pop %v1542
        %v1544 = vsub.f32 %v1506, %v1531
        %v1545 = vmul.f32 %v1544, 1.442695
        %v1546 = vpow.pop %v1545
        %v1547 = vsub.f32 %v1512, %v1531
        %v1548 = vmul.f32 %v1547, 1.442695
        %v1549 = vpow.pop %v1548
        %v1550 = vsub.f32 %v1518, %v1531
        %v1551 = vmul.f32 %v1550, 1.442695
        %v1552 = vpow.pop %v1551
        %v1553 = vsub.f32 %v1524, %v1531
        %v1554 = vmul.f32 %v1553, 1.442695
        %v1555 = vpow.pop %v1554
        %v1556 = vadd.f32 %v1534, %v1537
        %v1557 = vadd.f32 %v1556, %v1540
        %v1558 = vadd.f32 %v1557, %v1543
        %v1559 = vadd.f32 %v1558, %v1546
        %v1560 = vadd.f32 %v1559, %v1549
        %v1561 = vadd.f32 %v1560, %v1552
        %v1562 = vadd.f32 %v1561, %v1555
        %v1563 = vrcp.pop %v1562
        %v1564 = vmul.f32 %v1534, %v1563
        %v1565 = vmul.f32 %v1564, %v722
        %v1566 = vadd.f32 %v1565, 0.0
        %v1567 = vmul.f32 %v1537, %v1563
        %v1568 = vmul.f32 %v1567, %v722
        %1570 = vrot.lane.b32.xlu0 %v1568, 120
        %v1571 = vpop.permute.xlu0 %1570
        %v1573 = vadd.f32 %v1566, %v1571
        %v1574 = vmul.f32 %v1540, %v1563
        %v1575 = vmul.f32 %v1574, %v722
        %1577 = vrot.lane.b32.xlu0 %v1575, 112
        %v1578 = vpop.permute.xlu0 %1577
        %v1580 = vadd.f32 %v1573, %v1578
        %v1581 = vmul.f32 %v1543, %v1563
        %v1582 = vmul.f32 %v1581, %v722
        %1584 = vrot.lane.b32.xlu0 %v1582, 104
        %v1585 = vpop.permute.xlu0 %1584
        %v1587 = vadd.f32 %v1580, %v1585
        %v1588 = vmul.f32 %v1546, %v1563
        %v1589 = vmul.f32 %v1588, %v795
        %v1590 = vadd.f32 %v1587, %v1589
        %v1591 = vmul.f32 %v1549, %v1563
        %v1592 = vmul.f32 %v1591, %v795
        %1594 = vrot.lane.b32.xlu0 %v1592, 120
        %v1595 = vpop.permute.xlu0 %1594
        %v1597 = vadd.f32 %v1590, %v1595
        %v1598 = vmul.f32 %v1552, %v1563
        %v1599 = vmul.f32 %v1598, %v795
        %1601 = vrot.lane.b32.xlu0 %v1599, 112
        %v1602 = vpop.permute.xlu0 %1601
        %v1604 = vadd.f32 %v1597, %v1602
        %v1605 = vmul.f32 %v1555, %v1563
        %v1606 = vmul.f32 %v1605, %v795
        %1608 = vrot.lane.b32.xlu0 %v1606, 104
        %v1609 = vpop.permute.xlu0 %1608
        %v1611 = vadd.f32 %v1604, %v1609
        %1613 = vrot.lane.b32.xlu0 %v1611, 64
        %v1614 = vpop.permute.xlu0 %1613
        %v1615 = vsel %vm651, %v1614, 0
        %1617 = vmatprep.subr.mxu0 0.0
        %1618 = vmatpush1.msra.mxu0 %v517
        %1619 = vmatprep.subr.mxu0 0.0
        %1620 = vmatpush1.msra.mxu0 0.0
        %1621 = vmatprep.subr.mxu0 0.0
        %1622 = vmatpush1.msra.mxu0 0.0
        %1623 = vmatprep.subr.mxu0 0.0
        %1624 = vmatpush1.msra.mxu0 0.0
        %1625 = vmatprep.subr.mxu0 0.0
        %1626 = vmatpush1.msra.mxu0 0.0
        %1627 = vmatprep.subr.mxu0 0.0
        %1628 = vmatpush1.msra.mxu0 0.0
        %1629 = vmatprep.subr.mxu0 0.0
        %1630 = vmatpush1.msra.mxu0 0.0
        %1631 = vmatprep.subr.mxu0 0.0
        %1632 = vmatpush1.msra.mxu0 0.0
        %1633 = vmatprep.subr.mxu0 0.0
        %1634 = vmatpush1.msra.mxu0 0.0
        %1635 = vmatprep.subr.mxu0 0.0
        %1636 = vmatpush1.msra.mxu0 0.0
        %1637 = vmatprep.subr.mxu0 0.0
        %1638 = vmatpush1.msra.mxu0 0.0
        %1639 = vmatprep.subr.mxu0 0.0
        %1640 = vmatpush1.msra.mxu0 0.0
        %1641 = vmatprep.subr.mxu0 0.0
        %1642 = vmatpush1.msra.mxu0 0.0
        %1643 = vmatprep.subr.mxu0 0.0
        %1644 = vmatpush1.msra.mxu0 0.0
        %1645 = vmatprep.subr.mxu0 0.0
        %1646 = vmatpush1.msra.mxu0 0.0
        %1647 = vmatprep.subr.mxu0 0.0
        %1648 = vmatpush1.msra.mxu0 0.0
        %1649 = vmatprep.subr.mxu0 0.0
        %1650 = vmatpush1.msra.mxu0 0.0
        %1651 = vmatprep.subr.mxu0 0.0
        %1652 = vmatpush1.msra.mxu0 0.0
        %1653 = vmatprep.subr.mxu0 0.0
        %1654 = vmatpush1.msra.mxu0 0.0
        %1655 = vmatprep.subr.mxu0 0.0
        %1656 = vmatpush1.msra.mxu0 0.0
        %1657 = vmatprep.subr.mxu0 0.0
        %1658 = vmatpush1.msra.mxu0 0.0
        %1659 = vmatprep.subr.mxu0 0.0
        %1660 = vmatpush1.msra.mxu0 0.0
        %1661 = vmatprep.subr.mxu0 0.0
        %1662 = vmatpush1.msra.mxu0 0.0
        %1663 = vmatprep.subr.mxu0 0.0
        %1664 = vmatpush1.msra.mxu0 0.0
        %1665 = vmatprep.subr.mxu0 0.0
        %1666 = vmatpush1.msra.mxu0 0.0
        %1667 = vmatprep.subr.mxu0 0.0
        %1668 = vmatpush1.msra.mxu0 0.0
        %1669 = vmatprep.subr.mxu0 0.0
        %1670 = vmatpush1.msra.mxu0 0.0
        %1671 = vmatprep.subr.mxu0 0.0
        %1672 = vmatpush1.msra.mxu0 0.0
        %1673 = vmatprep.subr.mxu0 0.0
        %1674 = vmatpush1.msra.mxu0 0.0
        %1675 = vmatprep.subr.mxu0 0.0
        %1676 = vmatpush1.msra.mxu0 0.0
        %1677 = vmatprep.subr.mxu0 0.0
        %1678 = vmatpush1.msra.mxu0 0.0
        %1679 = vmatprep.subr.mxu0 0.0
        %1680 = vmatpush1.msra.mxu0 0.0
        %1681 = vmatprep.mubr.f32.mxu0 0.0
        %1682 = vmatmul.mubr.f32.gmra.mrb[0].mxu0 %v1615
        %v1683 = vpop.f32.mrb[0].mxu0
        %v1684 = vadd.f32 0.0, %v1683
        %v1685 = vpop.f32.mrb[0].mxu0
        %1686 = vdwg.mxu0
        %v1687 = vadd.f32 %v1466, %v1684
        %v1688 = vmul.f32 %v795, 0.35355338
        %v1689 = vmul.f32 %v1688, %v801
        %v1690 = vsel %vm804, %v1689, 0.0
        %1691 = vadd.xlane.f32.xlu0 %v1690
        %v1692 = vpop.xlane.xlu0 %1691
        %v1693 = vmul.f32 %v1688, %v809
        %v1694 = vsel %vm804, %v1693, 0.0
        %1695 = vadd.xlane.f32.xlu0 %v1694
        %v1696 = vpop.xlane.xlu0 %1695
        %v1697 = vmul.f32 %v1688, %v816
        %v1698 = vsel %vm804, %v1697, 0.0
        %1699 = vadd.xlane.f32.xlu0 %v1698
        %v1700 = vpop.xlane.xlu0 %1699
        %v1701 = vmul.f32 %v1688, %v823
        %v1702 = vsel %vm804, %v1701, 0.0
        %1703 = vadd.xlane.f32.xlu0 %v1702
        %v1704 = vpop.xlane.xlu0 %1703
        %v1705 = vmul.f32 %v1688, %v831
        %v1706 = vsel %vm804, %v1705, 0.0
        %1707 = vadd.xlane.f32.xlu0 %v1706
        %v1708 = vpop.xlane.xlu0 %1707
        %v1709 = vmul.f32 %v1688, %v838
        %v1710 = vsel %vm804, %v1709, 0.0
        %1711 = vadd.xlane.f32.xlu0 %v1710
        %v1712 = vpop.xlane.xlu0 %1711
        %v1713 = vmul.f32 %v1688, %v845
        %v1714 = vsel %vm804, %v1713, 0.0
        %1715 = vadd.xlane.f32.xlu0 %v1714
        %v1716 = vpop.xlane.xlu0 %1715
        %v1717 = vmul.f32 %v1688, %v852
        %v1718 = vsel %vm804, %v1717, 0.0
        %1719 = vadd.xlane.f32.xlu0 %v1718
        %v1720 = vpop.xlane.xlu0 %1719
        %v1721 = vmax.f32 %v1692, %v1696
        %v1722 = vmax.f32 %v1721, %v1700
        %v1723 = vmax.f32 %v1722, %v1704
        %v1724 = vmax.f32 %v1723, %v1708
        %v1725 = vmax.f32 %v1724, %v1712
        %v1726 = vmax.f32 %v1725, %v1716
        %v1727 = vmax.f32 %v1726, %v1720
        %v1728 = vsub.f32 %v1692, %v1727
        %v1729 = vmul.f32 %v1728, 1.442695
        %v1730 = vpow.pop %v1729
        %v1731 = vsub.f32 %v1696, %v1727
        %v1732 = vmul.f32 %v1731, 1.442695
        %v1733 = vpow.pop %v1732
        %v1734 = vsub.f32 %v1700, %v1727
        %v1735 = vmul.f32 %v1734, 1.442695
        %v1736 = vpow.pop %v1735
        %v1737 = vsub.f32 %v1704, %v1727
        %v1738 = vmul.f32 %v1737, 1.442695
        %v1739 = vpow.pop %v1738
        %v1740 = vsub.f32 %v1708, %v1727
        %v1741 = vmul.f32 %v1740, 1.442695
        %v1742 = vpow.pop %v1741
        %v1743 = vsub.f32 %v1712, %v1727
        %v1744 = vmul.f32 %v1743, 1.442695
        %v1745 = vpow.pop %v1744
        %v1746 = vsub.f32 %v1716, %v1727
        %v1747 = vmul.f32 %v1746, 1.442695
        %v1748 = vpow.pop %v1747
        %v1749 = vsub.f32 %v1720, %v1727
        %v1750 = vmul.f32 %v1749, 1.442695
        %v1751 = vpow.pop %v1750
        %v1752 = vadd.f32 %v1730, %v1733
        %v1753 = vadd.f32 %v1752, %v1736
        %v1754 = vadd.f32 %v1753, %v1739
        %v1755 = vadd.f32 %v1754, %v1742
        %v1756 = vadd.f32 %v1755, %v1745
        %v1757 = vadd.f32 %v1756, %v1748
        %v1758 = vadd.f32 %v1757, %v1751
        %v1759 = vrcp.pop %v1758
        %v1760 = vmul.f32 %v1730, %v1759
        %v1761 = vmul.f32 %v1760, %v722
        %v1762 = vadd.f32 %v1761, 0.0
        %v1763 = vmul.f32 %v1733, %v1759
        %v1764 = vmul.f32 %v1763, %v722
        %1766 = vrot.lane.b32.xlu0 %v1764, 120
        %v1767 = vpop.permute.xlu0 %1766
        %v1769 = vadd.f32 %v1762, %v1767
        %v1770 = vmul.f32 %v1736, %v1759
        %v1771 = vmul.f32 %v1770, %v722
        %1773 = vrot.lane.b32.xlu0 %v1771, 112
        %v1774 = vpop.permute.xlu0 %1773
        %v1776 = vadd.f32 %v1769, %v1774
        %v1777 = vmul.f32 %v1739, %v1759
        %v1778 = vmul.f32 %v1777, %v722
        %1780 = vrot.lane.b32.xlu0 %v1778, 104
        %v1781 = vpop.permute.xlu0 %1780
        %v1783 = vadd.f32 %v1776, %v1781
        %v1784 = vmul.f32 %v1742, %v1759
        %v1785 = vmul.f32 %v1784, %v795
        %v1786 = vadd.f32 %v1783, %v1785
        %v1787 = vmul.f32 %v1745, %v1759
        %v1788 = vmul.f32 %v1787, %v795
        %1790 = vrot.lane.b32.xlu0 %v1788, 120
        %v1791 = vpop.permute.xlu0 %1790
        %v1793 = vadd.f32 %v1786, %v1791
        %v1794 = vmul.f32 %v1748, %v1759
        %v1795 = vmul.f32 %v1794, %v795
        %1797 = vrot.lane.b32.xlu0 %v1795, 112
        %v1798 = vpop.permute.xlu0 %1797
        %v1800 = vadd.f32 %v1793, %v1798
        %v1801 = vmul.f32 %v1751, %v1759
        %v1802 = vmul.f32 %v1801, %v795
        %1804 = vrot.lane.b32.xlu0 %v1802, 104
        %v1805 = vpop.permute.xlu0 %1804
        %v1807 = vadd.f32 %v1800, %v1805
        %v1808 = vmul.f32 %v1688, %v946
        %1810 = vrot.lane.b32.xlu0 %v1808, 120
        %v1811 = vpop.permute.xlu0 %1810
        %v1813 = vsel %vm804, %v1811, 0.0
        %1814 = vadd.xlane.f32.xlu0 %v1813
        %v1815 = vpop.xlane.xlu0 %1814
        %1817 = vrot.lane.b32.xlu0 %v1689, 120
        %v1818 = vpop.permute.xlu0 %1817
        %v1820 = vsel %vm804, %v1818, 0.0
        %1821 = vadd.xlane.f32.xlu0 %v1820
        %v1822 = vpop.xlane.xlu0 %1821
        %1824 = vrot.lane.b32.xlu0 %v1693, 120
        %v1825 = vpop.permute.xlu0 %1824
        %v1827 = vsel %vm804, %v1825, 0.0
        %1828 = vadd.xlane.f32.xlu0 %v1827
        %v1829 = vpop.xlane.xlu0 %1828
        %1831 = vrot.lane.b32.xlu0 %v1697, 120
        %v1832 = vpop.permute.xlu0 %1831
        %v1834 = vsel %vm804, %v1832, 0.0
        %1835 = vadd.xlane.f32.xlu0 %v1834
        %v1836 = vpop.xlane.xlu0 %1835
        %v1837 = vmul.f32 %v1688, %v978
        %1839 = vrot.lane.b32.xlu0 %v1837, 120
        %v1840 = vpop.permute.xlu0 %1839
        %v1842 = vsel %vm804, %v1840, 0.0
        %1843 = vadd.xlane.f32.xlu0 %v1842
        %v1844 = vpop.xlane.xlu0 %1843
        %1846 = vrot.lane.b32.xlu0 %v1705, 120
        %v1847 = vpop.permute.xlu0 %1846
        %v1849 = vsel %vm804, %v1847, 0.0
        %1850 = vadd.xlane.f32.xlu0 %v1849
        %v1851 = vpop.xlane.xlu0 %1850
        %1853 = vrot.lane.b32.xlu0 %v1709, 120
        %v1854 = vpop.permute.xlu0 %1853
        %v1856 = vsel %vm804, %v1854, 0.0
        %1857 = vadd.xlane.f32.xlu0 %v1856
        %v1858 = vpop.xlane.xlu0 %1857
        %1860 = vrot.lane.b32.xlu0 %v1713, 120
        %v1861 = vpop.permute.xlu0 %1860
        %v1863 = vsel %vm804, %v1861, 0.0
        %1864 = vadd.xlane.f32.xlu0 %v1863
        %v1865 = vpop.xlane.xlu0 %1864
        %v1866 = vmax.f32 %v1815, %v1822
        %v1867 = vmax.f32 %v1866, %v1829
        %v1868 = vmax.f32 %v1867, %v1836
        %v1869 = vmax.f32 %v1868, %v1844
        %v1870 = vmax.f32 %v1869, %v1851
        %v1871 = vmax.f32 %v1870, %v1858
        %v1872 = vmax.f32 %v1871, %v1865
        %v1873 = vsub.f32 %v1815, %v1872
        %v1874 = vmul.f32 %v1873, 1.442695
        %v1875 = vpow.pop %v1874
        %v1876 = vsub.f32 %v1822, %v1872
        %v1877 = vmul.f32 %v1876, 1.442695
        %v1878 = vpow.pop %v1877
        %v1879 = vsub.f32 %v1829, %v1872
        %v1880 = vmul.f32 %v1879, 1.442695
        %v1881 = vpow.pop %v1880
        %v1882 = vsub.f32 %v1836, %v1872
        %v1883 = vmul.f32 %v1882, 1.442695
        %v1884 = vpow.pop %v1883
        %v1885 = vsub.f32 %v1844, %v1872
        %v1886 = vmul.f32 %v1885, 1.442695
        %v1887 = vpow.pop %v1886
        %v1888 = vsub.f32 %v1851, %v1872
        %v1889 = vmul.f32 %v1888, 1.442695
        %v1890 = vpow.pop %v1889
        %v1891 = vsub.f32 %v1858, %v1872
        %v1892 = vmul.f32 %v1891, 1.442695
        %v1893 = vpow.pop %v1892
        %v1894 = vsub.f32 %v1865, %v1872
        %v1895 = vmul.f32 %v1894, 1.442695
        %v1896 = vpow.pop %v1895
        %v1897 = vadd.f32 %v1875, %v1878
        %v1898 = vadd.f32 %v1897, %v1881
        %v1899 = vadd.f32 %v1898, %v1884
        %v1900 = vadd.f32 %v1899, %v1887
        %v1901 = vadd.f32 %v1900, %v1890
        %v1902 = vadd.f32 %v1901, %v1893
        %v1903 = vadd.f32 %v1902, %v1896
        %v1904 = vrcp.pop %v1903
        %v1905 = vmul.f32 %v1875, %v1904
        %v1906 = vmul.f32 %v1905, %v722
        %v1907 = vadd.f32 %v1906, 0.0
        %v1908 = vmul.f32 %v1878, %v1904
        %v1909 = vmul.f32 %v1908, %v722
        %1911 = vrot.lane.b32.xlu0 %v1909, 120
        %v1912 = vpop.permute.xlu0 %1911
        %v1914 = vadd.f32 %v1907, %v1912
        %v1915 = vmul.f32 %v1881, %v1904
        %v1916 = vmul.f32 %v1915, %v722
        %1918 = vrot.lane.b32.xlu0 %v1916, 112
        %v1919 = vpop.permute.xlu0 %1918
        %v1921 = vadd.f32 %v1914, %v1919
        %v1922 = vmul.f32 %v1884, %v1904
        %v1923 = vmul.f32 %v1922, %v722
        %1925 = vrot.lane.b32.xlu0 %v1923, 104
        %v1926 = vpop.permute.xlu0 %1925
        %v1928 = vadd.f32 %v1921, %v1926
        %v1929 = vmul.f32 %v1887, %v1904
        %v1930 = vmul.f32 %v1929, %v795
        %v1931 = vadd.f32 %v1928, %v1930
        %v1932 = vmul.f32 %v1890, %v1904
        %v1933 = vmul.f32 %v1932, %v795
        %1935 = vrot.lane.b32.xlu0 %v1933, 120
        %v1936 = vpop.permute.xlu0 %1935
        %v1938 = vadd.f32 %v1931, %v1936
        %v1939 = vmul.f32 %v1893, %v1904
        %v1940 = vmul.f32 %v1939, %v795
        %1942 = vrot.lane.b32.xlu0 %v1940, 112
        %v1943 = vpop.permute.xlu0 %1942
        %v1945 = vadd.f32 %v1938, %v1943
        %v1946 = vmul.f32 %v1896, %v1904
        %v1947 = vmul.f32 %v1946, %v795
        %1949 = vrot.lane.b32.xlu0 %v1947, 104
        %v1950 = vpop.permute.xlu0 %1949
        %v1952 = vadd.f32 %v1945, %v1950
        %1954 = vrot.lane.b32.xlu0 %v1952, 64
        %v1955 = vpop.permute.xlu0 %1954
        %v1956 = vsel %vm651, %v1955, 0
        %1958 = vmatprep.subr.mxu0 0.0
        %1959 = vmatpush1.msra.mxu0 %v515
        %1960 = vmatprep.subr.mxu0 0.0
        %1961 = vmatpush1.msra.mxu0 0.0
        %1962 = vmatprep.subr.mxu0 0.0
        %1963 = vmatpush1.msra.mxu0 0.0
        %1964 = vmatprep.subr.mxu0 0.0
        %1965 = vmatpush1.msra.mxu0 0.0
        %1966 = vmatprep.subr.mxu0 0.0
        %1967 = vmatpush1.msra.mxu0 0.0
        %1968 = vmatprep.subr.mxu0 0.0
        %1969 = vmatpush1.msra.mxu0 0.0
        %1970 = vmatprep.subr.mxu0 0.0
        %1971 = vmatpush1.msra.mxu0 0.0
        %1972 = vmatprep.subr.mxu0 0.0
        %1973 = vmatpush1.msra.mxu0 0.0
        %1974 = vmatprep.subr.mxu0 0.0
        %1975 = vmatpush1.msra.mxu0 0.0
        %1976 = vmatprep.subr.mxu0 0.0
        %1977 = vmatpush1.msra.mxu0 0.0
        %1978 = vmatprep.subr.mxu0 0.0
        %1979 = vmatpush1.msra.mxu0 0.0
        %1980 = vmatprep.subr.mxu0 0.0
        %1981 = vmatpush1.msra.mxu0 0.0
        %1982 = vmatprep.subr.mxu0 0.0
        %1983 = vmatpush1.msra.mxu0 0.0
        %1984 = vmatprep.subr.mxu0 0.0
        %1985 = vmatpush1.msra.mxu0 0.0
        %1986 = vmatprep.subr.mxu0 0.0
        %1987 = vmatpush1.msra.mxu0 0.0
        %1988 = vmatprep.subr.mxu0 0.0
        %1989 = vmatpush1.msra.mxu0 0.0
        %1990 = vmatprep.subr.mxu0 0.0
        %1991 = vmatpush1.msra.mxu0 0.0
        %1992 = vmatprep.subr.mxu0 0.0
        %1993 = vmatpush1.msra.mxu0 0.0
        %1994 = vmatprep.subr.mxu0 0.0
        %1995 = vmatpush1.msra.mxu0 0.0
        %1996 = vmatprep.subr.mxu0 0.0
        %1997 = vmatpush1.msra.mxu0 0.0
        %1998 = vmatprep.subr.mxu0 0.0
        %1999 = vmatpush1.msra.mxu0 0.0
        %2000 = vmatprep.subr.mxu0 0.0
        %2001 = vmatpush1.msra.mxu0 0.0
        %2002 = vmatprep.subr.mxu0 0.0
        %2003 = vmatpush1.msra.mxu0 0.0
        %2004 = vmatprep.subr.mxu0 0.0
        %2005 = vmatpush1.msra.mxu0 0.0
        %2006 = vmatprep.subr.mxu0 0.0
        %2007 = vmatpush1.msra.mxu0 0.0
        %2008 = vmatprep.subr.mxu0 0.0
        %2009 = vmatpush1.msra.mxu0 0.0
        %2010 = vmatprep.subr.mxu0 0.0
        %2011 = vmatpush1.msra.mxu0 0.0
        %2012 = vmatprep.subr.mxu0 0.0
        %2013 = vmatpush1.msra.mxu0 0.0
        %2014 = vmatprep.subr.mxu0 0.0
        %2015 = vmatpush1.msra.mxu0 0.0
        %2016 = vmatprep.subr.mxu0 0.0
        %2017 = vmatpush1.msra.mxu0 0.0
        %2018 = vmatprep.subr.mxu0 0.0
        %2019 = vmatpush1.msra.mxu0 0.0
        %2020 = vmatprep.subr.mxu0 0.0
        %2021 = vmatpush1.msra.mxu0 0.0
        %2022 = vmatprep.mubr.f32.mxu0 0.0
        %2023 = vmatmul.mubr.f32.gmra.mrb[0].mxu0 %v1956
        %v2024 = vpop.f32.mrb[0].mxu0
        %v2025 = vadd.f32 0.0, %v2024
        %v2026 = vpop.f32.mrb[0].mxu0
        %2027 = vdwg.mxu0
        %2029 = vrot.lane.b32.xlu0 %v1807, 64
        %v2030 = vpop.permute.xlu0 %2029
        %v2031 = vsel %vm651, %v2030, 0
        %2033 = vmatprep.subr.mxu0 0.0
        %2034 = vmatpush1.msra.mxu0 %v514
        %2035 = vmatprep.subr.mxu0 0.0
        %2036 = vmatpush1.msra.mxu0 0.0
        %2037 = vmatprep.subr.mxu0 0.0
        %2038 = vmatpush1.msra.mxu0 0.0
        %2039 = vmatprep.subr.mxu0 0.0
        %2040 = vmatpush1.msra.mxu0 0.0
        %2041 = vmatprep.subr.mxu0 0.0
        %2042 = vmatpush1.msra.mxu0 0.0
        %2043 = vmatprep.subr.mxu0 0.0
        %2044 = vmatpush1.msra.mxu0 0.0
        %2045 = vmatprep.subr.mxu0 0.0
        %2046 = vmatpush1.msra.mxu0 0.0
        %2047 = vmatprep.subr.mxu0 0.0
        %2048 = vmatpush1.msra.mxu0 0.0
        %2049 = vmatprep.subr.mxu0 0.0
        %2050 = vmatpush1.msra.mxu0 0.0
        %2051 = vmatprep.subr.mxu0 0.0
        %2052 = vmatpush1.msra.mxu0 0.0
        %2053 = vmatprep.subr.mxu0 0.0
        %2054 = vmatpush1.msra.mxu0 0.0
        %2055 = vmatprep.subr.mxu0 0.0
        %2056 = vmatpush1.msra.mxu0 0.0
        %2057 = vmatprep.subr.mxu0 0.0
        %2058 = vmatpush1.msra.mxu0 0.0
        %2059 = vmatprep.subr.mxu0 0.0
        %2060 = vmatpush1.msra.mxu0 0.0
        %2061 = vmatprep.subr.mxu0 0.0
        %2062 = vmatpush1.msra.mxu0 0.0
        %2063 = vmatprep.subr.mxu0 0.0
        %2064 = vmatpush1.msra.mxu0 0.0
        %2065 = vmatprep.subr.mxu0 0.0
        %2066 = vmatpush1.msra.mxu0 0.0
        %2067 = vmatprep.subr.mxu0 0.0
        %2068 = vmatpush1.msra.mxu0 0.0
        %2069 = vmatprep.subr.mxu0 0.0
        %2070 = vmatpush1.msra.mxu0 0.0
        %2071 = vmatprep.subr.mxu0 0.0
        %2072 = vmatpush1.msra.mxu0 0.0
        %2073 = vmatprep.subr.mxu0 0.0
        %2074 = vmatpush1.msra.mxu0 0.0
        %2075 = vmatprep.subr.mxu0 0.0
        %2076 = vmatpush1.msra.mxu0 0.0
        %2077 = vmatprep.subr.mxu0 0.0
        %2078 = vmatpush1.msra.mxu0 0.0
        %2079 = vmatprep.subr.mxu0 0.0
        %2080 = vmatpush1.msra.mxu0 0.0
        %2081 = vmatprep.subr.mxu0 0.0
        %2082 = vmatpush1.msra.mxu0 0.0
        %2083 = vmatprep.subr.mxu0 0.0
        %2084 = vmatpush1.msra.mxu0 0.0
        %2085 = vmatprep.subr.mxu0 0.0
        %2086 = vmatpush1.msra.mxu0 0.0
        %2087 = vmatprep.subr.mxu0 0.0
        %2088 = vmatpush1.msra.mxu0 0.0
        %2089 = vmatprep.subr.mxu0 0.0
        %2090 = vmatpush1.msra.mxu0 0.0
        %2091 = vmatprep.subr.mxu0 0.0
        %2092 = vmatpush1.msra.mxu0 0.0
        %2093 = vmatprep.subr.mxu0 0.0
        %2094 = vmatpush1.msra.mxu0 0.0
        %2095 = vmatprep.subr.mxu0 0.0
        %2096 = vmatpush1.msra.mxu0 0.0
        %2097 = vmatprep.mubr.f32.mxu0 0.0
        %2098 = vmatmul.mubr.f32.gmra.mrb[0].mxu0 %v2031
        %v2099 = vpop.f32.mrb[0].mxu0
        %v2100 = vadd.f32 %v2025, %v2099
        %v2101 = vpop.f32.mrb[0].mxu0
        %2102 = vdwg.mxu0
        %v2103 = vmul.f32 %v1688, %v1247
        %2105 = vrot.lane.b32.xlu0 %v2103, 112
        %v2106 = vpop.permute.xlu0 %2105
        %v2108 = vsel %vm804, %v2106, 0.0
        %2109 = vadd.xlane.f32.xlu0 %v2108
        %v2110 = vpop.xlane.xlu0 %2109
        %2111 = vrot.lane.b32.xlu0 %v1808, 112
        %v2112 = vpop.permute.xlu0 %2111
        %v2114 = vsel %vm804, %v2112, 0.0
        %2115 = vadd.xlane.f32.xlu0 %v2114
        %v2116 = vpop.xlane.xlu0 %2115
        %2117 = vrot.lane.b32.xlu0 %v1689, 112
        %v2118 = vpop.permute.xlu0 %2117
        %v2120 = vsel %vm804, %v2118, 0.0
        %2121 = vadd.xlane.f32.xlu0 %v2120
        %v2122 = vpop.xlane.xlu0 %2121
        %2123 = vrot.lane.b32.xlu0 %v1693, 112
        %v2124 = vpop.permute.xlu0 %2123
        %v2126 = vsel %vm804, %v2124, 0.0
        %2127 = vadd.xlane.f32.xlu0 %v2126
        %v2128 = vpop.xlane.xlu0 %2127
        %v2129 = vmul.f32 %v1688, %v1276
        %2131 = vrot.lane.b32.xlu0 %v2129, 112
        %v2132 = vpop.permute.xlu0 %2131
        %v2134 = vsel %vm804, %v2132, 0.0
        %2135 = vadd.xlane.f32.xlu0 %v2134
        %v2136 = vpop.xlane.xlu0 %2135
        %2137 = vrot.lane.b32.xlu0 %v1837, 112
        %v2138 = vpop.permute.xlu0 %2137
        %v2140 = vsel %vm804, %v2138, 0.0
        %2141 = vadd.xlane.f32.xlu0 %v2140
        %v2142 = vpop.xlane.xlu0 %2141
        %2143 = vrot.lane.b32.xlu0 %v1705, 112
        %v2144 = vpop.permute.xlu0 %2143
        %v2146 = vsel %vm804, %v2144, 0.0
        %2147 = vadd.xlane.f32.xlu0 %v2146
        %v2148 = vpop.xlane.xlu0 %2147
        %2149 = vrot.lane.b32.xlu0 %v1709, 112
        %v2150 = vpop.permute.xlu0 %2149
        %v2152 = vsel %vm804, %v2150, 0.0
        %2153 = vadd.xlane.f32.xlu0 %v2152
        %v2154 = vpop.xlane.xlu0 %2153
        %v2155 = vmax.f32 %v2110, %v2116
        %v2156 = vmax.f32 %v2155, %v2122
        %v2157 = vmax.f32 %v2156, %v2128
        %v2158 = vmax.f32 %v2157, %v2136
        %v2159 = vmax.f32 %v2158, %v2142
        %v2160 = vmax.f32 %v2159, %v2148
        %v2161 = vmax.f32 %v2160, %v2154
        %v2162 = vsub.f32 %v2110, %v2161
        %v2163 = vmul.f32 %v2162, 1.442695
        %v2164 = vpow.pop %v2163
        %v2165 = vsub.f32 %v2116, %v2161
        %v2166 = vmul.f32 %v2165, 1.442695
        %v2167 = vpow.pop %v2166
        %v2168 = vsub.f32 %v2122, %v2161
        %v2169 = vmul.f32 %v2168, 1.442695
        %v2170 = vpow.pop %v2169
        %v2171 = vsub.f32 %v2128, %v2161
        %v2172 = vmul.f32 %v2171, 1.442695
        %v2173 = vpow.pop %v2172
        %v2174 = vsub.f32 %v2136, %v2161
        %v2175 = vmul.f32 %v2174, 1.442695
        %v2176 = vpow.pop %v2175
        %v2177 = vsub.f32 %v2142, %v2161
        %v2178 = vmul.f32 %v2177, 1.442695
        %v2179 = vpow.pop %v2178
        %v2180 = vsub.f32 %v2148, %v2161
        %v2181 = vmul.f32 %v2180, 1.442695
        %v2182 = vpow.pop %v2181
        %v2183 = vsub.f32 %v2154, %v2161
        %v2184 = vmul.f32 %v2183, 1.442695
        %v2185 = vpow.pop %v2184
        %v2186 = vadd.f32 %v2164, %v2167
        %v2187 = vadd.f32 %v2186, %v2170
        %v2188 = vadd.f32 %v2187, %v2173
        %v2189 = vadd.f32 %v2188, %v2176
        %v2190 = vadd.f32 %v2189, %v2179
        %v2191 = vadd.f32 %v2190, %v2182
        %v2192 = vadd.f32 %v2191, %v2185
        %v2193 = vrcp.pop %v2192
        %v2194 = vmul.f32 %v2164, %v2193
        %v2195 = vmul.f32 %v2194, %v722
        %v2196 = vadd.f32 %v2195, 0.0
        %v2197 = vmul.f32 %v2167, %v2193
        %v2198 = vmul.f32 %v2197, %v722
        %2200 = vrot.lane.b32.xlu0 %v2198, 120
        %v2201 = vpop.permute.xlu0 %2200
        %v2203 = vadd.f32 %v2196, %v2201
        %v2204 = vmul.f32 %v2170, %v2193
        %v2205 = vmul.f32 %v2204, %v722
        %2207 = vrot.lane.b32.xlu0 %v2205, 112
        %v2208 = vpop.permute.xlu0 %2207
        %v2210 = vadd.f32 %v2203, %v2208
        %v2211 = vmul.f32 %v2173, %v2193
        %v2212 = vmul.f32 %v2211, %v722
        %2214 = vrot.lane.b32.xlu0 %v2212, 104
        %v2215 = vpop.permute.xlu0 %2214
        %v2217 = vadd.f32 %v2210, %v2215
        %v2218 = vmul.f32 %v2176, %v2193
        %v2219 = vmul.f32 %v2218, %v795
        %v2220 = vadd.f32 %v2217, %v2219
        %v2221 = vmul.f32 %v2179, %v2193
        %v2222 = vmul.f32 %v2221, %v795
        %2224 = vrot.lane.b32.xlu0 %v2222, 120
        %v2225 = vpop.permute.xlu0 %2224
        %v2227 = vadd.f32 %v2220, %v2225
        %v2228 = vmul.f32 %v2182, %v2193
        %v2229 = vmul.f32 %v2228, %v795
        %2231 = vrot.lane.b32.xlu0 %v2229, 112
        %v2232 = vpop.permute.xlu0 %2231
        %v2234 = vadd.f32 %v2227, %v2232
        %v2235 = vmul.f32 %v2185, %v2193
        %v2236 = vmul.f32 %v2235, %v795
        %2238 = vrot.lane.b32.xlu0 %v2236, 104
        %v2239 = vpop.permute.xlu0 %2238
        %v2241 = vadd.f32 %v2234, %v2239
        %2243 = vrot.lane.b32.xlu0 %v2241, 64
        %v2244 = vpop.permute.xlu0 %2243
        %v2245 = vsel %vm651, %v2244, 0
        %2247 = vmatprep.subr.mxu0 0.0
        %2248 = vmatpush1.msra.mxu0 %v516
        %2249 = vmatprep.subr.mxu0 0.0
        %2250 = vmatpush1.msra.mxu0 0.0
        %2251 = vmatprep.subr.mxu0 0.0
        %2252 = vmatpush1.msra.mxu0 0.0
        %2253 = vmatprep.subr.mxu0 0.0
        %2254 = vmatpush1.msra.mxu0 0.0
        %2255 = vmatprep.subr.mxu0 0.0
        %2256 = vmatpush1.msra.mxu0 0.0
        %2257 = vmatprep.subr.mxu0 0.0
        %2258 = vmatpush1.msra.mxu0 0.0
        %2259 = vmatprep.subr.mxu0 0.0
        %2260 = vmatpush1.msra.mxu0 0.0
        %2261 = vmatprep.subr.mxu0 0.0
        %2262 = vmatpush1.msra.mxu0 0.0
        %2263 = vmatprep.subr.mxu0 0.0
        %2264 = vmatpush1.msra.mxu0 0.0
        %2265 = vmatprep.subr.mxu0 0.0
        %2266 = vmatpush1.msra.mxu0 0.0
        %2267 = vmatprep.subr.mxu0 0.0
        %2268 = vmatpush1.msra.mxu0 0.0
        %2269 = vmatprep.subr.mxu0 0.0
        %2270 = vmatpush1.msra.mxu0 0.0
        %2271 = vmatprep.subr.mxu0 0.0
        %2272 = vmatpush1.msra.mxu0 0.0
        %2273 = vmatprep.subr.mxu0 0.0
        %2274 = vmatpush1.msra.mxu0 0.0
        %2275 = vmatprep.subr.mxu0 0.0
        %2276 = vmatpush1.msra.mxu0 0.0
        %2277 = vmatprep.subr.mxu0 0.0
        %2278 = vmatpush1.msra.mxu0 0.0
        %2279 = vmatprep.subr.mxu0 0.0
        %2280 = vmatpush1.msra.mxu0 0.0
        %2281 = vmatprep.subr.mxu0 0.0
        %2282 = vmatpush1.msra.mxu0 0.0
        %2283 = vmatprep.subr.mxu0 0.0
        %2284 = vmatpush1.msra.mxu0 0.0
        %2285 = vmatprep.subr.mxu0 0.0
        %2286 = vmatpush1.msra.mxu0 0.0
        %2287 = vmatprep.subr.mxu0 0.0
        %2288 = vmatpush1.msra.mxu0 0.0
        %2289 = vmatprep.subr.mxu0 0.0
        %2290 = vmatpush1.msra.mxu0 0.0
        %2291 = vmatprep.subr.mxu0 0.0
        %2292 = vmatpush1.msra.mxu0 0.0
        %2293 = vmatprep.subr.mxu0 0.0
        %2294 = vmatpush1.msra.mxu0 0.0
        %2295 = vmatprep.subr.mxu0 0.0
        %2296 = vmatpush1.msra.mxu0 0.0
        %2297 = vmatprep.subr.mxu0 0.0
        %2298 = vmatpush1.msra.mxu0 0.0
        %2299 = vmatprep.subr.mxu0 0.0
        %2300 = vmatpush1.msra.mxu0 0.0
        %2301 = vmatprep.subr.mxu0 0.0
        %2302 = vmatpush1.msra.mxu0 0.0
        %2303 = vmatprep.subr.mxu0 0.0
        %2304 = vmatpush1.msra.mxu0 0.0
        %2305 = vmatprep.subr.mxu0 0.0
        %2306 = vmatpush1.msra.mxu0 0.0
        %2307 = vmatprep.subr.mxu0 0.0
        %2308 = vmatpush1.msra.mxu0 0.0
        %2309 = vmatprep.subr.mxu0 0.0
        %2310 = vmatpush1.msra.mxu0 0.0
        %2311 = vmatprep.mubr.f32.mxu0 0.0
        %2312 = vmatmul.mubr.f32.gmra.mrb[0].mxu0 %v2245
        %v2313 = vpop.f32.mrb[0].mxu0
        %v2314 = vadd.f32 0.0, %v2313
        %v2315 = vpop.f32.mrb[0].mxu0
        %2316 = vdwg.mxu0
        %v2317 = vadd.f32 %v2100, %v2314
        %v2318 = vmul.f32 %v1688, %v1468
        %2320 = vrot.lane.b32.xlu0 %v2318, 104
        %v2321 = vpop.permute.xlu0 %2320
        %v2323 = vsel %vm804, %v2321, 0.0
        %2324 = vadd.xlane.f32.xlu0 %v2323
        %v2325 = vpop.xlane.xlu0 %2324
        %2326 = vrot.lane.b32.xlu0 %v2103, 104
        %v2327 = vpop.permute.xlu0 %2326
        %v2329 = vsel %vm804, %v2327, 0.0
        %2330 = vadd.xlane.f32.xlu0 %v2329
        %v2331 = vpop.xlane.xlu0 %2330
        %2332 = vrot.lane.b32.xlu0 %v1808, 104
        %v2333 = vpop.permute.xlu0 %2332
        %v2335 = vsel %vm804, %v2333, 0.0
        %2336 = vadd.xlane.f32.xlu0 %v2335
        %v2337 = vpop.xlane.xlu0 %2336
        %2338 = vrot.lane.b32.xlu0 %v1689, 104
        %v2339 = vpop.permute.xlu0 %2338
        %v2341 = vsel %vm804, %v2339, 0.0
        %2342 = vadd.xlane.f32.xlu0 %v2341
        %v2343 = vpop.xlane.xlu0 %2342
        %v2344 = vmul.f32 %v1688, %v1497
        %2346 = vrot.lane.b32.xlu0 %v2344, 104
        %v2347 = vpop.permute.xlu0 %2346
        %v2349 = vsel %vm804, %v2347, 0.0
        %2350 = vadd.xlane.f32.xlu0 %v2349
        %v2351 = vpop.xlane.xlu0 %2350
        %2352 = vrot.lane.b32.xlu0 %v2129, 104
        %v2353 = vpop.permute.xlu0 %2352
        %v2355 = vsel %vm804, %v2353, 0.0
        %2356 = vadd.xlane.f32.xlu0 %v2355
        %v2357 = vpop.xlane.xlu0 %2356
        %2358 = vrot.lane.b32.xlu0 %v1837, 104
        %v2359 = vpop.permute.xlu0 %2358
        %v2361 = vsel %vm804, %v2359, 0.0
        %2362 = vadd.xlane.f32.xlu0 %v2361
        %v2363 = vpop.xlane.xlu0 %2362
        %2364 = vrot.lane.b32.xlu0 %v1705, 104
        %v2365 = vpop.permute.xlu0 %2364
        %v2367 = vsel %vm804, %v2365, 0.0
        %2368 = vadd.xlane.f32.xlu0 %v2367
        %v2369 = vpop.xlane.xlu0 %2368
        %v2370 = vmax.f32 %v2325, %v2331
        %v2371 = vmax.f32 %v2370, %v2337
        %v2372 = vmax.f32 %v2371, %v2343
        %v2373 = vmax.f32 %v2372, %v2351
        %v2374 = vmax.f32 %v2373, %v2357
        %v2375 = vmax.f32 %v2374, %v2363
        %v2376 = vmax.f32 %v2375, %v2369
        %v2377 = vsub.f32 %v2325, %v2376
        %v2378 = vmul.f32 %v2377, 1.442695
        %v2379 = vpow.pop %v2378
        %v2380 = vsub.f32 %v2331, %v2376
        %v2381 = vmul.f32 %v2380, 1.442695
        %v2382 = vpow.pop %v2381
        %v2383 = vsub.f32 %v2337, %v2376
        %v2384 = vmul.f32 %v2383, 1.442695
        %v2385 = vpow.pop %v2384
        %v2386 = vsub.f32 %v2343, %v2376
        %v2387 = vmul.f32 %v2386, 1.442695
        %v2388 = vpow.pop %v2387
        %v2389 = vsub.f32 %v2351, %v2376
        %v2390 = vmul.f32 %v2389, 1.442695
        %v2391 = vpow.pop %v2390
        %v2392 = vsub.f32 %v2357, %v2376
        %v2393 = vmul.f32 %v2392, 1.442695
        %v2394 = vpow.pop %v2393
        %v2395 = vsub.f32 %v2363, %v2376
        %v2396 = vmul.f32 %v2395, 1.442695
        %v2397 = vpow.pop %v2396
        %v2398 = vsub.f32 %v2369, %v2376
        %v2399 = vmul.f32 %v2398, 1.442695
        %v2400 = vpow.pop %v2399
        %v2401 = vadd.f32 %v2379, %v2382
        %v2402 = vadd.f32 %v2401, %v2385
        %v2403 = vadd.f32 %v2402, %v2388
        %v2404 = vadd.f32 %v2403, %v2391
        %v2405 = vadd.f32 %v2404, %v2394
        %v2406 = vadd.f32 %v2405, %v2397
        %v2407 = vadd.f32 %v2406, %v2400
        %v2408 = vrcp.pop %v2407
        %v2409 = vmul.f32 %v2379, %v2408
        %v2410 = vmul.f32 %v2409, %v722
        %v2411 = vadd.f32 %v2410, 0.0
        %v2412 = vmul.f32 %v2382, %v2408
        %v2413 = vmul.f32 %v2412, %v722
        %2415 = vrot.lane.b32.xlu0 %v2413, 120
        %v2416 = vpop.permute.xlu0 %2415
        %v2418 = vadd.f32 %v2411, %v2416
        %v2419 = vmul.f32 %v2385, %v2408
        %v2420 = vmul.f32 %v2419, %v722
        %2422 = vrot.lane.b32.xlu0 %v2420, 112
        %v2423 = vpop.permute.xlu0 %2422
        %v2425 = vadd.f32 %v2418, %v2423
        %v2426 = vmul.f32 %v2388, %v2408
        %v2427 = vmul.f32 %v2426, %v722
        %2429 = vrot.lane.b32.xlu0 %v2427, 104
        %v2430 = vpop.permute.xlu0 %2429
        %v2432 = vadd.f32 %v2425, %v2430
        %v2433 = vmul.f32 %v2391, %v2408
        %v2434 = vmul.f32 %v2433, %v795
        %v2435 = vadd.f32 %v2432, %v2434
        %v2436 = vmul.f32 %v2394, %v2408
        %v2437 = vmul.f32 %v2436, %v795
        %2439 = vrot.lane.b32.xlu0 %v2437, 120
        %v2440 = vpop.permute.xlu0 %2439
        %v2442 = vadd.f32 %v2435, %v2440
        %v2443 = vmul.f32 %v2397, %v2408
        %v2444 = vmul.f32 %v2443, %v795
        %2446 = vrot.lane.b32.xlu0 %v2444, 112
        %v2447 = vpop.permute.xlu0 %2446
        %v2449 = vadd.f32 %v2442, %v2447
        %v2450 = vmul.f32 %v2400, %v2408
        %v2451 = vmul.f32 %v2450, %v795
        %2453 = vrot.lane.b32.xlu0 %v2451, 104
        %v2454 = vpop.permute.xlu0 %2453
        %v2456 = vadd.f32 %v2449, %v2454
        %2458 = vrot.lane.b32.xlu0 %v2456, 64
        %v2459 = vpop.permute.xlu0 %2458
        %v2460 = vsel %vm651, %v2459, 0
        %2462 = vmatprep.subr.mxu0 0.0
        %2463 = vmatpush1.msra.mxu0 %v517
        %2464 = vmatprep.subr.mxu0 0.0
        %2465 = vmatpush1.msra.mxu0 0.0
        %2466 = vmatprep.subr.mxu0 0.0
        %2467 = vmatpush1.msra.mxu0 0.0
        %2468 = vmatprep.subr.mxu0 0.0
        %2469 = vmatpush1.msra.mxu0 0.0
        %2470 = vmatprep.subr.mxu0 0.0
        %2471 = vmatpush1.msra.mxu0 0.0
        %2472 = vmatprep.subr.mxu0 0.0
        %2473 = vmatpush1.msra.mxu0 0.0
        %2474 = vmatprep.subr.mxu0 0.0
        %2475 = vmatpush1.msra.mxu0 0.0
        %2476 = vmatprep.subr.mxu0 0.0
        %2477 = vmatpush1.msra.mxu0 0.0
        %2478 = vmatprep.subr.mxu0 0.0
        %2479 = vmatpush1.msra.mxu0 0.0
        %2480 = vmatprep.subr.mxu0 0.0
        %2481 = vmatpush1.msra.mxu0 0.0
        %2482 = vmatprep.subr.mxu0 0.0
        %2483 = vmatpush1.msra.mxu0 0.0
        %2484 = vmatprep.subr.mxu0 0.0
        %2485 = vmatpush1.msra.mxu0 0.0
        %2486 = vmatprep.subr.mxu0 0.0
        %2487 = vmatpush1.msra.mxu0 0.0
        %2488 = vmatprep.subr.mxu0 0.0
        %2489 = vmatpush1.msra.mxu0 0.0
        %2490 = vmatprep.subr.mxu0 0.0
        %2491 = vmatpush1.msra.mxu0 0.0
        %2492 = vmatprep.subr.mxu0 0.0
        %2493 = vmatpush1.msra.mxu0 0.0
        %2494 = vmatprep.subr.mxu0 0.0
        %2495 = vmatpush1.msra.mxu0 0.0
        %2496 = vmatprep.subr.mxu0 0.0
        %2497 = vmatpush1.msra.mxu0 0.0
        %2498 = vmatprep.subr.mxu0 0.0
        %2499 = vmatpush1.msra.mxu0 0.0
        %2500 = vmatprep.subr.mxu0 0.0
        %2501 = vmatpush1.msra.mxu0 0.0
        %2502 = vmatprep.subr.mxu0 0.0
        %2503 = vmatpush1.msra.mxu0 0.0
        %2504 = vmatprep.subr.mxu0 0.0
        %2505 = vmatpush1.msra.mxu0 0.0
        %2506 = vmatprep.subr.mxu0 0.0
        %2507 = vmatpush1.msra.mxu0 0.0
        %2508 = vmatprep.subr.mxu0 0.0
        %2509 = vmatpush1.msra.mxu0 0.0
        %2510 = vmatprep.subr.mxu0 0.0
        %2511 = vmatpush1.msra.mxu0 0.0
        %2512 = vmatprep.subr.mxu0 0.0
        %2513 = vmatpush1.msra.mxu0 0.0
        %2514 = vmatprep.subr.mxu0 0.0
        %2515 = vmatpush1.msra.mxu0 0.0
        %2516 = vmatprep.subr.mxu0 0.0
        %2517 = vmatpush1.msra.mxu0 0.0
        %2518 = vmatprep.subr.mxu0 0.0
        %2519 = vmatpush1.msra.mxu0 0.0
        %2520 = vmatprep.subr.mxu0 0.0
        %2521 = vmatpush1.msra.mxu0 0.0
        %2522 = vmatprep.subr.mxu0 0.0
        %2523 = vmatpush1.msra.mxu0 0.0
        %2524 = vmatprep.subr.mxu0 0.0
        %2525 = vmatpush1.msra.mxu0 0.0
        %2526 = vmatprep.mubr.f32.mxu0 0.0
        %2527 = vmatmul.mubr.f32.gmra.mrb[0].mxu0 %v2460
        %v2528 = vpop.f32.mrb[0].mxu0
        %v2529 = vadd.f32 0.0, %v2528
        %v2530 = vpop.f32.mrb[0].mxu0
        %2531 = vdwg.mxu0
        %v2532 = vadd.f32 %v2317, %v2529
        %vm2533 = vcmask 31744
        %v2535 = vsel %vm2533, %v508, 0
        %vm2537 = vcmask 1043456
        %v2539 = vsel %vm2537, %v2532, 0
        %2541 = vmatprep.subr.mxu0 0.0
        %2542 = vmatpush1.msra.mxu0 %v2539
        %2543 = vmatprep.subr.mxu0 0.0
        %2544 = vmatpush1.msra.mxu0 0.0
        %2545 = vmatprep.subr.mxu0 0.0
        %2546 = vmatpush1.msra.mxu0 0.0
        %2547 = vmatprep.subr.mxu0 0.0
        %2548 = vmatpush1.msra.mxu0 0.0
        %2549 = vmatprep.subr.mxu0 0.0
        %2550 = vmatpush1.msra.mxu0 0.0
        %2551 = vmatprep.subr.mxu0 0.0
        %2552 = vmatpush1.msra.mxu0 0.0
        %2553 = vmatprep.subr.mxu0 0.0
        %2554 = vmatpush1.msra.mxu0 0.0
        %2555 = vmatprep.subr.mxu0 0.0
        %2556 = vmatpush1.msra.mxu0 0.0
        %2557 = vmatprep.subr.mxu0 0.0
        %2558 = vmatpush1.msra.mxu0 0.0
        %2559 = vmatprep.subr.mxu0 0.0
        %2560 = vmatpush1.msra.mxu0 0.0
        %2561 = vmatprep.subr.mxu0 0.0
        %2562 = vmatpush1.msra.mxu0 0.0
        %2563 = vmatprep.subr.mxu0 0.0
        %2564 = vmatpush1.msra.mxu0 0.0
        %2565 = vmatprep.subr.mxu0 0.0
        %2566 = vmatpush1.msra.mxu0 0.0
        %2567 = vmatprep.subr.mxu0 0.0
        %2568 = vmatpush1.msra.mxu0 0.0
        %2569 = vmatprep.subr.mxu0 0.0
        %2570 = vmatpush1.msra.mxu0 0.0
        %2571 = vmatprep.subr.mxu0 0.0
        %2572 = vmatpush1.msra.mxu0 0.0
        %2573 = vmatprep.subr.mxu0 0.0
        %2574 = vmatpush1.msra.mxu0 0.0
        %2575 = vmatprep.subr.mxu0 0.0
        %2576 = vmatpush1.msra.mxu0 0.0
        %2577 = vmatprep.subr.mxu0 0.0
        %2578 = vmatpush1.msra.mxu0 0.0
        %2579 = vmatprep.subr.mxu0 0.0
        %2580 = vmatpush1.msra.mxu0 0.0
        %2581 = vmatprep.subr.mxu0 0.0
        %2582 = vmatpush1.msra.mxu0 0.0
        %2583 = vmatprep.subr.mxu0 0.0
        %2584 = vmatpush1.msra.mxu0 0.0
        %2585 = vmatprep.subr.mxu0 0.0
        %2586 = vmatpush1.msra.mxu0 0.0
        %2587 = vmatprep.subr.mxu0 0.0
        %2588 = vmatpush1.msra.mxu0 0.0
        %2589 = vmatprep.subr.mxu0 0.0
        %2590 = vmatpush1.msra.mxu0 0.0
        %2591 = vmatprep.subr.mxu0 0.0
        %2592 = vmatpush1.msra.mxu0 0.0
        %2593 = vmatprep.subr.mxu0 0.0
        %2594 = vmatpush1.msra.mxu0 0.0
        %2595 = vmatprep.subr.mxu0 0.0
        %2596 = vmatpush1.msra.mxu0 0.0
        %2597 = vmatprep.subr.mxu0 0.0
        %2598 = vmatpush1.msra.mxu0 0.0
        %2599 = vmatprep.subr.mxu0 0.0
        %2600 = vmatpush1.msra.mxu0 0.0
        %2601 = vmatprep.subr.mxu0 0.0
        %2602 = vmatpush1.msra.mxu0 0.0
        %2603 = vmatprep.subr.mxu0 0.0
        %2604 = vmatpush1.msra.mxu0 0.0
        %2605 = vmatprep.mubr.f32.mxu0 0.0
        %2606 = vmatmul.mubr.f32.gmra.mrb[0].mxu0 %v2535
        %v2607 = vpop.f32.mrb[0].mxu0
        %v2608 = vadd.f32 0.0, %v2607
        %v2609 = vpop.f32.mrb[0].mxu0
        %2610 = vdwg.mxu0
        %v2612 = vsel %vm2533, %v504, 0
        %v2615 = vsel %vm2537, %v1687, 0
        %2617 = vmatprep.subr.mxu0 0.0
        %2618 = vmatpush1.msra.mxu0 %v2615
        %2619 = vmatprep.subr.mxu0 0.0
        %2620 = vmatpush1.msra.mxu0 0.0
        %2621 = vmatprep.subr.mxu0 0.0
        %2622 = vmatpush1.msra.mxu0 0.0
        %2623 = vmatprep.subr.mxu0 0.0
        %2624 = vmatpush1.msra.mxu0 0.0
        %2625 = vmatprep.subr.mxu0 0.0
        %2626 = vmatpush1.msra.mxu0 0.0
        %2627 = vmatprep.subr.mxu0 0.0
        %2628 = vmatpush1.msra.mxu0 0.0
        %2629 = vmatprep.subr.mxu0 0.0
        %2630 = vmatpush1.msra.mxu0 0.0
        %2631 = vmatprep.subr.mxu0 0.0
        %2632 = vmatpush1.msra.mxu0 0.0
        %2633 = vmatprep.subr.mxu0 0.0
        %2634 = vmatpush1.msra.mxu0 0.0
        %2635 = vmatprep.subr.mxu0 0.0
        %2636 = vmatpush1.msra.mxu0 0.0
        %2637 = vmatprep.subr.mxu0 0.0
        %2638 = vmatpush1.msra.mxu0 0.0
        %2639 = vmatprep.subr.mxu0 0.0
        %2640 = vmatpush1.msra.mxu0 0.0
        %2641 = vmatprep.subr.mxu0 0.0
        %2642 = vmatpush1.msra.mxu0 0.0
        %2643 = vmatprep.subr.mxu0 0.0
        %2644 = vmatpush1.msra.mxu0 0.0
        %2645 = vmatprep.subr.mxu0 0.0
        %2646 = vmatpush1.msra.mxu0 0.0
        %2647 = vmatprep.subr.mxu0 0.0
        %2648 = vmatpush1.msra.mxu0 0.0
        %2649 = vmatprep.subr.mxu0 0.0
        %2650 = vmatpush1.msra.mxu0 0.0
        %2651 = vmatprep.subr.mxu0 0.0
        %2652 = vmatpush1.msra.mxu0 0.0
        %2653 = vmatprep.subr.mxu0 0.0
        %2654 = vmatpush1.msra.mxu0 0.0
        %2655 = vmatprep.subr.mxu0 0.0
        %2656 = vmatpush1.msra.mxu0 0.0
        %2657 = vmatprep.subr.mxu0 0.0
        %2658 = vmatpush1.msra.mxu0 0.0
        %2659 = vmatprep.subr.mxu0 0.0
        %2660 = vmatpush1.msra.mxu0 0.0
        %2661 = vmatprep.subr.mxu0 0.0
        %2662 = vmatpush1.msra.mxu0 0.0
        %2663 = vmatprep.subr.mxu0 0.0
        %2664 = vmatpush1.msra.mxu0 0.0
        %2665 = vmatprep.subr.mxu0 0.0
        %2666 = vmatpush1.msra.mxu0 0.0
        %2667 = vmatprep.subr.mxu0 0.0
        %2668 = vmatpush1.msra.mxu0 0.0
        %2669 = vmatprep.subr.mxu0 0.0
        %2670 = vmatpush1.msra.mxu0 0.0
        %2671 = vmatprep.subr.mxu0 0.0
        %2672 = vmatpush1.msra.mxu0 0.0
        %2673 = vmatprep.subr.mxu0 0.0
        %2674 = vmatpush1.msra.mxu0 0.0
        %2675 = vmatprep.subr.mxu0 0.0
        %2676 = vmatpush1.msra.mxu0 0.0
        %2677 = vmatprep.subr.mxu0 0.0
        %2678 = vmatpush1.msra.mxu0 0.0
        %2679 = vmatprep.subr.mxu0 0.0
        %2680 = vmatpush1.msra.mxu0 0.0
        %2681 = vmatprep.mubr.f32.mxu0 0.0
        %2682 = vmatmul.mubr.f32.gmra.mrb[0].mxu0 %v2612
        %v2683 = vpop.f32.mrb[0].mxu0
        %v2684 = vadd.f32 %v2608, %v2683
        %v2685 = vpop.f32.mrb[0].mxu0
        %2686 = vdwg.mxu0
        %v2688 = vlaneseq
        %v2689 = vshrl.u32 %v2688, 7
        %v2690 = vsub.s32 0, %v2689
        %v2691 = vrot.slane %v518, %v2690
        %v2693 = vadd.f32 %v2684, %v2691
        %v2694 = vadd.f32 %v2693, %v570
        %v2695 = vsel %vm577, %v2694, 0.0
        %2696 = vadd.xlane.f32.xlu0 %v2695
        %v2697 = vpop.xlane.xlu0 %2696
        %v2698 = vrcp.pop 32.0
        %v2699 = vmul.f32 %v2697, %v2698
        %v2700 = vsub.f32 %v2694, %v2699
        %v2701 = vmul.f32 %v2700, %v2700
        %v2702 = vsel %vm577, %v2701, 0.0
        %2703 = vadd.xlane.f32.xlu0 %v2702
        %v2704 = vpop.xlane.xlu0 %2703
        %v2705 = vmul.f32 %v2704, %v2698
        %v2706 = vadd.f32 %v2705, 1e-05
        %v2707 = vrsqrt.pop %v2706
        %v2708 = vmul.f32 %v2700, %v2707
        %v2710 = vlaneseq
        %v2711 = vshrl.u32 %v2710, 7
        %v2712 = vsub.s32 0, %v2711
        %v2713 = vrot.slane %v519, %v2712
        %v2715 = vmul.f32 %v2708, %v2713
        %v2717 = vlaneseq
        %v2718 = vshrl.u32 %v2717, 7
        %v2719 = vsub.s32 0, %v2718
        %v2720 = vrot.slane %v520, %v2719
        %v2722 = vadd.f32 %v2715, %v2720
        %v2724 = vlaneseq
        %v2725 = vshrl.u32 %v2724, 7
        %v2726 = vsub.s32 0, %v2725
        %v2727 = vrot.slane %v525, %v2726
        %v2730 = vsel %vm577, %v2722, 0
        %2732 = vmatprep.subr.mxu0 0.0
        %2733 = vmatpush1.msra.mxu0 %v521
        %2734 = vmatprep.subr.mxu0 0.0
        %2735 = vmatpush1.msra.mxu0 %v522
        %2736 = vmatprep.subr.mxu0 0.0
        %2737 = vmatpush1.msra.mxu0 %v523
        %2738 = vmatprep.subr.mxu0 0.0
        %2739 = vmatpush1.msra.mxu0 %v524
        %2740 = vmatprep.subr.mxu0 0.0
        %2741 = vmatpush1.msra.mxu0 0.0
        %2742 = vmatprep.subr.mxu0 0.0
        %2743 = vmatpush1.msra.mxu0 0.0
        %2744 = vmatprep.subr.mxu0 0.0
        %2745 = vmatpush1.msra.mxu0 0.0
        %2746 = vmatprep.subr.mxu0 0.0
        %2747 = vmatpush1.msra.mxu0 0.0
        %2748 = vmatprep.subr.mxu0 0.0
        %2749 = vmatpush1.msra.mxu0 0.0
        %2750 = vmatprep.subr.mxu0 0.0
        %2751 = vmatpush1.msra.mxu0 0.0
        %2752 = vmatprep.subr.mxu0 0.0
        %2753 = vmatpush1.msra.mxu0 0.0
        %2754 = vmatprep.subr.mxu0 0.0
        %2755 = vmatpush1.msra.mxu0 0.0
        %2756 = vmatprep.subr.mxu0 0.0
        %2757 = vmatpush1.msra.mxu0 0.0
        %2758 = vmatprep.subr.mxu0 0.0
        %2759 = vmatpush1.msra.mxu0 0.0
        %2760 = vmatprep.subr.mxu0 0.0
        %2761 = vmatpush1.msra.mxu0 0.0
        %2762 = vmatprep.subr.mxu0 0.0
        %2763 = vmatpush1.msra.mxu0 0.0
        %2764 = vmatprep.subr.mxu0 0.0
        %2765 = vmatpush1.msra.mxu0 0.0
        %2766 = vmatprep.subr.mxu0 0.0
        %2767 = vmatpush1.msra.mxu0 0.0
        %2768 = vmatprep.subr.mxu0 0.0
        %2769 = vmatpush1.msra.mxu0 0.0
        %2770 = vmatprep.subr.mxu0 0.0
        %2771 = vmatpush1.msra.mxu0 0.0
        %2772 = vmatprep.subr.mxu0 0.0
        %2773 = vmatpush1.msra.mxu0 0.0
        %2774 = vmatprep.subr.mxu0 0.0
        %2775 = vmatpush1.msra.mxu0 0.0
        %2776 = vmatprep.subr.mxu0 0.0
        %2777 = vmatpush1.msra.mxu0 0.0
        %2778 = vmatprep.subr.mxu0 0.0
        %2779 = vmatpush1.msra.mxu0 0.0
        %2780 = vmatprep.subr.mxu0 0.0
        %2781 = vmatpush1.msra.mxu0 0.0
        %2782 = vmatprep.subr.mxu0 0.0
        %2783 = vmatpush1.msra.mxu0 0.0
        %2784 = vmatprep.subr.mxu0 0.0
        %2785 = vmatpush1.msra.mxu0 0.0
        %2786 = vmatprep.subr.mxu0 0.0
        %2787 = vmatpush1.msra.mxu0 0.0
        %2788 = vmatprep.subr.mxu0 0.0
        %2789 = vmatpush1.msra.mxu0 0.0
        %2790 = vmatprep.subr.mxu0 0.0
        %2791 = vmatpush1.msra.mxu0 0.0
        %2792 = vmatprep.subr.mxu0 0.0
        %2793 = vmatpush1.msra.mxu0 0.0
        %2794 = vmatprep.subr.mxu0 0.0
        %2795 = vmatpush1.msra.mxu0 0.0
        %2796 = vmatprep.mubr.f32.mxu0 0.0
        %2797 = vmatmul.mubr.f32.gmra.mrb[0].mxu0 %v2730
        %v2798 = vpop.f32.mrb[0].mxu0
        %v2799 = vadd.f32 %v2727, %v2798
        %v2800 = vpop.f32.mrb[0].mxu0
        %2801 = vdwg.mxu0
        %v2802 = vmax.f32 %v2799, 0.0
        %v2804 = vlaneseq
        %v2805 = vshrl.u32 %v2804, 7
        %v2806 = vsub.s32 0, %v2805
        %v2807 = vrot.slane %v534, %v2806
        %vm2809 = vcmask 523264
        %v2811 = vsel %vm2809, %v2802, 0
        %2813 = vmatprep.subr.mxu0 0.0
        %2814 = vmatpush1.msra.mxu0 %v526
        %2815 = vmatprep.subr.mxu0 0.0
        %2816 = vmatpush1.msra.mxu0 %v527
        %2817 = vmatprep.subr.mxu0 0.0
        %2818 = vmatpush1.msra.mxu0 %v528
        %2819 = vmatprep.subr.mxu0 0.0
        %2820 = vmatpush1.msra.mxu0 %v529
        %2821 = vmatprep.subr.mxu0 0.0
        %2822 = vmatpush1.msra.mxu0 %v530
        %2823 = vmatprep.subr.mxu0 0.0
        %2824 = vmatpush1.msra.mxu0 %v531
        %2825 = vmatprep.subr.mxu0 0.0
        %2826 = vmatpush1.msra.mxu0 %v532
        %2827 = vmatprep.subr.mxu0 0.0
        %2828 = vmatpush1.msra.mxu0 %v533
        %2829 = vmatprep.subr.mxu0 0.0
        %2830 = vmatpush1.msra.mxu0 0.0
        %2831 = vmatprep.subr.mxu0 0.0
        %2832 = vmatpush1.msra.mxu0 0.0
        %2833 = vmatprep.subr.mxu0 0.0
        %2834 = vmatpush1.msra.mxu0 0.0
        %2835 = vmatprep.subr.mxu0 0.0
        %2836 = vmatpush1.msra.mxu0 0.0
        %2837 = vmatprep.subr.mxu0 0.0
        %2838 = vmatpush1.msra.mxu0 0.0
        %2839 = vmatprep.subr.mxu0 0.0
        %2840 = vmatpush1.msra.mxu0 0.0
        %2841 = vmatprep.subr.mxu0 0.0
        %2842 = vmatpush1.msra.mxu0 0.0
        %2843 = vmatprep.subr.mxu0 0.0
        %2844 = vmatpush1.msra.mxu0 0.0
        %2845 = vmatprep.subr.mxu0 0.0
        %2846 = vmatpush1.msra.mxu0 0.0
        %2847 = vmatprep.subr.mxu0 0.0
        %2848 = vmatpush1.msra.mxu0 0.0
        %2849 = vmatprep.subr.mxu0 0.0
        %2850 = vmatpush1.msra.mxu0 0.0
        %2851 = vmatprep.subr.mxu0 0.0
        %2852 = vmatpush1.msra.mxu0 0.0
        %2853 = vmatprep.subr.mxu0 0.0
        %2854 = vmatpush1.msra.mxu0 0.0
        %2855 = vmatprep.subr.mxu0 0.0
        %2856 = vmatpush1.msra.mxu0 0.0
        %2857 = vmatprep.subr.mxu0 0.0
        %2858 = vmatpush1.msra.mxu0 0.0
        %2859 = vmatprep.subr.mxu0 0.0
        %2860 = vmatpush1.msra.mxu0 0.0
        %2861 = vmatprep.subr.mxu0 0.0
        %2862 = vmatpush1.msra.mxu0 0.0
        %2863 = vmatprep.subr.mxu0 0.0
        %2864 = vmatpush1.msra.mxu0 0.0
        %2865 = vmatprep.subr.mxu0 0.0
        %2866 = vmatpush1.msra.mxu0 0.0
        %2867 = vmatprep.subr.mxu0 0.0
        %2868 = vmatpush1.msra.mxu0 0.0
        %2869 = vmatprep.subr.mxu0 0.0
        %2870 = vmatpush1.msra.mxu0 0.0
        %2871 = vmatprep.subr.mxu0 0.0
        %2872 = vmatpush1.msra.mxu0 0.0
        %2873 = vmatprep.subr.mxu0 0.0
        %2874 = vmatpush1.msra.mxu0 0.0
        %2875 = vmatprep.subr.mxu0 0.0
        %2876 = vmatpush1.msra.mxu0 0.0
        %2877 = vmatprep.mubr.f32.mxu0 0.0
        %2878 = vmatmul.mubr.f32.gmra.mrb[0].mxu0 %v2811
        %v2879 = vpop.f32.mrb[0].mxu0
        %v2880 = vadd.f32 %v2807, %v2879
        %v2881 = vpop.f32.mrb[0].mxu0
        %2882 = vdwg.mxu0
        %v2883 = vadd.f32 %v2880, %v2722
        %v2884 = vsel %vm577, %v2883, 0.0
        %2885 = vadd.xlane.f32.xlu0 %v2884
        %v2886 = vpop.xlane.xlu0 %2885
        %v2887 = vmul.f32 %v2886, %v2698
        %v2888 = vsub.f32 %v2883, %v2887
        %v2889 = vmul.f32 %v2888, %v2888
        %v2890 = vsel %vm577, %v2889, 0.0
        %2891 = vadd.xlane.f32.xlu0 %v2890
        %v2892 = vpop.xlane.xlu0 %2891
        %v2893 = vmul.f32 %v2892, %v2698
        %v2894 = vadd.f32 %v2893, 1e-05
        %v2895 = vrsqrt.pop %v2894
        %v2896 = vmul.f32 %v2888, %v2895
        %v2898 = vlaneseq
        %v2899 = vshrl.u32 %v2898, 7
        %v2900 = vsub.s32 0, %v2899
        %v2901 = vrot.slane %v535, %v2900
        %v2903 = vmul.f32 %v2896, %v2901
        %v2905 = vlaneseq
        %v2906 = vshrl.u32 %v2905, 7
        %v2907 = vsub.s32 0, %v2906
        %v2908 = vrot.slane %v536, %v2907
        %v2910 = vadd.f32 %v2903, %v2908
        %v2912 = vsel %vm577, %v2910, 0
        %2914 = vmatprep.subr.mxu0 0.0
        %2915 = vmatpush1.msra.mxu0 %v509
        %2916 = vmatprep.subr.mxu0 0.0
        %2917 = vmatpush1.msra.mxu0 %v510
        %2918 = vmatprep.subr.mxu0 0.0
        %2919 = vmatpush1.msra.mxu0 %v511
        %2920 = vmatprep.subr.mxu0 0.0
        %2921 = vmatpush1.msra.mxu0 %v512
        %2922 = vmatprep.subr.mxu0 0.0
        %2923 = vmatpush1.msra.mxu0 0.0
        %2924 = vmatprep.subr.mxu0 0.0
        %2925 = vmatpush1.msra.mxu0 0.0
        %2926 = vmatprep.subr.mxu0 0.0
        %2927 = vmatpush1.msra.mxu0 0.0
        %2928 = vmatprep.subr.mxu0 0.0
        %2929 = vmatpush1.msra.mxu0 0.0
        %2930 = vmatprep.subr.mxu0 0.0
        %2931 = vmatpush1.msra.mxu0 0.0
        %2932 = vmatprep.subr.mxu0 0.0
        %2933 = vmatpush1.msra.mxu0 0.0
        %2934 = vmatprep.subr.mxu0 0.0
        %2935 = vmatpush1.msra.mxu0 0.0
        %2936 = vmatprep.subr.mxu0 0.0
        %2937 = vmatpush1.msra.mxu0 0.0
        %2938 = vmatprep.subr.mxu0 0.0
        %2939 = vmatpush1.msra.mxu0 0.0
        %2940 = vmatprep.subr.mxu0 0.0
        %2941 = vmatpush1.msra.mxu0 0.0
        %2942 = vmatprep.subr.mxu0 0.0
        %2943 = vmatpush1.msra.mxu0 0.0
        %2944 = vmatprep.subr.mxu0 0.0
        %2945 = vmatpush1.msra.mxu0 0.0
        %2946 = vmatprep.subr.mxu0 0.0
        %2947 = vmatpush1.msra.mxu0 0.0
        %2948 = vmatprep.subr.mxu0 0.0
        %2949 = vmatpush1.msra.mxu0 0.0
        %2950 = vmatprep.subr.mxu0 0.0
        %2951 = vmatpush1.msra.mxu0 0.0
        %2952 = vmatprep.subr.mxu0 0.0
        %2953 = vmatpush1.msra.mxu0 0.0
        %2954 = vmatprep.subr.mxu0 0.0
        %2955 = vmatpush1.msra.mxu0 0.0
        %2956 = vmatprep.subr.mxu0 0.0
        %2957 = vmatpush1.msra.mxu0 0.0
        %2958 = vmatprep.subr.mxu0 0.0
        %2959 = vmatpush1.msra.mxu0 0.0
        %2960 = vmatprep.subr.mxu0 0.0
        %2961 = vmatpush1.msra.mxu0 0.0
        %2962 = vmatprep.subr.mxu0 0.0
        %2963 = vmatpush1.msra.mxu0 0.0
        %2964 = vmatprep.subr.mxu0 0.0
        %2965 = vmatpush1.msra.mxu0 0.0
        %2966 = vmatprep.subr.mxu0 0.0
        %2967 = vmatpush1.msra.mxu0 0.0
        %2968 = vmatprep.subr.mxu0 0.0
        %2969 = vmatpush1.msra.mxu0 0.0
        %2970 = vmatprep.subr.mxu0 0.0
        %2971 = vmatpush1.msra.mxu0 0.0
        %2972 = vmatprep.subr.mxu0 0.0
        %2973 = vmatpush1.msra.mxu0 0.0
        %2974 = vmatprep.subr.mxu0 0.0
        %2975 = vmatpush1.msra.mxu0 0.0
        %2976 = vmatprep.subr.mxu0 0.0
        %2977 = vmatpush1.msra.mxu0 0.0
        %2978 = vmatprep.mubr.f32.mxu0 0.0
        %2979 = vmatmul.mubr.f32.gmra.mrb[0].mxu0 %v2912
        %v2980 = vpop.f32.mrb[0].mxu0
        %v2981 = vadd.f32 %v575, %v2980
        %v2982 = vpop.f32.mrb[0].mxu0
        %2983 = vdwg.mxu0
        %2984 = vmatprep.subr.mxu0 0.0
        %2985 = vmatpush1.msra.mxu0 %v2981
        %2986 = vmatprep.subr.mxu0 0.0
        %2987 = vmatpush1.msra.mxu0 0.0
        %2988 = vmatprep.subr.mxu0 0.0
        %2989 = vmatpush1.msra.mxu0 0.0
        %2990 = vmatprep.subr.mxu0 0.0
        %2991 = vmatpush1.msra.mxu0 0.0
        %2992 = vmatprep.subr.mxu0 0.0
        %2993 = vmatpush1.msra.mxu0 0.0
        %2994 = vmatprep.subr.mxu0 0.0
        %2995 = vmatpush1.msra.mxu0 0.0
        %2996 = vmatprep.subr.mxu0 0.0
        %2997 = vmatpush1.msra.mxu0 0.0
        %2998 = vmatprep.subr.mxu0 0.0
        %2999 = vmatpush1.msra.mxu0 0.0
        %3000 = vmatprep.subr.mxu0 0.0
        %3001 = vmatpush1.msra.mxu0 0.0
        %3002 = vmatprep.subr.mxu0 0.0
        %3003 = vmatpush1.msra.mxu0 0.0
        %3004 = vmatprep.subr.mxu0 0.0
        %3005 = vmatpush1.msra.mxu0 0.0
        %3006 = vmatprep.subr.mxu0 0.0
        %3007 = vmatpush1.msra.mxu0 0.0
        %3008 = vmatprep.subr.mxu0 0.0
        %3009 = vmatpush1.msra.mxu0 0.0
        %3010 = vmatprep.subr.mxu0 0.0
        %3011 = vmatpush1.msra.mxu0 0.0
        %3012 = vmatprep.subr.mxu0 0.0
        %3013 = vmatpush1.msra.mxu0 0.0
        %3014 = vmatprep.subr.mxu0 0.0
        %3015 = vmatpush1.msra.mxu0 0.0
        %3016 = vmatprep.subr.mxu0 0.0
        %3017 = vmatpush1.msra.mxu0 0.0
        %3018 = vmatprep.subr.mxu0 0.0
        %3019 = vmatpush1.msra.mxu0 0.0
        %3020 = vmatprep.subr.mxu0 0.0
        %3021 = vmatpush1.msra.mxu0 0.0
        %3022 = vmatprep.subr.mxu0 0.0
        %3023 = vmatpush1.msra.mxu0 0.0
        %3024 = vmatprep.subr.mxu0 0.0
        %3025 = vmatpush1.msra.mxu0 0.0
        %3026 = vmatprep.subr.mxu0 0.0
        %3027 = vmatpush1.msra.mxu0 0.0
        %3028 = vmatprep.subr.mxu0 0.0
        %3029 = vmatpush1.msra.mxu0 0.0
        %3030 = vmatprep.subr.mxu0 0.0
        %3031 = vmatpush1.msra.mxu0 0.0
        %3032 = vmatprep.subr.mxu0 0.0
        %3033 = vmatpush1.msra.mxu0 0.0
        %3034 = vmatprep.subr.mxu0 0.0
        %3035 = vmatpush1.msra.mxu0 0.0
        %3036 = vmatprep.subr.mxu0 0.0
        %3037 = vmatpush1.msra.mxu0 0.0
        %3038 = vmatprep.subr.mxu0 0.0
        %3039 = vmatpush1.msra.mxu0 0.0
        %3040 = vmatprep.subr.mxu0 0.0
        %3041 = vmatpush1.msra.mxu0 0.0
        %3042 = vmatprep.subr.mxu0 0.0
        %3043 = vmatpush1.msra.mxu0 0.0
        %3044 = vmatprep.subr.mxu0 0.0
        %3045 = vmatpush1.msra.mxu0 0.0
        %3046 = vmatprep.subr.mxu0 0.0
        %3047 = vmatpush1.msra.mxu0 0.0
        %3048 = vmatprep.mubr.f32.mxu0 0.0
        %3049 = vmatmul.mubr.f32.gmra.mrb[0].mxu0 %v653
        %v3050 = vpop.f32.mrb[0].mxu0
        %v3051 = vadd.f32 0.0, %v3050
        %v3052 = vpop.f32.mrb[0].mxu0
        %3053 = vdwg.mxu0
        %3054 = vmatprep.subr.mxu0 0.0
        %3055 = vmatpush1.msra.mxu0 %v2981
        %3056 = vmatprep.subr.mxu0 0.0
        %3057 = vmatpush1.msra.mxu0 0.0
        %3058 = vmatprep.subr.mxu0 0.0
        %3059 = vmatpush1.msra.mxu0 0.0
        %3060 = vmatprep.subr.mxu0 0.0
        %3061 = vmatpush1.msra.mxu0 0.0
        %3062 = vmatprep.subr.mxu0 0.0
        %3063 = vmatpush1.msra.mxu0 0.0
        %3064 = vmatprep.subr.mxu0 0.0
        %3065 = vmatpush1.msra.mxu0 0.0
        %3066 = vmatprep.subr.mxu0 0.0
        %3067 = vmatpush1.msra.mxu0 0.0
        %3068 = vmatprep.subr.mxu0 0.0
        %3069 = vmatpush1.msra.mxu0 0.0
        %3070 = vmatprep.subr.mxu0 0.0
        %3071 = vmatpush1.msra.mxu0 0.0
        %3072 = vmatprep.subr.mxu0 0.0
        %3073 = vmatpush1.msra.mxu0 0.0
        %3074 = vmatprep.subr.mxu0 0.0
        %3075 = vmatpush1.msra.mxu0 0.0
        %3076 = vmatprep.subr.mxu0 0.0
        %3077 = vmatpush1.msra.mxu0 0.0
        %3078 = vmatprep.subr.mxu0 0.0
        %3079 = vmatpush1.msra.mxu0 0.0
        %3080 = vmatprep.subr.mxu0 0.0
        %3081 = vmatpush1.msra.mxu0 0.0
        %3082 = vmatprep.subr.mxu0 0.0
        %3083 = vmatpush1.msra.mxu0 0.0
        %3084 = vmatprep.subr.mxu0 0.0
        %3085 = vmatpush1.msra.mxu0 0.0
        %3086 = vmatprep.subr.mxu0 0.0
        %3087 = vmatpush1.msra.mxu0 0.0
        %3088 = vmatprep.subr.mxu0 0.0
        %3089 = vmatpush1.msra.mxu0 0.0
        %3090 = vmatprep.subr.mxu0 0.0
        %3091 = vmatpush1.msra.mxu0 0.0
        %3092 = vmatprep.subr.mxu0 0.0
        %3093 = vmatpush1.msra.mxu0 0.0
        %3094 = vmatprep.subr.mxu0 0.0
        %3095 = vmatpush1.msra.mxu0 0.0
        %3096 = vmatprep.subr.mxu0 0.0
        %3097 = vmatpush1.msra.mxu0 0.0
        %3098 = vmatprep.subr.mxu0 0.0
        %3099 = vmatpush1.msra.mxu0 0.0
        %3100 = vmatprep.subr.mxu0 0.0
        %3101 = vmatpush1.msra.mxu0 0.0
        %3102 = vmatprep.subr.mxu0 0.0
        %3103 = vmatpush1.msra.mxu0 0.0
        %3104 = vmatprep.subr.mxu0 0.0
        %3105 = vmatpush1.msra.mxu0 0.0
        %3106 = vmatprep.subr.mxu0 0.0
        %3107 = vmatpush1.msra.mxu0 0.0
        %3108 = vmatprep.subr.mxu0 0.0
        %3109 = vmatpush1.msra.mxu0 0.0
        %3110 = vmatprep.subr.mxu0 0.0
        %3111 = vmatpush1.msra.mxu0 0.0
        %3112 = vmatprep.subr.mxu0 0.0
        %3113 = vmatpush1.msra.mxu0 0.0
        %3114 = vmatprep.subr.mxu0 0.0
        %3115 = vmatpush1.msra.mxu0 0.0
        %3116 = vmatprep.subr.mxu0 0.0
        %3117 = vmatpush1.msra.mxu0 0.0
        %3118 = vmatprep.mubr.f32.mxu0 0.0
        %3119 = vmatmul.mubr.f32.gmra.mrb[0].mxu0 %v726
        %v3120 = vpop.f32.mrb[0].mxu0
        %v3121 = vadd.f32 0.0, %v3120
        %v3122 = vpop.f32.mrb[0].mxu0
        %3123 = vdwg.mxu0
        %v3124 = vmul.f32 %v3051, 0.35355338
        %3126 = vrot.lane.b32.xlu0 %v3051, 96
        %v3127 = vpop.permute.xlu0 %3126
        %v3129 = vmul.f32 %v3124, %v3127
        %v3130 = vsel %vm804, %v3129, 0.0
        %3131 = vadd.xlane.f32.xlu0 %v3130
        %v3132 = vpop.xlane.xlu0 %3131
        %3133 = vrot.lane.b32.xlu0 %v3051, 88
        %v3134 = vpop.permute.xlu0 %3133
        %v3136 = vmul.f32 %v3124, %v3134
        %v3137 = vsel %vm804, %v3136, 0.0
        %3138 = vadd.xlane.f32.xlu0 %v3137
        %v3139 = vpop.xlane.xlu0 %3138
        %3140 = vrot.lane.b32.xlu0 %v3051, 80
        %v3141 = vpop.permute.xlu0 %3140
        %v3143 = vmul.f32 %v3124, %v3141
        %v3144 = vsel %vm804, %v3143, 0.0
        %3145 = vadd.xlane.f32.xlu0 %v3144
        %v3146 = vpop.xlane.xlu0 %3145
        %3147 = vrot.lane.b32.xlu0 %v3051, 72
        %v3148 = vpop.permute.xlu0 %3147
        %v3150 = vmul.f32 %v3124, %v3148
        %v3151 = vsel %vm804, %v3150, 0.0
        %3152 = vadd.xlane.f32.xlu0 %v3151
        %v3153 = vpop.xlane.xlu0 %3152
        %3155 = vrot.lane.b32.xlu0 %v3121, 96
        %v3156 = vpop.permute.xlu0 %3155
        %v3158 = vmul.f32 %v3124, %v3156
        %v3159 = vsel %vm804, %v3158, 0.0
        %3160 = vadd.xlane.f32.xlu0 %v3159
        %v3161 = vpop.xlane.xlu0 %3160
        %3162 = vrot.lane.b32.xlu0 %v3121, 88
        %v3163 = vpop.permute.xlu0 %3162
        %v3165 = vmul.f32 %v3124, %v3163
        %v3166 = vsel %vm804, %v3165, 0.0
        %3167 = vadd.xlane.f32.xlu0 %v3166
        %v3168 = vpop.xlane.xlu0 %3167
        %3169 = vrot.lane.b32.xlu0 %v3121, 80
        %v3170 = vpop.permute.xlu0 %3169
        %v3172 = vmul.f32 %v3124, %v3170
        %v3173 = vsel %vm804, %v3172, 0.0
        %3174 = vadd.xlane.f32.xlu0 %v3173
        %v3175 = vpop.xlane.xlu0 %3174
        %3176 = vrot.lane.b32.xlu0 %v3121, 72
        %v3177 = vpop.permute.xlu0 %3176
        %v3179 = vmul.f32 %v3124, %v3177
        %v3180 = vsel %vm804, %v3179, 0.0
        %3181 = vadd.xlane.f32.xlu0 %v3180
        %v3182 = vpop.xlane.xlu0 %3181
        %v3183 = vmax.f32 %v3132, %v3139
        %v3184 = vmax.f32 %v3183, %v3146
        %v3185 = vmax.f32 %v3184, %v3153
        %v3186 = vmax.f32 %v3185, %v3161
        %v3187 = vmax.f32 %v3186, %v3168
        %v3188 = vmax.f32 %v3187, %v3175
        %v3189 = vmax.f32 %v3188, %v3182
        %v3190 = vsub.f32 %v3132, %v3189
        %v3191 = vmul.f32 %v3190, 1.442695
        %v3192 = vpow.pop %v3191
        %v3193 = vsub.f32 %v3139, %v3189
        %v3194 = vmul.f32 %v3193, 1.442695
        %v3195 = vpow.pop %v3194
        %v3196 = vsub.f32 %v3146, %v3189
        %v3197 = vmul.f32 %v3196, 1.442695
        %v3198 = vpow.pop %v3197
        %v3199 = vsub.f32 %v3153, %v3189
        %v3200 = vmul.f32 %v3199, 1.442695
        %v3201 = vpow.pop %v3200
        %v3202 = vsub.f32 %v3161, %v3189
        %v3203 = vmul.f32 %v3202, 1.442695
        %v3204 = vpow.pop %v3203
        %v3205 = vsub.f32 %v3168, %v3189
        %v3206 = vmul.f32 %v3205, 1.442695
        %v3207 = vpow.pop %v3206
        %v3208 = vsub.f32 %v3175, %v3189
        %v3209 = vmul.f32 %v3208, 1.442695
        %v3210 = vpow.pop %v3209
        %v3211 = vsub.f32 %v3182, %v3189
        %v3212 = vmul.f32 %v3211, 1.442695
        %v3213 = vpow.pop %v3212
        %v3214 = vadd.f32 %v3192, %v3195
        %v3215 = vadd.f32 %v3214, %v3198
        %v3216 = vadd.f32 %v3215, %v3201
        %v3217 = vadd.f32 %v3216, %v3204
        %v3218 = vadd.f32 %v3217, %v3207
        %v3219 = vadd.f32 %v3218, %v3210
        %v3220 = vadd.f32 %v3219, %v3213
        %v3221 = vrcp.pop %v3220
        %v3222 = vmul.f32 %v3192, %v3221
        %v3223 = vmul.f32 %v3222, %v3051
        %v3224 = vadd.f32 %v3223, 0.0
        %v3225 = vmul.f32 %v3195, %v3221
        %v3226 = vmul.f32 %v3225, %v3051
        %3228 = vrot.lane.b32.xlu0 %v3226, 120
        %v3229 = vpop.permute.xlu0 %3228
        %v3231 = vadd.f32 %v3224, %v3229
        %v3232 = vmul.f32 %v3198, %v3221
        %v3233 = vmul.f32 %v3232, %v3051
        %3235 = vrot.lane.b32.xlu0 %v3233, 112
        %v3236 = vpop.permute.xlu0 %3235
        %v3238 = vadd.f32 %v3231, %v3236
        %v3239 = vmul.f32 %v3201, %v3221
        %v3240 = vmul.f32 %v3239, %v3051
        %3242 = vrot.lane.b32.xlu0 %v3240, 104
        %v3243 = vpop.permute.xlu0 %3242
        %v3245 = vadd.f32 %v3238, %v3243
        %v3246 = vmul.f32 %v3204, %v3221
        %v3247 = vmul.f32 %v3246, %v3121
        %v3248 = vadd.f32 %v3245, %v3247
        %v3249 = vmul.f32 %v3207, %v3221
        %v3250 = vmul.f32 %v3249, %v3121
        %3252 = vrot.lane.b32.xlu0 %v3250, 120
        %v3253 = vpop.permute.xlu0 %3252
        %v3255 = vadd.f32 %v3248, %v3253
        %v3256 = vmul.f32 %v3210, %v3221
        %v3257 = vmul.f32 %v3256, %v3121
        %3259 = vrot.lane.b32.xlu0 %v3257, 112
        %v3260 = vpop.permute.xlu0 %3259
        %v3262 = vadd.f32 %v3255, %v3260
        %v3263 = vmul.f32 %v3213, %v3221
        %v3264 = vmul.f32 %v3263, %v3121
        %3266 = vrot.lane.b32.xlu0 %v3264, 104
        %v3267 = vpop.permute.xlu0 %3266
        %v3269 = vadd.f32 %v3262, %v3267
        %3270 = vrot.lane.b32.xlu0 %v3051, 104
        %v3271 = vpop.permute.xlu0 %3270
        %v3273 = vmul.f32 %v3124, %v3271
        %3275 = vrot.lane.b32.xlu0 %v3273, 120
        %v3276 = vpop.permute.xlu0 %3275
        %v3278 = vsel %vm804, %v3276, 0.0
        %3279 = vadd.xlane.f32.xlu0 %v3278
        %v3280 = vpop.xlane.xlu0 %3279
        %3282 = vrot.lane.b32.xlu0 %v3129, 120
        %v3283 = vpop.permute.xlu0 %3282
        %v3285 = vsel %vm804, %v3283, 0.0
        %3286 = vadd.xlane.f32.xlu0 %v3285
        %v3287 = vpop.xlane.xlu0 %3286
        %3289 = vrot.lane.b32.xlu0 %v3136, 120
        %v3290 = vpop.permute.xlu0 %3289
        %v3292 = vsel %vm804, %v3290, 0.0
        %3293 = vadd.xlane.f32.xlu0 %v3292
        %v3294 = vpop.xlane.xlu0 %3293
        %3296 = vrot.lane.b32.xlu0 %v3143, 120
        %v3297 = vpop.permute.xlu0 %3296
        %v3299 = vsel %vm804, %v3297, 0.0
        %3300 = vadd.xlane.f32.xlu0 %v3299
        %v3301 = vpop.xlane.xlu0 %3300
        %3302 = vrot.lane.b32.xlu0 %v3121, 104
        %v3303 = vpop.permute.xlu0 %3302
        %v3305 = vmul.f32 %v3124, %v3303
        %3307 = vrot.lane.b32.xlu0 %v3305, 120
        %v3308 = vpop.permute.xlu0 %3307
        %v3310 = vsel %vm804, %v3308, 0.0
        %3311 = vadd.xlane.f32.xlu0 %v3310
        %v3312 = vpop.xlane.xlu0 %3311
        %3314 = vrot.lane.b32.xlu0 %v3158, 120
        %v3315 = vpop.permute.xlu0 %3314
        %v3317 = vsel %vm804, %v3315, 0.0
        %3318 = vadd.xlane.f32.xlu0 %v3317
        %v3319 = vpop.xlane.xlu0 %3318
        %3321 = vrot.lane.b32.xlu0 %v3165, 120
        %v3322 = vpop.permute.xlu0 %3321
        %v3324 = vsel %vm804, %v3322, 0.0
        %3325 = vadd.xlane.f32.xlu0 %v3324
        %v3326 = vpop.xlane.xlu0 %3325
        %3328 = vrot.lane.b32.xlu0 %v3172, 120
        %v3329 = vpop.permute.xlu0 %3328
        %v3331 = vsel %vm804, %v3329, 0.0
        %3332 = vadd.xlane.f32.xlu0 %v3331
        %v3333 = vpop.xlane.xlu0 %3332
        %v3334 = vmax.f32 %v3280, %v3287
        %v3335 = vmax.f32 %v3334, %v3294
        %v3336 = vmax.f32 %v3335, %v3301
        %v3337 = vmax.f32 %v3336, %v3312
        %v3338 = vmax.f32 %v3337, %v3319
        %v3339 = vmax.f32 %v3338, %v3326
        %v3340 = vmax.f32 %v3339, %v3333
        %v3341 = vsub.f32 %v3280, %v3340
        %v3342 = vmul.f32 %v3341, 1.442695
        %v3343 = vpow.pop %v3342
        %v3344 = vsub.f32 %v3287, %v3340
        %v3345 = vmul.f32 %v3344, 1.442695
        %v3346 = vpow.pop %v3345
        %v3347 = vsub.f32 %v3294, %v3340
        %v3348 = vmul.f32 %v3347, 1.442695
        %v3349 = vpow.pop %v3348
        %v3350 = vsub.f32 %v3301, %v3340
        %v3351 = vmul.f32 %v3350, 1.442695
        %v3352 = vpow.pop %v3351
        %v3353 = vsub.f32 %v3312, %v3340
        %v3354 = vmul.f32 %v3353, 1.442695
        %v3355 = vpow.pop %v3354
        %v3356 = vsub.f32 %v3319, %v3340
        %v3357 = vmul.f32 %v3356, 1.442695
        %v3358 = vpow.pop %v3357
        %v3359 = vsub.f32 %v3326, %v3340
        %v3360 = vmul.f32 %v3359, 1.442695
        %v3361 = vpow.pop %v3360
        %v3362 = vsub.f32 %v3333, %v3340
        %v3363 = vmul.f32 %v3362, 1.442695
        %v3364 = vpow.pop %v3363
        %v3365 = vadd.f32 %v3343, %v3346
        %v3366 = vadd.f32 %v3365, %v3349
        %v3367 = vadd.f32 %v3366, %v3352
        %v3368 = vadd.f32 %v3367, %v3355
        %v3369 = vadd.f32 %v3368, %v3358
        %v3370 = vadd.f32 %v3369, %v3361
        %v3371 = vadd.f32 %v3370, %v3364
        %v3372 = vrcp.pop %v3371
        %v3373 = vmul.f32 %v3343, %v3372
        %v3374 = vmul.f32 %v3373, %v3051
        %v3375 = vadd.f32 %v3374, 0.0
        %v3376 = vmul.f32 %v3346, %v3372
        %v3377 = vmul.f32 %v3376, %v3051
        %3379 = vrot.lane.b32.xlu0 %v3377, 120
        %v3380 = vpop.permute.xlu0 %3379
        %v3382 = vadd.f32 %v3375, %v3380
        %v3383 = vmul.f32 %v3349, %v3372
        %v3384 = vmul.f32 %v3383, %v3051
        %3386 = vrot.lane.b32.xlu0 %v3384, 112
        %v3387 = vpop.permute.xlu0 %3386
        %v3389 = vadd.f32 %v3382, %v3387
        %v3390 = vmul.f32 %v3352, %v3372
        %v3391 = vmul.f32 %v3390, %v3051
        %3393 = vrot.lane.b32.xlu0 %v3391, 104
        %v3394 = vpop.permute.xlu0 %3393
        %v3396 = vadd.f32 %v3389, %v3394
        %v3397 = vmul.f32 %v3355, %v3372
        %v3398 = vmul.f32 %v3397, %v3121
        %v3399 = vadd.f32 %v3396, %v3398
        %v3400 = vmul.f32 %v3358, %v3372
        %v3401 = vmul.f32 %v3400, %v3121
        %3403 = vrot.lane.b32.xlu0 %v3401, 120
        %v3404 = vpop.permute.xlu0 %3403
        %v3406 = vadd.f32 %v3399, %v3404
        %v3407 = vmul.f32 %v3361, %v3372
        %v3408 = vmul.f32 %v3407, %v3121
        %3410 = vrot.lane.b32.xlu0 %v3408, 112
        %v3411 = vpop.permute.xlu0 %3410
        %v3413 = vadd.f32 %v3406, %v3411
        %v3414 = vmul.f32 %v3364, %v3372
        %v3415 = vmul.f32 %v3414, %v3121
        %3417 = vrot.lane.b32.xlu0 %v3415, 104
        %v3418 = vpop.permute.xlu0 %3417
        %v3420 = vadd.f32 %v3413, %v3418
        %3422 = vrot.lane.b32.xlu0 %v3420, 64
        %v3423 = vpop.permute.xlu0 %3422
        %v3424 = vsel %vm651, %v3423, 0
        %3426 = vmatprep.subr.mxu0 0.0
        %3427 = vmatpush1.msra.mxu0 %v515
        %3428 = vmatprep.subr.mxu0 0.0
        %3429 = vmatpush1.msra.mxu0 0.0
        %3430 = vmatprep.subr.mxu0 0.0
        %3431 = vmatpush1.msra.mxu0 0.0
        %3432 = vmatprep.subr.mxu0 0.0
        %3433 = vmatpush1.msra.mxu0 0.0
        %3434 = vmatprep.subr.mxu0 0.0
        %3435 = vmatpush1.msra.mxu0 0.0
        %3436 = vmatprep.subr.mxu0 0.0
        %3437 = vmatpush1.msra.mxu0 0.0
        %3438 = vmatprep.subr.mxu0 0.0
        %3439 = vmatpush1.msra.mxu0 0.0
        %3440 = vmatprep.subr.mxu0 0.0
        %3441 = vmatpush1.msra.mxu0 0.0
        %3442 = vmatprep.subr.mxu0 0.0
        %3443 = vmatpush1.msra.mxu0 0.0
        %3444 = vmatprep.subr.mxu0 0.0
        %3445 = vmatpush1.msra.mxu0 0.0
        %3446 = vmatprep.subr.mxu0 0.0
        %3447 = vmatpush1.msra.mxu0 0.0
        %3448 = vmatprep.subr.mxu0 0.0
        %3449 = vmatpush1.msra.mxu0 0.0
        %3450 = vmatprep.subr.mxu0 0.0
        %3451 = vmatpush1.msra.mxu0 0.0
        %3452 = vmatprep.subr.mxu0 0.0
        %3453 = vmatpush1.msra.mxu0 0.0
        %3454 = vmatprep.subr.mxu0 0.0
        %3455 = vmatpush1.msra.mxu0 0.0
        %3456 = vmatprep.subr.mxu0 0.0
        %3457 = vmatpush1.msra.mxu0 0.0
        %3458 = vmatprep.subr.mxu0 0.0
        %3459 = vmatpush1.msra.mxu0 0.0
        %3460 = vmatprep.subr.mxu0 0.0
        %3461 = vmatpush1.msra.mxu0 0.0
        %3462 = vmatprep.subr.mxu0 0.0
        %3463 = vmatpush1.msra.mxu0 0.0
        %3464 = vmatprep.subr.mxu0 0.0
        %3465 = vmatpush1.msra.mxu0 0.0
        %3466 = vmatprep.subr.mxu0 0.0
        %3467 = vmatpush1.msra.mxu0 0.0
        %3468 = vmatprep.subr.mxu0 0.0
        %3469 = vmatpush1.msra.mxu0 0.0
        %3470 = vmatprep.subr.mxu0 0.0
        %3471 = vmatpush1.msra.mxu0 0.0
        %3472 = vmatprep.subr.mxu0 0.0
        %3473 = vmatpush1.msra.mxu0 0.0
        %3474 = vmatprep.subr.mxu0 0.0
        %3475 = vmatpush1.msra.mxu0 0.0
        %3476 = vmatprep.subr.mxu0 0.0
        %3477 = vmatpush1.msra.mxu0 0.0
        %3478 = vmatprep.subr.mxu0 0.0
        %3479 = vmatpush1.msra.mxu0 0.0
        %3480 = vmatprep.subr.mxu0 0.0
        %3481 = vmatpush1.msra.mxu0 0.0
        %3482 = vmatprep.subr.mxu0 0.0
        %3483 = vmatpush1.msra.mxu0 0.0
        %3484 = vmatprep.subr.mxu0 0.0
        %3485 = vmatpush1.msra.mxu0 0.0
        %3486 = vmatprep.subr.mxu0 0.0
        %3487 = vmatpush1.msra.mxu0 0.0
        %3488 = vmatprep.subr.mxu0 0.0
        %3489 = vmatpush1.msra.mxu0 0.0
        %3490 = vmatprep.mubr.f32.mxu0 0.0
        %3491 = vmatmul.mubr.f32.gmra.mrb[0].mxu0 %v3424
        %v3492 = vpop.f32.mrb[0].mxu0
        %v3493 = vadd.f32 0.0, %v3492
        %v3494 = vpop.f32.mrb[0].mxu0
        %3495 = vdwg.mxu0
        %3497 = vrot.lane.b32.xlu0 %v3269, 64
        %v3498 = vpop.permute.xlu0 %3497
        %v3499 = vsel %vm651, %v3498, 0
        %3501 = vmatprep.subr.mxu0 0.0
        %3502 = vmatpush1.msra.mxu0 %v514
        %3503 = vmatprep.subr.mxu0 0.0
        %3504 = vmatpush1.msra.mxu0 0.0
        %3505 = vmatprep.subr.mxu0 0.0
        %3506 = vmatpush1.msra.mxu0 0.0
        %3507 = vmatprep.subr.mxu0 0.0
        %3508 = vmatpush1.msra.mxu0 0.0
        %3509 = vmatprep.subr.mxu0 0.0
        %3510 = vmatpush1.msra.mxu0 0.0
        %3511 = vmatprep.subr.mxu0 0.0
        %3512 = vmatpush1.msra.mxu0 0.0
        %3513 = vmatprep.subr.mxu0 0.0
        %3514 = vmatpush1.msra.mxu0 0.0
        %3515 = vmatprep.subr.mxu0 0.0
        %3516 = vmatpush1.msra.mxu0 0.0
        %3517 = vmatprep.subr.mxu0 0.0
        %3518 = vmatpush1.msra.mxu0 0.0
        %3519 = vmatprep.subr.mxu0 0.0
        %3520 = vmatpush1.msra.mxu0 0.0
        %3521 = vmatprep.subr.mxu0 0.0
        %3522 = vmatpush1.msra.mxu0 0.0
        %3523 = vmatprep.subr.mxu0 0.0
        %3524 = vmatpush1.msra.mxu0 0.0
        %3525 = vmatprep.subr.mxu0 0.0
        %3526 = vmatpush1.msra.mxu0 0.0
        %3527 = vmatprep.subr.mxu0 0.0
        %3528 = vmatpush1.msra.mxu0 0.0
        %3529 = vmatprep.subr.mxu0 0.0
        %3530 = vmatpush1.msra.mxu0 0.0
        %3531 = vmatprep.subr.mxu0 0.0
        %3532 = vmatpush1.msra.mxu0 0.0
        %3533 = vmatprep.subr.mxu0 0.0
        %3534 = vmatpush1.msra.mxu0 0.0
        %3535 = vmatprep.subr.mxu0 0.0
        %3536 = vmatpush1.msra.mxu0 0.0
        %3537 = vmatprep.subr.mxu0 0.0
        %3538 = vmatpush1.msra.mxu0 0.0
        %3539 = vmatprep.subr.mxu0 0.0
        %3540 = vmatpush1.msra.mxu0 0.0
        %3541 = vmatprep.subr.mxu0 0.0
        %3542 = vmatpush1.msra.mxu0 0.0
        %3543 = vmatprep.subr.mxu0 0.0
        %3544 = vmatpush1.msra.mxu0 0.0
        %3545 = vmatprep.subr.mxu0 0.0
        %3546 = vmatpush1.msra.mxu0 0.0
        %3547 = vmatprep.subr.mxu0 0.0
        %3548 = vmatpush1.msra.mxu0 0.0
        %3549 = vmatprep.subr.mxu0 0.0
        %3550 = vmatpush1.msra.mxu0 0.0
        %3551 = vmatprep.subr.mxu0 0.0
        %3552 = vmatpush1.msra.mxu0 0.0
        %3553 = vmatprep.subr.mxu0 0.0
        %3554 = vmatpush1.msra.mxu0 0.0
        %3555 = vmatprep.subr.mxu0 0.0
        %3556 = vmatpush1.msra.mxu0 0.0
        %3557 = vmatprep.subr.mxu0 0.0
        %3558 = vmatpush1.msra.mxu0 0.0
        %3559 = vmatprep.subr.mxu0 0.0
        %3560 = vmatpush1.msra.mxu0 0.0
        %3561 = vmatprep.subr.mxu0 0.0
        %3562 = vmatpush1.msra.mxu0 0.0
        %3563 = vmatprep.subr.mxu0 0.0
        %3564 = vmatpush1.msra.mxu0 0.0
        %3565 = vmatprep.mubr.f32.mxu0 0.0
        %3566 = vmatmul.mubr.f32.gmra.mrb[0].mxu0 %v3499
        %v3567 = vpop.f32.mrb[0].mxu0
        %v3568 = vadd.f32 %v3493, %v3567
        %v3569 = vpop.f32.mrb[0].mxu0
        %3570 = vdwg.mxu0
        %3571 = vrot.lane.b32.xlu0 %v3051, 112
        %v3572 = vpop.permute.xlu0 %3571
        %v3574 = vmul.f32 %v3124, %v3572
        %3576 = vrot.lane.b32.xlu0 %v3574, 112
        %v3577 = vpop.permute.xlu0 %3576
        %v3579 = vsel %vm804, %v3577, 0.0
        %3580 = vadd.xlane.f32.xlu0 %v3579
        %v3581 = vpop.xlane.xlu0 %3580
        %3582 = vrot.lane.b32.xlu0 %v3273, 112
        %v3583 = vpop.permute.xlu0 %3582
        %v3585 = vsel %vm804, %v3583, 0.0
        %3586 = vadd.xlane.f32.xlu0 %v3585
        %v3587 = vpop.xlane.xlu0 %3586
        %3588 = vrot.lane.b32.xlu0 %v3129, 112
        %v3589 = vpop.permute.xlu0 %3588
        %v3591 = vsel %vm804, %v3589, 0.0
        %3592 = vadd.xlane.f32.xlu0 %v3591
        %v3593 = vpop.xlane.xlu0 %3592
        %3594 = vrot.lane.b32.xlu0 %v3136, 112
        %v3595 = vpop.permute.xlu0 %3594
        %v3597 = vsel %vm804, %v3595, 0.0
        %3598 = vadd.xlane.f32.xlu0 %v3597
        %v3599 = vpop.xlane.xlu0 %3598
        %3600 = vrot.lane.b32.xlu0 %v3121, 112
        %v3601 = vpop.permute.xlu0 %3600
        %v3603 = vmul.f32 %v3124, %v3601
        %3605 = vrot.lane.b32.xlu0 %v3603, 112
        %v3606 = vpop.permute.xlu0 %3605
        %v3608 = vsel %vm804, %v3606, 0.0
        %3609 = vadd.xlane.f32.xlu0 %v3608
        %v3610 = vpop.xlane.xlu0 %3609
        %3611 = vrot.lane.b32.xlu0 %v3305, 112
        %v3612 = vpop.permute.xlu0 %3611
        %v3614 = vsel %vm804, %v3612, 0.0
        %3615 = vadd.xlane.f32.xlu0 %v3614
        %v3616 = vpop.xlane.xlu0 %3615
        %3617 = vrot.lane.b32.xlu0 %v3158, 112
        %v3618 = vpop.permute.xlu0 %3617
        %v3620 = vsel %vm804, %v3618, 0.0
        %3621 = vadd.xlane.f32.xlu0 %v3620
        %v3622 = vpop.xlane.xlu0 %3621
        %3623 = vrot.lane.b32.xlu0 %v3165, 112
        %v3624 = vpop.permute.xlu0 %3623
        %v3626 = vsel %vm804, %v3624, 0.0
        %3627 = vadd.xlane.f32.xlu0 %v3626
        %v3628 = vpop.xlane.xlu0 %3627
        %v3629 = vmax.f32 %v3581, %v3587
        %v3630 = vmax.f32 %v3629, %v3593
        %v3631 = vmax.f32 %v3630, %v3599
        %v3632 = vmax.f32 %v3631, %v3610
        %v3633 = vmax.f32 %v3632, %v3616
        %v3634 = vmax.f32 %v3633, %v3622
        %v3635 = vmax.f32 %v3634, %v3628
        %v3636 = vsub.f32 %v3581, %v3635
        %v3637 = vmul.f32 %v3636, 1.442695
        %v3638 = vpow.pop %v3637
        %v3639 = vsub.f32 %v3587, %v3635
        %v3640 = vmul.f32 %v3639, 1.442695
        %v3641 = vpow.pop %v3640
        %v3642 = vsub.f32 %v3593, %v3635
        %v3643 = vmul.f32 %v3642, 1.442695
        %v3644 = vpow.pop %v3643
        %v3645 = vsub.f32 %v3599, %v3635
        %v3646 = vmul.f32 %v3645, 1.442695
        %v3647 = vpow.pop %v3646
        %v3648 = vsub.f32 %v3610, %v3635
        %v3649 = vmul.f32 %v3648, 1.442695
        %v3650 = vpow.pop %v3649
        %v3651 = vsub.f32 %v3616, %v3635
        %v3652 = vmul.f32 %v3651, 1.442695
        %v3653 = vpow.pop %v3652
        %v3654 = vsub.f32 %v3622, %v3635
        %v3655 = vmul.f32 %v3654, 1.442695
        %v3656 = vpow.pop %v3655
        %v3657 = vsub.f32 %v3628, %v3635
        %v3658 = vmul.f32 %v3657, 1.442695
        %v3659 = vpow.pop %v3658
        %v3660 = vadd.f32 %v3638, %v3641
        %v3661 = vadd.f32 %v3660, %v3644
        %v3662 = vadd.f32 %v3661, %v3647
        %v3663 = vadd.f32 %v3662, %v3650
        %v3664 = vadd.f32 %v3663, %v3653
        %v3665 = vadd.f32 %v3664, %v3656
        %v3666 = vadd.f32 %v3665, %v3659
        %v3667 = vrcp.pop %v3666
        %v3668 = vmul.f32 %v3638, %v3667
        %v3669 = vmul.f32 %v3668, %v3051
        %v3670 = vadd.f32 %v3669, 0.0
        %v3671 = vmul.f32 %v3641, %v3667
        %v3672 = vmul.f32 %v3671, %v3051
        %3674 = vrot.lane.b32.xlu0 %v3672, 120
        %v3675 = vpop.permute.xlu0 %3674
        %v3677 = vadd.f32 %v3670, %v3675
        %v3678 = vmul.f32 %v3644, %v3667
        %v3679 = vmul.f32 %v3678, %v3051
        %3681 = vrot.lane.b32.xlu0 %v3679, 112
        %v3682 = vpop.permute.xlu0 %3681
        %v3684 = vadd.f32 %v3677, %v3682
        %v3685 = vmul.f32 %v3647, %v3667
        %v3686 = vmul.f32 %v3685, %v3051
        %3688 = vrot.lane.b32.xlu0 %v3686, 104
        %v3689 = vpop.permute.xlu0 %3688
        %v3691 = vadd.f32 %v3684, %v3689
        %v3692 = vmul.f32 %v3650, %v3667
        %v3693 = vmul.f32 %v3692, %v3121
        %v3694 = vadd.f32 %v3691, %v3693
        %v3695 = vmul.f32 %v3653, %v3667
        %v3696 = vmul.f32 %v3695, %v3121
        %3698 = vrot.lane.b32.xlu0 %v3696, 120
        %v3699 = vpop.permute.xlu0 %3698
        %v3701 = vadd.f32 %v3694, %v3699
        %v3702 = vmul.f32 %v3656, %v3667
        %v3703 = vmul.f32 %v3702, %v3121
        %3705 = vrot.lane.b32.xlu0 %v3703, 112
        %v3706 = vpop.permute.xlu0 %3705
        %v3708 = vadd.f32 %v3701, %v3706
        %v3709 = vmul.f32 %v3659, %v3667
        %v3710 = vmul.f32 %v3709, %v3121
        %3712 = vrot.lane.b32.xlu0 %v3710, 104
        %v3713 = vpop.permute.xlu0 %3712
        %v3715 = vadd.f32 %v3708, %v3713
        %3717 = vrot.lane.b32.xlu0 %v3715, 64
        %v3718 = vpop.permute.xlu0 %3717
        %v3719 = vsel %vm651, %v3718, 0
        %3721 = vmatprep.subr.mxu0 0.0
        %3722 = vmatpush1.msra.mxu0 %v516
        %3723 = vmatprep.subr.mxu0 0.0
        %3724 = vmatpush1.msra.mxu0 0.0
        %3725 = vmatprep.subr.mxu0 0.0
        %3726 = vmatpush1.msra.mxu0 0.0
        %3727 = vmatprep.subr.mxu0 0.0
        %3728 = vmatpush1.msra.mxu0 0.0
        %3729 = vmatprep.subr.mxu0 0.0
        %3730 = vmatpush1.msra.mxu0 0.0
        %3731 = vmatprep.subr.mxu0 0.0
        %3732 = vmatpush1.msra.mxu0 0.0
        %3733 = vmatprep.subr.mxu0 0.0
        %3734 = vmatpush1.msra.mxu0 0.0
        %3735 = vmatprep.subr.mxu0 0.0
        %3736 = vmatpush1.msra.mxu0 0.0
        %3737 = vmatprep.subr.mxu0 0.0
        %3738 = vmatpush1.msra.mxu0 0.0
        %3739 = vmatprep.subr.mxu0 0.0
        %3740 = vmatpush1.msra.mxu0 0.0
        %3741 = vmatprep.subr.mxu0 0.0
        %3742 = vmatpush1.msra.mxu0 0.0
        %3743 = vmatprep.subr.mxu0 0.0
        %3744 = vmatpush1.msra.mxu0 0.0
        %3745 = vmatprep.subr.mxu0 0.0
        %3746 = vmatpush1.msra.mxu0 0.0
        %3747 = vmatprep.subr.mxu0 0.0
        %3748 = vmatpush1.msra.mxu0 0.0
        %3749 = vmatprep.subr.mxu0 0.0
        %3750 = vmatpush1.msra.mxu0 0.0
        %3751 = vmatprep.subr.mxu0 0.0
        %3752 = vmatpush1.msra.mxu0 0.0
        %3753 = vmatprep.subr.mxu0 0.0
        %3754 = vmatpush1.msra.mxu0 0.0
        %3755 = vmatprep.subr.mxu0 0.0
        %3756 = vmatpush1.msra.mxu0 0.0
        %3757 = vmatprep.subr.mxu0 0.0
        %3758 = vmatpush1.msra.mxu0 0.0
        %3759 = vmatprep.subr.mxu0 0.0
        %3760 = vmatpush1.msra.mxu0 0.0
        %3761 = vmatprep.subr.mxu0 0.0
        %3762 = vmatpush1.msra.mxu0 0.0
        %3763 = vmatprep.subr.mxu0 0.0
        %3764 = vmatpush1.msra.mxu0 0.0
        %3765 = vmatprep.subr.mxu0 0.0
        %3766 = vmatpush1.msra.mxu0 0.0
        %3767 = vmatprep.subr.mxu0 0.0
        %3768 = vmatpush1.msra.mxu0 0.0
        %3769 = vmatprep.subr.mxu0 0.0
        %3770 = vmatpush1.msra.mxu0 0.0
        %3771 = vmatprep.subr.mxu0 0.0
        %3772 = vmatpush1.msra.mxu0 0.0
        %3773 = vmatprep.subr.mxu0 0.0
        %3774 = vmatpush1.msra.mxu0 0.0
        %3775 = vmatprep.subr.mxu0 0.0
        %3776 = vmatpush1.msra.mxu0 0.0
        %3777 = vmatprep.subr.mxu0 0.0
        %3778 = vmatpush1.msra.mxu0 0.0
        %3779 = vmatprep.subr.mxu0 0.0
        %3780 = vmatpush1.msra.mxu0 0.0
        %3781 = vmatprep.subr.mxu0 0.0
        %3782 = vmatpush1.msra.mxu0 0.0
        %3783 = vmatprep.subr.mxu0 0.0
        %3784 = vmatpush1.msra.mxu0 0.0
        %3785 = vmatprep.mubr.f32.mxu0 0.0
        %3786 = vmatmul.mubr.f32.gmra.mrb[0].mxu0 %v3719
        %v3787 = vpop.f32.mrb[0].mxu0
        %v3788 = vadd.f32 0.0, %v3787
        %v3789 = vpop.f32.mrb[0].mxu0
        %3790 = vdwg.mxu0
        %v3791 = vadd.f32 %v3568, %v3788
        %3792 = vrot.lane.b32.xlu0 %v3051, 120
        %v3793 = vpop.permute.xlu0 %3792
        %v3795 = vmul.f32 %v3124, %v3793
        %3797 = vrot.lane.b32.xlu0 %v3795, 104
        %v3798 = vpop.permute.xlu0 %3797
        %v3800 = vsel %vm804, %v3798, 0.0
        %3801 = vadd.xlane.f32.xlu0 %v3800
        %v3802 = vpop.xlane.xlu0 %3801
        %3803 = vrot.lane.b32.xlu0 %v3574, 104
        %v3804 = vpop.permute.xlu0 %3803
        %v3806 = vsel %vm804, %v3804, 0.0
        %3807 = vadd.xlane.f32.xlu0 %v3806
        %v3808 = vpop.xlane.xlu0 %3807
        %3809 = vrot.lane.b32.xlu0 %v3273, 104
        %v3810 = vpop.permute.xlu0 %3809
        %v3812 = vsel %vm804, %v3810, 0.0
        %3813 = vadd.xlane.f32.xlu0 %v3812
        %v3814 = vpop.xlane.xlu0 %3813
        %3815 = vrot.lane.b32.xlu0 %v3129, 104
        %v3816 = vpop.permute.xlu0 %3815
        %v3818 = vsel %vm804, %v3816, 0.0
        %3819 = vadd.xlane.f32.xlu0 %v3818
        %v3820 = vpop.xlane.xlu0 %3819
        %3821 = vrot.lane.b32.xlu0 %v3121, 120
        %v3822 = vpop.permute.xlu0 %3821
        %v3824 = vmul.f32 %v3124, %v3822
        %3826 = vrot.lane.b32.xlu0 %v3824, 104
        %v3827 = vpop.permute.xlu0 %3826
        %v3829 = vsel %vm804, %v3827, 0.0
        %3830 = vadd.xlane.f32.xlu0 %v3829
        %v3831 = vpop.xlane.xlu0 %3830
        %3832 = vrot.lane.b32.xlu0 %v3603, 104
        %v3833 = vpop.permute.xlu0 %3832
        %v3835 = vsel %vm804, %v3833, 0.0
        %3836 = vadd.xlane.f32.xlu0 %v3835
        %v3837 = vpop.xlane.xlu0 %3836
        %3838 = vrot.lane.b32.xlu0 %v3305, 104
        %v3839 = vpop.permute.xlu0 %3838
        %v3841 = vsel %vm804, %v3839, 0.0
        %3842 = vadd.xlane.f32.xlu0 %v3841
        %v3843 = vpop.xlane.xlu0 %3842
        %3844 = vrot.lane.b32.xlu0 %v3158, 104
        %v3845 = vpop.permute.xlu0 %3844
        %v3847 = vsel %vm804, %v3845, 0.0
        %3848 = vadd.xlane.f32.xlu0 %v3847
        %v3849 = vpop.xlane.xlu0 %3848
        %v3850 = vmax.f32 %v3802, %v3808
        %v3851 = vmax.f32 %v3850, %v3814
        %v3852 = vmax.f32 %v3851, %v3820
        %v3853 = vmax.f32 %v3852, %v3831
        %v3854 = vmax.f32 %v3853, %v3837
        %v3855 = vmax.f32 %v3854, %v3843
        %v3856 = vmax.f32 %v3855, %v3849
        %v3857 = vsub.f32 %v3802, %v3856
        %v3858 = vmul.f32 %v3857, 1.442695
        %v3859 = vpow.pop %v3858
        %v3860 = vsub.f32 %v3808, %v3856
        %v3861 = vmul.f32 %v3860, 1.442695
        %v3862 = vpow.pop %v3861
        %v3863 = vsub.f32 %v3814, %v3856
        %v3864 = vmul.f32 %v3863, 1.442695
        %v3865 = vpow.pop %v3864
        %v3866 = vsub.f32 %v3820, %v3856
        %v3867 = vmul.f32 %v3866, 1.442695
        %v3868 = vpow.pop %v3867
        %v3869 = vsub.f32 %v3831, %v3856
        %v3870 = vmul.f32 %v3869, 1.442695
        %v3871 = vpow.pop %v3870
        %v3872 = vsub.f32 %v3837, %v3856
        %v3873 = vmul.f32 %v3872, 1.442695
        %v3874 = vpow.pop %v3873
        %v3875 = vsub.f32 %v3843, %v3856
        %v3876 = vmul.f32 %v3875, 1.442695
        %v3877 = vpow.pop %v3876
        %v3878 = vsub.f32 %v3849, %v3856
        %v3879 = vmul.f32 %v3878, 1.442695
        %v3880 = vpow.pop %v3879
        %v3881 = vadd.f32 %v3859, %v3862
        %v3882 = vadd.f32 %v3881, %v3865
        %v3883 = vadd.f32 %v3882, %v3868
        %v3884 = vadd.f32 %v3883, %v3871
        %v3885 = vadd.f32 %v3884, %v3874
        %v3886 = vadd.f32 %v3885, %v3877
        %v3887 = vadd.f32 %v3886, %v3880
        %v3888 = vrcp.pop %v3887
        %v3889 = vmul.f32 %v3859, %v3888
        %v3890 = vmul.f32 %v3889, %v3051
        %v3891 = vadd.f32 %v3890, 0.0
        %v3892 = vmul.f32 %v3862, %v3888
        %v3893 = vmul.f32 %v3892, %v3051
        %3895 = vrot.lane.b32.xlu0 %v3893, 120
        %v3896 = vpop.permute.xlu0 %3895
        %v3898 = vadd.f32 %v3891, %v3896
        %v3899 = vmul.f32 %v3865, %v3888
        %v3900 = vmul.f32 %v3899, %v3051
        %3902 = vrot.lane.b32.xlu0 %v3900, 112
        %v3903 = vpop.permute.xlu0 %3902
        %v3905 = vadd.f32 %v3898, %v3903
        %v3906 = vmul.f32 %v3868, %v3888
        %v3907 = vmul.f32 %v3906, %v3051
        %3909 = vrot.lane.b32.xlu0 %v3907, 104
        %v3910 = vpop.permute.xlu0 %3909
        %v3912 = vadd.f32 %v3905, %v3910
        %v3913 = vmul.f32 %v3871, %v3888
        %v3914 = vmul.f32 %v3913, %v3121
        %v3915 = vadd.f32 %v3912, %v3914
        %v3916 = vmul.f32 %v3874, %v3888
        %v3917 = vmul.f32 %v3916, %v3121
        %3919 = vrot.lane.b32.xlu0 %v3917, 120
        %v3920 = vpop.permute.xlu0 %3919
        %v3922 = vadd.f32 %v3915, %v3920
        %v3923 = vmul.f32 %v3877, %v3888
        %v3924 = vmul.f32 %v3923, %v3121
        %3926 = vrot.lane.b32.xlu0 %v3924, 112
        %v3927 = vpop.permute.xlu0 %3926
        %v3929 = vadd.f32 %v3922, %v3927
        %v3930 = vmul.f32 %v3880, %v3888
        %v3931 = vmul.f32 %v3930, %v3121
        %3933 = vrot.lane.b32.xlu0 %v3931, 104
        %v3934 = vpop.permute.xlu0 %3933
        %v3936 = vadd.f32 %v3929, %v3934
        %3938 = vrot.lane.b32.xlu0 %v3936, 64
        %v3939 = vpop.permute.xlu0 %3938
        %v3940 = vsel %vm651, %v3939, 0
        %3942 = vmatprep.subr.mxu0 0.0
        %3943 = vmatpush1.msra.mxu0 %v517
        %3944 = vmatprep.subr.mxu0 0.0
        %3945 = vmatpush1.msra.mxu0 0.0
        %3946 = vmatprep.subr.mxu0 0.0
        %3947 = vmatpush1.msra.mxu0 0.0
        %3948 = vmatprep.subr.mxu0 0.0
        %3949 = vmatpush1.msra.mxu0 0.0
        %3950 = vmatprep.subr.mxu0 0.0
        %3951 = vmatpush1.msra.mxu0 0.0
        %3952 = vmatprep.subr.mxu0 0.0
        %3953 = vmatpush1.msra.mxu0 0.0
        %3954 = vmatprep.subr.mxu0 0.0
        %3955 = vmatpush1.msra.mxu0 0.0
        %3956 = vmatprep.subr.mxu0 0.0
        %3957 = vmatpush1.msra.mxu0 0.0
        %3958 = vmatprep.subr.mxu0 0.0
        %3959 = vmatpush1.msra.mxu0 0.0
        %3960 = vmatprep.subr.mxu0 0.0
        %3961 = vmatpush1.msra.mxu0 0.0
        %3962 = vmatprep.subr.mxu0 0.0
        %3963 = vmatpush1.msra.mxu0 0.0
        %3964 = vmatprep.subr.mxu0 0.0
        %3965 = vmatpush1.msra.mxu0 0.0
        %3966 = vmatprep.subr.mxu0 0.0
        %3967 = vmatpush1.msra.mxu0 0.0
        %3968 = vmatprep.subr.mxu0 0.0
        %3969 = vmatpush1.msra.mxu0 0.0
        %3970 = vmatprep.subr.mxu0 0.0
        %3971 = vmatpush1.msra.mxu0 0.0
        %3972 = vmatprep.subr.mxu0 0.0
        %3973 = vmatpush1.msra.mxu0 0.0
        %3974 = vmatprep.subr.mxu0 0.0
        %3975 = vmatpush1.msra.mxu0 0.0
        %3976 = vmatprep.subr.mxu0 0.0
        %3977 = vmatpush1.msra.mxu0 0.0
        %3978 = vmatprep.subr.mxu0 0.0
        %3979 = vmatpush1.msra.mxu0 0.0
        %3980 = vmatprep.subr.mxu0 0.0
        %3981 = vmatpush1.msra.mxu0 0.0
        %3982 = vmatprep.subr.mxu0 0.0
        %3983 = vmatpush1.msra.mxu0 0.0
        %3984 = vmatprep.subr.mxu0 0.0
        %3985 = vmatpush1.msra.mxu0 0.0
        %3986 = vmatprep.subr.mxu0 0.0
        %3987 = vmatpush1.msra.mxu0 0.0
        %3988 = vmatprep.subr.mxu0 0.0
        %3989 = vmatpush1.msra.mxu0 0.0
        %3990 = vmatprep.subr.mxu0 0.0
        %3991 = vmatpush1.msra.mxu0 0.0
        %3992 = vmatprep.subr.mxu0 0.0
        %3993 = vmatpush1.msra.mxu0 0.0
        %3994 = vmatprep.subr.mxu0 0.0
        %3995 = vmatpush1.msra.mxu0 0.0
        %3996 = vmatprep.subr.mxu0 0.0
        %3997 = vmatpush1.msra.mxu0 0.0
        %3998 = vmatprep.subr.mxu0 0.0
        %3999 = vmatpush1.msra.mxu0 0.0
        %4000 = vmatprep.subr.mxu0 0.0
        %4001 = vmatpush1.msra.mxu0 0.0
        %4002 = vmatprep.subr.mxu0 0.0
        %4003 = vmatpush1.msra.mxu0 0.0
        %4004 = vmatprep.subr.mxu0 0.0
        %4005 = vmatpush1.msra.mxu0 0.0
        %4006 = vmatprep.mubr.f32.mxu0 0.0
        %4007 = vmatmul.mubr.f32.gmra.mrb[0].mxu0 %v3940
        %v4008 = vpop.f32.mrb[0].mxu0
        %v4009 = vadd.f32 0.0, %v4008
        %v4010 = vpop.f32.mrb[0].mxu0
        %4011 = vdwg.mxu0
        %v4012 = vadd.f32 %v3791, %v4009
        %v4013 = vmul.f32 %v3121, 0.35355338
        %v4014 = vmul.f32 %v4013, %v3127
        %v4015 = vsel %vm804, %v4014, 0.0
        %4016 = vadd.xlane.f32.xlu0 %v4015
        %v4017 = vpop.xlane.xlu0 %4016
        %v4018 = vmul.f32 %v4013, %v3134
        %v4019 = vsel %vm804, %v4018, 0.0
        %4020 = vadd.xlane.f32.xlu0 %v4019
        %v4021 = vpop.xlane.xlu0 %4020
        %v4022 = vmul.f32 %v4013, %v3141
        %v4023 = vsel %vm804, %v4022, 0.0
        %4024 = vadd.xlane.f32.xlu0 %v4023
        %v4025 = vpop.xlane.xlu0 %4024
        %v4026 = vmul.f32 %v4013, %v3148
        %v4027 = vsel %vm804, %v4026, 0.0
        %4028 = vadd.xlane.f32.xlu0 %v4027
        %v4029 = vpop.xlane.xlu0 %4028
        %v4030 = vmul.f32 %v4013, %v3156
        %v4031 = vsel %vm804, %v4030, 0.0
        %4032 = vadd.xlane.f32.xlu0 %v4031
        %v4033 = vpop.xlane.xlu0 %4032
        %v4034 = vmul.f32 %v4013, %v3163
        %v4035 = vsel %vm804, %v4034, 0.0
        %4036 = vadd.xlane.f32.xlu0 %v4035
        %v4037 = vpop.xlane.xlu0 %4036
        %v4038 = vmul.f32 %v4013, %v3170
        %v4039 = vsel %vm804, %v4038, 0.0
        %4040 = vadd.xlane.f32.xlu0 %v4039
        %v4041 = vpop.xlane.xlu0 %4040
        %v4042 = vmul.f32 %v4013, %v3177
        %v4043 = vsel %vm804, %v4042, 0.0
        %4044 = vadd.xlane.f32.xlu0 %v4043
        %v4045 = vpop.xlane.xlu0 %4044
        %v4046 = vmax.f32 %v4017, %v4021
        %v4047 = vmax.f32 %v4046, %v4025
        %v4048 = vmax.f32 %v4047, %v4029
        %v4049 = vmax.f32 %v4048, %v4033
        %v4050 = vmax.f32 %v4049, %v4037
        %v4051 = vmax.f32 %v4050, %v4041
        %v4052 = vmax.f32 %v4051, %v4045
        %v4053 = vsub.f32 %v4017, %v4052
        %v4054 = vmul.f32 %v4053, 1.442695
        %v4055 = vpow.pop %v4054
        %v4056 = vsub.f32 %v4021, %v4052
        %v4057 = vmul.f32 %v4056, 1.442695
        %v4058 = vpow.pop %v4057
        %v4059 = vsub.f32 %v4025, %v4052
        %v4060 = vmul.f32 %v4059, 1.442695
        %v4061 = vpow.pop %v4060
        %v4062 = vsub.f32 %v4029, %v4052
        %v4063 = vmul.f32 %v4062, 1.442695
        %v4064 = vpow.pop %v4063
        %v4065 = vsub.f32 %v4033, %v4052
        %v4066 = vmul.f32 %v4065, 1.442695
        %v4067 = vpow.pop %v4066
        %v4068 = vsub.f32 %v4037, %v4052
        %v4069 = vmul.f32 %v4068, 1.442695
        %v4070 = vpow.pop %v4069
        %v4071 = vsub.f32 %v4041, %v4052
        %v4072 = vmul.f32 %v4071, 1.442695
        %v4073 = vpow.pop %v4072
        %v4074 = vsub.f32 %v4045, %v4052
        %v4075 = vmul.f32 %v4074, 1.442695
        %v4076 = vpow.pop %v4075
        %v4077 = vadd.f32 %v4055, %v4058
        %v4078 = vadd.f32 %v4077, %v4061
        %v4079 = vadd.f32 %v4078, %v4064
        %v4080 = vadd.f32 %v4079, %v4067
        %v4081 = vadd.f32 %v4080, %v4070
        %v4082 = vadd.f32 %v4081, %v4073
        %v4083 = vadd.f32 %v4082, %v4076
        %v4084 = vrcp.pop %v4083
        %v4085 = vmul.f32 %v4055, %v4084
        %v4086 = vmul.f32 %v4085, %v3051
        %v4087 = vadd.f32 %v4086, 0.0
        %v4088 = vmul.f32 %v4058, %v4084
        %v4089 = vmul.f32 %v4088, %v3051
        %4091 = vrot.lane.b32.xlu0 %v4089, 120
        %v4092 = vpop.permute.xlu0 %4091
        %v4094 = vadd.f32 %v4087, %v4092
        %v4095 = vmul.f32 %v4061, %v4084
        %v4096 = vmul.f32 %v4095, %v3051
        %4098 = vrot.lane.b32.xlu0 %v4096, 112
        %v4099 = vpop.permute.xlu0 %4098
        %v4101 = vadd.f32 %v4094, %v4099
        %v4102 = vmul.f32 %v4064, %v4084
        %v4103 = vmul.f32 %v4102, %v3051
        %4105 = vrot.lane.b32.xlu0 %v4103, 104
        %v4106 = vpop.permute.xlu0 %4105
        %v4108 = vadd.f32 %v4101, %v4106
        %v4109 = vmul.f32 %v4067, %v4084
        %v4110 = vmul.f32 %v4109, %v3121
        %v4111 = vadd.f32 %v4108, %v4110
        %v4112 = vmul.f32 %v4070, %v4084
        %v4113 = vmul.f32 %v4112, %v3121
        %4115 = vrot.lane.b32.xlu0 %v4113, 120
        %v4116 = vpop.permute.xlu0 %4115
        %v4118 = vadd.f32 %v4111, %v4116
        %v4119 = vmul.f32 %v4073, %v4084
        %v4120 = vmul.f32 %v4119, %v3121
        %4122 = vrot.lane.b32.xlu0 %v4120, 112
        %v4123 = vpop.permute.xlu0 %4122
        %v4125 = vadd.f32 %v4118, %v4123
        %v4126 = vmul.f32 %v4076, %v4084
        %v4127 = vmul.f32 %v4126, %v3121
        %4129 = vrot.lane.b32.xlu0 %v4127, 104
        %v4130 = vpop.permute.xlu0 %4129
        %v4132 = vadd.f32 %v4125, %v4130
        %v4133 = vmul.f32 %v4013, %v3271
        %4135 = vrot.lane.b32.xlu0 %v4133, 120
        %v4136 = vpop.permute.xlu0 %4135
        %v4138 = vsel %vm804, %v4136, 0.0
        %4139 = vadd.xlane.f32.xlu0 %v4138
        %v4140 = vpop.xlane.xlu0 %4139
        %4142 = vrot.lane.b32.xlu0 %v4014, 120
        %v4143 = vpop.permute.xlu0 %4142
        %v4145 = vsel %vm804, %v4143, 0.0
        %4146 = vadd.xlane.f32.xlu0 %v4145
        %v4147 = vpop.xlane.xlu0 %4146
        %4149 = vrot.lane.b32.xlu0 %v4018, 120
        %v4150 = vpop.permute.xlu0 %4149
        %v4152 = vsel %vm804, %v4150, 0.0
        %4153 = vadd.xlane.f32.xlu0 %v4152
        %v4154 = vpop.xlane.xlu0 %4153
        %4156 = vrot.lane.b32.xlu0 %v4022, 120
        %v4157 = vpop.permute.xlu0 %4156
        %v4159 = vsel %vm804, %v4157, 0.0
        %4160 = vadd.xlane.f32.xlu0 %v4159
        %v4161 = vpop.xlane.xlu0 %4160
        %v4162 = vmul.f32 %v4013, %v3303
        %4164 = vrot.lane.b32.xlu0 %v4162, 120
        %v4165 = vpop.permute.xlu0 %4164
        %v4167 = vsel %vm804, %v4165, 0.0
        %4168 = vadd.xlane.f32.xlu0 %v4167
        %v4169 = vpop.xlane.xlu0 %4168
        %4171 = vrot.lane.b32.xlu0 %v4030, 120
        %v4172 = vpop.permute.xlu0 %4171
        %v4174 = vsel %vm804, %v4172, 0.0
        %4175 = vadd.xlane.f32.xlu0 %v4174
        %v4176 = vpop.xlane.xlu0 %4175
        %4178 = vrot.lane.b32.xlu0 %v4034, 120
        %v4179 = vpop.permute.xlu0 %4178
        %v4181 = vsel %vm804, %v4179, 0.0
        %4182 = vadd.xlane.f32.xlu0 %v4181
        %v4183 = vpop.xlane.xlu0 %4182
        %4185 = vrot.lane.b32.xlu0 %v4038, 120
        %v4186 = vpop.permute.xlu0 %4185
        %v4188 = vsel %vm804, %v4186, 0.0
        %4189 = vadd.xlane.f32.xlu0 %v4188
        %v4190 = vpop.xlane.xlu0 %4189
        %v4191 = vmax.f32 %v4140, %v4147
        %v4192 = vmax.f32 %v4191, %v4154
        %v4193 = vmax.f32 %v4192, %v4161
        %v4194 = vmax.f32 %v4193, %v4169
        %v4195 = vmax.f32 %v4194, %v4176
        %v4196 = vmax.f32 %v4195, %v4183
        %v4197 = vmax.f32 %v4196, %v4190
        %v4198 = vsub.f32 %v4140, %v4197
        %v4199 = vmul.f32 %v4198, 1.442695
        %v4200 = vpow.pop %v4199
        %v4201 = vsub.f32 %v4147, %v4197
        %v4202 = vmul.f32 %v4201, 1.442695
        %v4203 = vpow.pop %v4202
        %v4204 = vsub.f32 %v4154, %v4197
        %v4205 = vmul.f32 %v4204, 1.442695
        %v4206 = vpow.pop %v4205
        %v4207 = vsub.f32 %v4161, %v4197
        %v4208 = vmul.f32 %v4207, 1.442695
        %v4209 = vpow.pop %v4208
        %v4210 = vsub.f32 %v4169, %v4197
        %v4211 = vmul.f32 %v4210, 1.442695
        %v4212 = vpow.pop %v4211
        %v4213 = vsub.f32 %v4176, %v4197
        %v4214 = vmul.f32 %v4213, 1.442695
        %v4215 = vpow.pop %v4214
        %v4216 = vsub.f32 %v4183, %v4197
        %v4217 = vmul.f32 %v4216, 1.442695
        %v4218 = vpow.pop %v4217
        %v4219 = vsub.f32 %v4190, %v4197
        %v4220 = vmul.f32 %v4219, 1.442695
        %v4221 = vpow.pop %v4220
        %v4222 = vadd.f32 %v4200, %v4203
        %v4223 = vadd.f32 %v4222, %v4206
        %v4224 = vadd.f32 %v4223, %v4209
        %v4225 = vadd.f32 %v4224, %v4212
        %v4226 = vadd.f32 %v4225, %v4215
        %v4227 = vadd.f32 %v4226, %v4218
        %v4228 = vadd.f32 %v4227, %v4221
        %v4229 = vrcp.pop %v4228
        %v4230 = vmul.f32 %v4200, %v4229
        %v4231 = vmul.f32 %v4230, %v3051
        %v4232 = vadd.f32 %v4231, 0.0
        %v4233 = vmul.f32 %v4203, %v4229
        %v4234 = vmul.f32 %v4233, %v3051
        %4236 = vrot.lane.b32.xlu0 %v4234, 120
        %v4237 = vpop.permute.xlu0 %4236
        %v4239 = vadd.f32 %v4232, %v4237
        %v4240 = vmul.f32 %v4206, %v4229
        %v4241 = vmul.f32 %v4240, %v3051
        %4243 = vrot.lane.b32.xlu0 %v4241, 112
        %v4244 = vpop.permute.xlu0 %4243
        %v4246 = vadd.f32 %v4239, %v4244
        %v4247 = vmul.f32 %v4209, %v4229
        %v4248 = vmul.f32 %v4247, %v3051
        %4250 = vrot.lane.b32.xlu0 %v4248, 104
        %v4251 = vpop.permute.xlu0 %4250
        %v4253 = vadd.f32 %v4246, %v4251
        %v4254 = vmul.f32 %v4212, %v4229
        %v4255 = vmul.f32 %v4254, %v3121
        %v4256 = vadd.f32 %v4253, %v4255
        %v4257 = vmul.f32 %v4215, %v4229
        %v4258 = vmul.f32 %v4257, %v3121
        %4260 = vrot.lane.b32.xlu0 %v4258, 120
        %v4261 = vpop.permute.xlu0 %4260
        %v4263 = vadd.f32 %v4256, %v4261
        %v4264 = vmul.f32 %v4218, %v4229
        %v4265 = vmul.f32 %v4264, %v3121
        %4267 = vrot.lane.b32.xlu0 %v4265, 112
        %v4268 = vpop.permute.xlu0 %4267
        %v4270 = vadd.f32 %v4263, %v4268
        %v4271 = vmul.f32 %v4221, %v4229
        %v4272 = vmul.f32 %v4271, %v3121
        %4274 = vrot.lane.b32.xlu0 %v4272, 104
        %v4275 = vpop.permute.xlu0 %4274
        %v4277 = vadd.f32 %v4270, %v4275
        %4279 = vrot.lane.b32.xlu0 %v4277, 64
        %v4280 = vpop.permute.xlu0 %4279
        %v4281 = vsel %vm651, %v4280, 0
        %4283 = vmatprep.subr.mxu0 0.0
        %4284 = vmatpush1.msra.mxu0 %v515
        %4285 = vmatprep.subr.mxu0 0.0
        %4286 = vmatpush1.msra.mxu0 0.0
        %4287 = vmatprep.subr.mxu0 0.0
        %4288 = vmatpush1.msra.mxu0 0.0
        %4289 = vmatprep.subr.mxu0 0.0
        %4290 = vmatpush1.msra.mxu0 0.0
        %4291 = vmatprep.subr.mxu0 0.0
        %4292 = vmatpush1.msra.mxu0 0.0
        %4293 = vmatprep.subr.mxu0 0.0
        %4294 = vmatpush1.msra.mxu0 0.0
        %4295 = vmatprep.subr.mxu0 0.0
        %4296 = vmatpush1.msra.mxu0 0.0
        %4297 = vmatprep.subr.mxu0 0.0
        %4298 = vmatpush1.msra.mxu0 0.0
        %4299 = vmatprep.subr.mxu0 0.0
        %4300 = vmatpush1.msra.mxu0 0.0
        %4301 = vmatprep.subr.mxu0 0.0
        %4302 = vmatpush1.msra.mxu0 0.0
        %4303 = vmatprep.subr.mxu0 0.0
        %4304 = vmatpush1.msra.mxu0 0.0
        %4305 = vmatprep.subr.mxu0 0.0
        %4306 = vmatpush1.msra.mxu0 0.0
        %4307 = vmatprep.subr.mxu0 0.0
        %4308 = vmatpush1.msra.mxu0 0.0
        %4309 = vmatprep.subr.mxu0 0.0
        %4310 = vmatpush1.msra.mxu0 0.0
        %4311 = vmatprep.subr.mxu0 0.0
        %4312 = vmatpush1.msra.mxu0 0.0
        %4313 = vmatprep.subr.mxu0 0.0
        %4314 = vmatpush1.msra.mxu0 0.0
        %4315 = vmatprep.subr.mxu0 0.0
        %4316 = vmatpush1.msra.mxu0 0.0
        %4317 = vmatprep.subr.mxu0 0.0
        %4318 = vmatpush1.msra.mxu0 0.0
        %4319 = vmatprep.subr.mxu0 0.0
        %4320 = vmatpush1.msra.mxu0 0.0
        %4321 = vmatprep.subr.mxu0 0.0
        %4322 = vmatpush1.msra.mxu0 0.0
        %4323 = vmatprep.subr.mxu0 0.0
        %4324 = vmatpush1.msra.mxu0 0.0
        %4325 = vmatprep.subr.mxu0 0.0
        %4326 = vmatpush1.msra.mxu0 0.0
        %4327 = vmatprep.subr.mxu0 0.0
        %4328 = vmatpush1.msra.mxu0 0.0
        %4329 = vmatprep.subr.mxu0 0.0
        %4330 = vmatpush1.msra.mxu0 0.0
        %4331 = vmatprep.subr.mxu0 0.0
        %4332 = vmatpush1.msra.mxu0 0.0
        %4333 = vmatprep.subr.mxu0 0.0
        %4334 = vmatpush1.msra.mxu0 0.0
        %4335 = vmatprep.subr.mxu0 0.0
        %4336 = vmatpush1.msra.mxu0 0.0
        %4337 = vmatprep.subr.mxu0 0.0
        %4338 = vmatpush1.msra.mxu0 0.0
        %4339 = vmatprep.subr.mxu0 0.0
        %4340 = vmatpush1.msra.mxu0 0.0
        %4341 = vmatprep.subr.mxu0 0.0
        %4342 = vmatpush1.msra.mxu0 0.0
        %4343 = vmatprep.subr.mxu0 0.0
        %4344 = vmatpush1.msra.mxu0 0.0
        %4345 = vmatprep.subr.mxu0 0.0
        %4346 = vmatpush1.msra.mxu0 0.0
        %4347 = vmatprep.mubr.f32.mxu0 0.0
        %4348 = vmatmul.mubr.f32.gmra.mrb[0].mxu0 %v4281
        %v4349 = vpop.f32.mrb[0].mxu0
        %v4350 = vadd.f32 0.0, %v4349
        %v4351 = vpop.f32.mrb[0].mxu0
        %4352 = vdwg.mxu0
        %4354 = vrot.lane.b32.xlu0 %v4132, 64
        %v4355 = vpop.permute.xlu0 %4354
        %v4356 = vsel %vm651, %v4355, 0
        %4358 = vmatprep.subr.mxu0 0.0
        %4359 = vmatpush1.msra.mxu0 %v514
        %4360 = vmatprep.subr.mxu0 0.0
        %4361 = vmatpush1.msra.mxu0 0.0
        %4362 = vmatprep.subr.mxu0 0.0
        %4363 = vmatpush1.msra.mxu0 0.0
        %4364 = vmatprep.subr.mxu0 0.0
        %4365 = vmatpush1.msra.mxu0 0.0
        %4366 = vmatprep.subr.mxu0 0.0
        %4367 = vmatpush1.msra.mxu0 0.0
        %4368 = vmatprep.subr.mxu0 0.0
        %4369 = vmatpush1.msra.mxu0 0.0
        %4370 = vmatprep.subr.mxu0 0.0
        %4371 = vmatpush1.msra.mxu0 0.0
        %4372 = vmatprep.subr.mxu0 0.0
        %4373 = vmatpush1.msra.mxu0 0.0
        %4374 = vmatprep.subr.mxu0 0.0
        %4375 = vmatpush1.msra.mxu0 0.0
        %4376 = vmatprep.subr.mxu0 0.0
        %4377 = vmatpush1.msra.mxu0 0.0
        %4378 = vmatprep.subr.mxu0 0.0
        %4379 = vmatpush1.msra.mxu0 0.0
        %4380 = vmatprep.subr.mxu0 0.0
        %4381 = vmatpush1.msra.mxu0 0.0
        %4382 = vmatprep.subr.mxu0 0.0
        %4383 = vmatpush1.msra.mxu0 0.0
        %4384 = vmatprep.subr.mxu0 0.0
        %4385 = vmatpush1.msra.mxu0 0.0
        %4386 = vmatprep.subr.mxu0 0.0
        %4387 = vmatpush1.msra.mxu0 0.0
        %4388 = vmatprep.subr.mxu0 0.0
        %4389 = vmatpush1.msra.mxu0 0.0
        %4390 = vmatprep.subr.mxu0 0.0
        %4391 = vmatpush1.msra.mxu0 0.0
        %4392 = vmatprep.subr.mxu0 0.0
        %4393 = vmatpush1.msra.mxu0 0.0
        %4394 = vmatprep.subr.mxu0 0.0
        %4395 = vmatpush1.msra.mxu0 0.0
        %4396 = vmatprep.subr.mxu0 0.0
        %4397 = vmatpush1.msra.mxu0 0.0
        %4398 = vmatprep.subr.mxu0 0.0
        %4399 = vmatpush1.msra.mxu0 0.0
        %4400 = vmatprep.subr.mxu0 0.0
        %4401 = vmatpush1.msra.mxu0 0.0
        %4402 = vmatprep.subr.mxu0 0.0
        %4403 = vmatpush1.msra.mxu0 0.0
        %4404 = vmatprep.subr.mxu0 0.0
        %4405 = vmatpush1.msra.mxu0 0.0
        %4406 = vmatprep.subr.mxu0 0.0
        %4407 = vmatpush1.msra.mxu0 0.0
        %4408 = vmatprep.subr.mxu0 0.0
        %4409 = vmatpush1.msra.mxu0 0.0
        %4410 = vmatprep.subr.mxu0 0.0
        %4411 = vmatpush1.msra.mxu0 0.0
        %4412 = vmatprep.subr.mxu0 0.0
        %4413 = vmatpush1.msra.mxu0 0.0
        %4414 = vmatprep.subr.mxu0 0.0
        %4415 = vmatpush1.msra.mxu0 0.0
        %4416 = vmatprep.subr.mxu0 0.0
        %4417 = vmatpush1.msra.mxu0 0.0
        %4418 = vmatprep.subr.mxu0 0.0
        %4419 = vmatpush1.msra.mxu0 0.0
        %4420 = vmatprep.subr.mxu0 0.0
        %4421 = vmatpush1.msra.mxu0 0.0
        %4422 = vmatprep.mubr.f32.mxu0 0.0
        %4423 = vmatmul.mubr.f32.gmra.mrb[0].mxu0 %v4356
        %v4424 = vpop.f32.mrb[0].mxu0
        %v4425 = vadd.f32 %v4350, %v4424
        %v4426 = vpop.f32.mrb[0].mxu0
        %4427 = vdwg.mxu0
        %v4428 = vmul.f32 %v4013, %v3572
        %4430 = vrot.lane.b32.xlu0 %v4428, 112
        %v4431 = vpop.permute.xlu0 %4430
        %v4433 = vsel %vm804, %v4431, 0.0
        %4434 = vadd.xlane.f32.xlu0 %v4433
        %v4435 = vpop.xlane.xlu0 %4434
        %4436 = vrot.lane.b32.xlu0 %v4133, 112
        %v4437 = vpop.permute.xlu0 %4436
        %v4439 = vsel %vm804, %v4437, 0.0
        %4440 = vadd.xlane.f32.xlu0 %v4439
        %v4441 = vpop.xlane.xlu0 %4440
        %4442 = vrot.lane.b32.xlu0 %v4014, 112
        %v4443 = vpop.permute.xlu0 %4442
        %v4445 = vsel %vm804, %v4443, 0.0
        %4446 = vadd.xlane.f32.xlu0 %v4445
        %v4447 = vpop.xlane.xlu0 %4446
        %4448 = vrot.lane.b32.xlu0 %v4018, 112
        %v4449 = vpop.permute.xlu0 %4448
        %v4451 = vsel %vm804, %v4449, 0.0
        %4452 = vadd.xlane.f32.xlu0 %v4451
        %v4453 = vpop.xlane.xlu0 %4452
        %v4454 = vmul.f32 %v4013, %v3601
        %4456 = vrot.lane.b32.xlu0 %v4454, 112
        %v4457 = vpop.permute.xlu0 %4456
        %v4459 = vsel %vm804, %v4457, 0.0
        %4460 = vadd.xlane.f32.xlu0 %v4459
        %v4461 = vpop.xlane.xlu0 %4460
        %4462 = vrot.lane.b32.xlu0 %v4162, 112
        %v4463 = vpop.permute.xlu0 %4462
        %v4465 = vsel %vm804, %v4463, 0.0
        %4466 = vadd.xlane.f32.xlu0 %v4465
        %v4467 = vpop.xlane.xlu0 %4466
        %4468 = vrot.lane.b32.xlu0 %v4030, 112
        %v4469 = vpop.permute.xlu0 %4468
        %v4471 = vsel %vm804, %v4469, 0.0
        %4472 = vadd.xlane.f32.xlu0 %v4471
        %v4473 = vpop.xlane.xlu0 %4472
        %4474 = vrot.lane.b32.xlu0 %v4034, 112
        %v4475 = vpop.permute.xlu0 %4474
        %v4477 = vsel %vm804, %v4475, 0.0
        %4478 = vadd.xlane.f32.xlu0 %v4477
        %v4479 = vpop.xlane.xlu0 %4478
        %v4480 = vmax.f32 %v4435, %v4441
        %v4481 = vmax.f32 %v4480, %v4447
        %v4482 = vmax.f32 %v4481, %v4453
        %v4483 = vmax.f32 %v4482, %v4461
        %v4484 = vmax.f32 %v4483, %v4467
        %v4485 = vmax.f32 %v4484, %v4473
        %v4486 = vmax.f32 %v4485, %v4479
        %v4487 = vsub.f32 %v4435, %v4486
        %v4488 = vmul.f32 %v4487, 1.442695
        %v4489 = vpow.pop %v4488
        %v4490 = vsub.f32 %v4441, %v4486
        %v4491 = vmul.f32 %v4490, 1.442695
        %v4492 = vpow.pop %v4491
        %v4493 = vsub.f32 %v4447, %v4486
        %v4494 = vmul.f32 %v4493, 1.442695
        %v4495 = vpow.pop %v4494
        %v4496 = vsub.f32 %v4453, %v4486
        %v4497 = vmul.f32 %v4496, 1.442695
        %v4498 = vpow.pop %v4497
        %v4499 = vsub.f32 %v4461, %v4486
        %v4500 = vmul.f32 %v4499, 1.442695
        %v4501 = vpow.pop %v4500
        %v4502 = vsub.f32 %v4467, %v4486
        %v4503 = vmul.f32 %v4502, 1.442695
        %v4504 = vpow.pop %v4503
        %v4505 = vsub.f32 %v4473, %v4486
        %v4506 = vmul.f32 %v4505, 1.442695
        %v4507 = vpow.pop %v4506
        %v4508 = vsub.f32 %v4479, %v4486
        %v4509 = vmul.f32 %v4508, 1.442695
        %v4510 = vpow.pop %v4509
        %v4511 = vadd.f32 %v4489, %v4492
        %v4512 = vadd.f32 %v4511, %v4495
        %v4513 = vadd.f32 %v4512, %v4498
        %v4514 = vadd.f32 %v4513, %v4501
        %v4515 = vadd.f32 %v4514, %v4504
        %v4516 = vadd.f32 %v4515, %v4507
        %v4517 = vadd.f32 %v4516, %v4510
        %v4518 = vrcp.pop %v4517
        %v4519 = vmul.f32 %v4489, %v4518
        %v4520 = vmul.f32 %v4519, %v3051
        %v4521 = vadd.f32 %v4520, 0.0
        %v4522 = vmul.f32 %v4492, %v4518
        %v4523 = vmul.f32 %v4522, %v3051
        %4525 = vrot.lane.b32.xlu0 %v4523, 120
        %v4526 = vpop.permute.xlu0 %4525
        %v4528 = vadd.f32 %v4521, %v4526
        %v4529 = vmul.f32 %v4495, %v4518
        %v4530 = vmul.f32 %v4529, %v3051
        %4532 = vrot.lane.b32.xlu0 %v4530, 112
        %v4533 = vpop.permute.xlu0 %4532
        %v4535 = vadd.f32 %v4528, %v4533
        %v4536 = vmul.f32 %v4498, %v4518
        %v4537 = vmul.f32 %v4536, %v3051
        %4539 = vrot.lane.b32.xlu0 %v4537, 104
        %v4540 = vpop.permute.xlu0 %4539
        %v4542 = vadd.f32 %v4535, %v4540
        %v4543 = vmul.f32 %v4501, %v4518
        %v4544 = vmul.f32 %v4543, %v3121
        %v4545 = vadd.f32 %v4542, %v4544
        %v4546 = vmul.f32 %v4504, %v4518
        %v4547 = vmul.f32 %v4546, %v3121
        %4549 = vrot.lane.b32.xlu0 %v4547, 120
        %v4550 = vpop.permute.xlu0 %4549
        %v4552 = vadd.f32 %v4545, %v4550
        %v4553 = vmul.f32 %v4507, %v4518
        %v4554 = vmul.f32 %v4553, %v3121
        %4556 = vrot.lane.b32.xlu0 %v4554, 112
        %v4557 = vpop.permute.xlu0 %4556
        %v4559 = vadd.f32 %v4552, %v4557
        %v4560 = vmul.f32 %v4510, %v4518
        %v4561 = vmul.f32 %v4560, %v3121
        %4563 = vrot.lane.b32.xlu0 %v4561, 104
        %v4564 = vpop.permute.xlu0 %4563
        %v4566 = vadd.f32 %v4559, %v4564
        %4568 = vrot.lane.b32.xlu0 %v4566, 64
        %v4569 = vpop.permute.xlu0 %4568
        %v4570 = vsel %vm651, %v4569, 0
        %4572 = vmatprep.subr.mxu0 0.0
        %4573 = vmatpush1.msra.mxu0 %v516
        %4574 = vmatprep.subr.mxu0 0.0
        %4575 = vmatpush1.msra.mxu0 0.0
        %4576 = vmatprep.subr.mxu0 0.0
        %4577 = vmatpush1.msra.mxu0 0.0
        %4578 = vmatprep.subr.mxu0 0.0
        %4579 = vmatpush1.msra.mxu0 0.0
        %4580 = vmatprep.subr.mxu0 0.0
        %4581 = vmatpush1.msra.mxu0 0.0
        %4582 = vmatprep.subr.mxu0 0.0
        %4583 = vmatpush1.msra.mxu0 0.0
        %4584 = vmatprep.subr.mxu0 0.0
        %4585 = vmatpush1.msra.mxu0 0.0
        %4586 = vmatprep.subr.mxu0 0.0
        %4587 = vmatpush1.msra.mxu0 0.0
        %4588 = vmatprep.subr.mxu0 0.0
        %4589 = vmatpush1.msra.mxu0 0.0
        %4590 = vmatprep.subr.mxu0 0.0
        %4591 = vmatpush1.msra.mxu0 0.0
        %4592 = vmatprep.subr.mxu0 0.0
        %4593 = vmatpush1.msra.mxu0 0.0
        %4594 = vmatprep.subr.mxu0 0.0
        %4595 = vmatpush1.msra.mxu0 0.0
        %4596 = vmatprep.subr.mxu0 0.0
        %4597 = vmatpush1.msra.mxu0 0.0
        %4598 = vmatprep.subr.mxu0 0.0
        %4599 = vmatpush1.msra.mxu0 0.0
        %4600 = vmatprep.subr.mxu0 0.0
        %4601 = vmatpush1.msra.mxu0 0.0
        %4602 = vmatprep.subr.mxu0 0.0
        %4603 = vmatpush1.msra.mxu0 0.0
        %4604 = vmatprep.subr.mxu0 0.0
        %4605 = vmatpush1.msra.mxu0 0.0
        %4606 = vmatprep.subr.mxu0 0.0
        %4607 = vmatpush1.msra.mxu0 0.0
        %4608 = vmatprep.subr.mxu0 0.0
        %4609 = vmatpush1.msra.mxu0 0.0
        %4610 = vmatprep.subr.mxu0 0.0
        %4611 = vmatpush1.msra.mxu0 0.0
        %4612 = vmatprep.subr.mxu0 0.0
        %4613 = vmatpush1.msra.mxu0 0.0
        %4614 = vmatprep.subr.mxu0 0.0
        %4615 = vmatpush1.msra.mxu0 0.0
        %4616 = vmatprep.subr.mxu0 0.0
        %4617 = vmatpush1.msra.mxu0 0.0
        %4618 = vmatprep.subr.mxu0 0.0
        %4619 = vmatpush1.msra.mxu0 0.0
        %4620 = vmatprep.subr.mxu0 0.0
        %4621 = vmatpush1.msra.mxu0 0.0
        %4622 = vmatprep.subr.mxu0 0.0
        %4623 = vmatpush1.msra.mxu0 0.0
        %4624 = vmatprep.subr.mxu0 0.0
        %4625 = vmatpush1.msra.mxu0 0.0
        %4626 = vmatprep.subr.mxu0 0.0
        %4627 = vmatpush1.msra.mxu0 0.0
        %4628 = vmatprep.subr.mxu0 0.0
        %4629 = vmatpush1.msra.mxu0 0.0
        %4630 = vmatprep.subr.mxu0 0.0
        %4631 = vmatpush1.msra.mxu0 0.0
        %4632 = vmatprep.subr.mxu0 0.0
        %4633 = vmatpush1.msra.mxu0 0.0
        %4634 = vmatprep.subr.mxu0 0.0
        %4635 = vmatpush1.msra.mxu0 0.0
        %4636 = vmatprep.mubr.f32.mxu0 0.0
        %4637 = vmatmul.mubr.f32.gmra.mrb[0].mxu0 %v4570
        %v4638 = vpop.f32.mrb[0].mxu0
        %v4639 = vadd.f32 0.0, %v4638
        %v4640 = vpop.f32.mrb[0].mxu0
        %4641 = vdwg.mxu0
        %v4642 = vadd.f32 %v4425, %v4639
        %v4643 = vmul.f32 %v4013, %v3793
        %4645 = vrot.lane.b32.xlu0 %v4643, 104
        %v4646 = vpop.permute.xlu0 %4645
        %v4648 = vsel %vm804, %v4646, 0.0
        %4649 = vadd.xlane.f32.xlu0 %v4648
        %v4650 = vpop.xlane.xlu0 %4649
        %4651 = vrot.lane.b32.xlu0 %v4428, 104
        %v4652 = vpop.permute.xlu0 %4651
        %v4654 = vsel %vm804, %v4652, 0.0
        %4655 = vadd.xlane.f32.xlu0 %v4654
        %v4656 = vpop.xlane.xlu0 %4655
        %4657 = vrot.lane.b32.xlu0 %v4133, 104
        %v4658 = vpop.permute.xlu0 %4657
        %v4660 = vsel %vm804, %v4658, 0.0
        %4661 = vadd.xlane.f32.xlu0 %v4660
        %v4662 = vpop.xlane.xlu0 %4661
        %4663 = vrot.lane.b32.xlu0 %v4014, 104
        %v4664 = vpop.permute.xlu0 %4663
        %v4666 = vsel %vm804, %v4664, 0.0
        %4667 = vadd.xlane.f32.xlu0 %v4666
        %v4668 = vpop.xlane.xlu0 %4667
        %v4669 = vmul.f32 %v4013, %v3822
        %4671 = vrot.lane.b32.xlu0 %v4669, 104
        %v4672 = vpop.permute.xlu0 %4671
        %v4674 = vsel %vm804, %v4672, 0.0
        %4675 = vadd.xlane.f32.xlu0 %v4674
        %v4676 = vpop.xlane.xlu0 %4675
        %4677 = vrot.lane.b32.xlu0 %v4454, 104
        %v4678 = vpop.permute.xlu0 %4677
        %v4680 = vsel %vm804, %v4678, 0.0
        %4681 = vadd.xlane.f32.xlu0 %v4680
        %v4682 = vpop.xlane.xlu0 %4681
        %4683 = vrot.lane.b32.xlu0 %v4162, 104
        %v4684 = vpop.permute.xlu0 %4683
        %v4686 = vsel %vm804, %v4684, 0.0
        %4687 = vadd.xlane.f32.xlu0 %v4686
        %v4688 = vpop.xlane.xlu0 %4687
        %4689 = vrot.lane.b32.xlu0 %v4030, 104
        %v4690 = vpop.permute.xlu0 %4689
        %v4692 = vsel %vm804, %v4690, 0.0
        %4693 = vadd.xlane.f32.xlu0 %v4692
        %v4694 = vpop.xlane.xlu0 %4693
        %v4695 = vmax.f32 %v4650, %v4656
        %v4696 = vmax.f32 %v4695, %v4662
        %v4697 = vmax.f32 %v4696, %v4668
        %v4698 = vmax.f32 %v4697, %v4676
        %v4699 = vmax.f32 %v4698, %v4682
        %v4700 = vmax.f32 %v4699, %v4688
        %v4701 = vmax.f32 %v4700, %v4694
        %v4702 = vsub.f32 %v4650, %v4701
        %v4703 = vmul.f32 %v4702, 1.442695
        %v4704 = vpow.pop %v4703
        %v4705 = vsub.f32 %v4656, %v4701
        %v4706 = vmul.f32 %v4705, 1.442695
        %v4707 = vpow.pop %v4706
        %v4708 = vsub.f32 %v4662, %v4701
        %v4709 = vmul.f32 %v4708, 1.442695
        %v4710 = vpow.pop %v4709
        %v4711 = vsub.f32 %v4668, %v4701
        %v4712 = vmul.f32 %v4711, 1.442695
        %v4713 = vpow.pop %v4712
        %v4714 = vsub.f32 %v4676, %v4701
        %v4715 = vmul.f32 %v4714, 1.442695
        %v4716 = vpow.pop %v4715
        %v4717 = vsub.f32 %v4682, %v4701
        %v4718 = vmul.f32 %v4717, 1.442695
        %v4719 = vpow.pop %v4718
        %v4720 = vsub.f32 %v4688, %v4701
        %v4721 = vmul.f32 %v4720, 1.442695
        %v4722 = vpow.pop %v4721
        %v4723 = vsub.f32 %v4694, %v4701
        %v4724 = vmul.f32 %v4723, 1.442695
        %v4725 = vpow.pop %v4724
        %v4726 = vadd.f32 %v4704, %v4707
        %v4727 = vadd.f32 %v4726, %v4710
        %v4728 = vadd.f32 %v4727, %v4713
        %v4729 = vadd.f32 %v4728, %v4716
        %v4730 = vadd.f32 %v4729, %v4719
        %v4731 = vadd.f32 %v4730, %v4722
        %v4732 = vadd.f32 %v4731, %v4725
        %v4733 = vrcp.pop %v4732
        %v4734 = vmul.f32 %v4704, %v4733
        %v4735 = vmul.f32 %v4734, %v3051
        %v4736 = vadd.f32 %v4735, 0.0
        %v4737 = vmul.f32 %v4707, %v4733
        %v4738 = vmul.f32 %v4737, %v3051
        %4740 = vrot.lane.b32.xlu0 %v4738, 120
        %v4741 = vpop.permute.xlu0 %4740
        %v4743 = vadd.f32 %v4736, %v4741
        %v4744 = vmul.f32 %v4710, %v4733
        %v4745 = vmul.f32 %v4744, %v3051
        %4747 = vrot.lane.b32.xlu0 %v4745, 112
        %v4748 = vpop.permute.xlu0 %4747
        %v4750 = vadd.f32 %v4743, %v4748
        %v4751 = vmul.f32 %v4713, %v4733
        %v4752 = vmul.f32 %v4751, %v3051
        %4754 = vrot.lane.b32.xlu0 %v4752, 104
        %v4755 = vpop.permute.xlu0 %4754
        %v4757 = vadd.f32 %v4750, %v4755
        %v4758 = vmul.f32 %v4716, %v4733
        %v4759 = vmul.f32 %v4758, %v3121
        %v4760 = vadd.f32 %v4757, %v4759
        %v4761 = vmul.f32 %v4719, %v4733
        %v4762 = vmul.f32 %v4761, %v3121
        %4764 = vrot.lane.b32.xlu0 %v4762, 120
        %v4765 = vpop.permute.xlu0 %4764
        %v4767 = vadd.f32 %v4760, %v4765
        %v4768 = vmul.f32 %v4722, %v4733
        %v4769 = vmul.f32 %v4768, %v3121
        %4771 = vrot.lane.b32.xlu0 %v4769, 112
        %v4772 = vpop.permute.xlu0 %4771
        %v4774 = vadd.f32 %v4767, %v4772
        %v4775 = vmul.f32 %v4725, %v4733
        %v4776 = vmul.f32 %v4775, %v3121
        %4778 = vrot.lane.b32.xlu0 %v4776, 104
        %v4779 = vpop.permute.xlu0 %4778
        %v4781 = vadd.f32 %v4774, %v4779
        %4783 = vrot.lane.b32.xlu0 %v4781, 64
        %v4784 = vpop.permute.xlu0 %4783
        %v4785 = vsel %vm651, %v4784, 0
        %4787 = vmatprep.subr.mxu0 0.0
        %4788 = vmatpush1.msra.mxu0 %v517
        %4789 = vmatprep.subr.mxu0 0.0
        %4790 = vmatpush1.msra.mxu0 0.0
        %4791 = vmatprep.subr.mxu0 0.0
        %4792 = vmatpush1.msra.mxu0 0.0
        %4793 = vmatprep.subr.mxu0 0.0
        %4794 = vmatpush1.msra.mxu0 0.0
        %4795 = vmatprep.subr.mxu0 0.0
        %4796 = vmatpush1.msra.mxu0 0.0
        %4797 = vmatprep.subr.mxu0 0.0
        %4798 = vmatpush1.msra.mxu0 0.0
        %4799 = vmatprep.subr.mxu0 0.0
        %4800 = vmatpush1.msra.mxu0 0.0
        %4801 = vmatprep.subr.mxu0 0.0
        %4802 = vmatpush1.msra.mxu0 0.0
        %4803 = vmatprep.subr.mxu0 0.0
        %4804 = vmatpush1.msra.mxu0 0.0
        %4805 = vmatprep.subr.mxu0 0.0
        %4806 = vmatpush1.msra.mxu0 0.0
        %4807 = vmatprep.subr.mxu0 0.0
        %4808 = vmatpush1.msra.mxu0 0.0
        %4809 = vmatprep.subr.mxu0 0.0
        %4810 = vmatpush1.msra.mxu0 0.0
        %4811 = vmatprep.subr.mxu0 0.0
        %4812 = vmatpush1.msra.mxu0 0.0
        %4813 = vmatprep.subr.mxu0 0.0
        %4814 = vmatpush1.msra.mxu0 0.0
        %4815 = vmatprep.subr.mxu0 0.0
        %4816 = vmatpush1.msra.mxu0 0.0
        %4817 = vmatprep.subr.mxu0 0.0
        %4818 = vmatpush1.msra.mxu0 0.0
        %4819 = vmatprep.subr.mxu0 0.0
        %4820 = vmatpush1.msra.mxu0 0.0
        %4821 = vmatprep.subr.mxu0 0.0
        %4822 = vmatpush1.msra.mxu0 0.0
        %4823 = vmatprep.subr.mxu0 0.0
        %4824 = vmatpush1.msra.mxu0 0.0
        %4825 = vmatprep.subr.mxu0 0.0
        %4826 = vmatpush1.msra.mxu0 0.0
        %4827 = vmatprep.subr.mxu0 0.0
        %4828 = vmatpush1.msra.mxu0 0.0
        %4829 = vmatprep.subr.mxu0 0.0
        %4830 = vmatpush1.msra.mxu0 0.0
        %4831 = vmatprep.subr.mxu0 0.0
        %4832 = vmatpush1.msra.mxu0 0.0
        %4833 = vmatprep.subr.mxu0 0.0
        %4834 = vmatpush1.msra.mxu0 0.0
        %4835 = vmatprep.subr.mxu0 0.0
        %4836 = vmatpush1.msra.mxu0 0.0
        %4837 = vmatprep.subr.mxu0 0.0
        %4838 = vmatpush1.msra.mxu0 0.0
        %4839 = vmatprep.subr.mxu0 0.0
        %4840 = vmatpush1.msra.mxu0 0.0
        %4841 = vmatprep.subr.mxu0 0.0
        %4842 = vmatpush1.msra.mxu0 0.0
        %4843 = vmatprep.subr.mxu0 0.0
        %4844 = vmatpush1.msra.mxu0 0.0
        %4845 = vmatprep.subr.mxu0 0.0
        %4846 = vmatpush1.msra.mxu0 0.0
        %4847 = vmatprep.subr.mxu0 0.0
        %4848 = vmatpush1.msra.mxu0 0.0
        %4849 = vmatprep.subr.mxu0 0.0
        %4850 = vmatpush1.msra.mxu0 0.0
        %4851 = vmatprep.mubr.f32.mxu0 0.0
        %4852 = vmatmul.mubr.f32.gmra.mrb[0].mxu0 %v4785
        %v4853 = vpop.f32.mrb[0].mxu0
        %v4854 = vadd.f32 0.0, %v4853
        %v4855 = vpop.f32.mrb[0].mxu0
        %4856 = vdwg.mxu0
        %v4857 = vadd.f32 %v4642, %v4854
        %v4859 = vsel %vm2537, %v4857, 0
        %4861 = vmatprep.subr.mxu0 0.0
        %4862 = vmatpush1.msra.mxu0 %v4859
        %4863 = vmatprep.subr.mxu0 0.0
        %4864 = vmatpush1.msra.mxu0 0.0
        %4865 = vmatprep.subr.mxu0 0.0
        %4866 = vmatpush1.msra.mxu0 0.0
        %4867 = vmatprep.subr.mxu0 0.0
        %4868 = vmatpush1.msra.mxu0 0.0
        %4869 = vmatprep.subr.mxu0 0.0
        %4870 = vmatpush1.msra.mxu0 0.0
        %4871 = vmatprep.subr.mxu0 0.0
        %4872 = vmatpush1.msra.mxu0 0.0
        %4873 = vmatprep.subr.mxu0 0.0
        %4874 = vmatpush1.msra.mxu0 0.0
        %4875 = vmatprep.subr.mxu0 0.0
        %4876 = vmatpush1.msra.mxu0 0.0
        %4877 = vmatprep.subr.mxu0 0.0
        %4878 = vmatpush1.msra.mxu0 0.0
        %4879 = vmatprep.subr.mxu0 0.0
        %4880 = vmatpush1.msra.mxu0 0.0
        %4881 = vmatprep.subr.mxu0 0.0
        %4882 = vmatpush1.msra.mxu0 0.0
        %4883 = vmatprep.subr.mxu0 0.0
        %4884 = vmatpush1.msra.mxu0 0.0
        %4885 = vmatprep.subr.mxu0 0.0
        %4886 = vmatpush1.msra.mxu0 0.0
        %4887 = vmatprep.subr.mxu0 0.0
        %4888 = vmatpush1.msra.mxu0 0.0
        %4889 = vmatprep.subr.mxu0 0.0
        %4890 = vmatpush1.msra.mxu0 0.0
        %4891 = vmatprep.subr.mxu0 0.0
        %4892 = vmatpush1.msra.mxu0 0.0
        %4893 = vmatprep.subr.mxu0 0.0
        %4894 = vmatpush1.msra.mxu0 0.0
        %4895 = vmatprep.subr.mxu0 0.0
        %4896 = vmatpush1.msra.mxu0 0.0
        %4897 = vmatprep.subr.mxu0 0.0
        %4898 = vmatpush1.msra.mxu0 0.0
        %4899 = vmatprep.subr.mxu0 0.0
        %4900 = vmatpush1.msra.mxu0 0.0
        %4901 = vmatprep.subr.mxu0 0.0
        %4902 = vmatpush1.msra.mxu0 0.0
        %4903 = vmatprep.subr.mxu0 0.0
        %4904 = vmatpush1.msra.mxu0 0.0
        %4905 = vmatprep.subr.mxu0 0.0
        %4906 = vmatpush1.msra.mxu0 0.0
        %4907 = vmatprep.subr.mxu0 0.0
        %4908 = vmatpush1.msra.mxu0 0.0
        %4909 = vmatprep.subr.mxu0 0.0
        %4910 = vmatpush1.msra.mxu0 0.0
        %4911 = vmatprep.subr.mxu0 0.0
        %4912 = vmatpush1.msra.mxu0 0.0
        %4913 = vmatprep.subr.mxu0 0.0
        %4914 = vmatpush1.msra.mxu0 0.0
        %4915 = vmatprep.subr.mxu0 0.0
        %4916 = vmatpush1.msra.mxu0 0.0
        %4917 = vmatprep.subr.mxu0 0.0
        %4918 = vmatpush1.msra.mxu0 0.0
        %4919 = vmatprep.subr.mxu0 0.0
        %4920 = vmatpush1.msra.mxu0 0.0
        %4921 = vmatprep.subr.mxu0 0.0
        %4922 = vmatpush1.msra.mxu0 0.0
        %4923 = vmatprep.subr.mxu0 0.0
        %4924 = vmatpush1.msra.mxu0 0.0
        %4925 = vmatprep.mubr.f32.mxu0 0.0
        %4926 = vmatmul.mubr.f32.gmra.mrb[0].mxu0 %v2535
        %v4927 = vpop.f32.mrb[0].mxu0
        %v4928 = vadd.f32 0.0, %v4927
        %v4929 = vpop.f32.mrb[0].mxu0
        %4930 = vdwg.mxu0
        %v4932 = vsel %vm2537, %v4012, 0
        %4934 = vmatprep.subr.mxu0 0.0
        %4935 = vmatpush1.msra.mxu0 %v4932
        %4936 = vmatprep.subr.mxu0 0.0
        %4937 = vmatpush1.msra.mxu0 0.0
        %4938 = vmatprep.subr.mxu0 0.0
        %4939 = vmatpush1.msra.mxu0 0.0
        %4940 = vmatprep.subr.mxu0 0.0
        %4941 = vmatpush1.msra.mxu0 0.0
        %4942 = vmatprep.subr.mxu0 0.0
        %4943 = vmatpush1.msra.mxu0 0.0
        %4944 = vmatprep.subr.mxu0 0.0
        %4945 = vmatpush1.msra.mxu0 0.0
        %4946 = vmatprep.subr.mxu0 0.0
        %4947 = vmatpush1.msra.mxu0 0.0
        %4948 = vmatprep.subr.mxu0 0.0
        %4949 = vmatpush1.msra.mxu0 0.0
        %4950 = vmatprep.subr.mxu0 0.0
        %4951 = vmatpush1.msra.mxu0 0.0
        %4952 = vmatprep.subr.mxu0 0.0
        %4953 = vmatpush1.msra.mxu0 0.0
        %4954 = vmatprep.subr.mxu0 0.0
        %4955 = vmatpush1.msra.mxu0 0.0
        %4956 = vmatprep.subr.mxu0 0.0
        %4957 = vmatpush1.msra.mxu0 0.0
        %4958 = vmatprep.subr.mxu0 0.0
        %4959 = vmatpush1.msra.mxu0 0.0
        %4960 = vmatprep.subr.mxu0 0.0
        %4961 = vmatpush1.msra.mxu0 0.0
        %4962 = vmatprep.subr.mxu0 0.0
        %4963 = vmatpush1.msra.mxu0 0.0
        %4964 = vmatprep.subr.mxu0 0.0
        %4965 = vmatpush1.msra.mxu0 0.0
        %4966 = vmatprep.subr.mxu0 0.0
        %4967 = vmatpush1.msra.mxu0 0.0
        %4968 = vmatprep.subr.mxu0 0.0
        %4969 = vmatpush1.msra.mxu0 0.0
        %4970 = vmatprep.subr.mxu0 0.0
        %4971 = vmatpush1.msra.mxu0 0.0
        %4972 = vmatprep.subr.mxu0 0.0
        %4973 = vmatpush1.msra.mxu0 0.0
        %4974 = vmatprep.subr.mxu0 0.0
        %4975 = vmatpush1.msra.mxu0 0.0
        %4976 = vmatprep.subr.mxu0 0.0
        %4977 = vmatpush1.msra.mxu0 0.0
        %4978 = vmatprep.subr.mxu0 0.0
        %4979 = vmatpush1.msra.mxu0 0.0
        %4980 = vmatprep.subr.mxu0 0.0
        %4981 = vmatpush1.msra.mxu0 0.0
        %4982 = vmatprep.subr.mxu0 0.0
        %4983 = vmatpush1.msra.mxu0 0.0
        %4984 = vmatprep.subr.mxu0 0.0
        %4985 = vmatpush1.msra.mxu0 0.0
        %4986 = vmatprep.subr.mxu0 0.0
        %4987 = vmatpush1.msra.mxu0 0.0
        %4988 = vmatprep.subr.mxu0 0.0
        %4989 = vmatpush1.msra.mxu0 0.0
        %4990 = vmatprep.subr.mxu0 0.0
        %4991 = vmatpush1.msra.mxu0 0.0
        %4992 = vmatprep.subr.mxu0 0.0
        %4993 = vmatpush1.msra.mxu0 0.0
        %4994 = vmatprep.subr.mxu0 0.0
        %4995 = vmatpush1.msra.mxu0 0.0
        %4996 = vmatprep.subr.mxu0 0.0
        %4997 = vmatpush1.msra.mxu0 0.0
        %4998 = vmatprep.mubr.f32.mxu0 0.0
        %4999 = vmatmul.mubr.f32.gmra.mrb[0].mxu0 %v2612
        %v5000 = vpop.f32.mrb[0].mxu0
        %v5001 = vadd.f32 %v4928, %v5000
        %v5002 = vpop.f32.mrb[0].mxu0
        %5003 = vdwg.mxu0
        %v5004 = vadd.f32 %v5001, %v2691
        %v5005 = vadd.f32 %v5004, %v2910
        %v5006 = vsel %vm577, %v5005, 0.0
        %5007 = vadd.xlane.f32.xlu0 %v5006
        %v5008 = vpop.xlane.xlu0 %5007
        %v5009 = vmul.f32 %v5008, %v2698
        %v5010 = vsub.f32 %v5005, %v5009
        %v5011 = vmul.f32 %v5010, %v5010
        %v5012 = vsel %vm577, %v5011, 0.0
        %5013 = vadd.xlane.f32.xlu0 %v5012
        %v5014 = vpop.xlane.xlu0 %5013
        %v5015 = vmul.f32 %v5014, %v2698
        %v5016 = vadd.f32 %v5015, 1e-05
        %v5017 = vrsqrt.pop %v5016
        %v5018 = vmul.f32 %v5010, %v5017
        %v5019 = vmul.f32 %v5018, %v2713
        %v5020 = vadd.f32 %v5019, %v2720
        %v5022 = vsel %vm577, %v5020, 0
        %5024 = vmatprep.subr.mxu0 0.0
        %5025 = vmatpush1.msra.mxu0 %v521
        %5026 = vmatprep.subr.mxu0 0.0
        %5027 = vmatpush1.msra.mxu0 %v522
        %5028 = vmatprep.subr.mxu0 0.0
        %5029 = vmatpush1.msra.mxu0 %v523
        %5030 = vmatprep.subr.mxu0 0.0
        %5031 = vmatpush1.msra.mxu0 %v524
        %5032 = vmatprep.subr.mxu0 0.0
        %5033 = vmatpush1.msra.mxu0 0.0
        %5034 = vmatprep.subr.mxu0 0.0
        %5035 = vmatpush1.msra.mxu0 0.0
        %5036 = vmatprep.subr.mxu0 0.0
        %5037 = vmatpush1.msra.mxu0 0.0
        %5038 = vmatprep.subr.mxu0 0.0
        %5039 = vmatpush1.msra.mxu0 0.0
        %5040 = vmatprep.subr.mxu0 0.0
        %5041 = vmatpush1.msra.mxu0 0.0
        %5042 = vmatprep.subr.mxu0 0.0
        %5043 = vmatpush1.msra.mxu0 0.0
        %5044 = vmatprep.subr.mxu0 0.0
        %5045 = vmatpush1.msra.mxu0 0.0
        %5046 = vmatprep.subr.mxu0 0.0
        %5047 = vmatpush1.msra.mxu0 0.0
        %5048 = vmatprep.subr.mxu0 0.0
        %5049 = vmatpush1.msra.mxu0 0.0
        %5050 = vmatprep.subr.mxu0 0.0
        %5051 = vmatpush1.msra.mxu0 0.0
        %5052 = vmatprep.subr.mxu0 0.0
        %5053 = vmatpush1.msra.mxu0 0.0
        %5054 = vmatprep.subr.mxu0 0.0
        %5055 = vmatpush1.msra.mxu0 0.0
        %5056 = vmatprep.subr.mxu0 0.0
        %5057 = vmatpush1.msra.mxu0 0.0
        %5058 = vmatprep.subr.mxu0 0.0
        %5059 = vmatpush1.msra.mxu0 0.0
        %5060 = vmatprep.subr.mxu0 0.0
        %5061 = vmatpush1.msra.mxu0 0.0
        %5062 = vmatprep.subr.mxu0 0.0
        %5063 = vmatpush1.msra.mxu0 0.0
        %5064 = vmatprep.subr.mxu0 0.0
        %5065 = vmatpush1.msra.mxu0 0.0
        %5066 = vmatprep.subr.mxu0 0.0
        %5067 = vmatpush1.msra.mxu0 0.0
        %5068 = vmatprep.subr.mxu0 0.0
        %5069 = vmatpush1.msra.mxu0 0.0
        %5070 = vmatprep.subr.mxu0 0.0
        %5071 = vmatpush1.msra.mxu0 0.0
        %5072 = vmatprep.subr.mxu0 0.0
        %5073 = vmatpush1.msra.mxu0 0.0
        %5074 = vmatprep.subr.mxu0 0.0
        %5075 = vmatpush1.msra.mxu0 0.0
        %5076 = vmatprep.subr.mxu0 0.0
        %5077 = vmatpush1.msra.mxu0 0.0
        %5078 = vmatprep.subr.mxu0 0.0
        %5079 = vmatpush1.msra.mxu0 0.0
        %5080 = vmatprep.subr.mxu0 0.0
        %5081 = vmatpush1.msra.mxu0 0.0
        %5082 = vmatprep.subr.mxu0 0.0
        %5083 = vmatpush1.msra.mxu0 0.0
        %5084 = vmatprep.subr.mxu0 0.0
        %5085 = vmatpush1.msra.mxu0 0.0
        %5086 = vmatprep.subr.mxu0 0.0
        %5087 = vmatpush1.msra.mxu0 0.0
        %5088 = vmatprep.mubr.f32.mxu0 0.0
        %5089 = vmatmul.mubr.f32.gmra.mrb[0].mxu0 %v5022
        %v5090 = vpop.f32.mrb[0].mxu0
        %v5091 = vadd.f32 %v2727, %v5090
        %v5092 = vpop.f32.mrb[0].mxu0
        %5093 = vdwg.mxu0
        %v5094 = vmax.f32 %v5091, 0.0
        %v5096 = vsel %vm2809, %v5094, 0
        %5098 = vmatprep.subr.mxu0 0.0
        %5099 = vmatpush1.msra.mxu0 %v526
        %5100 = vmatprep.subr.mxu0 0.0
        %5101 = vmatpush1.msra.mxu0 %v527
        %5102 = vmatprep.subr.mxu0 0.0
        %5103 = vmatpush1.msra.mxu0 %v528
        %5104 = vmatprep.subr.mxu0 0.0
        %5105 = vmatpush1.msra.mxu0 %v529
        %5106 = vmatprep.subr.mxu0 0.0
        %5107 = vmatpush1.msra.mxu0 %v530
        %5108 = vmatprep.subr.mxu0 0.0
        %5109 = vmatpush1.msra.mxu0 %v531
        %5110 = vmatprep.subr.mxu0 0.0
        %5111 = vmatpush1.msra.mxu0 %v532
        %5112 = vmatprep.subr.mxu0 0.0
        %5113 = vmatpush1.msra.mxu0 %v533
        %5114 = vmatprep.subr.mxu0 0.0
        %5115 = vmatpush1.msra.mxu0 0.0
        %5116 = vmatprep.subr.mxu0 0.0
        %5117 = vmatpush1.msra.mxu0 0.0
        %5118 = vmatprep.subr.mxu0 0.0
        %5119 = vmatpush1.msra.mxu0 0.0
        %5120 = vmatprep.subr.mxu0 0.0
        %5121 = vmatpush1.msra.mxu0 0.0
        %5122 = vmatprep.subr.mxu0 0.0
        %5123 = vmatpush1.msra.mxu0 0.0
        %5124 = vmatprep.subr.mxu0 0.0
        %5125 = vmatpush1.msra.mxu0 0.0
        %5126 = vmatprep.subr.mxu0 0.0
        %5127 = vmatpush1.msra.mxu0 0.0
        %5128 = vmatprep.subr.mxu0 0.0
        %5129 = vmatpush1.msra.mxu0 0.0
        %5130 = vmatprep.subr.mxu0 0.0
        %5131 = vmatpush1.msra.mxu0 0.0
        %5132 = vmatprep.subr.mxu0 0.0
        %5133 = vmatpush1.msra.mxu0 0.0
        %5134 = vmatprep.subr.mxu0 0.0
        %5135 = vmatpush1.msra.mxu0 0.0
        %5136 = vmatprep.subr.mxu0 0.0
        %5137 = vmatpush1.msra.mxu0 0.0
        %5138 = vmatprep.subr.mxu0 0.0
        %5139 = vmatpush1.msra.mxu0 0.0
        %5140 = vmatprep.subr.mxu0 0.0
        %5141 = vmatpush1.msra.mxu0 0.0
        %5142 = vmatprep.subr.mxu0 0.0
        %5143 = vmatpush1.msra.mxu0 0.0
        %5144 = vmatprep.subr.mxu0 0.0
        %5145 = vmatpush1.msra.mxu0 0.0
        %5146 = vmatprep.subr.mxu0 0.0
        %5147 = vmatpush1.msra.mxu0 0.0
        %5148 = vmatprep.subr.mxu0 0.0
        %5149 = vmatpush1.msra.mxu0 0.0
        %5150 = vmatprep.subr.mxu0 0.0
        %5151 = vmatpush1.msra.mxu0 0.0
        %5152 = vmatprep.subr.mxu0 0.0
        %5153 = vmatpush1.msra.mxu0 0.0
        %5154 = vmatprep.subr.mxu0 0.0
        %5155 = vmatpush1.msra.mxu0 0.0
        %5156 = vmatprep.subr.mxu0 0.0
        %5157 = vmatpush1.msra.mxu0 0.0
        %5158 = vmatprep.subr.mxu0 0.0
        %5159 = vmatpush1.msra.mxu0 0.0
        %5160 = vmatprep.subr.mxu0 0.0
        %5161 = vmatpush1.msra.mxu0 0.0
        %5162 = vmatprep.mubr.f32.mxu0 0.0
        %5163 = vmatmul.mubr.f32.gmra.mrb[0].mxu0 %v5096
        %v5164 = vpop.f32.mrb[0].mxu0
        %v5165 = vadd.f32 %v2807, %v5164
        %v5166 = vpop.f32.mrb[0].mxu0
        %5167 = vdwg.mxu0
        %v5168 = vadd.f32 %v5165, %v5020
        %v5169 = vsel %vm577, %v5168, 0.0
        %5170 = vadd.xlane.f32.xlu0 %v5169
        %v5171 = vpop.xlane.xlu0 %5170
        %v5172 = vmul.f32 %v5171, %v2698
        %v5173 = vsub.f32 %v5168, %v5172
        %v5174 = vmul.f32 %v5173, %v5173
        %v5175 = vsel %vm577, %v5174, 0.0
        %5176 = vadd.xlane.f32.xlu0 %v5175
        %v5177 = vpop.xlane.xlu0 %5176
        %v5178 = vmul.f32 %v5177, %v2698
        %v5179 = vadd.f32 %v5178, 1e-05
        %v5180 = vrsqrt.pop %v5179
        %v5181 = vmul.f32 %v5173, %v5180
        %v5182 = vmul.f32 %v5181, %v2901
        %v5183 = vadd.f32 %v5182, %v2908
        %v5185 = vsel %vm577, %v5183, 0
        %5187 = vmatprep.subr.mxu0 0.0
        %5188 = vmatpush1.msra.mxu0 %v537
        %5189 = vmatprep.subr.mxu0 0.0
        %5190 = vmatpush1.msra.mxu0 %v538
        %5191 = vmatprep.subr.mxu0 0.0
        %5192 = vmatpush1.msra.mxu0 %v539
        %5193 = vmatprep.subr.mxu0 0.0
        %5194 = vmatpush1.msra.mxu0 %v540
        %5195 = vmatprep.subr.mxu0 0.0
        %5196 = vmatpush1.msra.mxu0 0.0
        %5197 = vmatprep.subr.mxu0 0.0
        %5198 = vmatpush1.msra.mxu0 0.0
        %5199 = vmatprep.subr.mxu0 0.0
        %5200 = vmatpush1.msra.mxu0 0.0
        %5201 = vmatprep.subr.mxu0 0.0
        %5202 = vmatpush1.msra.mxu0 0.0
        %5203 = vmatprep.subr.mxu0 0.0
        %5204 = vmatpush1.msra.mxu0 0.0
        %5205 = vmatprep.subr.mxu0 0.0
        %5206 = vmatpush1.msra.mxu0 0.0
        %5207 = vmatprep.subr.mxu0 0.0
        %5208 = vmatpush1.msra.mxu0 0.0
        %5209 = vmatprep.subr.mxu0 0.0
        %5210 = vmatpush1.msra.mxu0 0.0
        %5211 = vmatprep.subr.mxu0 0.0
        %5212 = vmatpush1.msra.mxu0 0.0
        %5213 = vmatprep.subr.mxu0 0.0
        %5214 = vmatpush1.msra.mxu0 0.0
        %5215 = vmatprep.subr.mxu0 0.0
        %5216 = vmatpush1.msra.mxu0 0.0
        %5217 = vmatprep.subr.mxu0 0.0
        %5218 = vmatpush1.msra.mxu0 0.0
        %5219 = vmatprep.subr.mxu0 0.0
        %5220 = vmatpush1.msra.mxu0 0.0
        %5221 = vmatprep.subr.mxu0 0.0
        %5222 = vmatpush1.msra.mxu0 0.0
        %5223 = vmatprep.subr.mxu0 0.0
        %5224 = vmatpush1.msra.mxu0 0.0
        %5225 = vmatprep.subr.mxu0 0.0
        %5226 = vmatpush1.msra.mxu0 0.0
        %5227 = vmatprep.subr.mxu0 0.0
        %5228 = vmatpush1.msra.mxu0 0.0
        %5229 = vmatprep.subr.mxu0 0.0
        %5230 = vmatpush1.msra.mxu0 0.0
        %5231 = vmatprep.subr.mxu0 0.0
        %5232 = vmatpush1.msra.mxu0 0.0
        %5233 = vmatprep.subr.mxu0 0.0
        %5234 = vmatpush1.msra.mxu0 0.0
        %5235 = vmatprep.subr.mxu0 0.0
        %5236 = vmatpush1.msra.mxu0 0.0
        %5237 = vmatprep.subr.mxu0 0.0
        %5238 = vmatpush1.msra.mxu0 0.0
        %5239 = vmatprep.subr.mxu0 0.0
        %5240 = vmatpush1.msra.mxu0 0.0
        %5241 = vmatprep.subr.mxu0 0.0
        %5242 = vmatpush1.msra.mxu0 0.0
        %5243 = vmatprep.subr.mxu0 0.0
        %5244 = vmatpush1.msra.mxu0 0.0
        %5245 = vmatprep.subr.mxu0 0.0
        %5246 = vmatpush1.msra.mxu0 0.0
        %5247 = vmatprep.subr.mxu0 0.0
        %5248 = vmatpush1.msra.mxu0 0.0
        %5249 = vmatprep.subr.mxu0 0.0
        %5250 = vmatpush1.msra.mxu0 0.0
        %5251 = vmatprep.mubr.f32.mxu0 0.0
        %5252 = vmatmul.mubr.f32.gmra.mrb[0].mxu0 %v5185
        %v5253 = vpop.f32.mrb[0].mxu0
        %v5254 = vadd.f32 0.0, %v5253
        %v5255 = vpop.f32.mrb[0].mxu0
        %5256 = vdwg.mxu0
        %v5257 = vadd.f32 %v569, %v5254
        %v5258 = vrot.slane %v5183, 1
        %v5259 = vsel %vm577, %v5258, 0
        %5261 = vmatprep.subr.mxu0 0.0
        %5262 = vmatpush1.msra.mxu0 %v541
        %5263 = vmatprep.subr.mxu0 0.0
        %5264 = vmatpush1.msra.mxu0 %v542
        %5265 = vmatprep.subr.mxu0 0.0
        %5266 = vmatpush1.msra.mxu0 %v543
        %5267 = vmatprep.subr.mxu0 0.0
        %5268 = vmatpush1.msra.mxu0 %v544
        %5269 = vmatprep.subr.mxu0 0.0
        %5270 = vmatpush1.msra.mxu0 0.0
        %5271 = vmatprep.subr.mxu0 0.0
        %5272 = vmatpush1.msra.mxu0 0.0
        %5273 = vmatprep.subr.mxu0 0.0
        %5274 = vmatpush1.msra.mxu0 0.0
        %5275 = vmatprep.subr.mxu0 0.0
        %5276 = vmatpush1.msra.mxu0 0.0
        %5277 = vmatprep.subr.mxu0 0.0
        %5278 = vmatpush1.msra.mxu0 0.0
        %5279 = vmatprep.subr.mxu0 0.0
        %5280 = vmatpush1.msra.mxu0 0.0
        %5281 = vmatprep.subr.mxu0 0.0
        %5282 = vmatpush1.msra.mxu0 0.0
        %5283 = vmatprep.subr.mxu0 0.0
        %5284 = vmatpush1.msra.mxu0 0.0
        %5285 = vmatprep.subr.mxu0 0.0
        %5286 = vmatpush1.msra.mxu0 0.0
        %5287 = vmatprep.subr.mxu0 0.0
        %5288 = vmatpush1.msra.mxu0 0.0
        %5289 = vmatprep.subr.mxu0 0.0
        %5290 = vmatpush1.msra.mxu0 0.0
        %5291 = vmatprep.subr.mxu0 0.0
        %5292 = vmatpush1.msra.mxu0 0.0
        %5293 = vmatprep.subr.mxu0 0.0
        %5294 = vmatpush1.msra.mxu0 0.0
        %5295 = vmatprep.subr.mxu0 0.0
        %5296 = vmatpush1.msra.mxu0 0.0
        %5297 = vmatprep.subr.mxu0 0.0
        %5298 = vmatpush1.msra.mxu0 0.0
        %5299 = vmatprep.subr.mxu0 0.0
        %5300 = vmatpush1.msra.mxu0 0.0
        %5301 = vmatprep.subr.mxu0 0.0
        %5302 = vmatpush1.msra.mxu0 0.0
        %5303 = vmatprep.subr.mxu0 0.0
        %5304 = vmatpush1.msra.mxu0 0.0
        %5305 = vmatprep.subr.mxu0 0.0
        %5306 = vmatpush1.msra.mxu0 0.0
        %5307 = vmatprep.subr.mxu0 0.0
        %5308 = vmatpush1.msra.mxu0 0.0
        %5309 = vmatprep.subr.mxu0 0.0
        %5310 = vmatpush1.msra.mxu0 0.0
        %5311 = vmatprep.subr.mxu0 0.0
        %5312 = vmatpush1.msra.mxu0 0.0
        %5313 = vmatprep.subr.mxu0 0.0
        %5314 = vmatpush1.msra.mxu0 0.0
        %5315 = vmatprep.subr.mxu0 0.0
        %5316 = vmatpush1.msra.mxu0 0.0
        %5317 = vmatprep.subr.mxu0 0.0
        %5318 = vmatpush1.msra.mxu0 0.0
        %5319 = vmatprep.subr.mxu0 0.0
        %5320 = vmatpush1.msra.mxu0 0.0
        %5321 = vmatprep.subr.mxu0 0.0
        %5322 = vmatpush1.msra.mxu0 0.0
        %5323 = vmatprep.subr.mxu0 0.0
        %5324 = vmatpush1.msra.mxu0 0.0
        %5325 = vmatprep.mubr.f32.mxu0 0.0
        %5326 = vmatmul.mubr.f32.gmra.mrb[0].mxu0 %v5259
        %v5327 = vpop.f32.mrb[0].mxu0
        %v5328 = vadd.f32 0.0, %v5327
        %v5329 = vpop.f32.mrb[0].mxu0
        %5330 = vdwg.mxu0
        %v5331 = vadd.f32 %v5257, %v5328
        %v5332 = vrot.slane %v5183, 2
        %v5333 = vsel %vm577, %v5332, 0
        %5335 = vmatprep.subr.mxu0 0.0
        %5336 = vmatpush1.msra.mxu0 %v545
        %5337 = vmatprep.subr.mxu0 0.0
        %5338 = vmatpush1.msra.mxu0 %v546
        %5339 = vmatprep.subr.mxu0 0.0
        %5340 = vmatpush1.msra.mxu0 %v547
        %5341 = vmatprep.subr.mxu0 0.0
        %5342 = vmatpush1.msra.mxu0 %v548
        %5343 = vmatprep.subr.mxu0 0.0
        %5344 = vmatpush1.msra.mxu0 0.0
        %5345 = vmatprep.subr.mxu0 0.0
        %5346 = vmatpush1.msra.mxu0 0.0
        %5347 = vmatprep.subr.mxu0 0.0
        %5348 = vmatpush1.msra.mxu0 0.0
        %5349 = vmatprep.subr.mxu0 0.0
        %5350 = vmatpush1.msra.mxu0 0.0
        %5351 = vmatprep.subr.mxu0 0.0
        %5352 = vmatpush1.msra.mxu0 0.0
        %5353 = vmatprep.subr.mxu0 0.0
        %5354 = vmatpush1.msra.mxu0 0.0
        %5355 = vmatprep.subr.mxu0 0.0
        %5356 = vmatpush1.msra.mxu0 0.0
        %5357 = vmatprep.subr.mxu0 0.0
        %5358 = vmatpush1.msra.mxu0 0.0
        %5359 = vmatprep.subr.mxu0 0.0
        %5360 = vmatpush1.msra.mxu0 0.0
        %5361 = vmatprep.subr.mxu0 0.0
        %5362 = vmatpush1.msra.mxu0 0.0
        %5363 = vmatprep.subr.mxu0 0.0
        %5364 = vmatpush1.msra.mxu0 0.0
        %5365 = vmatprep.subr.mxu0 0.0
        %5366 = vmatpush1.msra.mxu0 0.0
        %5367 = vmatprep.subr.mxu0 0.0
        %5368 = vmatpush1.msra.mxu0 0.0
        %5369 = vmatprep.subr.mxu0 0.0
        %5370 = vmatpush1.msra.mxu0 0.0
        %5371 = vmatprep.subr.mxu0 0.0
        %5372 = vmatpush1.msra.mxu0 0.0
        %5373 = vmatprep.subr.mxu0 0.0
        %5374 = vmatpush1.msra.mxu0 0.0
        %5375 = vmatprep.subr.mxu0 0.0
        %5376 = vmatpush1.msra.mxu0 0.0
        %5377 = vmatprep.subr.mxu0 0.0
        %5378 = vmatpush1.msra.mxu0 0.0
        %5379 = vmatprep.subr.mxu0 0.0
        %5380 = vmatpush1.msra.mxu0 0.0
        %5381 = vmatprep.subr.mxu0 0.0
        %5382 = vmatpush1.msra.mxu0 0.0
        %5383 = vmatprep.subr.mxu0 0.0
        %5384 = vmatpush1.msra.mxu0 0.0
        %5385 = vmatprep.subr.mxu0 0.0
        %5386 = vmatpush1.msra.mxu0 0.0
        %5387 = vmatprep.subr.mxu0 0.0
        %5388 = vmatpush1.msra.mxu0 0.0
        %5389 = vmatprep.subr.mxu0 0.0
        %5390 = vmatpush1.msra.mxu0 0.0
        %5391 = vmatprep.subr.mxu0 0.0
        %5392 = vmatpush1.msra.mxu0 0.0
        %5393 = vmatprep.subr.mxu0 0.0
        %5394 = vmatpush1.msra.mxu0 0.0
        %5395 = vmatprep.subr.mxu0 0.0
        %5396 = vmatpush1.msra.mxu0 0.0
        %5397 = vmatprep.subr.mxu0 0.0
        %5398 = vmatpush1.msra.mxu0 0.0
        %5399 = vmatprep.mubr.f32.mxu0 0.0
        %5400 = vmatmul.mubr.f32.gmra.mrb[0].mxu0 %v5333
        %v5401 = vpop.f32.mrb[0].mxu0
        %v5402 = vadd.f32 0.0, %v5401
        %v5403 = vpop.f32.mrb[0].mxu0
        %5404 = vdwg.mxu0
        %v5405 = vadd.f32 %v5331, %v5402
        %v5406 = vrot.slane %v5183, 3
        %v5407 = vsel %vm577, %v5406, 0
        %5409 = vmatprep.subr.mxu0 0.0
        %5410 = vmatpush1.msra.mxu0 %v549
        %5411 = vmatprep.subr.mxu0 0.0
        %5412 = vmatpush1.msra.mxu0 %v550
        %5413 = vmatprep.subr.mxu0 0.0
        %5414 = vmatpush1.msra.mxu0 %v551
        %5415 = vmatprep.subr.mxu0 0.0
        %5416 = vmatpush1.msra.mxu0 %v552
        %5417 = vmatprep.subr.mxu0 0.0
        %5418 = vmatpush1.msra.mxu0 0.0
        %5419 = vmatprep.subr.mxu0 0.0
        %5420 = vmatpush1.msra.mxu0 0.0
        %5421 = vmatprep.subr.mxu0 0.0
        %5422 = vmatpush1.msra.mxu0 0.0
        %5423 = vmatprep.subr.mxu0 0.0
        %5424 = vmatpush1.msra.mxu0 0.0
        %5425 = vmatprep.subr.mxu0 0.0
        %5426 = vmatpush1.msra.mxu0 0.0
        %5427 = vmatprep.subr.mxu0 0.0
        %5428 = vmatpush1.msra.mxu0 0.0
        %5429 = vmatprep.subr.mxu0 0.0
        %5430 = vmatpush1.msra.mxu0 0.0
        %5431 = vmatprep.subr.mxu0 0.0
        %5432 = vmatpush1.msra.mxu0 0.0
        %5433 = vmatprep.subr.mxu0 0.0
        %5434 = vmatpush1.msra.mxu0 0.0
        %5435 = vmatprep.subr.mxu0 0.0
        %5436 = vmatpush1.msra.mxu0 0.0
        %5437 = vmatprep.subr.mxu0 0.0
        %5438 = vmatpush1.msra.mxu0 0.0
        %5439 = vmatprep.subr.mxu0 0.0
        %5440 = vmatpush1.msra.mxu0 0.0
        %5441 = vmatprep.subr.mxu0 0.0
        %5442 = vmatpush1.msra.mxu0 0.0
        %5443 = vmatprep.subr.mxu0 0.0
        %5444 = vmatpush1.msra.mxu0 0.0
        %5445 = vmatprep.subr.mxu0 0.0
        %5446 = vmatpush1.msra.mxu0 0.0
        %5447 = vmatprep.subr.mxu0 0.0
        %5448 = vmatpush1.msra.mxu0 0.0
        %5449 = vmatprep.subr.mxu0 0.0
        %5450 = vmatpush1.msra.mxu0 0.0
        %5451 = vmatprep.subr.mxu0 0.0
        %5452 = vmatpush1.msra.mxu0 0.0
        %5453 = vmatprep.subr.mxu0 0.0
        %5454 = vmatpush1.msra.mxu0 0.0
        %5455 = vmatprep.subr.mxu0 0.0
        %5456 = vmatpush1.msra.mxu0 0.0
        %5457 = vmatprep.subr.mxu0 0.0
        %5458 = vmatpush1.msra.mxu0 0.0
        %5459 = vmatprep.subr.mxu0 0.0
        %5460 = vmatpush1.msra.mxu0 0.0
        %5461 = vmatprep.subr.mxu0 0.0
        %5462 = vmatpush1.msra.mxu0 0.0
        %5463 = vmatprep.subr.mxu0 0.0
        %5464 = vmatpush1.msra.mxu0 0.0
        %5465 = vmatprep.subr.mxu0 0.0
        %5466 = vmatpush1.msra.mxu0 0.0
        %5467 = vmatprep.subr.mxu0 0.0
        %5468 = vmatpush1.msra.mxu0 0.0
        %5469 = vmatprep.subr.mxu0 0.0
        %5470 = vmatpush1.msra.mxu0 0.0
        %5471 = vmatprep.subr.mxu0 0.0
        %5472 = vmatpush1.msra.mxu0 0.0
        %5473 = vmatprep.mubr.f32.mxu0 0.0
        %5474 = vmatmul.mubr.f32.gmra.mrb[0].mxu0 %v5407
        %v5475 = vpop.f32.mrb[0].mxu0
        %v5476 = vadd.f32 0.0, %v5475
        %v5477 = vpop.f32.mrb[0].mxu0
        %5478 = vdwg.mxu0
        %v5479 = vadd.f32 %v5405, %v5476
        %v5480 = vrot.slane %v5183, 4
        %v5481 = vsel %vm577, %v5480, 0
        %5483 = vmatprep.subr.mxu0 0.0
        %5484 = vmatpush1.msra.mxu0 %v553
        %5485 = vmatprep.subr.mxu0 0.0
        %5486 = vmatpush1.msra.mxu0 %v554
        %5487 = vmatprep.subr.mxu0 0.0
        %5488 = vmatpush1.msra.mxu0 %v555
        %5489 = vmatprep.subr.mxu0 0.0
        %5490 = vmatpush1.msra.mxu0 %v556
        %5491 = vmatprep.subr.mxu0 0.0
        %5492 = vmatpush1.msra.mxu0 0.0
        %5493 = vmatprep.subr.mxu0 0.0
        %5494 = vmatpush1.msra.mxu0 0.0
        %5495 = vmatprep.subr.mxu0 0.0
        %5496 = vmatpush1.msra.mxu0 0.0
        %5497 = vmatprep.subr.mxu0 0.0
        %5498 = vmatpush1.msra.mxu0 0.0
        %5499 = vmatprep.subr.mxu0 0.0
        %5500 = vmatpush1.msra.mxu0 0.0
        %5501 = vmatprep.subr.mxu0 0.0
        %5502 = vmatpush1.msra.mxu0 0.0
        %5503 = vmatprep.subr.mxu0 0.0
        %5504 = vmatpush1.msra.mxu0 0.0
        %5505 = vmatprep.subr.mxu0 0.0
        %5506 = vmatpush1.msra.mxu0 0.0
        %5507 = vmatprep.subr.mxu0 0.0
        %5508 = vmatpush1.msra.mxu0 0.0
        %5509 = vmatprep.subr.mxu0 0.0
        %5510 = vmatpush1.msra.mxu0 0.0
        %5511 = vmatprep.subr.mxu0 0.0
        %5512 = vmatpush1.msra.mxu0 0.0
        %5513 = vmatprep.subr.mxu0 0.0
        %5514 = vmatpush1.msra.mxu0 0.0
        %5515 = vmatprep.subr.mxu0 0.0
        %5516 = vmatpush1.msra.mxu0 0.0
        %5517 = vmatprep.subr.mxu0 0.0
        %5518 = vmatpush1.msra.mxu0 0.0
        %5519 = vmatprep.subr.mxu0 0.0
        %5520 = vmatpush1.msra.mxu0 0.0
        %5521 = vmatprep.subr.mxu0 0.0
        %5522 = vmatpush1.msra.mxu0 0.0
        %5523 = vmatprep.subr.mxu0 0.0
        %5524 = vmatpush1.msra.mxu0 0.0
        %5525 = vmatprep.subr.mxu0 0.0
        %5526 = vmatpush1.msra.mxu0 0.0
        %5527 = vmatprep.subr.mxu0 0.0
        %5528 = vmatpush1.msra.mxu0 0.0
        %5529 = vmatprep.subr.mxu0 0.0
        %5530 = vmatpush1.msra.mxu0 0.0
        %5531 = vmatprep.subr.mxu0 0.0
        %5532 = vmatpush1.msra.mxu0 0.0
        %5533 = vmatprep.subr.mxu0 0.0
        %5534 = vmatpush1.msra.mxu0 0.0
        %5535 = vmatprep.subr.mxu0 0.0
        %5536 = vmatpush1.msra.mxu0 0.0
        %5537 = vmatprep.subr.mxu0 0.0
        %5538 = vmatpush1.msra.mxu0 0.0
        %5539 = vmatprep.subr.mxu0 0.0
        %5540 = vmatpush1.msra.mxu0 0.0
        %5541 = vmatprep.subr.mxu0 0.0
        %5542 = vmatpush1.msra.mxu0 0.0
        %5543 = vmatprep.subr.mxu0 0.0
        %5544 = vmatpush1.msra.mxu0 0.0
        %5545 = vmatprep.subr.mxu0 0.0
        %5546 = vmatpush1.msra.mxu0 0.0
        %5547 = vmatprep.mubr.f32.mxu0 0.0
        %5548 = vmatmul.mubr.f32.gmra.mrb[0].mxu0 %v5481
        %v5549 = vpop.f32.mrb[0].mxu0
        %v5550 = vadd.f32 0.0, %v5549
        %v5551 = vpop.f32.mrb[0].mxu0
        %5552 = vdwg.mxu0
        %v5553 = vadd.f32 %v5479, %v5550
        %v5554 = vrot.slane %v5183, 5
        %v5555 = vsel %vm577, %v5554, 0
        %5557 = vmatprep.subr.mxu0 0.0
        %5558 = vmatpush1.msra.mxu0 %v557
        %5559 = vmatprep.subr.mxu0 0.0
        %5560 = vmatpush1.msra.mxu0 %v558
        %5561 = vmatprep.subr.mxu0 0.0
        %5562 = vmatpush1.msra.mxu0 %v559
        %5563 = vmatprep.subr.mxu0 0.0
        %5564 = vmatpush1.msra.mxu0 %v560
        %5565 = vmatprep.subr.mxu0 0.0
        %5566 = vmatpush1.msra.mxu0 0.0
        %5567 = vmatprep.subr.mxu0 0.0
        %5568 = vmatpush1.msra.mxu0 0.0
        %5569 = vmatprep.subr.mxu0 0.0
        %5570 = vmatpush1.msra.mxu0 0.0
        %5571 = vmatprep.subr.mxu0 0.0
        %5572 = vmatpush1.msra.mxu0 0.0
        %5573 = vmatprep.subr.mxu0 0.0
        %5574 = vmatpush1.msra.mxu0 0.0
        %5575 = vmatprep.subr.mxu0 0.0
        %5576 = vmatpush1.msra.mxu0 0.0
        %5577 = vmatprep.subr.mxu0 0.0
        %5578 = vmatpush1.msra.mxu0 0.0
        %5579 = vmatprep.subr.mxu0 0.0
        %5580 = vmatpush1.msra.mxu0 0.0
        %5581 = vmatprep.subr.mxu0 0.0
        %5582 = vmatpush1.msra.mxu0 0.0
        %5583 = vmatprep.subr.mxu0 0.0
        %5584 = vmatpush1.msra.mxu0 0.0
        %5585 = vmatprep.subr.mxu0 0.0
        %5586 = vmatpush1.msra.mxu0 0.0
        %5587 = vmatprep.subr.mxu0 0.0
        %5588 = vmatpush1.msra.mxu0 0.0
        %5589 = vmatprep.subr.mxu0 0.0
        %5590 = vmatpush1.msra.mxu0 0.0
        %5591 = vmatprep.subr.mxu0 0.0
        %5592 = vmatpush1.msra.mxu0 0.0
        %5593 = vmatprep.subr.mxu0 0.0
        %5594 = vmatpush1.msra.mxu0 0.0
        %5595 = vmatprep.subr.mxu0 0.0
        %5596 = vmatpush1.msra.mxu0 0.0
        %5597 = vmatprep.subr.mxu0 0.0
        %5598 = vmatpush1.msra.mxu0 0.0
        %5599 = vmatprep.subr.mxu0 0.0
        %5600 = vmatpush1.msra.mxu0 0.0
        %5601 = vmatprep.subr.mxu0 0.0
        %5602 = vmatpush1.msra.mxu0 0.0
        %5603 = vmatprep.subr.mxu0 0.0
        %5604 = vmatpush1.msra.mxu0 0.0
        %5605 = vmatprep.subr.mxu0 0.0
        %5606 = vmatpush1.msra.mxu0 0.0
        %5607 = vmatprep.subr.mxu0 0.0
        %5608 = vmatpush1.msra.mxu0 0.0
        %5609 = vmatprep.subr.mxu0 0.0
        %5610 = vmatpush1.msra.mxu0 0.0
        %5611 = vmatprep.subr.mxu0 0.0
        %5612 = vmatpush1.msra.mxu0 0.0
        %5613 = vmatprep.subr.mxu0 0.0
        %5614 = vmatpush1.msra.mxu0 0.0
        %5615 = vmatprep.subr.mxu0 0.0
        %5616 = vmatpush1.msra.mxu0 0.0
        %5617 = vmatprep.subr.mxu0 0.0
        %5618 = vmatpush1.msra.mxu0 0.0
        %5619 = vmatprep.subr.mxu0 0.0
        %5620 = vmatpush1.msra.mxu0 0.0
        %5621 = vmatprep.mubr.f32.mxu0 0.0
        %5622 = vmatmul.mubr.f32.gmra.mrb[0].mxu0 %v5555
        %v5623 = vpop.f32.mrb[0].mxu0
        %v5624 = vadd.f32 0.0, %v5623
        %v5625 = vpop.f32.mrb[0].mxu0
        %5626 = vdwg.mxu0
        %v5627 = vadd.f32 %v5553, %v5624
        %v5628 = vrot.slane %v5183, 6
        %v5629 = vsel %vm577, %v5628, 0
        %5631 = vmatprep.subr.mxu0 0.0
        %5632 = vmatpush1.msra.mxu0 %v561
        %5633 = vmatprep.subr.mxu0 0.0
        %5634 = vmatpush1.msra.mxu0 %v562
        %5635 = vmatprep.subr.mxu0 0.0
        %5636 = vmatpush1.msra.mxu0 %v563
        %5637 = vmatprep.subr.mxu0 0.0
        %5638 = vmatpush1.msra.mxu0 %v564
        %5639 = vmatprep.subr.mxu0 0.0
        %5640 = vmatpush1.msra.mxu0 0.0
        %5641 = vmatprep.subr.mxu0 0.0
        %5642 = vmatpush1.msra.mxu0 0.0
        %5643 = vmatprep.subr.mxu0 0.0
        %5644 = vmatpush1.msra.mxu0 0.0
        %5645 = vmatprep.subr.mxu0 0.0
        %5646 = vmatpush1.msra.mxu0 0.0
        %5647 = vmatprep.subr.mxu0 0.0
        %5648 = vmatpush1.msra.mxu0 0.0
        %5649 = vmatprep.subr.mxu0 0.0
        %5650 = vmatpush1.msra.mxu0 0.0
        %5651 = vmatprep.subr.mxu0 0.0
        %5652 = vmatpush1.msra.mxu0 0.0
        %5653 = vmatprep.subr.mxu0 0.0
        %5654 = vmatpush1.msra.mxu0 0.0
        %5655 = vmatprep.subr.mxu0 0.0
        %5656 = vmatpush1.msra.mxu0 0.0
        %5657 = vmatprep.subr.mxu0 0.0
        %5658 = vmatpush1.msra.mxu0 0.0
        %5659 = vmatprep.subr.mxu0 0.0
        %5660 = vmatpush1.msra.mxu0 0.0
        %5661 = vmatprep.subr.mxu0 0.0
        %5662 = vmatpush1.msra.mxu0 0.0
        %5663 = vmatprep.subr.mxu0 0.0
        %5664 = vmatpush1.msra.mxu0 0.0
        %5665 = vmatprep.subr.mxu0 0.0
        %5666 = vmatpush1.msra.mxu0 0.0
        %5667 = vmatprep.subr.mxu0 0.0
        %5668 = vmatpush1.msra.mxu0 0.0
        %5669 = vmatprep.subr.mxu0 0.0
        %5670 = vmatpush1.msra.mxu0 0.0
        %5671 = vmatprep.subr.mxu0 0.0
        %5672 = vmatpush1.msra.mxu0 0.0
        %5673 = vmatprep.subr.mxu0 0.0
        %5674 = vmatpush1.msra.mxu0 0.0
        %5675 = vmatprep.subr.mxu0 0.0
        %5676 = vmatpush1.msra.mxu0 0.0
        %5677 = vmatprep.subr.mxu0 0.0
        %5678 = vmatpush1.msra.mxu0 0.0
        %5679 = vmatprep.subr.mxu0 0.0
        %5680 = vmatpush1.msra.mxu0 0.0
        %5681 = vmatprep.subr.mxu0 0.0
        %5682 = vmatpush1.msra.mxu0 0.0
        %5683 = vmatprep.subr.mxu0 0.0
        %5684 = vmatpush1.msra.mxu0 0.0
        %5685 = vmatprep.subr.mxu0 0.0
        %5686 = vmatpush1.msra.mxu0 0.0
        %5687 = vmatprep.subr.mxu0 0.0
        %5688 = vmatpush1.msra.mxu0 0.0
        %5689 = vmatprep.subr.mxu0 0.0
        %5690 = vmatpush1.msra.mxu0 0.0
        %5691 = vmatprep.subr.mxu0 0.0
        %5692 = vmatpush1.msra.mxu0 0.0
        %5693 = vmatprep.subr.mxu0 0.0
        %5694 = vmatpush1.msra.mxu0 0.0
        %5695 = vmatprep.mubr.f32.mxu0 0.0
        %5696 = vmatmul.mubr.f32.gmra.mrb[0].mxu0 %v5629
        %v5697 = vpop.f32.mrb[0].mxu0
        %v5698 = vadd.f32 0.0, %v5697
        %v5699 = vpop.f32.mrb[0].mxu0
        %5700 = vdwg.mxu0
        %v5701 = vadd.f32 %v5627, %v5698
        %v5702 = vrot.slane %v5183, 7
        %v5703 = vsel %vm577, %v5702, 0
        %5705 = vmatprep.subr.mxu0 0.0
        %5706 = vmatpush1.msra.mxu0 %v565
        %5707 = vmatprep.subr.mxu0 0.0
        %5708 = vmatpush1.msra.mxu0 %v566
        %5709 = vmatprep.subr.mxu0 0.0
        %5710 = vmatpush1.msra.mxu0 %v567
        %5711 = vmatprep.subr.mxu0 0.0
        %5712 = vmatpush1.msra.mxu0 %v568
        %5713 = vmatprep.subr.mxu0 0.0
        %5714 = vmatpush1.msra.mxu0 0.0
        %5715 = vmatprep.subr.mxu0 0.0
        %5716 = vmatpush1.msra.mxu0 0.0
        %5717 = vmatprep.subr.mxu0 0.0
        %5718 = vmatpush1.msra.mxu0 0.0
        %5719 = vmatprep.subr.mxu0 0.0
        %5720 = vmatpush1.msra.mxu0 0.0
        %5721 = vmatprep.subr.mxu0 0.0
        %5722 = vmatpush1.msra.mxu0 0.0
        %5723 = vmatprep.subr.mxu0 0.0
        %5724 = vmatpush1.msra.mxu0 0.0
        %5725 = vmatprep.subr.mxu0 0.0
        %5726 = vmatpush1.msra.mxu0 0.0
        %5727 = vmatprep.subr.mxu0 0.0
        %5728 = vmatpush1.msra.mxu0 0.0
        %5729 = vmatprep.subr.mxu0 0.0
        %5730 = vmatpush1.msra.mxu0 0.0
        %5731 = vmatprep.subr.mxu0 0.0
        %5732 = vmatpush1.msra.mxu0 0.0
        %5733 = vmatprep.subr.mxu0 0.0
        %5734 = vmatpush1.msra.mxu0 0.0
        %5735 = vmatprep.subr.mxu0 0.0
        %5736 = vmatpush1.msra.mxu0 0.0
        %5737 = vmatprep.subr.mxu0 0.0
        %5738 = vmatpush1.msra.mxu0 0.0
        %5739 = vmatprep.subr.mxu0 0.0
        %5740 = vmatpush1.msra.mxu0 0.0
        %5741 = vmatprep.subr.mxu0 0.0
        %5742 = vmatpush1.msra.mxu0 0.0
        %5743 = vmatprep.subr.mxu0 0.0
        %5744 = vmatpush1.msra.mxu0 0.0
        %5745 = vmatprep.subr.mxu0 0.0
        %5746 = vmatpush1.msra.mxu0 0.0
        %5747 = vmatprep.subr.mxu0 0.0
        %5748 = vmatpush1.msra.mxu0 0.0
        %5749 = vmatprep.subr.mxu0 0.0
        %5750 = vmatpush1.msra.mxu0 0.0
        %5751 = vmatprep.subr.mxu0 0.0
        %5752 = vmatpush1.msra.mxu0 0.0
        %5753 = vmatprep.subr.mxu0 0.0
        %5754 = vmatpush1.msra.mxu0 0.0
        %5755 = vmatprep.subr.mxu0 0.0
        %5756 = vmatpush1.msra.mxu0 0.0
        %5757 = vmatprep.subr.mxu0 0.0
        %5758 = vmatpush1.msra.mxu0 0.0
        %5759 = vmatprep.subr.mxu0 0.0
        %5760 = vmatpush1.msra.mxu0 0.0
        %5761 = vmatprep.subr.mxu0 0.0
        %5762 = vmatpush1.msra.mxu0 0.0
        %5763 = vmatprep.subr.mxu0 0.0
        %5764 = vmatpush1.msra.mxu0 0.0
        %5765 = vmatprep.subr.mxu0 0.0
        %5766 = vmatpush1.msra.mxu0 0.0
        %5767 = vmatprep.subr.mxu0 0.0
        %5768 = vmatpush1.msra.mxu0 0.0
        %5769 = vmatprep.mubr.f32.mxu0 0.0
        %5770 = vmatmul.mubr.f32.gmra.mrb[0].mxu0 %v5703
        %v5771 = vpop.f32.mrb[0].mxu0
        %v5772 = vadd.f32 0.0, %v5771
        %v5773 = vpop.f32.mrb[0].mxu0
        %5774 = vdwg.mxu0
        %v5775 = vadd.f32 %v5701, %v5772
        %vm5776 = vcmask 24576
        %5777 = vst.msk [vmem:[%s484] sm:$0x1] %vm5776, %v5775
        %s5778 = sand.u32 %s357, 1
        %s5779 = scalar_lea.sflag [#allocation3], %s5778
        %s5780 = sand.u32 %s357, 1
        %s5781 = scalar_lea.vmem [#allocation2], %s5780
        // Predicated region
        $region81: #{transformer_forward.1} parent=79 // pred_check
          %p5782 = pneg %p367
        $region82: #{transformer_forward.1} parent=79 // pred_check_branch
          %5784 = sbr.rel (%p5782) target = $region84
        $region83: #{transformer_forward.1} parent=79 // pred_region
          %s5786 = ssub.s32 16, 16
          %5787 = vsyncadd %s5779, %s5786
          %s5788 = smul.addr %s29, 16
          %s5789 = scalar_lea.hbm %s15, %s5788
          %s5791 = sshll.u32 %s5781, 4
          %s5792 = int_to_ptr.vmem [resolvable:$true] %s5791
          %5794 = dma.vmem_to_hbm [thread:$0]  %s5792, 16, %s5789, %s5779
        $region84: #{transformer_forward.1} parent=79 // pred_fallthru
          _
      $region80: #{transformer_forward.1} parent=5 // pred_fallthru
        _
      %p5795 = scmp.le.s32.totalorder 2, %s24
      // Predicated region
      $region85: #{transformer_forward.1} parent=5 // pred_check
        %p5796 = pneg %p5795
      $region86: #{transformer_forward.1} parent=5 // pred_check_branch
        %5798 = sbr.rel (%p5796) target = $region88
      $region87: #{transformer_forward.1} parent=5 // pred_region
        %s5799 = ssub.s32 %s24, 2
        // Predicated region
        $region89: #{transformer_forward.1} parent=87 // pred_check
          %p5800 = pneg %p373
        $region90: #{transformer_forward.1} parent=87 // pred_check_branch
          %5802 = sbr.rel (%p5800) target = $region92
        $region91: #{transformer_forward.1} parent=87 // pred_region
          %s5803 = sand.u32 %s358, 1
          %s5804 = scalar_lea.sflag [#allocation3], %s5803
          %s5805 = sand.u32 %s358, 1
          %s5806 = scalar_lea.vmem [#allocation2], %s5805
          %5807 = dma.done %s5804, 16
        $region92: #{transformer_forward.1} parent=87 // pred_fallthru
          _
      $region88: #{transformer_forward.1} parent=5 // pred_fallthru
        _
    $region6: #{transformer_forward.1} parent=1 // loop_footer
      %s28 = sadd.s32 1, %s24
    $region7: #{transformer_forward.1} parent=1 // loop_footer_branch
      %23 = sbr.rel target = $region3
    $region8: #{transformer_forward.1} parent=1 // loop_exit
      _
    %5808 = vsyncpa [#allocation3], 1
    %s5809 = scalar_lea.sflag [#allocation3], 1
    %5810 = vsyncpa %s5809, 1

</llo_original>
